<compile_context>
chip_gen: v6e
topology: v6e:2x2x1
jax: 0.10.0
libtpu: 0.0.40
codegen_flags: <defaults>
</compile_context>

<pallas_src>
import functools

import jax
import jax.numpy as jnp
from jax.experimental import pallas as pl
from jax.experimental.pallas import tpu as pltpu

NEG_SLOPE = 0.2  # LeakyReLU(0.2)


# --------------------------------------------------------------------------
# In-kernel helpers (operate on VMEM-resident values)
# --------------------------------------------------------------------------
def _zpad(x, pads):
    """Zero-pad a value along each axis via concat (kept entirely in VMEM)."""
    for ax, (lo, hi) in enumerate(pads):
        if lo == 0 and hi == 0:
            continue
        parts = []
        if lo:
            shp = list(x.shape); shp[ax] = lo
            parts.append(jnp.zeros(shp, x.dtype))
        parts.append(x)
        if hi:
            shp = list(x.shape); shp[ax] = hi
            parts.append(jnp.zeros(shp, x.dtype))
        x = jnp.concatenate(parts, axis=ax)
    return x


def _matmul_bn_lrelu(x2d, w, scale, bias, out_dtype=jnp.float32):
    """bf16 MXU matmul (f32 accumulate) + folded-BN + LeakyReLU (f32 epilogue)."""
    y = jax.lax.dot_general(
        x2d.astype(jnp.bfloat16), w,                     # w stored bf16
        dimension_numbers=(((1,), (0,)), ((), ())),
        preferred_element_type=jnp.float32)              # (M, C_out) f32
    y = y * scale + bias
    y = jnp.where(y >= 0.0, y, NEG_SLOPE * y)
    return y.astype(out_dtype)


def _conv1x1(x_hwc, w, scale, bias, out_dtype=jnp.float32):
    H, W, C = x_hwc.shape
    y = _matmul_bn_lrelu(x_hwc.reshape(H * W, C), w, scale, bias, out_dtype)
    return y.reshape(H, W, -1)


def _conv_1d7(x_hwc, w, scale, bias, *, axis, out_dtype):
    """7-tap conv sliding along `axis` (0 -> (7,1) conv, 1 -> (1,7) conv),
    padding 3 on both sides, as a single im2col matmul."""
    H, W, C = x_hwc.shape
    xp = _zpad(x_hwc, [(3, 3) if a == axis else (0, 0) for a in range(3)])
    taps = []
    for k in range(7):                      # static unroll: build im2col slab
        if axis == 0:
            taps.append(xp[k:k + H, :, :])
        else:
            taps.append(xp[:, k:k + W, :])
    cols = jnp.concatenate(taps, axis=-1)   # (H, W, 7*C)
    y = _matmul_bn_lrelu(cols.reshape(H * W, 7 * C), w, scale, bias, out_dtype)
    return y.reshape(H, W, -1)


def _sumpool3(x_hwc):
    """3x3 window SUM, stride 1, zero pad 1 (the 1/9 of AvgPool2d is folded
    into the following conv's BN scale).  Separable: 4 adds instead of 8."""
    H, W, C = x_hwc.shape
    xp = _zpad(x_hwc.astype(jnp.float32), [(1, 1), (1, 1), (0, 0)])  # (H+2,W+2,C)
    sw = xp[:, 0:W, :] + xp[:, 1:W + 1, :] + xp[:, 2:W + 2, :]       # (H+2,W,C)
    return sw[0:H, :, :] + sw[1:H + 1, :, :] + sw[2:H + 2, :, :]     # (H,W,C)


# --------------------------------------------------------------------------
# Fused InceptionC kernel (one grid step = one batch element)
#
# Unit order (each unit = weight, scale, bias):
#   0: fused 1x1 stem  (branch1x1 | branch7x7 head | branch7x7dbl head)
#   1: b7_2   (1,7)    2: b7_3   (7,1)
#   3: b7d_2  (7,1)    4: b7d_3  (1,7)   5: b7d_4 (7,1)   6: b7d_5 (1,7)
#   7: branch_pool 1x1 (after 3x3 avg pool)
# --------------------------------------------------------------------------
def _inception_c_kernel(c7, *refs):
    x_ref, o_ref = refs[0], refs[-1]
    pr = refs[1:-1]

    def unit(i):
        return pr[3 * i][...], pr[3 * i + 1][...], pr[3 * i + 2][...]

    x = x_ref[0]                                   # (H, W, C_in) f32
    H, W, C = x.shape
    x_bf = x.astype(jnp.bfloat16)                  # cast ONCE for all matmuls

    # ---- fused 1x1 stem: one lane-dense matmul feeding three branches ----
    w, s, b = unit(0)
    stem = _matmul_bn_lrelu(x_bf.reshape(H * W, C), w, s, b)   # (H*W, 192+2*c7)
    b1 = stem[:, :192].reshape(H, W, 192)                       # branch1x1 out
    t2 = stem[:, 192:192 + c7].astype(jnp.bfloat16).reshape(H, W, c7)
    t3 = stem[:, 192 + c7:].astype(jnp.bfloat16).reshape(H, W, c7)

    # ---- branch 2: (1,7) -> (7,1) ----
    t2 = _conv_1d7(t2, *unit(1), axis=1, out_dtype=jnp.bfloat16)
    b2 = _conv_1d7(t2, *unit(2), axis=0, out_dtype=jnp.float32)

    # ---- branch 3: (7,1) -> (1,7) -> (7,1) -> (1,7) ----
    t3 = _conv_1d7(t3, *unit(3), axis=0, out_dtype=jnp.bfloat16)
    t3 = _conv_1d7(t3, *unit(4), axis=1, out_dtype=jnp.bfloat16)
    t3 = _conv_1d7(t3, *unit(5), axis=0, out_dtype=jnp.bfloat16)
    b3 = _conv_1d7(t3, *unit(6), axis=1, out_dtype=jnp.float32)

    # ---- branch 4: avgpool(3,1,1) fused with the 1x1 conv (1/9 in scale) ----
    w, s, b = unit(7)
    bp = _conv1x1(_sumpool3(x), w, s * (1.0 / 9.0), b, out_dtype=jnp.float32)

    # single lane-dense store of the concatenated (H, W, 768) slab
    o_ref[0] = jnp.concatenate([b1, b2, b3, bp], axis=-1).astype(o_ref.dtype)


# --------------------------------------------------------------------------
# Public wrapper: NCHW in / NCHW out (PyTorch convention)
# --------------------------------------------------------------------------
def inception_c(x_nchw, params):
    N, C_in, H, W = x_nchw.shape
    x = jnp.transpose(x_nchw, (0, 2, 3, 1)).astype(jnp.float32)  # NHWC

    # Fuse the three 1x1 convs that consume the block input into ONE unit.
    w1, s1, b1 = params["branch1x1"]
    w2, s2, b2 = params["b7_1"]
    w3, s3, b3 = params["b7d_1"]
    stem = (jnp.concatenate([w1, w2, w3], axis=1),
            jnp.concatenate([s1, s2, s3], axis=1),
            jnp.concatenate([b1, b2, b3], axis=1))
    c7 = w2.shape[1]

    units = [stem,
             params["b7_2"], params["b7_3"],
             params["b7d_2"], params["b7d_3"], params["b7d_4"], params["b7d_5"],
             params["branch_pool"]]
    flat = [a for u in units for a in u]

    n_out = 4 * 192
    in_specs = [pl.BlockSpec((1, H, W, C_in), lambda n: (n, 0, 0, 0))]
    for a in flat:
        in_specs.append(pl.BlockSpec(a.shape, lambda n, nd=a.ndim: (0,) * nd))

    out = pl.pallas_call(
        functools.partial(_inception_c_kernel, c7),
        out_shape=jax.ShapeDtypeStruct((N, H, W, n_out), jnp.float32),
        grid=(N,),
        in_specs=in_specs,
        out_specs=pl.BlockSpec((1, H, W, n_out), lambda n: (n, 0, 0, 0)),
        compiler_params=pltpu.CompilerParams(
            dimension_semantics=("parallel",)),
    )(x, *flat)

    return jnp.transpose(out, (0, 3, 1, 2))                      # back to NCHW


# --------------------------------------------------------------------------
# Parameter construction (synthetic, deterministic)
# --------------------------------------------------------------------------
def make_conv_bn_params(key, c_in, c_out, K):
    kw, kg, kb, km, kv = jax.random.split(key, 5)
    w = 0.1 * jax.random.normal(kw, (K, c_in, c_out), jnp.float32)
    gamma = 1.0 + 0.1 * jax.random.normal(kg, (c_out,), jnp.float32)
    beta = 0.1 * jax.random.normal(kb, (c_out,), jnp.float32)
    run_mean = 0.1 * jax.random.normal(km, (c_out,), jnp.float32)
    run_var = jnp.abs(jax.random.normal(kv, (c_out,), jnp.float32)) + 0.5
    scale = gamma * jax.lax.rsqrt(run_var + 1e-5)
    bias = beta - run_mean * scale
    # pack taps into the contraction dim; store weights bf16 for the MXU
    w_packed = w.reshape(K * c_in, c_out).astype(jnp.bfloat16)
    return w_packed, scale.reshape(1, c_out), bias.reshape(1, c_out)


def make_inception_c_params(key, channels_in, channels_7x7):
    keys = jax.random.split(key, 10)
    c7 = channels_7x7
    return {
        "branch1x1":   make_conv_bn_params(keys[0], channels_in, 192, 1),
        "b7_1":        make_conv_bn_params(keys[1], channels_in, c7, 1),
        "b7_2":        make_conv_bn_params(keys[2], c7, c7, 7),   # (1,7)
        "b7_3":        make_conv_bn_params(keys[3], c7, 192, 7),  # (7,1)
        "b7d_1":       make_conv_bn_params(keys[4], channels_in, c7, 1),
        "b7d_2":       make_conv_bn_params(keys[5], c7, c7, 7),   # (7,1)
        "b7d_3":       make_conv_bn_params(keys[6], c7, c7, 7),   # (1,7)
        "b7d_4":       make_conv_bn_params(keys[7], c7, c7, 7),   # (7,1)
        "b7d_5":       make_conv_bn_params(keys[8], c7, 192, 7),  # (1,7)
        "branch_pool": make_conv_bn_params(keys[9], channels_in, 192, 1),
    }


if __name__ == "__main__":
    N, C_IN, H, W = 2, 4, 16, 16
    CHANNELS_7X7 = 8

    root = jax.random.PRNGKey(0)
    k_x, k_p = jax.random.split(root)
    x = jax.random.normal(k_x, (N, C_IN, H, W), jnp.float32)
    params = make_inception_c_params(k_p, C_IN, CHANNELS_7X7)

    fwd = jax.jit(inception_c)
    out = fwd(x, params)
    jax.block_until_ready(out)

    assert out.shape == (N, 192 * 4, H, W), out.shape
    assert out.dtype == jnp.float32
    assert bool(jnp.isfinite(out).all())
    print("KERNEL_OK")
</pallas_src>

<mosaic_0001>
module attributes {stable_mosaic.version = 11 : i64} {
  func.func @_inception_c_kernel(%arg0: i32, %arg1: memref<1x16x16x4xf32, #tpu.memory_space<vmem>>, %arg2: memref<4x208xbf16, #tpu.memory_space<vmem>>, %arg3: memref<1x208xf32, #tpu.memory_space<vmem>>, %arg4: memref<1x208xf32, #tpu.memory_space<vmem>>, %arg5: memref<56x8xbf16, #tpu.memory_space<vmem>>, %arg6: memref<1x8xf32, #tpu.memory_space<vmem>>, %arg7: memref<1x8xf32, #tpu.memory_space<vmem>>, %arg8: memref<56x192xbf16, #tpu.memory_space<vmem>>, %arg9: memref<1x192xf32, #tpu.memory_space<vmem>>, %arg10: memref<1x192xf32, #tpu.memory_space<vmem>>, %arg11: memref<56x8xbf16, #tpu.memory_space<vmem>>, %arg12: memref<1x8xf32, #tpu.memory_space<vmem>>, %arg13: memref<1x8xf32, #tpu.memory_space<vmem>>, %arg14: memref<56x8xbf16, #tpu.memory_space<vmem>>, %arg15: memref<1x8xf32, #tpu.memory_space<vmem>>, %arg16: memref<1x8xf32, #tpu.memory_space<vmem>>, %arg17: memref<56x8xbf16, #tpu.memory_space<vmem>>, %arg18: memref<1x8xf32, #tpu.memory_space<vmem>>, %arg19: memref<1x8xf32, #tpu.memory_space<vmem>>, %arg20: memref<56x192xbf16, #tpu.memory_space<vmem>>, %arg21: memref<1x192xf32, #tpu.memory_space<vmem>>, %arg22: memref<1x192xf32, #tpu.memory_space<vmem>>, %arg23: memref<4x192xbf16, #tpu.memory_space<vmem>>, %arg24: memref<1x192xf32, #tpu.memory_space<vmem>>, %arg25: memref<1x192xf32, #tpu.memory_space<vmem>>, %arg26: memref<1x16x16x768xf32, #tpu.memory_space<vmem>>) attributes {dimension_semantics = [#tpu.dimension_semantics<parallel>], iteration_bounds = array<i64: 2>, scalar_prefetch = 0 : i64, scratch_operands = 0 : i64, tpu.core_type = #tpu.core_type<tc>, window_params = [{transform_indices = @transform_0, window_bounds = array<i64: 1, 16, 16, 4>}, {pipeline_mode = #tpu.pipeline_mode<synchronous>, transform_indices = @transform_1, window_bounds = array<i64: 4, 208>}, {pipeline_mode = #tpu.pipeline_mode<synchronous>, transform_indices = @transform_2, window_bounds = array<i64: 1, 208>}, {pipeline_mode = #tpu.pipeline_mode<synchronous>, transform_indices = @transform_3, window_bounds = array<i64: 1, 208>}, {pipeline_mode = #tpu.pipeline_mode<synchronous>, transform_indices = @transform_4, window_bounds = array<i64: 56, 8>}, {pipeline_mode = #tpu.pipeline_mode<synchronous>, transform_indices = @transform_5, window_bounds = array<i64: 1, 8>}, {pipeline_mode = #tpu.pipeline_mode<synchronous>, transform_indices = @transform_6, window_bounds = array<i64: 1, 8>}, {pipeline_mode = #tpu.pipeline_mode<synchronous>, transform_indices = @transform_7, window_bounds = array<i64: 56, 192>}, {pipeline_mode = #tpu.pipeline_mode<synchronous>, transform_indices = @transform_8, window_bounds = array<i64: 1, 192>}, {pipeline_mode = #tpu.pipeline_mode<synchronous>, transform_indices = @transform_9, window_bounds = array<i64: 1, 192>}, {pipeline_mode = #tpu.pipeline_mode<synchronous>, transform_indices = @transform_10, window_bounds = array<i64: 56, 8>}, {pipeline_mode = #tpu.pipeline_mode<synchronous>, transform_indices = @transform_11, window_bounds = array<i64: 1, 8>}, {pipeline_mode = #tpu.pipeline_mode<synchronous>, transform_indices = @transform_12, window_bounds = array<i64: 1, 8>}, {pipeline_mode = #tpu.pipeline_mode<synchronous>, transform_indices = @transform_13, window_bounds = array<i64: 56, 8>}, {pipeline_mode = #tpu.pipeline_mode<synchronous>, transform_indices = @transform_14, window_bounds = array<i64: 1, 8>}, {pipeline_mode = #tpu.pipeline_mode<synchronous>, transform_indices = @transform_15, window_bounds = array<i64: 1, 8>}, {pipeline_mode = #tpu.pipeline_mode<synchronous>, transform_indices = @transform_16, window_bounds = array<i64: 56, 8>}, {pipeline_mode = #tpu.pipeline_mode<synchronous>, transform_indices = @transform_17, window_bounds = array<i64: 1, 8>}, {pipeline_mode = #tpu.pipeline_mode<synchronous>, transform_indices = @transform_18, window_bounds = array<i64: 1, 8>}, {pipeline_mode = #tpu.pipeline_mode<synchronous>, transform_indices = @transform_19, window_bounds = array<i64: 56, 192>}, {pipeline_mode = #tpu.pipeline_mode<synchronous>, transform_indices = @transform_20, window_bounds = array<i64: 1, 192>}, {pipeline_mode = #tpu.pipeline_mode<synchronous>, transform_indices = @transform_21, window_bounds = array<i64: 1, 192>}, {pipeline_mode = #tpu.pipeline_mode<synchronous>, transform_indices = @transform_22, window_bounds = array<i64: 4, 192>}, {pipeline_mode = #tpu.pipeline_mode<synchronous>, transform_indices = @transform_23, window_bounds = array<i64: 1, 192>}, {pipeline_mode = #tpu.pipeline_mode<synchronous>, transform_indices = @transform_24, window_bounds = array<i64: 1, 192>}, {transform_indices = @transform_25, window_bounds = array<i64: 1, 16, 16, 768>}]} {
    %c0 = arith.constant 0 : index
    %c0_0 = arith.constant 0 : index
    %c0_1 = arith.constant 0 : index
    %c0_2 = arith.constant 0 : index
    %0 = vector.load %arg1[%c0, %c0_0, %c0_1, %c0_2] : memref<1x16x16x4xf32, #tpu.memory_space<vmem>>, vector<1x16x16x4xf32>
    %1 = vector.shape_cast %0 : vector<1x16x16x4xf32> to vector<16x16x4xf32>
    %2 = arith.truncf %1 : vector<16x16x4xf32> to vector<16x16x4xbf16>
    %c0_3 = arith.constant 0 : index
    %c0_4 = arith.constant 0 : index
    %3 = vector.load %arg2[%c0_3, %c0_4] : memref<4x208xbf16, #tpu.memory_space<vmem>>, vector<4x208xbf16>
    %c0_5 = arith.constant 0 : index
    %c0_6 = arith.constant 0 : index
    %4 = vector.load %arg3[%c0_5, %c0_6] : memref<1x208xf32, #tpu.memory_space<vmem>>, vector<1x208xf32>
    %c0_7 = arith.constant 0 : index
    %c0_8 = arith.constant 0 : index
    %5 = vector.load %arg4[%c0_7, %c0_8] : memref<1x208xf32, #tpu.memory_space<vmem>>, vector<1x208xf32>
    %6 = vector.shape_cast %2 : vector<16x16x4xbf16> to vector<256x4xbf16>
    %cst = arith.constant dense<0.000000e+00> : vector<256x208xf32>
    %7 = tpu.matmul %6, %3, %cst {dimension_numbers = #tpu.dot_dimension_numbers<[1], [0], [0], [1], [0, 0, 1, 1], [], []>} : vector<256x4xbf16>, vector<4x208xbf16>, vector<256x208xf32> -> vector<256x208xf32>
    %8 = vector.broadcast %4 : vector<1x208xf32> to vector<256x208xf32>
    %9 = arith.mulf %7, %8 : vector<256x208xf32>
    %10 = vector.broadcast %5 : vector<1x208xf32> to vector<256x208xf32>
    %11 = arith.addf %9, %10 : vector<256x208xf32>
    %cst_9 = arith.constant 0.000000e+00 : f32
    %12 = vector.broadcast %cst_9 : f32 to vector<256x208xf32>
    %13 = arith.cmpf oge, %11, %12 : vector<256x208xf32>
    %cst_10 = arith.constant 2.000000e-01 : f32
    %14 = vector.broadcast %cst_10 : f32 to vector<256x208xf32>
    %15 = arith.mulf %14, %11 : vector<256x208xf32>
    %16 = arith.select %13, %11, %15 : vector<256x208xi1>, vector<256x208xf32>
    %17 = vector.extract_strided_slice %16 {offsets = [0, 0], sizes = [256, 192], strides = [1, 1]} : vector<256x208xf32> to vector<256x192xf32>
    %18 = vector.shape_cast %17 : vector<256x192xf32> to vector<16x16x192xf32>
    %19 = vector.extract_strided_slice %16 {offsets = [0, 192], sizes = [256, 8], strides = [1, 1]} : vector<256x208xf32> to vector<256x8xf32>
    %20 = arith.truncf %19 : vector<256x8xf32> to vector<256x8xbf16>
    %21 = vector.shape_cast %20 : vector<256x8xbf16> to vector<16x16x8xbf16>
    %22 = vector.extract_strided_slice %16 {offsets = [0, 200], sizes = [256, 8], strides = [1, 1]} : vector<256x208xf32> to vector<256x8xf32>
    %23 = arith.truncf %22 : vector<256x8xf32> to vector<256x8xbf16>
    %24 = vector.shape_cast %23 : vector<256x8xbf16> to vector<16x16x8xbf16>
    %c0_11 = arith.constant 0 : index
    %c0_12 = arith.constant 0 : index
    %25 = vector.load %arg5[%c0_11, %c0_12] : memref<56x8xbf16, #tpu.memory_space<vmem>>, vector<56x8xbf16>
    %c0_13 = arith.constant 0 : index
    %c0_14 = arith.constant 0 : index
    %26 = vector.load %arg6[%c0_13, %c0_14] : memref<1x8xf32, #tpu.memory_space<vmem>>, vector<1x8xf32>
    %c0_15 = arith.constant 0 : index
    %c0_16 = arith.constant 0 : index
    %27 = vector.load %arg7[%c0_15, %c0_16] : memref<1x8xf32, #tpu.memory_space<vmem>>, vector<1x8xf32>
    %cst_17 = arith.constant 0.000000e+00 : bf16
    %28 = vector.broadcast %cst_17 : bf16 to vector<16x3x8xbf16>
    %cst_18 = arith.constant 0.000000e+00 : bf16
    %29 = vector.broadcast %cst_18 : bf16 to vector<16x3x8xbf16>
    %30 = tpu.concatenate %28, %21, %29 in 1 : vector<16x3x8xbf16>, vector<16x16x8xbf16>, vector<16x3x8xbf16> -> vector<16x22x8xbf16>
    %31 = vector.extract_strided_slice %30 {offsets = [0, 0, 0], sizes = [16, 16, 8], strides = [1, 1, 1]} : vector<16x22x8xbf16> to vector<16x16x8xbf16>
    %32 = vector.extract_strided_slice %30 {offsets = [0, 1, 0], sizes = [16, 16, 8], strides = [1, 1, 1]} : vector<16x22x8xbf16> to vector<16x16x8xbf16>
    %33 = vector.extract_strided_slice %30 {offsets = [0, 2, 0], sizes = [16, 16, 8], strides = [1, 1, 1]} : vector<16x22x8xbf16> to vector<16x16x8xbf16>
    %34 = vector.extract_strided_slice %30 {offsets = [0, 3, 0], sizes = [16, 16, 8], strides = [1, 1, 1]} : vector<16x22x8xbf16> to vector<16x16x8xbf16>
    %35 = vector.extract_strided_slice %30 {offsets = [0, 4, 0], sizes = [16, 16, 8], strides = [1, 1, 1]} : vector<16x22x8xbf16> to vector<16x16x8xbf16>
    %36 = vector.extract_strided_slice %30 {offsets = [0, 5, 0], sizes = [16, 16, 8], strides = [1, 1, 1]} : vector<16x22x8xbf16> to vector<16x16x8xbf16>
    %37 = vector.extract_strided_slice %30 {offsets = [0, 6, 0], sizes = [16, 16, 8], strides = [1, 1, 1]} : vector<16x22x8xbf16> to vector<16x16x8xbf16>
    %38 = tpu.concatenate %31, %32, %33, %34, %35, %36, %37 in 2 : vector<16x16x8xbf16>, vector<16x16x8xbf16>, vector<16x16x8xbf16>, vector<16x16x8xbf16>, vector<16x16x8xbf16>, vector<16x16x8xbf16>, vector<16x16x8xbf16> -> vector<16x16x56xbf16>
    %39 = vector.shape_cast %38 : vector<16x16x56xbf16> to vector<256x56xbf16>
    %cst_19 = arith.constant dense<0.000000e+00> : vector<256x8xf32>
    %40 = tpu.matmul %39, %25, %cst_19 {dimension_numbers = #tpu.dot_dimension_numbers<[1], [0], [0], [1], [0, 0, 1, 1], [], []>} : vector<256x56xbf16>, vector<56x8xbf16>, vector<256x8xf32> -> vector<256x8xf32>
    %41 = vector.broadcast %26 : vector<1x8xf32> to vector<256x8xf32>
    %42 = arith.mulf %40, %41 : vector<256x8xf32>
    %43 = vector.broadcast %27 : vector<1x8xf32> to vector<256x8xf32>
    %44 = arith.addf %42, %43 : vector<256x8xf32>
    %cst_20 = arith.constant 0.000000e+00 : f32
    %45 = vector.broadcast %cst_20 : f32 to vector<256x8xf32>
    %46 = arith.cmpf oge, %44, %45 : vector<256x8xf32>
    %cst_21 = arith.constant 2.000000e-01 : f32
    %47 = vector.broadcast %cst_21 : f32 to vector<256x8xf32>
    %48 = arith.mulf %47, %44 : vector<256x8xf32>
    %49 = arith.select %46, %44, %48 : vector<256x8xi1>, vector<256x8xf32>
    %50 = arith.truncf %49 : vector<256x8xf32> to vector<256x8xbf16>
    %51 = vector.shape_cast %50 : vector<256x8xbf16> to vector<16x16x8xbf16>
    %c0_22 = arith.constant 0 : index
    %c0_23 = arith.constant 0 : index
    %52 = vector.load %arg8[%c0_22, %c0_23] : memref<56x192xbf16, #tpu.memory_space<vmem>>, vector<56x192xbf16>
    %c0_24 = arith.constant 0 : index
    %c0_25 = arith.constant 0 : index
    %53 = vector.load %arg9[%c0_24, %c0_25] : memref<1x192xf32, #tpu.memory_space<vmem>>, vector<1x192xf32>
    %c0_26 = arith.constant 0 : index
    %c0_27 = arith.constant 0 : index
    %54 = vector.load %arg10[%c0_26, %c0_27] : memref<1x192xf32, #tpu.memory_space<vmem>>, vector<1x192xf32>
    %cst_28 = arith.constant 0.000000e+00 : bf16
    %55 = vector.broadcast %cst_28 : bf16 to vector<3x16x8xbf16>
    %cst_29 = arith.constant 0.000000e+00 : bf16
    %56 = vector.broadcast %cst_29 : bf16 to vector<3x16x8xbf16>
    %57 = tpu.concatenate %55, %51, %56 in 0 : vector<3x16x8xbf16>, vector<16x16x8xbf16>, vector<3x16x8xbf16> -> vector<22x16x8xbf16>
    %58 = vector.extract_strided_slice %57 {offsets = [0, 0, 0], sizes = [16, 16, 8], strides = [1, 1, 1]} : vector<22x16x8xbf16> to vector<16x16x8xbf16>
    %59 = vector.extract_strided_slice %57 {offsets = [1, 0, 0], sizes = [16, 16, 8], strides = [1, 1, 1]} : vector<22x16x8xbf16> to vector<16x16x8xbf16>
    %60 = vector.extract_strided_slice %57 {offsets = [2, 0, 0], sizes = [16, 16, 8], strides = [1, 1, 1]} : vector<22x16x8xbf16> to vector<16x16x8xbf16>
    %61 = vector.extract_strided_slice %57 {offsets = [3, 0, 0], sizes = [16, 16, 8], strides = [1, 1, 1]} : vector<22x16x8xbf16> to vector<16x16x8xbf16>
    %62 = vector.extract_strided_slice %57 {offsets = [4, 0, 0], sizes = [16, 16, 8], strides = [1, 1, 1]} : vector<22x16x8xbf16> to vector<16x16x8xbf16>
    %63 = vector.extract_strided_slice %57 {offsets = [5, 0, 0], sizes = [16, 16, 8], strides = [1, 1, 1]} : vector<22x16x8xbf16> to vector<16x16x8xbf16>
    %64 = vector.extract_strided_slice %57 {offsets = [6, 0, 0], sizes = [16, 16, 8], strides = [1, 1, 1]} : vector<22x16x8xbf16> to vector<16x16x8xbf16>
    %65 = tpu.concatenate %58, %59, %60, %61, %62, %63, %64 in 2 : vector<16x16x8xbf16>, vector<16x16x8xbf16>, vector<16x16x8xbf16>, vector<16x16x8xbf16>, vector<16x16x8xbf16>, vector<16x16x8xbf16>, vector<16x16x8xbf16> -> vector<16x16x56xbf16>
    %66 = vector.shape_cast %65 : vector<16x16x56xbf16> to vector<256x56xbf16>
    %cst_30 = arith.constant dense<0.000000e+00> : vector<256x192xf32>
    %67 = tpu.matmul %66, %52, %cst_30 {dimension_numbers = #tpu.dot_dimension_numbers<[1], [0], [0], [1], [0, 0, 1, 1], [], []>} : vector<256x56xbf16>, vector<56x192xbf16>, vector<256x192xf32> -> vector<256x192xf32>
    %68 = vector.broadcast %53 : vector<1x192xf32> to vector<256x192xf32>
    %69 = arith.mulf %67, %68 : vector<256x192xf32>
    %70 = vector.broadcast %54 : vector<1x192xf32> to vector<256x192xf32>
    %71 = arith.addf %69, %70 : vector<256x192xf32>
    %cst_31 = arith.constant 0.000000e+00 : f32
    %72 = vector.broadcast %cst_31 : f32 to vector<256x192xf32>
    %73 = arith.cmpf oge, %71, %72 : vector<256x192xf32>
    %cst_32 = arith.constant 2.000000e-01 : f32
    %74 = vector.broadcast %cst_32 : f32 to vector<256x192xf32>
    %75 = arith.mulf %74, %71 : vector<256x192xf32>
    %76 = arith.select %73, %71, %75 : vector<256x192xi1>, vector<256x192xf32>
    %77 = vector.shape_cast %76 : vector<256x192xf32> to vector<16x16x192xf32>
    %c0_33 = arith.constant 0 : index
    %c0_34 = arith.constant 0 : index
    %78 = vector.load %arg11[%c0_33, %c0_34] : memref<56x8xbf16, #tpu.memory_space<vmem>>, vector<56x8xbf16>
    %c0_35 = arith.constant 0 : index
    %c0_36 = arith.constant 0 : index
    %79 = vector.load %arg12[%c0_35, %c0_36] : memref<1x8xf32, #tpu.memory_space<vmem>>, vector<1x8xf32>
    %c0_37 = arith.constant 0 : index
    %c0_38 = arith.constant 0 : index
    %80 = vector.load %arg13[%c0_37, %c0_38] : memref<1x8xf32, #tpu.memory_space<vmem>>, vector<1x8xf32>
    %cst_39 = arith.constant 0.000000e+00 : bf16
    %81 = vector.broadcast %cst_39 : bf16 to vector<3x16x8xbf16>
    %cst_40 = arith.constant 0.000000e+00 : bf16
    %82 = vector.broadcast %cst_40 : bf16 to vector<3x16x8xbf16>
    %83 = tpu.concatenate %81, %24, %82 in 0 : vector<3x16x8xbf16>, vector<16x16x8xbf16>, vector<3x16x8xbf16> -> vector<22x16x8xbf16>
    %84 = vector.extract_strided_slice %83 {offsets = [0, 0, 0], sizes = [16, 16, 8], strides = [1, 1, 1]} : vector<22x16x8xbf16> to vector<16x16x8xbf16>
    %85 = vector.extract_strided_slice %83 {offsets = [1, 0, 0], sizes = [16, 16, 8], strides = [1, 1, 1]} : vector<22x16x8xbf16> to vector<16x16x8xbf16>
    %86 = vector.extract_strided_slice %83 {offsets = [2, 0, 0], sizes = [16, 16, 8], strides = [1, 1, 1]} : vector<22x16x8xbf16> to vector<16x16x8xbf16>
    %87 = vector.extract_strided_slice %83 {offsets = [3, 0, 0], sizes = [16, 16, 8], strides = [1, 1, 1]} : vector<22x16x8xbf16> to vector<16x16x8xbf16>
    %88 = vector.extract_strided_slice %83 {offsets = [4, 0, 0], sizes = [16, 16, 8], strides = [1, 1, 1]} : vector<22x16x8xbf16> to vector<16x16x8xbf16>
    %89 = vector.extract_strided_slice %83 {offsets = [5, 0, 0], sizes = [16, 16, 8], strides = [1, 1, 1]} : vector<22x16x8xbf16> to vector<16x16x8xbf16>
    %90 = vector.extract_strided_slice %83 {offsets = [6, 0, 0], sizes = [16, 16, 8], strides = [1, 1, 1]} : vector<22x16x8xbf16> to vector<16x16x8xbf16>
    %91 = tpu.concatenate %84, %85, %86, %87, %88, %89, %90 in 2 : vector<16x16x8xbf16>, vector<16x16x8xbf16>, vector<16x16x8xbf16>, vector<16x16x8xbf16>, vector<16x16x8xbf16>, vector<16x16x8xbf16>, vector<16x16x8xbf16> -> vector<16x16x56xbf16>
    %92 = vector.shape_cast %91 : vector<16x16x56xbf16> to vector<256x56xbf16>
    %cst_41 = arith.constant dense<0.000000e+00> : vector<256x8xf32>
    %93 = tpu.matmul %92, %78, %cst_41 {dimension_numbers = #tpu.dot_dimension_numbers<[1], [0], [0], [1], [0, 0, 1, 1], [], []>} : vector<256x56xbf16>, vector<56x8xbf16>, vector<256x8xf32> -> vector<256x8xf32>
    %94 = vector.broadcast %79 : vector<1x8xf32> to vector<256x8xf32>
    %95 = arith.mulf %93, %94 : vector<256x8xf32>
    %96 = vector.broadcast %80 : vector<1x8xf32> to vector<256x8xf32>
    %97 = arith.addf %95, %96 : vector<256x8xf32>
    %cst_42 = arith.constant 0.000000e+00 : f32
    %98 = vector.broadcast %cst_42 : f32 to vector<256x8xf32>
    %99 = arith.cmpf oge, %97, %98 : vector<256x8xf32>
    %cst_43 = arith.constant 2.000000e-01 : f32
    %100 = vector.broadcast %cst_43 : f32 to vector<256x8xf32>
    %101 = arith.mulf %100, %97 : vector<256x8xf32>
    %102 = arith.select %99, %97, %101 : vector<256x8xi1>, vector<256x8xf32>
    %103 = arith.truncf %102 : vector<256x8xf32> to vector<256x8xbf16>
    %104 = vector.shape_cast %103 : vector<256x8xbf16> to vector<16x16x8xbf16>
    %c0_44 = arith.constant 0 : index
    %c0_45 = arith.constant 0 : index
    %105 = vector.load %arg14[%c0_44, %c0_45] : memref<56x8xbf16, #tpu.memory_space<vmem>>, vector<56x8xbf16>
    %c0_46 = arith.constant 0 : index
    %c0_47 = arith.constant 0 : index
    %106 = vector.load %arg15[%c0_46, %c0_47] : memref<1x8xf32, #tpu.memory_space<vmem>>, vector<1x8xf32>
    %c0_48 = arith.constant 0 : index
    %c0_49 = arith.constant 0 : index
    %107 = vector.load %arg16[%c0_48, %c0_49] : memref<1x8xf32, #tpu.memory_space<vmem>>, vector<1x8xf32>
    %cst_50 = arith.constant 0.000000e+00 : bf16
    %108 = vector.broadcast %cst_50 : bf16 to vector<16x3x8xbf16>
    %cst_51 = arith.constant 0.000000e+00 : bf16
    %109 = vector.broadcast %cst_51 : bf16 to vector<16x3x8xbf16>
    %110 = tpu.concatenate %108, %104, %109 in 1 : vector<16x3x8xbf16>, vector<16x16x8xbf16>, vector<16x3x8xbf16> -> vector<16x22x8xbf16>
    %111 = vector.extract_strided_slice %110 {offsets = [0, 0, 0], sizes = [16, 16, 8], strides = [1, 1, 1]} : vector<16x22x8xbf16> to vector<16x16x8xbf16>
    %112 = vector.extract_strided_slice %110 {offsets = [0, 1, 0], sizes = [16, 16, 8], strides = [1, 1, 1]} : vector<16x22x8xbf16> to vector<16x16x8xbf16>
    %113 = vector.extract_strided_slice %110 {offsets = [0, 2, 0], sizes = [16, 16, 8], strides = [1, 1, 1]} : vector<16x22x8xbf16> to vector<16x16x8xbf16>
    %114 = vector.extract_strided_slice %110 {offsets = [0, 3, 0], sizes = [16, 16, 8], strides = [1, 1, 1]} : vector<16x22x8xbf16> to vector<16x16x8xbf16>
    %115 = vector.extract_strided_slice %110 {offsets = [0, 4, 0], sizes = [16, 16, 8], strides = [1, 1, 1]} : vector<16x22x8xbf16> to vector<16x16x8xbf16>
    %116 = vector.extract_strided_slice %110 {offsets = [0, 5, 0], sizes = [16, 16, 8], strides = [1, 1, 1]} : vector<16x22x8xbf16> to vector<16x16x8xbf16>
    %117 = vector.extract_strided_slice %110 {offsets = [0, 6, 0], sizes = [16, 16, 8], strides = [1, 1, 1]} : vector<16x22x8xbf16> to vector<16x16x8xbf16>
    %118 = tpu.concatenate %111, %112, %113, %114, %115, %116, %117 in 2 : vector<16x16x8xbf16>, vector<16x16x8xbf16>, vector<16x16x8xbf16>, vector<16x16x8xbf16>, vector<16x16x8xbf16>, vector<16x16x8xbf16>, vector<16x16x8xbf16> -> vector<16x16x56xbf16>
    %119 = vector.shape_cast %118 : vector<16x16x56xbf16> to vector<256x56xbf16>
    %cst_52 = arith.constant dense<0.000000e+00> : vector<256x8xf32>
    %120 = tpu.matmul %119, %105, %cst_52 {dimension_numbers = #tpu.dot_dimension_numbers<[1], [0], [0], [1], [0, 0, 1, 1], [], []>} : vector<256x56xbf16>, vector<56x8xbf16>, vector<256x8xf32> -> vector<256x8xf32>
    %121 = vector.broadcast %106 : vector<1x8xf32> to vector<256x8xf32>
    %122 = arith.mulf %120, %121 : vector<256x8xf32>
    %123 = vector.broadcast %107 : vector<1x8xf32> to vector<256x8xf32>
    %124 = arith.addf %122, %123 : vector<256x8xf32>
    %cst_53 = arith.constant 0.000000e+00 : f32
    %125 = vector.broadcast %cst_53 : f32 to vector<256x8xf32>
    %126 = arith.cmpf oge, %124, %125 : vector<256x8xf32>
    %cst_54 = arith.constant 2.000000e-01 : f32
    %127 = vector.broadcast %cst_54 : f32 to vector<256x8xf32>
    %128 = arith.mulf %127, %124 : vector<256x8xf32>
    %129 = arith.select %126, %124, %128 : vector<256x8xi1>, vector<256x8xf32>
    %130 = arith.truncf %129 : vector<256x8xf32> to vector<256x8xbf16>
    %131 = vector.shape_cast %130 : vector<256x8xbf16> to vector<16x16x8xbf16>
    %c0_55 = arith.constant 0 : index
    %c0_56 = arith.constant 0 : index
    %132 = vector.load %arg17[%c0_55, %c0_56] : memref<56x8xbf16, #tpu.memory_space<vmem>>, vector<56x8xbf16>
    %c0_57 = arith.constant 0 : index
    %c0_58 = arith.constant 0 : index
    %133 = vector.load %arg18[%c0_57, %c0_58] : memref<1x8xf32, #tpu.memory_space<vmem>>, vector<1x8xf32>
    %c0_59 = arith.constant 0 : index
    %c0_60 = arith.constant 0 : index
    %134 = vector.load %arg19[%c0_59, %c0_60] : memref<1x8xf32, #tpu.memory_space<vmem>>, vector<1x8xf32>
    %cst_61 = arith.constant 0.000000e+00 : bf16
    %135 = vector.broadcast %cst_61 : bf16 to vector<3x16x8xbf16>
    %cst_62 = arith.constant 0.000000e+00 : bf16
    %136 = vector.broadcast %cst_62 : bf16 to vector<3x16x8xbf16>
    %137 = tpu.concatenate %135, %131, %136 in 0 : vector<3x16x8xbf16>, vector<16x16x8xbf16>, vector<3x16x8xbf16> -> vector<22x16x8xbf16>
    %138 = vector.extract_strided_slice %137 {offsets = [0, 0, 0], sizes = [16, 16, 8], strides = [1, 1, 1]} : vector<22x16x8xbf16> to vector<16x16x8xbf16>
    %139 = vector.extract_strided_slice %137 {offsets = [1, 0, 0], sizes = [16, 16, 8], strides = [1, 1, 1]} : vector<22x16x8xbf16> to vector<16x16x8xbf16>
    %140 = vector.extract_strided_slice %137 {offsets = [2, 0, 0], sizes = [16, 16, 8], strides = [1, 1, 1]} : vector<22x16x8xbf16> to vector<16x16x8xbf16>
    %141 = vector.extract_strided_slice %137 {offsets = [3, 0, 0], sizes = [16, 16, 8], strides = [1, 1, 1]} : vector<22x16x8xbf16> to vector<16x16x8xbf16>
    %142 = vector.extract_strided_slice %137 {offsets = [4, 0, 0], sizes = [16, 16, 8], strides = [1, 1, 1]} : vector<22x16x8xbf16> to vector<16x16x8xbf16>
    %143 = vector.extract_strided_slice %137 {offsets = [5, 0, 0], sizes = [16, 16, 8], strides = [1, 1, 1]} : vector<22x16x8xbf16> to vector<16x16x8xbf16>
    %144 = vector.extract_strided_slice %137 {offsets = [6, 0, 0], sizes = [16, 16, 8], strides = [1, 1, 1]} : vector<22x16x8xbf16> to vector<16x16x8xbf16>
    %145 = tpu.concatenate %138, %139, %140, %141, %142, %143, %144 in 2 : vector<16x16x8xbf16>, vector<16x16x8xbf16>, vector<16x16x8xbf16>, vector<16x16x8xbf16>, vector<16x16x8xbf16>, vector<16x16x8xbf16>, vector<16x16x8xbf16> -> vector<16x16x56xbf16>
    %146 = vector.shape_cast %145 : vector<16x16x56xbf16> to vector<256x56xbf16>
    %cst_63 = arith.constant dense<0.000000e+00> : vector<256x8xf32>
    %147 = tpu.matmul %146, %132, %cst_63 {dimension_numbers = #tpu.dot_dimension_numbers<[1], [0], [0], [1], [0, 0, 1, 1], [], []>} : vector<256x56xbf16>, vector<56x8xbf16>, vector<256x8xf32> -> vector<256x8xf32>
    %148 = vector.broadcast %133 : vector<1x8xf32> to vector<256x8xf32>
    %149 = arith.mulf %147, %148 : vector<256x8xf32>
    %150 = vector.broadcast %134 : vector<1x8xf32> to vector<256x8xf32>
    %151 = arith.addf %149, %150 : vector<256x8xf32>
    %cst_64 = arith.constant 0.000000e+00 : f32
    %152 = vector.broadcast %cst_64 : f32 to vector<256x8xf32>
    %153 = arith.cmpf oge, %151, %152 : vector<256x8xf32>
    %cst_65 = arith.constant 2.000000e-01 : f32
    %154 = vector.broadcast %cst_65 : f32 to vector<256x8xf32>
    %155 = arith.mulf %154, %151 : vector<256x8xf32>
    %156 = arith.select %153, %151, %155 : vector<256x8xi1>, vector<256x8xf32>
    %157 = arith.truncf %156 : vector<256x8xf32> to vector<256x8xbf16>
    %158 = vector.shape_cast %157 : vector<256x8xbf16> to vector<16x16x8xbf16>
    %c0_66 = arith.constant 0 : index
    %c0_67 = arith.constant 0 : index
    %159 = vector.load %arg20[%c0_66, %c0_67] : memref<56x192xbf16, #tpu.memory_space<vmem>>, vector<56x192xbf16>
    %c0_68 = arith.constant 0 : index
    %c0_69 = arith.constant 0 : index
    %160 = vector.load %arg21[%c0_68, %c0_69] : memref<1x192xf32, #tpu.memory_space<vmem>>, vector<1x192xf32>
    %c0_70 = arith.constant 0 : index
    %c0_71 = arith.constant 0 : index
    %161 = vector.load %arg22[%c0_70, %c0_71] : memref<1x192xf32, #tpu.memory_space<vmem>>, vector<1x192xf32>
    %cst_72 = arith.constant 0.000000e+00 : bf16
    %162 = vector.broadcast %cst_72 : bf16 to vector<16x3x8xbf16>
    %cst_73 = arith.constant 0.000000e+00 : bf16
    %163 = vector.broadcast %cst_73 : bf16 to vector<16x3x8xbf16>
    %164 = tpu.concatenate %162, %158, %163 in 1 : vector<16x3x8xbf16>, vector<16x16x8xbf16>, vector<16x3x8xbf16> -> vector<16x22x8xbf16>
    %165 = vector.extract_strided_slice %164 {offsets = [0, 0, 0], sizes = [16, 16, 8], strides = [1, 1, 1]} : vector<16x22x8xbf16> to vector<16x16x8xbf16>
    %166 = vector.extract_strided_slice %164 {offsets = [0, 1, 0], sizes = [16, 16, 8], strides = [1, 1, 1]} : vector<16x22x8xbf16> to vector<16x16x8xbf16>
    %167 = vector.extract_strided_slice %164 {offsets = [0, 2, 0], sizes = [16, 16, 8], strides = [1, 1, 1]} : vector<16x22x8xbf16> to vector<16x16x8xbf16>
    %168 = vector.extract_strided_slice %164 {offsets = [0, 3, 0], sizes = [16, 16, 8], strides = [1, 1, 1]} : vector<16x22x8xbf16> to vector<16x16x8xbf16>
    %169 = vector.extract_strided_slice %164 {offsets = [0, 4, 0], sizes = [16, 16, 8], strides = [1, 1, 1]} : vector<16x22x8xbf16> to vector<16x16x8xbf16>
    %170 = vector.extract_strided_slice %164 {offsets = [0, 5, 0], sizes = [16, 16, 8], strides = [1, 1, 1]} : vector<16x22x8xbf16> to vector<16x16x8xbf16>
    %171 = vector.extract_strided_slice %164 {offsets = [0, 6, 0], sizes = [16, 16, 8], strides = [1, 1, 1]} : vector<16x22x8xbf16> to vector<16x16x8xbf16>
    %172 = tpu.concatenate %165, %166, %167, %168, %169, %170, %171 in 2 : vector<16x16x8xbf16>, vector<16x16x8xbf16>, vector<16x16x8xbf16>, vector<16x16x8xbf16>, vector<16x16x8xbf16>, vector<16x16x8xbf16>, vector<16x16x8xbf16> -> vector<16x16x56xbf16>
    %173 = vector.shape_cast %172 : vector<16x16x56xbf16> to vector<256x56xbf16>
    %cst_74 = arith.constant dense<0.000000e+00> : vector<256x192xf32>
    %174 = tpu.matmul %173, %159, %cst_74 {dimension_numbers = #tpu.dot_dimension_numbers<[1], [0], [0], [1], [0, 0, 1, 1], [], []>} : vector<256x56xbf16>, vector<56x192xbf16>, vector<256x192xf32> -> vector<256x192xf32>
    %175 = vector.broadcast %160 : vector<1x192xf32> to vector<256x192xf32>
    %176 = arith.mulf %174, %175 : vector<256x192xf32>
    %177 = vector.broadcast %161 : vector<1x192xf32> to vector<256x192xf32>
    %178 = arith.addf %176, %177 : vector<256x192xf32>
    %cst_75 = arith.constant 0.000000e+00 : f32
    %179 = vector.broadcast %cst_75 : f32 to vector<256x192xf32>
    %180 = arith.cmpf oge, %178, %179 : vector<256x192xf32>
    %cst_76 = arith.constant 2.000000e-01 : f32
    %181 = vector.broadcast %cst_76 : f32 to vector<256x192xf32>
    %182 = arith.mulf %181, %178 : vector<256x192xf32>
    %183 = arith.select %180, %178, %182 : vector<256x192xi1>, vector<256x192xf32>
    %184 = vector.shape_cast %183 : vector<256x192xf32> to vector<16x16x192xf32>
    %c0_77 = arith.constant 0 : index
    %c0_78 = arith.constant 0 : index
    %185 = vector.load %arg23[%c0_77, %c0_78] : memref<4x192xbf16, #tpu.memory_space<vmem>>, vector<4x192xbf16>
    %c0_79 = arith.constant 0 : index
    %c0_80 = arith.constant 0 : index
    %186 = vector.load %arg24[%c0_79, %c0_80] : memref<1x192xf32, #tpu.memory_space<vmem>>, vector<1x192xf32>
    %c0_81 = arith.constant 0 : index
    %c0_82 = arith.constant 0 : index
    %187 = vector.load %arg25[%c0_81, %c0_82] : memref<1x192xf32, #tpu.memory_space<vmem>>, vector<1x192xf32>
    %cst_83 = arith.constant 0.000000e+00 : f32
    %188 = vector.broadcast %cst_83 : f32 to vector<1x16x4xf32>
    %cst_84 = arith.constant 0.000000e+00 : f32
    %189 = vector.broadcast %cst_84 : f32 to vector<1x16x4xf32>
    %190 = tpu.concatenate %188, %1, %189 in 0 : vector<1x16x4xf32>, vector<16x16x4xf32>, vector<1x16x4xf32> -> vector<18x16x4xf32>
    %cst_85 = arith.constant 0.000000e+00 : f32
    %191 = vector.broadcast %cst_85 : f32 to vector<18x1x4xf32>
    %cst_86 = arith.constant 0.000000e+00 : f32
    %192 = vector.broadcast %cst_86 : f32 to vector<18x1x4xf32>
    %193 = tpu.concatenate %191, %190, %192 in 1 : vector<18x1x4xf32>, vector<18x16x4xf32>, vector<18x1x4xf32> -> vector<18x18x4xf32>
    %194 = vector.extract_strided_slice %193 {offsets = [0, 0, 0], sizes = [18, 16, 4], strides = [1, 1, 1]} : vector<18x18x4xf32> to vector<18x16x4xf32>
    %195 = vector.extract_strided_slice %193 {offsets = [0, 1, 0], sizes = [18, 16, 4], strides = [1, 1, 1]} : vector<18x18x4xf32> to vector<18x16x4xf32>
    %196 = arith.addf %194, %195 : vector<18x16x4xf32>
    %197 = vector.extract_strided_slice %193 {offsets = [0, 2, 0], sizes = [18, 16, 4], strides = [1, 1, 1]} : vector<18x18x4xf32> to vector<18x16x4xf32>
    %198 = arith.addf %196, %197 : vector<18x16x4xf32>
    %199 = vector.extract_strided_slice %198 {offsets = [0, 0, 0], sizes = [16, 16, 4], strides = [1, 1, 1]} : vector<18x16x4xf32> to vector<16x16x4xf32>
    %200 = vector.extract_strided_slice %198 {offsets = [1, 0, 0], sizes = [16, 16, 4], strides = [1, 1, 1]} : vector<18x16x4xf32> to vector<16x16x4xf32>
    %201 = arith.addf %199, %200 : vector<16x16x4xf32>
    %202 = vector.extract_strided_slice %198 {offsets = [2, 0, 0], sizes = [16, 16, 4], strides = [1, 1, 1]} : vector<18x16x4xf32> to vector<16x16x4xf32>
    %203 = arith.addf %201, %202 : vector<16x16x4xf32>
    %cst_87 = arith.constant 0.111111112 : f32
    %204 = vector.broadcast %cst_87 : f32 to vector<1x192xf32>
    %205 = arith.mulf %186, %204 : vector<1x192xf32>
    %206 = vector.shape_cast %203 : vector<16x16x4xf32> to vector<256x4xf32>
    %207 = arith.truncf %206 : vector<256x4xf32> to vector<256x4xbf16>
    %cst_88 = arith.constant dense<0.000000e+00> : vector<256x192xf32>
    %208 = tpu.matmul %207, %185, %cst_88 {dimension_numbers = #tpu.dot_dimension_numbers<[1], [0], [0], [1], [0, 0, 1, 1], [], []>} : vector<256x4xbf16>, vector<4x192xbf16>, vector<256x192xf32> -> vector<256x192xf32>
    %209 = vector.broadcast %205 : vector<1x192xf32> to vector<256x192xf32>
    %210 = arith.mulf %208, %209 : vector<256x192xf32>
    %211 = vector.broadcast %187 : vector<1x192xf32> to vector<256x192xf32>
    %212 = arith.addf %210, %211 : vector<256x192xf32>
    %cst_89 = arith.constant 0.000000e+00 : f32
    %213 = vector.broadcast %cst_89 : f32 to vector<256x192xf32>
    %214 = arith.cmpf oge, %212, %213 : vector<256x192xf32>
    %cst_90 = arith.constant 2.000000e-01 : f32
    %215 = vector.broadcast %cst_90 : f32 to vector<256x192xf32>
    %216 = arith.mulf %215, %212 : vector<256x192xf32>
    %217 = arith.select %214, %212, %216 : vector<256x192xi1>, vector<256x192xf32>
    %218 = vector.shape_cast %217 : vector<256x192xf32> to vector<16x16x192xf32>
    %219 = tpu.concatenate %18, %77, %184, %218 in 2 : vector<16x16x192xf32>, vector<16x16x192xf32>, vector<16x16x192xf32>, vector<16x16x192xf32> -> vector<16x16x768xf32>
    %c0_91 = arith.constant 0 : index
    %c0_92 = arith.constant 0 : index
    %c0_93 = arith.constant 0 : index
    %c0_94 = arith.constant 0 : index
    %220 = vector.load %arg26[%c0_91, %c0_92, %c0_93, %c0_94] : memref<1x16x16x768xf32, #tpu.memory_space<vmem>>, vector<1x16x16x768xf32>
    %221 = vector.shape_cast %220 : vector<1x16x16x768xf32> to vector<16x16x768xf32>
    %222 = vector.shape_cast %219 : vector<16x16x768xf32> to vector<1x16x16x768xf32>
    tpu.vector_store %arg26[%c0_91, %c0_92, %c0_93, %c0_94], %222 {strides = array<i32>} : memref<1x16x16x768xf32, #tpu.memory_space<vmem>>, vector<1x16x16x768xf32>,
    return
  }
  func.func @transform_0(%arg0: i32) -> (i32, i32, i32, i32) {
    %c0_i32 = arith.constant 0 : i32
    %c0_i32_0 = arith.constant 0 : i32
    %c0_i32_1 = arith.constant 0 : i32
    %c0_i32_2 = arith.constant 0 : i32
    return %arg0, %c0_i32, %c0_i32_0, %c0_i32_1 : i32, i32, i32, i32
  }
  func.func @transform_1(%arg0: i32) -> (i32, i32) {
    %c0_i32 = arith.constant 0 : i32
    %c0_i32_0 = arith.constant 0 : i32
    %c0_i32_1 = arith.constant 0 : i32
    return %c0_i32, %c0_i32_0 : i32, i32
  }
  func.func @transform_2(%arg0: i32) -> (i32, i32) {
    %c0_i32 = arith.constant 0 : i32
    %c0_i32_0 = arith.constant 0 : i32
    %c0_i32_1 = arith.constant 0 : i32
    return %c0_i32, %c0_i32_0 : i32, i32
  }
  func.func @transform_3(%arg0: i32) -> (i32, i32) {
    %c0_i32 = arith.constant 0 : i32
    %c0_i32_0 = arith.constant 0 : i32
    %c0_i32_1 = arith.constant 0 : i32
    return %c0_i32, %c0_i32_0 : i32, i32
  }
  func.func @transform_4(%arg0: i32) -> (i32, i32) {
    %c0_i32 = arith.constant 0 : i32
    %c0_i32_0 = arith.constant 0 : i32
    %c0_i32_1 = arith.constant 0 : i32
    return %c0_i32, %c0_i32_0 : i32, i32
  }
  func.func @transform_5(%arg0: i32) -> (i32, i32) {
    %c0_i32 = arith.constant 0 : i32
    %c0_i32_0 = arith.constant 0 : i32
    %c0_i32_1 = arith.constant 0 : i32
    return %c0_i32, %c0_i32_0 : i32, i32
  }
  func.func @transform_6(%arg0: i32) -> (i32, i32) {
    %c0_i32 = arith.constant 0 : i32
    %c0_i32_0 = arith.constant 0 : i32
    %c0_i32_1 = arith.constant 0 : i32
    return %c0_i32, %c0_i32_0 : i32, i32
  }
  func.func @transform_7(%arg0: i32) -> (i32, i32) {
    %c0_i32 = arith.constant 0 : i32
    %c0_i32_0 = arith.constant 0 : i32
    %c0_i32_1 = arith.constant 0 : i32
    return %c0_i32, %c0_i32_0 : i32, i32
  }
  func.func @transform_8(%arg0: i32) -> (i32, i32) {
    %c0_i32 = arith.constant 0 : i32
    %c0_i32_0 = arith.constant 0 : i32
    %c0_i32_1 = arith.constant 0 : i32
    return %c0_i32, %c0_i32_0 : i32, i32
  }
  func.func @transform_9(%arg0: i32) -> (i32, i32) {
    %c0_i32 = arith.constant 0 : i32
    %c0_i32_0 = arith.constant 0 : i32
    %c0_i32_1 = arith.constant 0 : i32
    return %c0_i32, %c0_i32_0 : i32, i32
  }
  func.func @transform_10(%arg0: i32) -> (i32, i32) {
    %c0_i32 = arith.constant 0 : i32
    %c0_i32_0 = arith.constant 0 : i32
    %c0_i32_1 = arith.constant 0 : i32
    return %c0_i32, %c0_i32_0 : i32, i32
  }
  func.func @transform_11(%arg0: i32) -> (i32, i32) {
    %c0_i32 = arith.constant 0 : i32
    %c0_i32_0 = arith.constant 0 : i32
    %c0_i32_1 = arith.constant 0 : i32
    return %c0_i32, %c0_i32_0 : i32, i32
  }
  func.func @transform_12(%arg0: i32) -> (i32, i32) {
    %c0_i32 = arith.constant 0 : i32
    %c0_i32_0 = arith.constant 0 : i32
    %c0_i32_1 = arith.constant 0 : i32
    return %c0_i32, %c0_i32_0 : i32, i32
  }
  func.func @transform_13(%arg0: i32) -> (i32, i32) {
    %c0_i32 = arith.constant 0 : i32
    %c0_i32_0 = arith.constant 0 : i32
    %c0_i32_1 = arith.constant 0 : i32
    return %c0_i32, %c0_i32_0 : i32, i32
  }
  func.func @transform_14(%arg0: i32) -> (i32, i32) {
    %c0_i32 = arith.constant 0 : i32
    %c0_i32_0 = arith.constant 0 : i32
    %c0_i32_1 = arith.constant 0 : i32
    return %c0_i32, %c0_i32_0 : i32, i32
  }
  func.func @transform_15(%arg0: i32) -> (i32, i32) {
    %c0_i32 = arith.constant 0 : i32
    %c0_i32_0 = arith.constant 0 : i32
    %c0_i32_1 = arith.constant 0 : i32
    return %c0_i32, %c0_i32_0 : i32, i32
  }
  func.func @transform_16(%arg0: i32) -> (i32, i32) {
    %c0_i32 = arith.constant 0 : i32
    %c0_i32_0 = arith.constant 0 : i32
    %c0_i32_1 = arith.constant 0 : i32
    return %c0_i32, %c0_i32_0 : i32, i32
  }
  func.func @transform_17(%arg0: i32) -> (i32, i32) {
    %c0_i32 = arith.constant 0 : i32
    %c0_i32_0 = arith.constant 0 : i32
    %c0_i32_1 = arith.constant 0 : i32
    return %c0_i32, %c0_i32_0 : i32, i32
  }
  func.func @transform_18(%arg0: i32) -> (i32, i32) {
    %c0_i32 = arith.constant 0 : i32
    %c0_i32_0 = arith.constant 0 : i32
    %c0_i32_1 = arith.constant 0 : i32
    return %c0_i32, %c0_i32_0 : i32, i32
  }
  func.func @transform_19(%arg0: i32) -> (i32, i32) {
    %c0_i32 = arith.constant 0 : i32
    %c0_i32_0 = arith.constant 0 : i32
    %c0_i32_1 = arith.constant 0 : i32
    return %c0_i32, %c0_i32_0 : i32, i32
  }
  func.func @transform_20(%arg0: i32) -> (i32, i32) {
    %c0_i32 = arith.constant 0 : i32
    %c0_i32_0 = arith.constant 0 : i32
    %c0_i32_1 = arith.constant 0 : i32
    return %c0_i32, %c0_i32_0 : i32, i32
  }
  func.func @transform_21(%arg0: i32) -> (i32, i32) {
    %c0_i32 = arith.constant 0 : i32
    %c0_i32_0 = arith.constant 0 : i32
    %c0_i32_1 = arith.constant 0 : i32
    return %c0_i32, %c0_i32_0 : i32, i32
  }
  func.func @transform_22(%arg0: i32) -> (i32, i32) {
    %c0_i32 = arith.constant 0 : i32
    %c0_i32_0 = arith.constant 0 : i32
    %c0_i32_1 = arith.constant 0 : i32
    return %c0_i32, %c0_i32_0 : i32, i32
  }
  func.func @transform_23(%arg0: i32) -> (i32, i32) {
    %c0_i32 = arith.constant 0 : i32
    %c0_i32_0 = arith.constant 0 : i32
    %c0_i32_1 = arith.constant 0 : i32
    return %c0_i32, %c0_i32_0 : i32, i32
  }
  func.func @transform_24(%arg0: i32) -> (i32, i32) {
    %c0_i32 = arith.constant 0 : i32
    %c0_i32_0 = arith.constant 0 : i32
    %c0_i32_1 = arith.constant 0 : i32
    return %c0_i32, %c0_i32_0 : i32, i32
  }
  func.func @transform_25(%arg0: i32) -> (i32, i32, i32, i32) {
    %c0_i32 = arith.constant 0 : i32
    %c0_i32_0 = arith.constant 0 : i32
    %c0_i32_1 = arith.constant 0 : i32
    %c0_i32_2 = arith.constant 0 : i32
    return %arg0, %c0_i32, %c0_i32_0, %c0_i32_1 : i32, i32, i32, i32
  }
}

</mosaic_0001>

<llo_original>
// kernel: inception_c.1
$region0: #{inception_c.1}
  #allocation0 [shape = 'u32[]', space=smem, size = 0x4, offset = 0x4, fixed_abs, tag = 'smem constant byte address 0x4 - core index']
  #allocation1 [shape = 'u32[144,128]{1,0:T(1,128)}', space=vmem, size = 0x12000, scoped, tag = 'internal scratch']
  %s0 = inlined_call_operand.vmem [shape: f32[2,16,16,4], index: 0, kind: input, shape index: {}]
  %s1 = inlined_call_operand.vmem [shape: bf16[4,208], index: 1, kind: input, shape index: {}]
  %s2 = inlined_call_operand.vmem [shape: f32[1,208], index: 2, kind: input, shape index: {}]
  %s3 = inlined_call_operand.vmem [shape: f32[1,208], index: 3, kind: input, shape index: {}]
  %s4 = inlined_call_operand.vmem [shape: bf16[56,8], index: 4, kind: input, shape index: {}]
  %s5 = inlined_call_operand.hbm [shape: f32[1,8], index: 5, kind: input, shape index: {}]
  %s6 = inlined_call_operand.hbm [shape: f32[1,8], index: 6, kind: input, shape index: {}]
  %s7 = inlined_call_operand.hbm [shape: bf16[56,192], index: 7, kind: input, shape index: {}]
  %s8 = inlined_call_operand.hbm [shape: f32[1,192], index: 8, kind: input, shape index: {}]
  %s9 = inlined_call_operand.hbm [shape: f32[1,192], index: 9, kind: input, shape index: {}]
  %s10 = inlined_call_operand.vmem [shape: bf16[56,8], index: 10, kind: input, shape index: {}]
  %s11 = inlined_call_operand.hbm [shape: f32[1,8], index: 11, kind: input, shape index: {}]
  %s12 = inlined_call_operand.hbm [shape: f32[1,8], index: 12, kind: input, shape index: {}]
  %s13 = inlined_call_operand.vmem [shape: bf16[56,8], index: 13, kind: input, shape index: {}]
  %s14 = inlined_call_operand.hbm [shape: f32[1,8], index: 14, kind: input, shape index: {}]
  %s15 = inlined_call_operand.hbm [shape: f32[1,8], index: 15, kind: input, shape index: {}]
  %s16 = inlined_call_operand.vmem [shape: bf16[56,8], index: 16, kind: input, shape index: {}]
  %s17 = inlined_call_operand.hbm [shape: f32[1,8], index: 17, kind: input, shape index: {}]
  %s18 = inlined_call_operand.hbm [shape: f32[1,8], index: 18, kind: input, shape index: {}]
  %s19 = inlined_call_operand.hbm [shape: bf16[56,192], index: 19, kind: input, shape index: {}]
  %s20 = inlined_call_operand.hbm [shape: f32[1,192], index: 20, kind: input, shape index: {}]
  %s21 = inlined_call_operand.hbm [shape: f32[1,192], index: 21, kind: input, shape index: {}]
  %s22 = inlined_call_operand.hbm [shape: bf16[4,192], index: 22, kind: input, shape index: {}]
  %s23 = inlined_call_operand.hbm [shape: f32[1,192], index: 23, kind: input, shape index: {}]
  %s24 = inlined_call_operand.hbm [shape: f32[1,192], index: 24, kind: input, shape index: {}]
  %s25 = inlined_call_operand.hbm [shape: f32[2,16,16,768], index: 25, kind: output, shape index: {}]
  %s26 = sld [smem:[#allocation0]]
  $region201: #{inception_c.1} parent=0
    _
  %s28 = ssub.s32 1, %s26
  %s29 = scalar_select 0, %s28, %s26
  $region1: #{inception_c.1} parent=0
    #allocation2 [shape = 'u8[512]{0}', space=vmem, size = 0x400, scoped, tag = 'input window, operand 5, single buffered']
    #allocation3 [shape = 's32[2]{0}', space=sflag, size = 0x8, scoped, tag = 'scoped memory for inception_c.1']
    #allocation4 [shape = 's32[2]{0}', space=sflag, size = 0x8, scoped, tag = 'scoped memory for inception_c.1']
    #allocation5 [shape = 'u8[512]{0}', space=vmem, size = 0x400, scoped, tag = 'input window, operand 6, single buffered']
    #allocation6 [shape = 's32[1]{0}', space=sflag, size = 0x4, scoped, tag = 'scoped memory for inception_c.1']
    #allocation7 [shape = 'u8[28672]{0}', space=vmem, size = 0x7000, scoped, tag = 'input window, operand 7, single buffered']
    #allocation8 [shape = 'u8[1024]{0}', space=vmem, size = 0x400, scoped, tag = 'input window, operand 8, single buffered']
    #allocation9 [shape = 's32[1]{0}', space=sflag, size = 0x4, scoped, tag = 'scoped memory for inception_c.1']
    #allocation10 [shape = 'u8[1024]{0}', space=vmem, size = 0x400, scoped, tag = 'input window, operand 9, single buffered']
    #allocation11 [shape = 'u8[512]{0}', space=vmem, size = 0x400, scoped, tag = 'input window, operand 11, single buffered']
    #allocation12 [shape = 's32[1]{0}', space=sflag, size = 0x4, scoped, tag = 'scoped memory for inception_c.1']
    #allocation13 [shape = 'u8[512]{0}', space=vmem, size = 0x400, scoped, tag = 'input window, operand 12, single buffered']
    #allocation14 [shape = 'u8[512]{0}', space=vmem, size = 0x400, scoped, tag = 'input window, operand 14, single buffered']
    #allocation15 [shape = 's32[1]{0}', space=sflag, size = 0x4, scoped, tag = 'scoped memory for inception_c.1']
    #allocation16 [shape = 'u8[512]{0}', space=vmem, size = 0x400, scoped, tag = 'input window, operand 15, single buffered']
    #allocation17 [shape = 'u8[512]{0}', space=vmem, size = 0x400, scoped, tag = 'input window, operand 17, single buffered']
    #allocation18 [shape = 's32[1]{0}', space=sflag, size = 0x4, scoped, tag = 'scoped memory for inception_c.1']
    #allocation19 [shape = 'u8[512]{0}', space=vmem, size = 0x400, scoped, tag = 'input window, operand 18, single buffered']
    #allocation20 [shape = 'u8[28672]{0}', space=vmem, size = 0x7000, scoped, tag = 'input window, operand 19, single buffered']
    #allocation21 [shape = 's32[1]{0}', space=sflag, size = 0x4, scoped, tag = 'scoped memory for inception_c.1']
    #allocation22 [shape = 'u8[1024]{0}', space=vmem, size = 0x400, scoped, tag = 'input window, operand 20, single buffered']
    #allocation23 [shape = 'u8[1024]{0}', space=vmem, size = 0x400, scoped, tag = 'input window, operand 21, single buffered']
    #allocation24 [shape = 's32[1]{0}', space=sflag, size = 0x4, scoped, tag = 'scoped memory for inception_c.1']
    #allocation25 [shape = 'u8[2048]{0}', space=vmem, size = 0x800, scoped, tag = 'input window, operand 22, single buffered']
    #allocation26 [shape = 'u8[1024]{0}', space=vmem, size = 0x400, scoped, tag = 'input window, operand 23, single buffered']
    #allocation27 [shape = 's32[1]{0}', space=sflag, size = 0x4, scoped, tag = 'scoped memory for inception_c.1']
    #allocation28 [shape = 'u8[1024]{0}', space=vmem, size = 0x400, scoped, tag = 'input window, operand 24, single buffered']
    #allocation29 [shape = 'u8[1572864]{0}', space=vmem, size = 0x180000, scoped, tag = 'output window, operand 0']
    %30 = vsyncpa [#allocation3], 0
    %31 = vsyncpa [#allocation6], 0
    %32 = vsyncpa [#allocation9], 0
    %33 = vsyncpa [#allocation12], 0
    %34 = vsyncpa [#allocation15], 0
    %35 = vsyncpa [#allocation18], 0
    %36 = vsyncpa [#allocation21], 0
    %37 = vsyncpa [#allocation24], 0
    %38 = vsyncpa [#allocation27], 0
    %39 = vsyncpa [#allocation4], 0
    %s40 = scalar_lea.sflag [#allocation4], 1
    %41 = vsyncpa %s40, 0
    loop: start=0, step=1, limit=4
    $region2: #{inception_c.1} parent=1 // loop_pre_header
      _
    $region3: #{inception_c.1} parent=1 // loop_header
      %s43 = sphi 0, %s47
      %p44 = scmp.ge.s32.totalorder %s43, 4
      %s53 = sphi 0, %s55
      %s56 = sphi 0, %s53
      %s57 = sphi 0, %s56
      %s73 = sphi 0, %s57
      %s77 = sphi 0, %s77
      %s79 = sphi 0, %s77
      %s80 = sphi 0, %s79
      %s94 = sphi 0, %s80
      %s98 = sphi 0, %s98
      %s100 = sphi 0, %s98
      %s101 = sphi 0, %s100
      %s115 = sphi 0, %s101
      %s119 = sphi 0, %s119
      %s121 = sphi 0, %s119
      %s122 = sphi 0, %s121
      %s136 = sphi 0, %s122
      %s140 = sphi 0, %s140
      %s142 = sphi 0, %s140
      %s143 = sphi 0, %s142
      %s157 = sphi 0, %s143
      %s161 = sphi 0, %s161
      %s163 = sphi 0, %s161
      %s164 = sphi 0, %s163
      %s178 = sphi 0, %s164
      %s182 = sphi 0, %s182
      %s184 = sphi 0, %s182
      %s185 = sphi 0, %s184
      %s199 = sphi 0, %s185
      %s203 = sphi 0, %s203
      %s205 = sphi 0, %s203
      %s206 = sphi 0, %s205
      %s220 = sphi 0, %s206
      %s224 = sphi 0, %s224
      %s226 = sphi 0, %s224
      %s227 = sphi 0, %s226
      %s241 = sphi 0, %s227
      %s245 = sphi 0, %s245
      %s247 = sphi 0, %s245
      %s248 = sphi 0, %s247
      %s262 = sphi 0, %s248
      %s266 = sphi 0, %s266
      %s268 = sphi 0, %s266
      %s269 = sphi 0, %s268
      %s283 = sphi 0, %s269
      %s287 = sphi 0, %s287
      %s289 = sphi 0, %s287
      %s290 = sphi 0, %s289
      %s304 = sphi 0, %s290
      %s308 = sphi 0, %s308
      %s310 = sphi 0, %s308
      %s311 = sphi 0, %s310
      %s325 = sphi 0, %s311
      %s329 = sphi 0, %s329
      %s331 = sphi 0, %s329
      %s332 = sphi 0, %s331
      %s346 = sphi 0, %s332
      %s350 = sphi 0, %s350
      %s352 = sphi 0, %s350
      %s353 = sphi 0, %s352
      %s367 = sphi 0, %s353
      %s371 = sphi 0, %s371
      %s373 = sphi 0, %s371
      %s374 = sphi 0, %s373
      %s388 = sphi 0, %s374
      %s392 = sphi 0, %s392
      %s394 = sphi 0, %s392
      %s395 = sphi 0, %s394
      %s409 = sphi 0, %s395
      %s413 = sphi 0, %s413
      %s415 = sphi 0, %s413
      %s416 = sphi 0, %s415
      %s430 = sphi 0, %s416
      %s434 = sphi 0, %s434
      %s436 = sphi 0, %s434
      %s437 = sphi 0, %s436
      %s451 = sphi 0, %s437
      %s455 = sphi 0, %s455
      %s457 = sphi 0, %s455
      %s458 = sphi 0, %s457
      %s472 = sphi 0, %s458
      %s476 = sphi 0, %s476
      %s478 = sphi 0, %s476
      %s479 = sphi 0, %s478
      %s493 = sphi 0, %s479
      %s497 = sphi 0, %s497
      %s499 = sphi 0, %s497
      %s500 = sphi 0, %s499
      %s514 = sphi 0, %s500
      %s518 = sphi 0, %s518
      %s520 = sphi 0, %s518
      %s521 = sphi 0, %s520
      %s535 = sphi 0, %s521
      %s539 = sphi 0, %s539
      %s541 = sphi 0, %s539
      %s542 = sphi 0, %s541
      %s556 = sphi 0, %s542
      %s560 = sphi 0, %s560
      %s562 = sphi 0, %s560
      %s563 = sphi 0, %s562
      %s577 = sphi 0, %s563
      %s583 = sphi 0, %s585
      %s586 = sphi 0, %s583
      %s587 = sphi 0, %s586
      %s603 = sphi 0, %s587
    $region4: #{inception_c.1} parent=1 // loop_header_branch
      %46 = sbr.rel (%p44) target = $region8
    $region5: #{inception_c.1} parent=1 // loop_body
      %s48 = ssub.s32 %s43, 1
      %s49 = ssub.s32 %s43, 2
      %s50 = sadd.s32 %s43, 1
      %s51 = ssub.s32 %s43, %s50
      %p52 = scmp.eq.s32.totalorder %s51, 0
      %s54 = sadd.s32 %s53, 1
      %s55 = scalar_select %p52, %s53, %s54
      %p58 = pneg %p52
      %p59 = scmp.eq.s32.totalorder %s43, 1
      %p60 = por %p58, %p59
      %p61 = scmp.ne.s32.totalorder %s53, %s56
      %p62 = scmp.eq.s32.totalorder %s43, 0
      %p63 = por %p61, %p62
      %p64 = scmp.ne.s32.totalorder %s53, %s56
      %p65 = scmp.eq.s32.totalorder %s48, 1
      %p66 = por %p64, %p65
      %p67 = scmp.ne.s32.totalorder %s56, %s57
      %p68 = scmp.eq.s32.totalorder %s48, 0
      %p69 = por %p67, %p68
      %p70 = scmp.ne.s32.totalorder %s56, %s57
      %p71 = scmp.eq.s32.totalorder %s49, 1
      %p72 = por %p70, %p71
      %p74 = scmp.ne.s32.totalorder %s57, %s73
      %p75 = scmp.eq.s32.totalorder %s49, 0
      %p76 = por %p74, %p75
      %s78 = sadd.s32 %s77, 1
      %p81 = scmp.eq.s32.totalorder %s43, 1
      %p82 = scmp.ne.s32.totalorder %s77, %s79
      %p83 = scmp.eq.s32.totalorder %s43, 0
      %p84 = por %p82, %p83
      %p85 = scmp.ne.s32.totalorder %s77, %s79
      %p86 = scmp.eq.s32.totalorder %s48, 1
      %p87 = por %p85, %p86
      %p88 = scmp.ne.s32.totalorder %s79, %s80
      %p89 = scmp.eq.s32.totalorder %s48, 0
      %p90 = por %p88, %p89
      %p91 = scmp.ne.s32.totalorder %s79, %s80
      %p92 = scmp.eq.s32.totalorder %s49, 1
      %p93 = por %p91, %p92
      %p95 = scmp.ne.s32.totalorder %s80, %s94
      %p96 = scmp.eq.s32.totalorder %s49, 0
      %p97 = por %p95, %p96
      %s99 = sadd.s32 %s98, 1
      %p102 = scmp.eq.s32.totalorder %s43, 1
      %p103 = scmp.ne.s32.totalorder %s98, %s100
      %p104 = scmp.eq.s32.totalorder %s43, 0
      %p105 = por %p103, %p104
      %p106 = scmp.ne.s32.totalorder %s98, %s100
      %p107 = scmp.eq.s32.totalorder %s48, 1
      %p108 = por %p106, %p107
      %p109 = scmp.ne.s32.totalorder %s100, %s101
      %p110 = scmp.eq.s32.totalorder %s48, 0
      %p111 = por %p109, %p110
      %p112 = scmp.ne.s32.totalorder %s100, %s101
      %p113 = scmp.eq.s32.totalorder %s49, 1
      %p114 = por %p112, %p113
      %p116 = scmp.ne.s32.totalorder %s101, %s115
      %p117 = scmp.eq.s32.totalorder %s49, 0
      %p118 = por %p116, %p117
      %s120 = sadd.s32 %s119, 1
      %p123 = scmp.eq.s32.totalorder %s43, 1
      %p124 = scmp.ne.s32.totalorder %s119, %s121
      %p125 = scmp.eq.s32.totalorder %s43, 0
      %p126 = por %p124, %p125
      %p127 = scmp.ne.s32.totalorder %s119, %s121
      %p128 = scmp.eq.s32.totalorder %s48, 1
      %p129 = por %p127, %p128
      %p130 = scmp.ne.s32.totalorder %s121, %s122
      %p131 = scmp.eq.s32.totalorder %s48, 0
      %p132 = por %p130, %p131
      %p133 = scmp.ne.s32.totalorder %s121, %s122
      %p134 = scmp.eq.s32.totalorder %s49, 1
      %p135 = por %p133, %p134
      %p137 = scmp.ne.s32.totalorder %s122, %s136
      %p138 = scmp.eq.s32.totalorder %s49, 0
      %p139 = por %p137, %p138
      %s141 = sadd.s32 %s140, 1
      %p144 = scmp.eq.s32.totalorder %s43, 1
      %p145 = scmp.ne.s32.totalorder %s140, %s142
      %p146 = scmp.eq.s32.totalorder %s43, 0
      %p147 = por %p145, %p146
      %p148 = scmp.ne.s32.totalorder %s140, %s142
      %p149 = scmp.eq.s32.totalorder %s48, 1
      %p150 = por %p148, %p149
      %p151 = scmp.ne.s32.totalorder %s142, %s143
      %p152 = scmp.eq.s32.totalorder %s48, 0
      %p153 = por %p151, %p152
      %p154 = scmp.ne.s32.totalorder %s142, %s143
      %p155 = scmp.eq.s32.totalorder %s49, 1
      %p156 = por %p154, %p155
      %p158 = scmp.ne.s32.totalorder %s143, %s157
      %p159 = scmp.eq.s32.totalorder %s49, 0
      %p160 = por %p158, %p159
      %s162 = sadd.s32 %s161, 1
      %p165 = scmp.eq.s32.totalorder %s43, 1
      %p166 = scmp.ne.s32.totalorder %s161, %s163
      %p167 = scmp.eq.s32.totalorder %s43, 0
      %p168 = por %p166, %p167
      %p169 = scmp.ne.s32.totalorder %s161, %s163
      %p170 = scmp.eq.s32.totalorder %s48, 1
      %p171 = por %p169, %p170
      %p172 = scmp.ne.s32.totalorder %s163, %s164
      %p173 = scmp.eq.s32.totalorder %s48, 0
      %p174 = por %p172, %p173
      %p175 = scmp.ne.s32.totalorder %s163, %s164
      %p176 = scmp.eq.s32.totalorder %s49, 1
      %p177 = por %p175, %p176
      %p179 = scmp.ne.s32.totalorder %s164, %s178
      %p180 = scmp.eq.s32.totalorder %s49, 0
      %p181 = por %p179, %p180
      %s183 = sadd.s32 %s182, 1
      %p186 = scmp.eq.s32.totalorder %s43, 1
      %p187 = scmp.ne.s32.totalorder %s182, %s184
      %p188 = scmp.eq.s32.totalorder %s43, 0
      %p189 = por %p187, %p188
      %p190 = scmp.ne.s32.totalorder %s182, %s184
      %p191 = scmp.eq.s32.totalorder %s48, 1
      %p192 = por %p190, %p191
      %p193 = scmp.ne.s32.totalorder %s184, %s185
      %p194 = scmp.eq.s32.totalorder %s48, 0
      %p195 = por %p193, %p194
      %p196 = scmp.ne.s32.totalorder %s184, %s185
      %p197 = scmp.eq.s32.totalorder %s49, 1
      %p198 = por %p196, %p197
      %p200 = scmp.ne.s32.totalorder %s185, %s199
      %p201 = scmp.eq.s32.totalorder %s49, 0
      %p202 = por %p200, %p201
      %s204 = sadd.s32 %s203, 1
      %p207 = scmp.eq.s32.totalorder %s43, 1
      %p208 = scmp.ne.s32.totalorder %s203, %s205
      %p209 = scmp.eq.s32.totalorder %s43, 0
      %p210 = por %p208, %p209
      %p211 = scmp.ne.s32.totalorder %s203, %s205
      %p212 = scmp.eq.s32.totalorder %s48, 1
      %p213 = por %p211, %p212
      %p214 = scmp.ne.s32.totalorder %s205, %s206
      %p215 = scmp.eq.s32.totalorder %s48, 0
      %p216 = por %p214, %p215
      %p217 = scmp.ne.s32.totalorder %s205, %s206
      %p218 = scmp.eq.s32.totalorder %s49, 1
      %p219 = por %p217, %p218
      %p221 = scmp.ne.s32.totalorder %s206, %s220
      %p222 = scmp.eq.s32.totalorder %s49, 0
      %p223 = por %p221, %p222
      %s225 = sadd.s32 %s224, 1
      %p228 = scmp.eq.s32.totalorder %s43, 1
      %p229 = scmp.ne.s32.totalorder %s224, %s226
      %p230 = scmp.eq.s32.totalorder %s43, 0
      %p231 = por %p229, %p230
      %p232 = scmp.ne.s32.totalorder %s224, %s226
      %p233 = scmp.eq.s32.totalorder %s48, 1
      %p234 = por %p232, %p233
      %p235 = scmp.ne.s32.totalorder %s226, %s227
      %p236 = scmp.eq.s32.totalorder %s48, 0
      %p237 = por %p235, %p236
      %p238 = scmp.ne.s32.totalorder %s226, %s227
      %p239 = scmp.eq.s32.totalorder %s49, 1
      %p240 = por %p238, %p239
      %p242 = scmp.ne.s32.totalorder %s227, %s241
      %p243 = scmp.eq.s32.totalorder %s49, 0
      %p244 = por %p242, %p243
      %s246 = sadd.s32 %s245, 1
      %p249 = scmp.eq.s32.totalorder %s43, 1
      %p250 = scmp.ne.s32.totalorder %s245, %s247
      %p251 = scmp.eq.s32.totalorder %s43, 0
      %p252 = por %p250, %p251
      %p253 = scmp.ne.s32.totalorder %s245, %s247
      %p254 = scmp.eq.s32.totalorder %s48, 1
      %p255 = por %p253, %p254
      %p256 = scmp.ne.s32.totalorder %s247, %s248
      %p257 = scmp.eq.s32.totalorder %s48, 0
      %p258 = por %p256, %p257
      %p259 = scmp.ne.s32.totalorder %s247, %s248
      %p260 = scmp.eq.s32.totalorder %s49, 1
      %p261 = por %p259, %p260
      %p263 = scmp.ne.s32.totalorder %s248, %s262
      %p264 = scmp.eq.s32.totalorder %s49, 0
      %p265 = por %p263, %p264
      %s267 = sadd.s32 %s266, 1
      %p270 = scmp.eq.s32.totalorder %s43, 1
      %p271 = scmp.ne.s32.totalorder %s266, %s268
      %p272 = scmp.eq.s32.totalorder %s43, 0
      %p273 = por %p271, %p272
      %p274 = scmp.ne.s32.totalorder %s266, %s268
      %p275 = scmp.eq.s32.totalorder %s48, 1
      %p276 = por %p274, %p275
      %p277 = scmp.ne.s32.totalorder %s268, %s269
      %p278 = scmp.eq.s32.totalorder %s48, 0
      %p279 = por %p277, %p278
      %p280 = scmp.ne.s32.totalorder %s268, %s269
      %p281 = scmp.eq.s32.totalorder %s49, 1
      %p282 = por %p280, %p281
      %p284 = scmp.ne.s32.totalorder %s269, %s283
      %p285 = scmp.eq.s32.totalorder %s49, 0
      %p286 = por %p284, %p285
      %s288 = sadd.s32 %s287, 1
      %p291 = scmp.eq.s32.totalorder %s43, 1
      %p292 = scmp.ne.s32.totalorder %s287, %s289
      %p293 = scmp.eq.s32.totalorder %s43, 0
      %p294 = por %p292, %p293
      %p295 = scmp.ne.s32.totalorder %s287, %s289
      %p296 = scmp.eq.s32.totalorder %s48, 1
      %p297 = por %p295, %p296
      %p298 = scmp.ne.s32.totalorder %s289, %s290
      %p299 = scmp.eq.s32.totalorder %s48, 0
      %p300 = por %p298, %p299
      %p301 = scmp.ne.s32.totalorder %s289, %s290
      %p302 = scmp.eq.s32.totalorder %s49, 1
      %p303 = por %p301, %p302
      %p305 = scmp.ne.s32.totalorder %s290, %s304
      %p306 = scmp.eq.s32.totalorder %s49, 0
      %p307 = por %p305, %p306
      %s309 = sadd.s32 %s308, 1
      %p312 = scmp.eq.s32.totalorder %s43, 1
      %p313 = scmp.ne.s32.totalorder %s308, %s310
      %p314 = scmp.eq.s32.totalorder %s43, 0
      %p315 = por %p313, %p314
      %p316 = scmp.ne.s32.totalorder %s308, %s310
      %p317 = scmp.eq.s32.totalorder %s48, 1
      %p318 = por %p316, %p317
      %p319 = scmp.ne.s32.totalorder %s310, %s311
      %p320 = scmp.eq.s32.totalorder %s48, 0
      %p321 = por %p319, %p320
      %p322 = scmp.ne.s32.totalorder %s310, %s311
      %p323 = scmp.eq.s32.totalorder %s49, 1
      %p324 = por %p322, %p323
      %p326 = scmp.ne.s32.totalorder %s311, %s325
      %p327 = scmp.eq.s32.totalorder %s49, 0
      %p328 = por %p326, %p327
      %s330 = sadd.s32 %s329, 1
      %p333 = scmp.eq.s32.totalorder %s43, 1
      %p334 = scmp.ne.s32.totalorder %s329, %s331
      %p335 = scmp.eq.s32.totalorder %s43, 0
      %p336 = por %p334, %p335
      %p337 = scmp.ne.s32.totalorder %s329, %s331
      %p338 = scmp.eq.s32.totalorder %s48, 1
      %p339 = por %p337, %p338
      %p340 = scmp.ne.s32.totalorder %s331, %s332
      %p341 = scmp.eq.s32.totalorder %s48, 0
      %p342 = por %p340, %p341
      %p343 = scmp.ne.s32.totalorder %s331, %s332
      %p344 = scmp.eq.s32.totalorder %s49, 1
      %p345 = por %p343, %p344
      %p347 = scmp.ne.s32.totalorder %s332, %s346
      %p348 = scmp.eq.s32.totalorder %s49, 0
      %p349 = por %p347, %p348
      %s351 = sadd.s32 %s350, 1
      %p354 = scmp.eq.s32.totalorder %s43, 1
      %p355 = scmp.ne.s32.totalorder %s350, %s352
      %p356 = scmp.eq.s32.totalorder %s43, 0
      %p357 = por %p355, %p356
      %p358 = scmp.ne.s32.totalorder %s350, %s352
      %p359 = scmp.eq.s32.totalorder %s48, 1
      %p360 = por %p358, %p359
      %p361 = scmp.ne.s32.totalorder %s352, %s353
      %p362 = scmp.eq.s32.totalorder %s48, 0
      %p363 = por %p361, %p362
      %p364 = scmp.ne.s32.totalorder %s352, %s353
      %p365 = scmp.eq.s32.totalorder %s49, 1
      %p366 = por %p364, %p365
      %p368 = scmp.ne.s32.totalorder %s353, %s367
      %p369 = scmp.eq.s32.totalorder %s49, 0
      %p370 = por %p368, %p369
      %s372 = sadd.s32 %s371, 1
      %p375 = scmp.eq.s32.totalorder %s43, 1
      %p376 = scmp.ne.s32.totalorder %s371, %s373
      %p377 = scmp.eq.s32.totalorder %s43, 0
      %p378 = por %p376, %p377
      %p379 = scmp.ne.s32.totalorder %s371, %s373
      %p380 = scmp.eq.s32.totalorder %s48, 1
      %p381 = por %p379, %p380
      %p382 = scmp.ne.s32.totalorder %s373, %s374
      %p383 = scmp.eq.s32.totalorder %s48, 0
      %p384 = por %p382, %p383
      %p385 = scmp.ne.s32.totalorder %s373, %s374
      %p386 = scmp.eq.s32.totalorder %s49, 1
      %p387 = por %p385, %p386
      %p389 = scmp.ne.s32.totalorder %s374, %s388
      %p390 = scmp.eq.s32.totalorder %s49, 0
      %p391 = por %p389, %p390
      %s393 = sadd.s32 %s392, 1
      %p396 = scmp.eq.s32.totalorder %s43, 1
      %p397 = scmp.ne.s32.totalorder %s392, %s394
      %p398 = scmp.eq.s32.totalorder %s43, 0
      %p399 = por %p397, %p398
      %p400 = scmp.ne.s32.totalorder %s392, %s394
      %p401 = scmp.eq.s32.totalorder %s48, 1
      %p402 = por %p400, %p401
      %p403 = scmp.ne.s32.totalorder %s394, %s395
      %p404 = scmp.eq.s32.totalorder %s48, 0
      %p405 = por %p403, %p404
      %p406 = scmp.ne.s32.totalorder %s394, %s395
      %p407 = scmp.eq.s32.totalorder %s49, 1
      %p408 = por %p406, %p407
      %p410 = scmp.ne.s32.totalorder %s395, %s409
      %p411 = scmp.eq.s32.totalorder %s49, 0
      %p412 = por %p410, %p411
      %s414 = sadd.s32 %s413, 1
      %p417 = scmp.eq.s32.totalorder %s43, 1
      %p418 = scmp.ne.s32.totalorder %s413, %s415
      %p419 = scmp.eq.s32.totalorder %s43, 0
      %p420 = por %p418, %p419
      %p421 = scmp.ne.s32.totalorder %s413, %s415
      %p422 = scmp.eq.s32.totalorder %s48, 1
      %p423 = por %p421, %p422
      %p424 = scmp.ne.s32.totalorder %s415, %s416
      %p425 = scmp.eq.s32.totalorder %s48, 0
      %p426 = por %p424, %p425
      %p427 = scmp.ne.s32.totalorder %s415, %s416
      %p428 = scmp.eq.s32.totalorder %s49, 1
      %p429 = por %p427, %p428
      %p431 = scmp.ne.s32.totalorder %s416, %s430
      %p432 = scmp.eq.s32.totalorder %s49, 0
      %p433 = por %p431, %p432
      %s435 = sadd.s32 %s434, 1
      %p438 = scmp.eq.s32.totalorder %s43, 1
      %p439 = scmp.ne.s32.totalorder %s434, %s436
      %p440 = scmp.eq.s32.totalorder %s43, 0
      %p441 = por %p439, %p440
      %p442 = scmp.ne.s32.totalorder %s434, %s436
      %p443 = scmp.eq.s32.totalorder %s48, 1
      %p444 = por %p442, %p443
      %p445 = scmp.ne.s32.totalorder %s436, %s437
      %p446 = scmp.eq.s32.totalorder %s48, 0
      %p447 = por %p445, %p446
      %p448 = scmp.ne.s32.totalorder %s436, %s437
      %p449 = scmp.eq.s32.totalorder %s49, 1
      %p450 = por %p448, %p449
      %p452 = scmp.ne.s32.totalorder %s437, %s451
      %p453 = scmp.eq.s32.totalorder %s49, 0
      %p454 = por %p452, %p453
      %s456 = sadd.s32 %s455, 1
      %p459 = scmp.eq.s32.totalorder %s43, 1
      %p460 = scmp.ne.s32.totalorder %s455, %s457
      %p461 = scmp.eq.s32.totalorder %s43, 0
      %p462 = por %p460, %p461
      %p463 = scmp.ne.s32.totalorder %s455, %s457
      %p464 = scmp.eq.s32.totalorder %s48, 1
      %p465 = por %p463, %p464
      %p466 = scmp.ne.s32.totalorder %s457, %s458
      %p467 = scmp.eq.s32.totalorder %s48, 0
      %p468 = por %p466, %p467
      %p469 = scmp.ne.s32.totalorder %s457, %s458
      %p470 = scmp.eq.s32.totalorder %s49, 1
      %p471 = por %p469, %p470
      %p473 = scmp.ne.s32.totalorder %s458, %s472
      %p474 = scmp.eq.s32.totalorder %s49, 0
      %p475 = por %p473, %p474
      %s477 = sadd.s32 %s476, 1
      %p480 = scmp.eq.s32.totalorder %s43, 1
      %p481 = scmp.ne.s32.totalorder %s476, %s478
      %p482 = scmp.eq.s32.totalorder %s43, 0
      %p483 = por %p481, %p482
      %p484 = scmp.ne.s32.totalorder %s476, %s478
      %p485 = scmp.eq.s32.totalorder %s48, 1
      %p486 = por %p484, %p485
      %p487 = scmp.ne.s32.totalorder %s478, %s479
      %p488 = scmp.eq.s32.totalorder %s48, 0
      %p489 = por %p487, %p488
      %p490 = scmp.ne.s32.totalorder %s478, %s479
      %p491 = scmp.eq.s32.totalorder %s49, 1
      %p492 = por %p490, %p491
      %p494 = scmp.ne.s32.totalorder %s479, %s493
      %p495 = scmp.eq.s32.totalorder %s49, 0
      %p496 = por %p494, %p495
      %s498 = sadd.s32 %s497, 1
      %p501 = scmp.eq.s32.totalorder %s43, 1
      %p502 = scmp.ne.s32.totalorder %s497, %s499
      %p503 = scmp.eq.s32.totalorder %s43, 0
      %p504 = por %p502, %p503
      %p505 = scmp.ne.s32.totalorder %s497, %s499
      %p506 = scmp.eq.s32.totalorder %s48, 1
      %p507 = por %p505, %p506
      %p508 = scmp.ne.s32.totalorder %s499, %s500
      %p509 = scmp.eq.s32.totalorder %s48, 0
      %p510 = por %p508, %p509
      %p511 = scmp.ne.s32.totalorder %s499, %s500
      %p512 = scmp.eq.s32.totalorder %s49, 1
      %p513 = por %p511, %p512
      %p515 = scmp.ne.s32.totalorder %s500, %s514
      %p516 = scmp.eq.s32.totalorder %s49, 0
      %p517 = por %p515, %p516
      %s519 = sadd.s32 %s518, 1
      %p522 = scmp.eq.s32.totalorder %s43, 1
      %p523 = scmp.ne.s32.totalorder %s518, %s520
      %p524 = scmp.eq.s32.totalorder %s43, 0
      %p525 = por %p523, %p524
      %p526 = scmp.ne.s32.totalorder %s518, %s520
      %p527 = scmp.eq.s32.totalorder %s48, 1
      %p528 = por %p526, %p527
      %p529 = scmp.ne.s32.totalorder %s520, %s521
      %p530 = scmp.eq.s32.totalorder %s48, 0
      %p531 = por %p529, %p530
      %p532 = scmp.ne.s32.totalorder %s520, %s521
      %p533 = scmp.eq.s32.totalorder %s49, 1
      %p534 = por %p532, %p533
      %p536 = scmp.ne.s32.totalorder %s521, %s535
      %p537 = scmp.eq.s32.totalorder %s49, 0
      %p538 = por %p536, %p537
      %s540 = sadd.s32 %s539, 1
      %p543 = scmp.eq.s32.totalorder %s43, 1
      %p544 = scmp.ne.s32.totalorder %s539, %s541
      %p545 = scmp.eq.s32.totalorder %s43, 0
      %p546 = por %p544, %p545
      %p547 = scmp.ne.s32.totalorder %s539, %s541
      %p548 = scmp.eq.s32.totalorder %s48, 1
      %p549 = por %p547, %p548
      %p550 = scmp.ne.s32.totalorder %s541, %s542
      %p551 = scmp.eq.s32.totalorder %s48, 0
      %p552 = por %p550, %p551
      %p553 = scmp.ne.s32.totalorder %s541, %s542
      %p554 = scmp.eq.s32.totalorder %s49, 1
      %p555 = por %p553, %p554
      %p557 = scmp.ne.s32.totalorder %s542, %s556
      %p558 = scmp.eq.s32.totalorder %s49, 0
      %p559 = por %p557, %p558
      %s561 = sadd.s32 %s560, 1
      %p564 = scmp.eq.s32.totalorder %s43, 1
      %p565 = scmp.ne.s32.totalorder %s560, %s562
      %p566 = scmp.eq.s32.totalorder %s43, 0
      %p567 = por %p565, %p566
      %p568 = scmp.ne.s32.totalorder %s560, %s562
      %p569 = scmp.eq.s32.totalorder %s48, 1
      %p570 = por %p568, %p569
      %p571 = scmp.ne.s32.totalorder %s562, %s563
      %p572 = scmp.eq.s32.totalorder %s48, 0
      %p573 = por %p571, %p572
      %p574 = scmp.ne.s32.totalorder %s562, %s563
      %p575 = scmp.eq.s32.totalorder %s49, 1
      %p576 = por %p574, %p575
      %p578 = scmp.ne.s32.totalorder %s563, %s577
      %p579 = scmp.eq.s32.totalorder %s49, 0
      %p580 = por %p578, %p579
      %s581 = ssub.s32 %s43, %s50
      %p582 = scmp.eq.s32.totalorder %s581, 0
      %s584 = sadd.s32 %s583, 1
      %s585 = scalar_select %p582, %s583, %s584
      %p588 = pneg %p582
      %p589 = scmp.eq.s32.totalorder %s43, 1
      %p590 = por %p588, %p589
      %p591 = scmp.ne.s32.totalorder %s583, %s586
      %p592 = scmp.eq.s32.totalorder %s43, 0
      %p593 = por %p591, %p592
      %p594 = scmp.ne.s32.totalorder %s583, %s586
      %p595 = scmp.eq.s32.totalorder %s48, 1
      %p596 = por %p594, %p595
      %p597 = scmp.ne.s32.totalorder %s586, %s587
      %p598 = scmp.eq.s32.totalorder %s48, 0
      %p599 = por %p597, %p598
      %p600 = scmp.ne.s32.totalorder %s586, %s587
      %p601 = scmp.eq.s32.totalorder %s49, 1
      %p602 = por %p600, %p601
      %p604 = scmp.ne.s32.totalorder %s587, %s603
      %p605 = scmp.eq.s32.totalorder %s49, 0
      %p606 = por %p604, %p605
      %p607 = scmp.le.s32.totalorder 1, %s43
      %p608 = scmp.lt.s32.totalorder %s43, 3
      %p609 = pnand %p607, %p608
      %p610 = pneg %p609
      // Predicated region
      $region9: #{inception_c.1} parent=5 // pred_check
        _
      $region10: #{inception_c.1} parent=5 // pred_check_branch
        %612 = sbr.rel (%p609) target = $region12
      $region11: #{inception_c.1} parent=5 // pred_region
        %s613 = ssub.s32 %s43, 1
        // Predicated region
        $region13: #{inception_c.1} parent=11 // pred_check
          %p614 = pneg %p90
        $region14: #{inception_c.1} parent=11 // pred_check_branch
          %616 = sbr.rel (%p614) target = $region16
        $region15: #{inception_c.1} parent=11 // pred_region
          _
        $region16: #{inception_c.1} parent=11 // pred_fallthru
          _
        // Predicated region
        $region17: #{inception_c.1} parent=11 // pred_check
          %p617 = pneg %p111
        $region18: #{inception_c.1} parent=11 // pred_check_branch
          %619 = sbr.rel (%p617) target = $region20
        $region19: #{inception_c.1} parent=11 // pred_region
          _
        $region20: #{inception_c.1} parent=11 // pred_fallthru
          _
        // Predicated region
        $region21: #{inception_c.1} parent=11 // pred_check
          %p620 = pneg %p132
        $region22: #{inception_c.1} parent=11 // pred_check_branch
          %622 = sbr.rel (%p620) target = $region24
        $region23: #{inception_c.1} parent=11 // pred_region
          _
        $region24: #{inception_c.1} parent=11 // pred_fallthru
          _
        // Predicated region
        $region25: #{inception_c.1} parent=11 // pred_check
          %p623 = pneg %p153
        $region26: #{inception_c.1} parent=11 // pred_check_branch
          %625 = sbr.rel (%p623) target = $region28
        $region27: #{inception_c.1} parent=11 // pred_region
          _
        $region28: #{inception_c.1} parent=11 // pred_fallthru
          _
        // Predicated region
        $region29: #{inception_c.1} parent=11 // pred_check
          %p626 = pneg %p174
        $region30: #{inception_c.1} parent=11 // pred_check_branch
          %628 = sbr.rel (%p626) target = $region32
        $region31: #{inception_c.1} parent=11 // pred_region
          %s630 = ssub.s32 16, 16
          %631 = vsyncadd [#allocation3], %s630
          %s633 = sshll.u32 [#allocation2], 4
          %s634 = int_to_ptr.vmem [resolvable:$true] %s633
          %636 = dma.hbm_to_vmem [thread:$0]  %s5, 16, %s634, [#allocation3]
        $region32: #{inception_c.1} parent=11 // pred_fallthru
          _
        // Predicated region
        $region33: #{inception_c.1} parent=11 // pred_check
          %p637 = pneg %p195
        $region34: #{inception_c.1} parent=11 // pred_check_branch
          %639 = sbr.rel (%p637) target = $region36
        $region35: #{inception_c.1} parent=11 // pred_region
          %s641 = ssub.s32 16, 16
          %642 = vsyncadd [#allocation6], %s641
          %s644 = sshll.u32 [#allocation5], 4
          %s645 = int_to_ptr.vmem [resolvable:$true] %s644
          %647 = dma.hbm_to_vmem [thread:$0]  %s6, 16, %s645, [#allocation6]
        $region36: #{inception_c.1} parent=11 // pred_fallthru
          _
        // Predicated region
        $region37: #{inception_c.1} parent=11 // pred_check
          %p648 = pneg %p216
        $region38: #{inception_c.1} parent=11 // pred_check_branch
          %650 = sbr.rel (%p648) target = $region40
        $region39: #{inception_c.1} parent=11 // pred_region
          %s652 = ssub.s32 896, 896
          %653 = vsyncadd [#allocation6], %s652
          %s654 = sshll.u32 [#allocation7], 4
          %s655 = int_to_ptr.vmem [resolvable:$true] %s654
          %660 = dma.hbm_to_vmem [thread:$0]  %s7, 896, %s655, [#allocation6], 128, 128, 8
        $region40: #{inception_c.1} parent=11 // pred_fallthru
          _
        // Predicated region
        $region41: #{inception_c.1} parent=11 // pred_check
          %p661 = pneg %p237
        $region42: #{inception_c.1} parent=11 // pred_check_branch
          %663 = sbr.rel (%p661) target = $region44
        $region43: #{inception_c.1} parent=11 // pred_region
          %s665 = ssub.s32 32, 32
          %666 = vsyncadd [#allocation9], %s665
          %s668 = sshll.u32 [#allocation8], 4
          %s669 = int_to_ptr.vmem [resolvable:$true] %s668
          %671 = dma.hbm_to_vmem [thread:$0]  %s8, 32, %s669, [#allocation9]
        $region44: #{inception_c.1} parent=11 // pred_fallthru
          _
        // Predicated region
        $region45: #{inception_c.1} parent=11 // pred_check
          %p672 = pneg %p258
        $region46: #{inception_c.1} parent=11 // pred_check_branch
          %674 = sbr.rel (%p672) target = $region48
        $region47: #{inception_c.1} parent=11 // pred_region
          %s676 = ssub.s32 32, 32
          %677 = vsyncadd [#allocation9], %s676
          %s679 = sshll.u32 [#allocation10], 4
          %s680 = int_to_ptr.vmem [resolvable:$true] %s679
          %682 = dma.hbm_to_vmem [thread:$0]  %s9, 32, %s680, [#allocation9]
        $region48: #{inception_c.1} parent=11 // pred_fallthru
          _
        // Predicated region
        $region49: #{inception_c.1} parent=11 // pred_check
          %p683 = pneg %p279
        $region50: #{inception_c.1} parent=11 // pred_check_branch
          %685 = sbr.rel (%p683) target = $region52
        $region51: #{inception_c.1} parent=11 // pred_region
          _
        $region52: #{inception_c.1} parent=11 // pred_fallthru
          _
        // Predicated region
        $region53: #{inception_c.1} parent=11 // pred_check
          %p686 = pneg %p300
        $region54: #{inception_c.1} parent=11 // pred_check_branch
          %688 = sbr.rel (%p686) target = $region56
        $region55: #{inception_c.1} parent=11 // pred_region
          %s690 = ssub.s32 16, 16
          %691 = vsyncadd [#allocation12], %s690
          %s693 = sshll.u32 [#allocation11], 4
          %s694 = int_to_ptr.vmem [resolvable:$true] %s693
          %696 = dma.hbm_to_vmem [thread:$0]  %s11, 16, %s694, [#allocation12]
        $region56: #{inception_c.1} parent=11 // pred_fallthru
          _
        // Predicated region
        $region57: #{inception_c.1} parent=11 // pred_check
          %p697 = pneg %p321
        $region58: #{inception_c.1} parent=11 // pred_check_branch
          %699 = sbr.rel (%p697) target = $region60
        $region59: #{inception_c.1} parent=11 // pred_region
          %s701 = ssub.s32 16, 16
          %702 = vsyncadd [#allocation12], %s701
          %s704 = sshll.u32 [#allocation13], 4
          %s705 = int_to_ptr.vmem [resolvable:$true] %s704
          %707 = dma.hbm_to_vmem [thread:$0]  %s12, 16, %s705, [#allocation12]
        $region60: #{inception_c.1} parent=11 // pred_fallthru
          _
        // Predicated region
        $region61: #{inception_c.1} parent=11 // pred_check
          %p708 = pneg %p342
        $region62: #{inception_c.1} parent=11 // pred_check_branch
          %710 = sbr.rel (%p708) target = $region64
        $region63: #{inception_c.1} parent=11 // pred_region
          _
        $region64: #{inception_c.1} parent=11 // pred_fallthru
          _
        // Predicated region
        $region65: #{inception_c.1} parent=11 // pred_check
          %p711 = pneg %p363
        $region66: #{inception_c.1} parent=11 // pred_check_branch
          %713 = sbr.rel (%p711) target = $region68
        $region67: #{inception_c.1} parent=11 // pred_region
          %s715 = ssub.s32 16, 16
          %716 = vsyncadd [#allocation15], %s715
          %s718 = sshll.u32 [#allocation14], 4
          %s719 = int_to_ptr.vmem [resolvable:$true] %s718
          %721 = dma.hbm_to_vmem [thread:$0]  %s14, 16, %s719, [#allocation15]
        $region68: #{inception_c.1} parent=11 // pred_fallthru
          _
        // Predicated region
        $region69: #{inception_c.1} parent=11 // pred_check
          %p722 = pneg %p384
        $region70: #{inception_c.1} parent=11 // pred_check_branch
          %724 = sbr.rel (%p722) target = $region72
        $region71: #{inception_c.1} parent=11 // pred_region
          %s726 = ssub.s32 16, 16
          %727 = vsyncadd [#allocation15], %s726
          %s729 = sshll.u32 [#allocation16], 4
          %s730 = int_to_ptr.vmem [resolvable:$true] %s729
          %732 = dma.hbm_to_vmem [thread:$0]  %s15, 16, %s730, [#allocation15]
        $region72: #{inception_c.1} parent=11 // pred_fallthru
          _
        // Predicated region
        $region73: #{inception_c.1} parent=11 // pred_check
          %p733 = pneg %p405
        $region74: #{inception_c.1} parent=11 // pred_check_branch
          %735 = sbr.rel (%p733) target = $region76
        $region75: #{inception_c.1} parent=11 // pred_region
          _
        $region76: #{inception_c.1} parent=11 // pred_fallthru
          _
        // Predicated region
        $region77: #{inception_c.1} parent=11 // pred_check
          %p736 = pneg %p426
        $region78: #{inception_c.1} parent=11 // pred_check_branch
          %738 = sbr.rel (%p736) target = $region80
        $region79: #{inception_c.1} parent=11 // pred_region
          %s740 = ssub.s32 16, 16
          %741 = vsyncadd [#allocation18], %s740
          %s743 = sshll.u32 [#allocation17], 4
          %s744 = int_to_ptr.vmem [resolvable:$true] %s743
          %746 = dma.hbm_to_vmem [thread:$0]  %s17, 16, %s744, [#allocation18]
        $region80: #{inception_c.1} parent=11 // pred_fallthru
          _
        // Predicated region
        $region81: #{inception_c.1} parent=11 // pred_check
          %p747 = pneg %p447
        $region82: #{inception_c.1} parent=11 // pred_check_branch
          %749 = sbr.rel (%p747) target = $region84
        $region83: #{inception_c.1} parent=11 // pred_region
          %s751 = ssub.s32 16, 16
          %752 = vsyncadd [#allocation18], %s751
          %s754 = sshll.u32 [#allocation19], 4
          %s755 = int_to_ptr.vmem [resolvable:$true] %s754
          %757 = dma.hbm_to_vmem [thread:$0]  %s18, 16, %s755, [#allocation18]
        $region84: #{inception_c.1} parent=11 // pred_fallthru
          _
        // Predicated region
        $region85: #{inception_c.1} parent=11 // pred_check
          %p758 = pneg %p468
        $region86: #{inception_c.1} parent=11 // pred_check_branch
          %760 = sbr.rel (%p758) target = $region88
        $region87: #{inception_c.1} parent=11 // pred_region
          %s762 = ssub.s32 896, 896
          %763 = vsyncadd [#allocation21], %s762
          %s764 = sshll.u32 [#allocation20], 4
          %s765 = int_to_ptr.vmem [resolvable:$true] %s764
          %770 = dma.hbm_to_vmem [thread:$0]  %s19, 896, %s765, [#allocation21], 128, 128, 8
        $region88: #{inception_c.1} parent=11 // pred_fallthru
          _
        // Predicated region
        $region89: #{inception_c.1} parent=11 // pred_check
          %p771 = pneg %p489
        $region90: #{inception_c.1} parent=11 // pred_check_branch
          %773 = sbr.rel (%p771) target = $region92
        $region91: #{inception_c.1} parent=11 // pred_region
          %s775 = ssub.s32 32, 32
          %776 = vsyncadd [#allocation21], %s775
          %s778 = sshll.u32 [#allocation22], 4
          %s779 = int_to_ptr.vmem [resolvable:$true] %s778
          %781 = dma.hbm_to_vmem [thread:$0]  %s20, 32, %s779, [#allocation21]
        $region92: #{inception_c.1} parent=11 // pred_fallthru
          _
        // Predicated region
        $region93: #{inception_c.1} parent=11 // pred_check
          %p782 = pneg %p510
        $region94: #{inception_c.1} parent=11 // pred_check_branch
          %784 = sbr.rel (%p782) target = $region96
        $region95: #{inception_c.1} parent=11 // pred_region
          %s786 = ssub.s32 32, 32
          %787 = vsyncadd [#allocation24], %s786
          %s789 = sshll.u32 [#allocation23], 4
          %s790 = int_to_ptr.vmem [resolvable:$true] %s789
          %792 = dma.hbm_to_vmem [thread:$0]  %s21, 32, %s790, [#allocation24]
        $region96: #{inception_c.1} parent=11 // pred_fallthru
          _
        // Predicated region
        $region97: #{inception_c.1} parent=11 // pred_check
          %p793 = pneg %p531
        $region98: #{inception_c.1} parent=11 // pred_check_branch
          %795 = sbr.rel (%p793) target = $region100
        $region99: #{inception_c.1} parent=11 // pred_region
          %s797 = ssub.s32 64, 64
          %798 = vsyncadd [#allocation24], %s797
          %s800 = sshll.u32 [#allocation25], 4
          %s801 = int_to_ptr.vmem [resolvable:$true] %s800
          %803 = dma.hbm_to_vmem [thread:$0]  %s22, 64, %s801, [#allocation24]
        $region100: #{inception_c.1} parent=11 // pred_fallthru
          _
        // Predicated region
        $region101: #{inception_c.1} parent=11 // pred_check
          %p804 = pneg %p552
        $region102: #{inception_c.1} parent=11 // pred_check_branch
          %806 = sbr.rel (%p804) target = $region104
        $region103: #{inception_c.1} parent=11 // pred_region
          %s808 = ssub.s32 32, 32
          %809 = vsyncadd [#allocation27], %s808
          %s811 = sshll.u32 [#allocation26], 4
          %s812 = int_to_ptr.vmem [resolvable:$true] %s811
          %814 = dma.hbm_to_vmem [thread:$0]  %s23, 32, %s812, [#allocation27]
        $region104: #{inception_c.1} parent=11 // pred_fallthru
          _
        // Predicated region
        $region105: #{inception_c.1} parent=11 // pred_check
          %p815 = pneg %p573
        $region106: #{inception_c.1} parent=11 // pred_check_branch
          %817 = sbr.rel (%p815) target = $region108
        $region107: #{inception_c.1} parent=11 // pred_region
          %s819 = ssub.s32 32, 32
          %820 = vsyncadd [#allocation27], %s819
          %s822 = sshll.u32 [#allocation28], 4
          %s823 = int_to_ptr.vmem [resolvable:$true] %s822
          %825 = dma.hbm_to_vmem [thread:$0]  %s24, 32, %s823, [#allocation27]
        $region108: #{inception_c.1} parent=11 // pred_fallthru
          _
      $region12: #{inception_c.1} parent=5 // pred_fallthru
        _
      %p826 = scmp.lt.s32.totalorder %s43, 2
      // Predicated region
      $region109: #{inception_c.1} parent=5 // pred_check
        %p827 = pneg %p826
      $region110: #{inception_c.1} parent=5 // pred_check_branch
        %829 = sbr.rel (%p827) target = $region112
      $region111: #{inception_c.1} parent=5 // pred_region
        // Predicated region
        $region113: #{inception_c.1} parent=111 // pred_check
          %p830 = pneg %p63
        $region114: #{inception_c.1} parent=111 // pred_check_branch
          %832 = sbr.rel (%p830) target = $region116
        $region115: #{inception_c.1} parent=111 // pred_region
          %p833 = scmp.lt.s32.totalorder %s43, 1
          %s834 = scalar_select %p833, %s43, 1
          %s835 = smul.addr %s834, 32
          %s836 = smul.addr %s835, 8
          %s837 = scalar_lea.vmem %s0, %s836
        $region116: #{inception_c.1} parent=111 // pred_fallthru
          _
      $region112: #{inception_c.1} parent=5 // pred_fallthru
        _
      %p838 = scmp.le.s32.totalorder 1, %s43
      %p839 = scmp.lt.s32.totalorder %s43, 3
      %p840 = pnand %p838, %p839
      %p841 = pneg %p840
      // Predicated region
      $region117: #{inception_c.1} parent=5 // pred_check
        _
      $region118: #{inception_c.1} parent=5 // pred_check_branch
        %843 = sbr.rel (%p840) target = $region120
      $region119: #{inception_c.1} parent=5 // pred_region
        %s844 = ssub.s32 %s43, 1
        // Predicated region
        $region121: #{inception_c.1} parent=119 // pred_check
          %p845 = pneg %p174
        $region122: #{inception_c.1} parent=119 // pred_check_branch
          %847 = sbr.rel (%p845) target = $region124
        $region123: #{inception_c.1} parent=119 // pred_region
          %848 = dma.done [#allocation3], 16
        $region124: #{inception_c.1} parent=119 // pred_fallthru
          _
        // Predicated region
        $region125: #{inception_c.1} parent=119 // pred_check
          %p849 = pneg %p195
        $region126: #{inception_c.1} parent=119 // pred_check_branch
          %851 = sbr.rel (%p849) target = $region128
        $region127: #{inception_c.1} parent=119 // pred_region
          %852 = dma.done [#allocation6], 16
        $region128: #{inception_c.1} parent=119 // pred_fallthru
          _
        // Predicated region
        $region129: #{inception_c.1} parent=119 // pred_check
          %p853 = pneg %p216
        $region130: #{inception_c.1} parent=119 // pred_check_branch
          %855 = sbr.rel (%p853) target = $region132
        $region131: #{inception_c.1} parent=119 // pred_region
          %856 = dma.done [#allocation6], 896
        $region132: #{inception_c.1} parent=119 // pred_fallthru
          _
        // Predicated region
        $region133: #{inception_c.1} parent=119 // pred_check
          %p857 = pneg %p237
        $region134: #{inception_c.1} parent=119 // pred_check_branch
          %859 = sbr.rel (%p857) target = $region136
        $region135: #{inception_c.1} parent=119 // pred_region
          %860 = dma.done [#allocation9], 32
        $region136: #{inception_c.1} parent=119 // pred_fallthru
          _
        // Predicated region
        $region137: #{inception_c.1} parent=119 // pred_check
          %p861 = pneg %p258
        $region138: #{inception_c.1} parent=119 // pred_check_branch
          %863 = sbr.rel (%p861) target = $region140
        $region139: #{inception_c.1} parent=119 // pred_region
          %864 = dma.done [#allocation9], 32
        $region140: #{inception_c.1} parent=119 // pred_fallthru
          _
        // Predicated region
        $region141: #{inception_c.1} parent=119 // pred_check
          %p865 = pneg %p300
        $region142: #{inception_c.1} parent=119 // pred_check_branch
          %867 = sbr.rel (%p865) target = $region144
        $region143: #{inception_c.1} parent=119 // pred_region
          %868 = dma.done [#allocation12], 16
        $region144: #{inception_c.1} parent=119 // pred_fallthru
          _
        // Predicated region
        $region145: #{inception_c.1} parent=119 // pred_check
          %p869 = pneg %p321
        $region146: #{inception_c.1} parent=119 // pred_check_branch
          %871 = sbr.rel (%p869) target = $region148
        $region147: #{inception_c.1} parent=119 // pred_region
          %872 = dma.done [#allocation12], 16
        $region148: #{inception_c.1} parent=119 // pred_fallthru
          _
        // Predicated region
        $region149: #{inception_c.1} parent=119 // pred_check
          %p873 = pneg %p363
        $region150: #{inception_c.1} parent=119 // pred_check_branch
          %875 = sbr.rel (%p873) target = $region152
        $region151: #{inception_c.1} parent=119 // pred_region
          %876 = dma.done [#allocation15], 16
        $region152: #{inception_c.1} parent=119 // pred_fallthru
          _
        // Predicated region
        $region153: #{inception_c.1} parent=119 // pred_check
          %p877 = pneg %p384
        $region154: #{inception_c.1} parent=119 // pred_check_branch
          %879 = sbr.rel (%p877) target = $region156
        $region155: #{inception_c.1} parent=119 // pred_region
          %880 = dma.done [#allocation15], 16
        $region156: #{inception_c.1} parent=119 // pred_fallthru
          _
        // Predicated region
        $region157: #{inception_c.1} parent=119 // pred_check
          %p881 = pneg %p426
        $region158: #{inception_c.1} parent=119 // pred_check_branch
          %883 = sbr.rel (%p881) target = $region160
        $region159: #{inception_c.1} parent=119 // pred_region
          %884 = dma.done [#allocation18], 16
        $region160: #{inception_c.1} parent=119 // pred_fallthru
          _
        // Predicated region
        $region161: #{inception_c.1} parent=119 // pred_check
          %p885 = pneg %p447
        $region162: #{inception_c.1} parent=119 // pred_check_branch
          %887 = sbr.rel (%p885) target = $region164
        $region163: #{inception_c.1} parent=119 // pred_region
          %888 = dma.done [#allocation18], 16
        $region164: #{inception_c.1} parent=119 // pred_fallthru
          _
        // Predicated region
        $region165: #{inception_c.1} parent=119 // pred_check
          %p889 = pneg %p468
        $region166: #{inception_c.1} parent=119 // pred_check_branch
          %891 = sbr.rel (%p889) target = $region168
        $region167: #{inception_c.1} parent=119 // pred_region
          %892 = dma.done [#allocation21], 896
        $region168: #{inception_c.1} parent=119 // pred_fallthru
          _
        // Predicated region
        $region169: #{inception_c.1} parent=119 // pred_check
          %p893 = pneg %p489
        $region170: #{inception_c.1} parent=119 // pred_check_branch
          %895 = sbr.rel (%p893) target = $region172
        $region171: #{inception_c.1} parent=119 // pred_region
          %896 = dma.done [#allocation21], 32
        $region172: #{inception_c.1} parent=119 // pred_fallthru
          _
        // Predicated region
        $region173: #{inception_c.1} parent=119 // pred_check
          %p897 = pneg %p510
        $region174: #{inception_c.1} parent=119 // pred_check_branch
          %899 = sbr.rel (%p897) target = $region176
        $region175: #{inception_c.1} parent=119 // pred_region
          %900 = dma.done [#allocation24], 32
        $region176: #{inception_c.1} parent=119 // pred_fallthru
          _
        // Predicated region
        $region177: #{inception_c.1} parent=119 // pred_check
          %p901 = pneg %p531
        $region178: #{inception_c.1} parent=119 // pred_check_branch
          %903 = sbr.rel (%p901) target = $region180
        $region179: #{inception_c.1} parent=119 // pred_region
          %904 = dma.done [#allocation24], 64
        $region180: #{inception_c.1} parent=119 // pred_fallthru
          _
        // Predicated region
        $region181: #{inception_c.1} parent=119 // pred_check
          %p905 = pneg %p552
        $region182: #{inception_c.1} parent=119 // pred_check_branch
          %907 = sbr.rel (%p905) target = $region184
        $region183: #{inception_c.1} parent=119 // pred_region
          %908 = dma.done [#allocation27], 32
        $region184: #{inception_c.1} parent=119 // pred_fallthru
          _
        // Predicated region
        $region185: #{inception_c.1} parent=119 // pred_check
          %p909 = pneg %p573
        $region186: #{inception_c.1} parent=119 // pred_check_branch
          %911 = sbr.rel (%p909) target = $region188
        $region187: #{inception_c.1} parent=119 // pred_region
          %912 = dma.done [#allocation27], 32
        $region188: #{inception_c.1} parent=119 // pred_fallthru
          _
        %p913 = scmp.lt.s32.totalorder %s48, 1
        %s914 = scalar_select %p913, %s48, 1
        %s915 = smul.addr %s914, 32
        %s916 = smul.addr %s915, 8
        %s917 = scalar_lea.vmem %s0, %s916
        %p918 = pneg %p69
        %p919 = pneg %p66
        %p920 = pneg %p90
        %p921 = pneg %p87
        %p922 = pneg %p111
        %p923 = pneg %p108
        %p924 = pneg %p132
        %p925 = pneg %p129
        %p926 = pneg %p153
        %p927 = pneg %p150
        %p928 = pneg %p174
        %p929 = pneg %p171
        %p930 = pneg %p195
        %p931 = pneg %p192
        %p932 = pneg %p216
        %p933 = pneg %p213
        %p934 = pneg %p237
        %p935 = pneg %p234
        %p936 = pneg %p258
        %p937 = pneg %p255
        %p938 = pneg %p279
        %p939 = pneg %p276
        %p940 = pneg %p300
        %p941 = pneg %p297
        %p942 = pneg %p321
        %p943 = pneg %p318
        %p944 = pneg %p342
        %p945 = pneg %p339
        %p946 = pneg %p363
        %p947 = pneg %p360
        %p948 = pneg %p384
        %p949 = pneg %p381
        %p950 = pneg %p405
        %p951 = pneg %p402
        %p952 = pneg %p426
        %p953 = pneg %p423
        %p954 = pneg %p447
        %p955 = pneg %p444
        %p956 = pneg %p468
        %p957 = pneg %p465
        %p958 = pneg %p489
        %p959 = pneg %p486
        %p960 = pneg %p510
        %p961 = pneg %p507
        %p962 = pneg %p531
        %p963 = pneg %p528
        %p964 = pneg %p552
        %p965 = pneg %p549
        %p966 = pneg %p573
        %p967 = pneg %p570
        %p968 = pneg %p599
        %p969 = pneg %p596
        %s970 = sand.u32 %s586, 1
        %s971 = scalar_lea.sflag [#allocation4], %s970
        %s972 = sand.u32 %s586, 1
        %s973 = smul.addr %s972, 1536
        %s974 = scalar_lea.vmem [#allocation29], %s973
        %p975 = scmp.lt.s32.totalorder %s48, 1
        %s976 = scalar_select %p975, %s48, 1
        %s977 = smul.addr %s976, 32
        %s978 = smul.addr %s977, 8
        %s979 = scalar_lea.vmem %s0, %s978
        %v981 = vld [vmem:[%s979] sm:$0xff]
        %v982 = vld [vmem:[%s979 + $0x8] sm:$0xff]
        %v983 = vld [vmem:[%s979 + $0x10] sm:$0xff]
        %v984 = vld [vmem:[%s979 + $0x18] sm:$0xff]
        %v985 = vld [vmem:[%s979 + $0x20] sm:$0xff]
        %v986 = vld [vmem:[%s979 + $0x28] sm:$0xff]
        %v987 = vld [vmem:[%s979 + $0x30] sm:$0xff]
        %v988 = vld [vmem:[%s979 + $0x38] sm:$0xff]
        %v989 = vld [vmem:[%s979 + $0x40] sm:$0xff]
        %v990 = vld [vmem:[%s979 + $0x48] sm:$0xff]
        %v991 = vld [vmem:[%s979 + $0x50] sm:$0xff]
        %v992 = vld [vmem:[%s979 + $0x58] sm:$0xff]
        %v993 = vld [vmem:[%s979 + $0x60] sm:$0xff]
        %v994 = vld [vmem:[%s979 + $0x68] sm:$0xff]
        %v995 = vld [vmem:[%s979 + $0x70] sm:$0xff]
        %v996 = vld [vmem:[%s979 + $0x78] sm:$0xff]
        %v997 = vld [vmem:[%s979 + $0x80] sm:$0xff]
        %v998 = vld [vmem:[%s979 + $0x88] sm:$0xff]
        %v999 = vld [vmem:[%s979 + $0x90] sm:$0xff]
        %v1000 = vld [vmem:[%s979 + $0x98] sm:$0xff]
        %v1001 = vld [vmem:[%s979 + $0xa0] sm:$0xff]
        %v1002 = vld [vmem:[%s979 + $0xa8] sm:$0xff]
        %v1003 = vld [vmem:[%s979 + $0xb0] sm:$0xff]
        %v1004 = vld [vmem:[%s979 + $0xb8] sm:$0xff]
        %v1005 = vld [vmem:[%s979 + $0xc0] sm:$0xff]
        %v1006 = vld [vmem:[%s979 + $0xc8] sm:$0xff]
        %v1007 = vld [vmem:[%s979 + $0xd0] sm:$0xff]
        %v1008 = vld [vmem:[%s979 + $0xd8] sm:$0xff]
        %v1009 = vld [vmem:[%s979 + $0xe0] sm:$0xff]
        %v1010 = vld [vmem:[%s979 + $0xe8] sm:$0xff]
        %v1011 = vld [vmem:[%s979 + $0xf0] sm:$0xff]
        %v1012 = vld [vmem:[%s979 + $0xf8] sm:$0xff]
        %v1013 = vpack.c.bf16 %v982, %v981
        %v1014 = vpack.c.bf16 %v984, %v983
        %v1015 = vpack.c.bf16 %v986, %v985
        %v1016 = vpack.c.bf16 %v988, %v987
        %v1017 = vpack.c.bf16 %v990, %v989
        %v1018 = vpack.c.bf16 %v992, %v991
        %v1019 = vpack.c.bf16 %v994, %v993
        %v1020 = vpack.c.bf16 %v996, %v995
        %v1021 = vpack.c.bf16 %v998, %v997
        %v1022 = vpack.c.bf16 %v1000, %v999
        %v1023 = vpack.c.bf16 %v1002, %v1001
        %v1024 = vpack.c.bf16 %v1004, %v1003
        %v1025 = vpack.c.bf16 %v1006, %v1005
        %v1026 = vpack.c.bf16 %v1008, %v1007
        %v1027 = vpack.c.bf16 %v1010, %v1009
        %v1028 = vpack.c.bf16 %v1012, %v1011
        %v1029 = vld [vmem:[%s1] sm:$0xf]
        %v1030 = vld [vmem:[%s2] sm:$0x3]
        %v1031 = vld [vmem:[%s3] sm:$0x3]
        %v1034 = vunpack.c.l.s4 1983009808
        %v1035 = vunpack.c.0.s8 %v1034
        %v1036 = vlaneseq
        %v1037 = vshrl.u32 %v1036, 7
        %v1038 = vsub.s32 %v1035, %v1037
        %v1039 = vrot.slane %v1029, %v1038
        %v1040 = vcombine.high %v1039, %v1039
        %vm1041 = vcmask 31744
        %v1043 = vsel %vm1041, %v1013, 0
        %v1046 = vsel %vm1041, %v1014, 0
        %v1049 = vsel %vm1041, %v1015, 0
        %v1052 = vsel %vm1041, %v1016, 0
        %v1055 = vsel %vm1041, %v1017, 0
        %v1058 = vsel %vm1041, %v1018, 0
        %v1061 = vsel %vm1041, %v1019, 0
        %v1064 = vsel %vm1041, %v1020, 0
        %v1067 = vsel %vm1041, %v1021, 0
        %v1070 = vsel %vm1041, %v1022, 0
        %v1073 = vsel %vm1041, %v1023, 0
        %v1076 = vsel %vm1041, %v1024, 0
        %v1079 = vsel %vm1041, %v1025, 0
        %v1082 = vsel %vm1041, %v1026, 0
        %v1085 = vsel %vm1041, %v1027, 0
        %v1088 = vsel %vm1041, %v1028, 0
        %vm1090 = vcmask 1041408
        %v1092 = vsel %vm1090, %v1039, 0
        %v1095 = vsel %vm1090, %v1040, 0
        %1097 = vmatprep.subr.bf16.mxu0 0
        %1098 = vmatpush1.bf16.msra.mxu0 0
        %1099 = vmatprep.subr.bf16.mxu0 0
        %1100 = vmatpush1.bf16.msra.mxu0 0
        %1101 = vmatprep.subr.bf16.mxu0 0
        %1102 = vmatpush1.bf16.msra.mxu0 0
        %1103 = vmatprep.subr.bf16.mxu0 0
        %1104 = vmatpush1.bf16.msra.mxu0 0
        %1105 = vmatprep.subr.bf16.mxu0 0
        %1106 = vmatpush1.bf16.msra.mxu0 0
        %1107 = vmatprep.subr.bf16.mxu0 0
        %1108 = vmatpush1.bf16.msra.mxu0 0
        %1109 = vmatprep.subr.bf16.mxu0 0
        %1110 = vmatpush1.bf16.msra.mxu0 0
        %1111 = vmatprep.subr.bf16.mxu0 %v1095
        %1112 = vmatpush1.bf16.msra.mxu0 %v1092
        %1113 = vmatprep.subr.bf16.mxu0 0
        %1114 = vmatpush2.bf16.msra.mxu0 0
        %1115 = vmatprep.subr.bf16.mxu0 0
        %1116 = vmatpush2.bf16.msra.mxu0 0
        %1117 = vmatprep.subr.bf16.mxu0 0
        %1118 = vmatpush2.bf16.msra.mxu0 0
        %1119 = vmatprep.subr.bf16.mxu0 0
        %1120 = vmatpush2.bf16.msra.mxu0 0
        %1121 = vmatprep.subr.bf16.mxu0 0
        %1122 = vmatpush2.bf16.msra.mxu0 0
        %1123 = vmatprep.subr.bf16.mxu0 0
        %1124 = vmatpush2.bf16.msra.mxu0 0
        %1125 = vmatprep.subr.bf16.mxu0 0
        %1126 = vmatpush2.bf16.msra.mxu0 0
        %1127 = vmatprep.subr.bf16.mxu0 0
        %1128 = vmatpush2.bf16.msra.mxu0 0
        %1129 = vmatprep.mubr.bf16.mxu0 0
        %1130 = vmatmul.mubr.bf16.gmra.mxu0 %v1043
        %v1131 = vpop.f32.mrf.mxu0
        %v1132 = vadd.f32 0.0, %v1131
        %v1133 = vpop.f32.mrf.mxu0
        %v1134 = vadd.f32 0.0, %v1133
        %v1135 = vpop.f32.mrf.mxu0
        %v1136 = vadd.f32 0.0, %v1135
        %v1137 = vpop.f32.mrf.mxu0
        %v1138 = vadd.f32 0.0, %v1137
        %1139 = vmatprep.mubr.bf16.mxu0 0
        %1140 = vmatmul.mubr.bf16.gmra.mxu0 %v1046
        %v1141 = vpop.f32.mrf.mxu0
        %v1142 = vadd.f32 0.0, %v1141
        %v1143 = vpop.f32.mrf.mxu0
        %v1144 = vadd.f32 0.0, %v1143
        %v1145 = vpop.f32.mrf.mxu0
        %v1146 = vadd.f32 0.0, %v1145
        %v1147 = vpop.f32.mrf.mxu0
        %v1148 = vadd.f32 0.0, %v1147
        %1149 = vmatprep.mubr.bf16.mxu0 0
        %1150 = vmatmul.mubr.bf16.gmra.mxu0 %v1049
        %v1151 = vpop.f32.mrf.mxu0
        %v1152 = vadd.f32 0.0, %v1151
        %v1153 = vpop.f32.mrf.mxu0
        %v1154 = vadd.f32 0.0, %v1153
        %v1155 = vpop.f32.mrf.mxu0
        %v1156 = vadd.f32 0.0, %v1155
        %v1157 = vpop.f32.mrf.mxu0
        %v1158 = vadd.f32 0.0, %v1157
        %1159 = vmatprep.mubr.bf16.mxu0 0
        %1160 = vmatmul.mubr.bf16.gmra.mxu0 %v1052
        %v1161 = vpop.f32.mrf.mxu0
        %v1162 = vadd.f32 0.0, %v1161
        %v1163 = vpop.f32.mrf.mxu0
        %v1164 = vadd.f32 0.0, %v1163
        %v1165 = vpop.f32.mrf.mxu0
        %v1166 = vadd.f32 0.0, %v1165
        %v1167 = vpop.f32.mrf.mxu0
        %v1168 = vadd.f32 0.0, %v1167
        %1169 = vmatprep.mubr.bf16.mxu0 0
        %1170 = vmatmul.mubr.bf16.gmra.mxu0 %v1055
        %v1171 = vpop.f32.mrf.mxu0
        %v1172 = vadd.f32 0.0, %v1171
        %v1173 = vpop.f32.mrf.mxu0
        %v1174 = vadd.f32 0.0, %v1173
        %v1175 = vpop.f32.mrf.mxu0
        %v1176 = vadd.f32 0.0, %v1175
        %v1177 = vpop.f32.mrf.mxu0
        %v1178 = vadd.f32 0.0, %v1177
        %1179 = vmatprep.mubr.bf16.mxu0 0
        %1180 = vmatmul.mubr.bf16.gmra.mxu0 %v1058
        %v1181 = vpop.f32.mrf.mxu0
        %v1182 = vadd.f32 0.0, %v1181
        %v1183 = vpop.f32.mrf.mxu0
        %v1184 = vadd.f32 0.0, %v1183
        %v1185 = vpop.f32.mrf.mxu0
        %v1186 = vadd.f32 0.0, %v1185
        %v1187 = vpop.f32.mrf.mxu0
        %v1188 = vadd.f32 0.0, %v1187
        %1189 = vmatprep.mubr.bf16.mxu0 0
        %1190 = vmatmul.mubr.bf16.gmra.mxu0 %v1061
        %v1191 = vpop.f32.mrf.mxu0
        %v1192 = vadd.f32 0.0, %v1191
        %v1193 = vpop.f32.mrf.mxu0
        %v1194 = vadd.f32 0.0, %v1193
        %v1195 = vpop.f32.mrf.mxu0
        %v1196 = vadd.f32 0.0, %v1195
        %v1197 = vpop.f32.mrf.mxu0
        %v1198 = vadd.f32 0.0, %v1197
        %1199 = vmatprep.mubr.bf16.mxu0 0
        %1200 = vmatmul.mubr.bf16.gmra.mxu0 %v1064
        %v1201 = vpop.f32.mrf.mxu0
        %v1202 = vadd.f32 0.0, %v1201
        %v1203 = vpop.f32.mrf.mxu0
        %v1204 = vadd.f32 0.0, %v1203
        %v1205 = vpop.f32.mrf.mxu0
        %v1206 = vadd.f32 0.0, %v1205
        %v1207 = vpop.f32.mrf.mxu0
        %v1208 = vadd.f32 0.0, %v1207
        %1209 = vmatprep.mubr.bf16.mxu0 0
        %1210 = vmatmul.mubr.bf16.gmra.mxu0 %v1067
        %v1211 = vpop.f32.mrf.mxu0
        %v1212 = vadd.f32 0.0, %v1211
        %v1213 = vpop.f32.mrf.mxu0
        %v1214 = vadd.f32 0.0, %v1213
        %v1215 = vpop.f32.mrf.mxu0
        %v1216 = vadd.f32 0.0, %v1215
        %v1217 = vpop.f32.mrf.mxu0
        %v1218 = vadd.f32 0.0, %v1217
        %1219 = vmatprep.mubr.bf16.mxu0 0
        %1220 = vmatmul.mubr.bf16.gmra.mxu0 %v1070
        %v1221 = vpop.f32.mrf.mxu0
        %v1222 = vadd.f32 0.0, %v1221
        %v1223 = vpop.f32.mrf.mxu0
        %v1224 = vadd.f32 0.0, %v1223
        %v1225 = vpop.f32.mrf.mxu0
        %v1226 = vadd.f32 0.0, %v1225
        %v1227 = vpop.f32.mrf.mxu0
        %v1228 = vadd.f32 0.0, %v1227
        %1229 = vmatprep.mubr.bf16.mxu0 0
        %1230 = vmatmul.mubr.bf16.gmra.mxu0 %v1073
        %v1231 = vpop.f32.mrf.mxu0
        %v1232 = vadd.f32 0.0, %v1231
        %v1233 = vpop.f32.mrf.mxu0
        %v1234 = vadd.f32 0.0, %v1233
        %v1235 = vpop.f32.mrf.mxu0
        %v1236 = vadd.f32 0.0, %v1235
        %v1237 = vpop.f32.mrf.mxu0
        %v1238 = vadd.f32 0.0, %v1237
        %1239 = vmatprep.mubr.bf16.mxu0 0
        %1240 = vmatmul.mubr.bf16.gmra.mxu0 %v1076
        %v1241 = vpop.f32.mrf.mxu0
        %v1242 = vadd.f32 0.0, %v1241
        %v1243 = vpop.f32.mrf.mxu0
        %v1244 = vadd.f32 0.0, %v1243
        %v1245 = vpop.f32.mrf.mxu0
        %v1246 = vadd.f32 0.0, %v1245
        %v1247 = vpop.f32.mrf.mxu0
        %v1248 = vadd.f32 0.0, %v1247
        %1249 = vmatprep.mubr.bf16.mxu0 0
        %1250 = vmatmul.mubr.bf16.gmra.mxu0 %v1079
        %v1251 = vpop.f32.mrf.mxu0
        %v1252 = vadd.f32 0.0, %v1251
        %v1253 = vpop.f32.mrf.mxu0
        %v1254 = vadd.f32 0.0, %v1253
        %v1255 = vpop.f32.mrf.mxu0
        %v1256 = vadd.f32 0.0, %v1255
        %v1257 = vpop.f32.mrf.mxu0
        %v1258 = vadd.f32 0.0, %v1257
        %1259 = vmatprep.mubr.bf16.mxu0 0
        %1260 = vmatmul.mubr.bf16.gmra.mxu0 %v1082
        %v1261 = vpop.f32.mrf.mxu0
        %v1262 = vadd.f32 0.0, %v1261
        %v1263 = vpop.f32.mrf.mxu0
        %v1264 = vadd.f32 0.0, %v1263
        %v1265 = vpop.f32.mrf.mxu0
        %v1266 = vadd.f32 0.0, %v1265
        %v1267 = vpop.f32.mrf.mxu0
        %v1268 = vadd.f32 0.0, %v1267
        %1269 = vmatprep.mubr.bf16.mxu0 0
        %1270 = vmatmul.mubr.bf16.gmra.mxu0 %v1085
        %v1271 = vpop.f32.mrf.mxu0
        %v1272 = vadd.f32 0.0, %v1271
        %v1273 = vpop.f32.mrf.mxu0
        %v1274 = vadd.f32 0.0, %v1273
        %v1275 = vpop.f32.mrf.mxu0
        %v1276 = vadd.f32 0.0, %v1275
        %v1277 = vpop.f32.mrf.mxu0
        %v1278 = vadd.f32 0.0, %v1277
        %1279 = vmatprep.mubr.bf16.mxu0 0
        %1280 = vmatmul.mubr.bf16.gmra.mxu0 %v1088
        %v1281 = vpop.f32.mrf.mxu0
        %v1282 = vadd.f32 0.0, %v1281
        %v1283 = vpop.f32.mrf.mxu0
        %v1284 = vadd.f32 0.0, %v1283
        %v1285 = vpop.f32.mrf.mxu0
        %v1286 = vadd.f32 0.0, %v1285
        %v1287 = vpop.f32.mrf.mxu0
        %v1288 = vadd.f32 0.0, %v1287
        %1289 = vdwg.mxu0
        %v1291 = vlaneseq
        %v1292 = vshrl.u32 %v1291, 7
        %v1293 = vsub.s32 0, %v1292
        %v1294 = vrot.slane %v1030, %v1293
        %v1295 = vlaneseq
        %v1296 = vshrl.u32 %v1295, 7
        %v1297 = vsub.s32 1, %v1296
        %v1298 = vrot.slane %v1030, %v1297
        %v1301 = vmul.f32 %v1132, %v1294
        %v1302 = vmul.f32 %v1134, %v1298
        %v1303 = vmul.f32 %v1136, %v1294
        %v1304 = vmul.f32 %v1138, %v1298
        %v1305 = vmul.f32 %v1142, %v1294
        %v1306 = vmul.f32 %v1144, %v1298
        %v1307 = vmul.f32 %v1146, %v1294
        %v1308 = vmul.f32 %v1148, %v1298
        %v1309 = vmul.f32 %v1152, %v1294
        %v1310 = vmul.f32 %v1154, %v1298
        %v1311 = vmul.f32 %v1156, %v1294
        %v1312 = vmul.f32 %v1158, %v1298
        %v1313 = vmul.f32 %v1162, %v1294
        %v1314 = vmul.f32 %v1164, %v1298
        %v1315 = vmul.f32 %v1166, %v1294
        %v1316 = vmul.f32 %v1168, %v1298
        %v1317 = vmul.f32 %v1172, %v1294
        %v1318 = vmul.f32 %v1174, %v1298
        %v1319 = vmul.f32 %v1176, %v1294
        %v1320 = vmul.f32 %v1178, %v1298
        %v1321 = vmul.f32 %v1182, %v1294
        %v1322 = vmul.f32 %v1184, %v1298
        %v1323 = vmul.f32 %v1186, %v1294
        %v1324 = vmul.f32 %v1188, %v1298
        %v1325 = vmul.f32 %v1192, %v1294
        %v1326 = vmul.f32 %v1194, %v1298
        %v1327 = vmul.f32 %v1196, %v1294
        %v1328 = vmul.f32 %v1198, %v1298
        %v1329 = vmul.f32 %v1202, %v1294
        %v1330 = vmul.f32 %v1204, %v1298
        %v1331 = vmul.f32 %v1206, %v1294
        %v1332 = vmul.f32 %v1208, %v1298
        %v1333 = vmul.f32 %v1212, %v1294
        %v1334 = vmul.f32 %v1214, %v1298
        %v1335 = vmul.f32 %v1216, %v1294
        %v1336 = vmul.f32 %v1218, %v1298
        %v1337 = vmul.f32 %v1222, %v1294
        %v1338 = vmul.f32 %v1224, %v1298
        %v1339 = vmul.f32 %v1226, %v1294
        %v1340 = vmul.f32 %v1228, %v1298
        %v1341 = vmul.f32 %v1232, %v1294
        %v1342 = vmul.f32 %v1234, %v1298
        %v1343 = vmul.f32 %v1236, %v1294
        %v1344 = vmul.f32 %v1238, %v1298
        %v1345 = vmul.f32 %v1242, %v1294
        %v1346 = vmul.f32 %v1244, %v1298
        %v1347 = vmul.f32 %v1246, %v1294
        %v1348 = vmul.f32 %v1248, %v1298
        %v1349 = vmul.f32 %v1252, %v1294
        %v1350 = vmul.f32 %v1254, %v1298
        %v1351 = vmul.f32 %v1256, %v1294
        %v1352 = vmul.f32 %v1258, %v1298
        %v1353 = vmul.f32 %v1262, %v1294
        %v1354 = vmul.f32 %v1264, %v1298
        %v1355 = vmul.f32 %v1266, %v1294
        %v1356 = vmul.f32 %v1268, %v1298
        %v1357 = vmul.f32 %v1272, %v1294
        %v1358 = vmul.f32 %v1274, %v1298
        %v1359 = vmul.f32 %v1276, %v1294
        %v1360 = vmul.f32 %v1278, %v1298
        %v1361 = vmul.f32 %v1282, %v1294
        %v1362 = vmul.f32 %v1284, %v1298
        %v1363 = vmul.f32 %v1286, %v1294
        %v1364 = vmul.f32 %v1288, %v1298
        %v1366 = vlaneseq
        %v1367 = vshrl.u32 %v1366, 7
        %v1368 = vsub.s32 0, %v1367
        %v1369 = vrot.slane %v1031, %v1368
        %v1370 = vlaneseq
        %v1371 = vshrl.u32 %v1370, 7
        %v1372 = vsub.s32 1, %v1371
        %v1373 = vrot.slane %v1031, %v1372
        %v1376 = vadd.f32 %v1301, %v1369
        %v1377 = vadd.f32 %v1302, %v1373
        %v1378 = vadd.f32 %v1303, %v1369
        %v1379 = vadd.f32 %v1304, %v1373
        %v1380 = vadd.f32 %v1305, %v1369
        %v1381 = vadd.f32 %v1306, %v1373
        %v1382 = vadd.f32 %v1307, %v1369
        %v1383 = vadd.f32 %v1308, %v1373
        %v1384 = vadd.f32 %v1309, %v1369
        %v1385 = vadd.f32 %v1310, %v1373
        %v1386 = vadd.f32 %v1311, %v1369
        %v1387 = vadd.f32 %v1312, %v1373
        %v1388 = vadd.f32 %v1313, %v1369
        %v1389 = vadd.f32 %v1314, %v1373
        %v1390 = vadd.f32 %v1315, %v1369
        %v1391 = vadd.f32 %v1316, %v1373
        %v1392 = vadd.f32 %v1317, %v1369
        %v1393 = vadd.f32 %v1318, %v1373
        %v1394 = vadd.f32 %v1319, %v1369
        %v1395 = vadd.f32 %v1320, %v1373
        %v1396 = vadd.f32 %v1321, %v1369
        %v1397 = vadd.f32 %v1322, %v1373
        %v1398 = vadd.f32 %v1323, %v1369
        %v1399 = vadd.f32 %v1324, %v1373
        %v1400 = vadd.f32 %v1325, %v1369
        %v1401 = vadd.f32 %v1326, %v1373
        %v1402 = vadd.f32 %v1327, %v1369
        %v1403 = vadd.f32 %v1328, %v1373
        %v1404 = vadd.f32 %v1329, %v1369
        %v1405 = vadd.f32 %v1330, %v1373
        %v1406 = vadd.f32 %v1331, %v1369
        %v1407 = vadd.f32 %v1332, %v1373
        %v1408 = vadd.f32 %v1333, %v1369
        %v1409 = vadd.f32 %v1334, %v1373
        %v1410 = vadd.f32 %v1335, %v1369
        %v1411 = vadd.f32 %v1336, %v1373
        %v1412 = vadd.f32 %v1337, %v1369
        %v1413 = vadd.f32 %v1338, %v1373
        %v1414 = vadd.f32 %v1339, %v1369
        %v1415 = vadd.f32 %v1340, %v1373
        %v1416 = vadd.f32 %v1341, %v1369
        %v1417 = vadd.f32 %v1342, %v1373
        %v1418 = vadd.f32 %v1343, %v1369
        %v1419 = vadd.f32 %v1344, %v1373
        %v1420 = vadd.f32 %v1345, %v1369
        %v1421 = vadd.f32 %v1346, %v1373
        %v1422 = vadd.f32 %v1347, %v1369
        %v1423 = vadd.f32 %v1348, %v1373
        %v1424 = vadd.f32 %v1349, %v1369
        %v1425 = vadd.f32 %v1350, %v1373
        %v1426 = vadd.f32 %v1351, %v1369
        %v1427 = vadd.f32 %v1352, %v1373
        %v1428 = vadd.f32 %v1353, %v1369
        %v1429 = vadd.f32 %v1354, %v1373
        %v1430 = vadd.f32 %v1355, %v1369
        %v1431 = vadd.f32 %v1356, %v1373
        %v1432 = vadd.f32 %v1357, %v1369
        %v1433 = vadd.f32 %v1358, %v1373
        %v1434 = vadd.f32 %v1359, %v1369
        %v1435 = vadd.f32 %v1360, %v1373
        %v1436 = vadd.f32 %v1361, %v1369
        %v1437 = vadd.f32 %v1362, %v1373
        %v1438 = vadd.f32 %v1363, %v1369
        %v1439 = vadd.f32 %v1364, %v1373
        %vm1440 = vcmp.ge.f32.partialorder %v1376, 0.0
        %vm1441 = vcmp.ge.f32.partialorder %v1377, 0.0
        %vm1442 = vcmp.ge.f32.partialorder %v1378, 0.0
        %vm1443 = vcmp.ge.f32.partialorder %v1379, 0.0
        %vm1444 = vcmp.ge.f32.partialorder %v1380, 0.0
        %vm1445 = vcmp.ge.f32.partialorder %v1381, 0.0
        %vm1446 = vcmp.ge.f32.partialorder %v1382, 0.0
        %vm1447 = vcmp.ge.f32.partialorder %v1383, 0.0
        %vm1448 = vcmp.ge.f32.partialorder %v1384, 0.0
        %vm1449 = vcmp.ge.f32.partialorder %v1385, 0.0
        %vm1450 = vcmp.ge.f32.partialorder %v1386, 0.0
        %vm1451 = vcmp.ge.f32.partialorder %v1387, 0.0
        %vm1452 = vcmp.ge.f32.partialorder %v1388, 0.0
        %vm1453 = vcmp.ge.f32.partialorder %v1389, 0.0
        %vm1454 = vcmp.ge.f32.partialorder %v1390, 0.0
        %vm1455 = vcmp.ge.f32.partialorder %v1391, 0.0
        %vm1456 = vcmp.ge.f32.partialorder %v1392, 0.0
        %vm1457 = vcmp.ge.f32.partialorder %v1393, 0.0
        %vm1458 = vcmp.ge.f32.partialorder %v1394, 0.0
        %vm1459 = vcmp.ge.f32.partialorder %v1395, 0.0
        %vm1460 = vcmp.ge.f32.partialorder %v1396, 0.0
        %vm1461 = vcmp.ge.f32.partialorder %v1397, 0.0
        %vm1462 = vcmp.ge.f32.partialorder %v1398, 0.0
        %vm1463 = vcmp.ge.f32.partialorder %v1399, 0.0
        %vm1464 = vcmp.ge.f32.partialorder %v1400, 0.0
        %vm1465 = vcmp.ge.f32.partialorder %v1401, 0.0
        %vm1466 = vcmp.ge.f32.partialorder %v1402, 0.0
        %vm1467 = vcmp.ge.f32.partialorder %v1403, 0.0
        %vm1468 = vcmp.ge.f32.partialorder %v1404, 0.0
        %vm1469 = vcmp.ge.f32.partialorder %v1405, 0.0
        %vm1470 = vcmp.ge.f32.partialorder %v1406, 0.0
        %vm1471 = vcmp.ge.f32.partialorder %v1407, 0.0
        %vm1472 = vcmp.ge.f32.partialorder %v1408, 0.0
        %vm1473 = vcmp.ge.f32.partialorder %v1409, 0.0
        %vm1474 = vcmp.ge.f32.partialorder %v1410, 0.0
        %vm1475 = vcmp.ge.f32.partialorder %v1411, 0.0
        %vm1476 = vcmp.ge.f32.partialorder %v1412, 0.0
        %vm1477 = vcmp.ge.f32.partialorder %v1413, 0.0
        %vm1478 = vcmp.ge.f32.partialorder %v1414, 0.0
        %vm1479 = vcmp.ge.f32.partialorder %v1415, 0.0
        %vm1480 = vcmp.ge.f32.partialorder %v1416, 0.0
        %vm1481 = vcmp.ge.f32.partialorder %v1417, 0.0
        %vm1482 = vcmp.ge.f32.partialorder %v1418, 0.0
        %vm1483 = vcmp.ge.f32.partialorder %v1419, 0.0
        %vm1484 = vcmp.ge.f32.partialorder %v1420, 0.0
        %vm1485 = vcmp.ge.f32.partialorder %v1421, 0.0
        %vm1486 = vcmp.ge.f32.partialorder %v1422, 0.0
        %vm1487 = vcmp.ge.f32.partialorder %v1423, 0.0
        %vm1488 = vcmp.ge.f32.partialorder %v1424, 0.0
        %vm1489 = vcmp.ge.f32.partialorder %v1425, 0.0
        %vm1490 = vcmp.ge.f32.partialorder %v1426, 0.0
        %vm1491 = vcmp.ge.f32.partialorder %v1427, 0.0
        %vm1492 = vcmp.ge.f32.partialorder %v1428, 0.0
        %vm1493 = vcmp.ge.f32.partialorder %v1429, 0.0
        %vm1494 = vcmp.ge.f32.partialorder %v1430, 0.0
        %vm1495 = vcmp.ge.f32.partialorder %v1431, 0.0
        %vm1496 = vcmp.ge.f32.partialorder %v1432, 0.0
        %vm1497 = vcmp.ge.f32.partialorder %v1433, 0.0
        %vm1498 = vcmp.ge.f32.partialorder %v1434, 0.0
        %vm1499 = vcmp.ge.f32.partialorder %v1435, 0.0
        %vm1500 = vcmp.ge.f32.partialorder %v1436, 0.0
        %vm1501 = vcmp.ge.f32.partialorder %v1437, 0.0
        %vm1502 = vcmp.ge.f32.partialorder %v1438, 0.0
        %vm1503 = vcmp.ge.f32.partialorder %v1439, 0.0
        %v1504 = vmul.f32 %v1376, 0.2
        %v1505 = vmul.f32 %v1377, 0.2
        %v1506 = vmul.f32 %v1378, 0.2
        %v1507 = vmul.f32 %v1379, 0.2
        %v1508 = vmul.f32 %v1380, 0.2
        %v1509 = vmul.f32 %v1381, 0.2
        %v1510 = vmul.f32 %v1382, 0.2
        %v1511 = vmul.f32 %v1383, 0.2
        %v1512 = vmul.f32 %v1384, 0.2
        %v1513 = vmul.f32 %v1385, 0.2
        %v1514 = vmul.f32 %v1386, 0.2
        %v1515 = vmul.f32 %v1387, 0.2
        %v1516 = vmul.f32 %v1388, 0.2
        %v1517 = vmul.f32 %v1389, 0.2
        %v1518 = vmul.f32 %v1390, 0.2
        %v1519 = vmul.f32 %v1391, 0.2
        %v1520 = vmul.f32 %v1392, 0.2
        %v1521 = vmul.f32 %v1393, 0.2
        %v1522 = vmul.f32 %v1394, 0.2
        %v1523 = vmul.f32 %v1395, 0.2
        %v1524 = vmul.f32 %v1396, 0.2
        %v1525 = vmul.f32 %v1397, 0.2
        %v1526 = vmul.f32 %v1398, 0.2
        %v1527 = vmul.f32 %v1399, 0.2
        %v1528 = vmul.f32 %v1400, 0.2
        %v1529 = vmul.f32 %v1401, 0.2
        %v1530 = vmul.f32 %v1402, 0.2
        %v1531 = vmul.f32 %v1403, 0.2
        %v1532 = vmul.f32 %v1404, 0.2
        %v1533 = vmul.f32 %v1405, 0.2
        %v1534 = vmul.f32 %v1406, 0.2
        %v1535 = vmul.f32 %v1407, 0.2
        %v1536 = vmul.f32 %v1408, 0.2
        %v1537 = vmul.f32 %v1409, 0.2
        %v1538 = vmul.f32 %v1410, 0.2
        %v1539 = vmul.f32 %v1411, 0.2
        %v1540 = vmul.f32 %v1412, 0.2
        %v1541 = vmul.f32 %v1413, 0.2
        %v1542 = vmul.f32 %v1414, 0.2
        %v1543 = vmul.f32 %v1415, 0.2
        %v1544 = vmul.f32 %v1416, 0.2
        %v1545 = vmul.f32 %v1417, 0.2
        %v1546 = vmul.f32 %v1418, 0.2
        %v1547 = vmul.f32 %v1419, 0.2
        %v1548 = vmul.f32 %v1420, 0.2
        %v1549 = vmul.f32 %v1421, 0.2
        %v1550 = vmul.f32 %v1422, 0.2
        %v1551 = vmul.f32 %v1423, 0.2
        %v1552 = vmul.f32 %v1424, 0.2
        %v1553 = vmul.f32 %v1425, 0.2
        %v1554 = vmul.f32 %v1426, 0.2
        %v1555 = vmul.f32 %v1427, 0.2
        %v1556 = vmul.f32 %v1428, 0.2
        %v1557 = vmul.f32 %v1429, 0.2
        %v1558 = vmul.f32 %v1430, 0.2
        %v1559 = vmul.f32 %v1431, 0.2
        %v1560 = vmul.f32 %v1432, 0.2
        %v1561 = vmul.f32 %v1433, 0.2
        %v1562 = vmul.f32 %v1434, 0.2
        %v1563 = vmul.f32 %v1435, 0.2
        %v1564 = vmul.f32 %v1436, 0.2
        %v1565 = vmul.f32 %v1437, 0.2
        %v1566 = vmul.f32 %v1438, 0.2
        %v1567 = vmul.f32 %v1439, 0.2
        %v1568 = vsel %vm1440, %v1376, %v1504
        %v1569 = vsel %vm1441, %v1377, %v1505
        %v1570 = vsel %vm1442, %v1378, %v1506
        %v1571 = vsel %vm1443, %v1379, %v1507
        %v1572 = vsel %vm1444, %v1380, %v1508
        %v1573 = vsel %vm1445, %v1381, %v1509
        %v1574 = vsel %vm1446, %v1382, %v1510
        %v1575 = vsel %vm1447, %v1383, %v1511
        %v1576 = vsel %vm1448, %v1384, %v1512
        %v1577 = vsel %vm1449, %v1385, %v1513
        %v1578 = vsel %vm1450, %v1386, %v1514
        %v1579 = vsel %vm1451, %v1387, %v1515
        %v1580 = vsel %vm1452, %v1388, %v1516
        %v1581 = vsel %vm1453, %v1389, %v1517
        %v1582 = vsel %vm1454, %v1390, %v1518
        %v1583 = vsel %vm1455, %v1391, %v1519
        %v1584 = vsel %vm1456, %v1392, %v1520
        %v1585 = vsel %vm1457, %v1393, %v1521
        %v1586 = vsel %vm1458, %v1394, %v1522
        %v1587 = vsel %vm1459, %v1395, %v1523
        %v1588 = vsel %vm1460, %v1396, %v1524
        %v1589 = vsel %vm1461, %v1397, %v1525
        %v1590 = vsel %vm1462, %v1398, %v1526
        %v1591 = vsel %vm1463, %v1399, %v1527
        %v1592 = vsel %vm1464, %v1400, %v1528
        %v1593 = vsel %vm1465, %v1401, %v1529
        %v1594 = vsel %vm1466, %v1402, %v1530
        %v1595 = vsel %vm1467, %v1403, %v1531
        %v1596 = vsel %vm1468, %v1404, %v1532
        %v1597 = vsel %vm1469, %v1405, %v1533
        %v1598 = vsel %vm1470, %v1406, %v1534
        %v1599 = vsel %vm1471, %v1407, %v1535
        %v1600 = vsel %vm1472, %v1408, %v1536
        %v1601 = vsel %vm1473, %v1409, %v1537
        %v1602 = vsel %vm1474, %v1410, %v1538
        %v1603 = vsel %vm1475, %v1411, %v1539
        %v1604 = vsel %vm1476, %v1412, %v1540
        %v1605 = vsel %vm1477, %v1413, %v1541
        %v1606 = vsel %vm1478, %v1414, %v1542
        %v1607 = vsel %vm1479, %v1415, %v1543
        %v1608 = vsel %vm1480, %v1416, %v1544
        %v1609 = vsel %vm1481, %v1417, %v1545
        %v1610 = vsel %vm1482, %v1418, %v1546
        %v1611 = vsel %vm1483, %v1419, %v1547
        %v1612 = vsel %vm1484, %v1420, %v1548
        %v1613 = vsel %vm1485, %v1421, %v1549
        %v1614 = vsel %vm1486, %v1422, %v1550
        %v1615 = vsel %vm1487, %v1423, %v1551
        %v1616 = vsel %vm1488, %v1424, %v1552
        %v1617 = vsel %vm1489, %v1425, %v1553
        %v1618 = vsel %vm1490, %v1426, %v1554
        %v1619 = vsel %vm1491, %v1427, %v1555
        %v1620 = vsel %vm1492, %v1428, %v1556
        %v1621 = vsel %vm1493, %v1429, %v1557
        %v1622 = vsel %vm1494, %v1430, %v1558
        %v1623 = vsel %vm1495, %v1431, %v1559
        %v1624 = vsel %vm1496, %v1432, %v1560
        %v1625 = vsel %vm1497, %v1433, %v1561
        %v1626 = vsel %vm1498, %v1434, %v1562
        %v1627 = vsel %vm1499, %v1435, %v1563
        %v1628 = vsel %vm1500, %v1436, %v1564
        %v1629 = vsel %vm1501, %v1437, %v1565
        %v1630 = vsel %vm1502, %v1438, %v1566
        %v1631 = vsel %vm1503, %v1439, %v1567
        %v1632 = vpack.c.bf16 %v1571, %v1569
        %v1633 = vpack.c.bf16 %v1575, %v1573
        %v1634 = vpack.c.bf16 %v1579, %v1577
        %v1635 = vpack.c.bf16 %v1583, %v1581
        %v1636 = vpack.c.bf16 %v1587, %v1585
        %v1637 = vpack.c.bf16 %v1591, %v1589
        %v1638 = vpack.c.bf16 %v1595, %v1593
        %v1639 = vpack.c.bf16 %v1599, %v1597
        %v1640 = vpack.c.bf16 %v1603, %v1601
        %v1641 = vpack.c.bf16 %v1607, %v1605
        %v1642 = vpack.c.bf16 %v1611, %v1609
        %v1643 = vpack.c.bf16 %v1615, %v1613
        %v1644 = vpack.c.bf16 %v1619, %v1617
        %v1645 = vpack.c.bf16 %v1623, %v1621
        %v1646 = vpack.c.bf16 %v1627, %v1625
        %v1647 = vpack.c.bf16 %v1631, %v1629
        %v1648 = vld [vmem:[%s4] sm:$0xf]
        %v1649 = vld [vmem:[%s4 + $0x4] sm:$0xf]
        %v1650 = vld [vmem:[%s4 + $0x8] sm:$0xf]
        %v1651 = vld [vmem:[%s4 + $0xc] sm:$0xf]
        %v1652 = vld [vmem:[%s4 + $0x10] sm:$0xf]
        %v1653 = vld [vmem:[%s4 + $0x14] sm:$0xf]
        %v1654 = vld [vmem:[%s4 + $0x18] sm:$0xf]
        %v1655 = vld [vmem:[#allocation2] sm:$0x1]
        %v1656 = vld [vmem:[#allocation5] sm:$0x1]
        %v1658 = vshrl.u32 %v1632, 16
        %v1660 = vrot.slane %v1658, 6
        %v1661 = vshll.u32 %v1632, 16
        %v1663 = vrot.slane %v1661, 7
        %v1664 = vor.u32 %v1660, %v1663
        %v1666 = vshrl.u32 %v1633, 16
        %v1668 = vrot.slane %v1666, 6
        %v1669 = vshll.u32 %v1633, 16
        %v1671 = vrot.slane %v1669, 7
        %v1672 = vor.u32 %v1668, %v1671
        %v1674 = vshrl.u32 %v1634, 16
        %v1676 = vrot.slane %v1674, 6
        %v1677 = vshll.u32 %v1634, 16
        %v1679 = vrot.slane %v1677, 7
        %v1680 = vor.u32 %v1676, %v1679
        %v1682 = vshrl.u32 %v1635, 16
        %v1684 = vrot.slane %v1682, 6
        %v1685 = vshll.u32 %v1635, 16
        %v1687 = vrot.slane %v1685, 7
        %v1688 = vor.u32 %v1684, %v1687
        %v1690 = vshrl.u32 %v1636, 16
        %v1692 = vrot.slane %v1690, 6
        %v1693 = vshll.u32 %v1636, 16
        %v1695 = vrot.slane %v1693, 7
        %v1696 = vor.u32 %v1692, %v1695
        %v1698 = vshrl.u32 %v1637, 16
        %v1700 = vrot.slane %v1698, 6
        %v1701 = vshll.u32 %v1637, 16
        %v1703 = vrot.slane %v1701, 7
        %v1704 = vor.u32 %v1700, %v1703
        %v1706 = vshrl.u32 %v1638, 16
        %v1708 = vrot.slane %v1706, 6
        %v1709 = vshll.u32 %v1638, 16
        %v1711 = vrot.slane %v1709, 7
        %v1712 = vor.u32 %v1708, %v1711
        %v1714 = vshrl.u32 %v1639, 16
        %v1716 = vrot.slane %v1714, 6
        %v1717 = vshll.u32 %v1639, 16
        %v1719 = vrot.slane %v1717, 7
        %v1720 = vor.u32 %v1716, %v1719
        %v1722 = vshrl.u32 %v1640, 16
        %v1724 = vrot.slane %v1722, 6
        %v1725 = vshll.u32 %v1640, 16
        %v1727 = vrot.slane %v1725, 7
        %v1728 = vor.u32 %v1724, %v1727
        %v1730 = vshrl.u32 %v1641, 16
        %v1732 = vrot.slane %v1730, 6
        %v1733 = vshll.u32 %v1641, 16
        %v1735 = vrot.slane %v1733, 7
        %v1736 = vor.u32 %v1732, %v1735
        %v1738 = vshrl.u32 %v1642, 16
        %v1740 = vrot.slane %v1738, 6
        %v1741 = vshll.u32 %v1642, 16
        %v1743 = vrot.slane %v1741, 7
        %v1744 = vor.u32 %v1740, %v1743
        %v1746 = vshrl.u32 %v1643, 16
        %v1748 = vrot.slane %v1746, 6
        %v1749 = vshll.u32 %v1643, 16
        %v1751 = vrot.slane %v1749, 7
        %v1752 = vor.u32 %v1748, %v1751
        %v1754 = vshrl.u32 %v1644, 16
        %v1756 = vrot.slane %v1754, 6
        %v1757 = vshll.u32 %v1644, 16
        %v1759 = vrot.slane %v1757, 7
        %v1760 = vor.u32 %v1756, %v1759
        %v1762 = vshrl.u32 %v1645, 16
        %v1764 = vrot.slane %v1762, 6
        %v1765 = vshll.u32 %v1645, 16
        %v1767 = vrot.slane %v1765, 7
        %v1768 = vor.u32 %v1764, %v1767
        %v1770 = vshrl.u32 %v1646, 16
        %v1772 = vrot.slane %v1770, 6
        %v1773 = vshll.u32 %v1646, 16
        %v1775 = vrot.slane %v1773, 7
        %v1776 = vor.u32 %v1772, %v1775
        %v1778 = vshrl.u32 %v1647, 16
        %v1780 = vrot.slane %v1778, 6
        %v1781 = vshll.u32 %v1647, 16
        %v1783 = vrot.slane %v1781, 7
        %v1784 = vor.u32 %v1780, %v1783
        %1785 = vrot.lane.b32.xlu0 %v1664, 64
        %v1786 = vpop.permute.xlu0 %1785
        %1787 = vrot.lane.b32.xlu0 %v1672, 64
        %v1788 = vpop.permute.xlu0 %1787
        %1789 = vrot.lane.b32.xlu0 %v1680, 64
        %v1790 = vpop.permute.xlu0 %1789
        %1791 = vrot.lane.b32.xlu0 %v1688, 64
        %v1792 = vpop.permute.xlu0 %1791
        %1793 = vrot.lane.b32.xlu0 %v1696, 64
        %v1794 = vpop.permute.xlu0 %1793
        %1795 = vrot.lane.b32.xlu0 %v1704, 64
        %v1796 = vpop.permute.xlu0 %1795
        %1797 = vrot.lane.b32.xlu0 %v1712, 64
        %v1798 = vpop.permute.xlu0 %1797
        %1799 = vrot.lane.b32.xlu0 %v1720, 64
        %v1800 = vpop.permute.xlu0 %1799
        %1801 = vrot.lane.b32.xlu0 %v1728, 64
        %v1802 = vpop.permute.xlu0 %1801
        %1803 = vrot.lane.b32.xlu0 %v1736, 64
        %v1804 = vpop.permute.xlu0 %1803
        %1805 = vrot.lane.b32.xlu0 %v1744, 64
        %v1806 = vpop.permute.xlu0 %1805
        %1807 = vrot.lane.b32.xlu0 %v1752, 64
        %v1808 = vpop.permute.xlu0 %1807
        %1809 = vrot.lane.b32.xlu0 %v1760, 64
        %v1810 = vpop.permute.xlu0 %1809
        %1811 = vrot.lane.b32.xlu0 %v1768, 64
        %v1812 = vpop.permute.xlu0 %1811
        %1813 = vrot.lane.b32.xlu0 %v1776, 64
        %v1814 = vpop.permute.xlu0 %1813
        %1815 = vrot.lane.b32.xlu0 %v1784, 64
        %v1816 = vpop.permute.xlu0 %1815
        %vm1833 = vcmask 1041408
        %vm1834 = vsmask.f32 1280
        %vm1835 = vmand %vm1833, %vm1834
        %v1836 = vsel %vm1835, 0, %v1786
        %v1837 = vsel %vm1835, 0, %v1788
        %v1838 = vsel %vm1835, 0, %v1790
        %v1839 = vsel %vm1835, 0, %v1792
        %v1840 = vsel %vm1835, 0, %v1794
        %v1841 = vsel %vm1835, 0, %v1796
        %v1842 = vsel %vm1835, 0, %v1798
        %v1843 = vsel %vm1835, 0, %v1800
        %v1844 = vsel %vm1835, 0, %v1802
        %v1845 = vsel %vm1835, 0, %v1804
        %v1846 = vsel %vm1835, 0, %v1806
        %v1847 = vsel %vm1835, 0, %v1808
        %v1848 = vsel %vm1835, 0, %v1810
        %v1849 = vsel %vm1835, 0, %v1812
        %v1850 = vsel %vm1835, 0, %v1814
        %v1851 = vsel %vm1835, 0, %v1816
        %v1852 = vsel %vm1835, %v1786, 0
        %v1853 = vsel %vm1835, %v1788, 0
        %v1854 = vsel %vm1835, %v1790, 0
        %v1855 = vsel %vm1835, %v1792, 0
        %v1856 = vsel %vm1835, %v1794, 0
        %v1857 = vsel %vm1835, %v1796, 0
        %v1858 = vsel %vm1835, %v1798, 0
        %v1859 = vsel %vm1835, %v1800, 0
        %v1860 = vsel %vm1835, %v1802, 0
        %v1861 = vsel %vm1835, %v1804, 0
        %v1862 = vsel %vm1835, %v1806, 0
        %v1863 = vsel %vm1835, %v1808, 0
        %v1864 = vsel %vm1835, %v1810, 0
        %v1865 = vsel %vm1835, %v1812, 0
        %v1866 = vsel %vm1835, %v1814, 0
        %v1867 = vsel %vm1835, %v1816, 0
        %vm1868 = vsmask.f32 7424
        %v1870 = vshrl.u32 %v1836, 16
        %v1872 = vshll.u32 %v1836, 16
        %v1874 = vrot.slane %v1872, 1
        %v1875 = vor.u32 %v1870, %v1874
        %v1877 = vshll.u32 %v1852, 16
        %v1879 = vrot.slane %v1877, 1
        %v1880 = vsel %vm1868, %v1875, %v1879
        %v1882 = vshrl.u32 %v1837, 16
        %v1884 = vshll.u32 %v1837, 16
        %v1886 = vrot.slane %v1884, 1
        %v1887 = vor.u32 %v1882, %v1886
        %v1889 = vshll.u32 %v1853, 16
        %v1891 = vrot.slane %v1889, 1
        %v1892 = vsel %vm1868, %v1887, %v1891
        %v1894 = vshrl.u32 %v1838, 16
        %v1896 = vshll.u32 %v1838, 16
        %v1898 = vrot.slane %v1896, 1
        %v1899 = vor.u32 %v1894, %v1898
        %v1901 = vshll.u32 %v1854, 16
        %v1903 = vrot.slane %v1901, 1
        %v1904 = vsel %vm1868, %v1899, %v1903
        %v1906 = vshrl.u32 %v1839, 16
        %v1908 = vshll.u32 %v1839, 16
        %v1910 = vrot.slane %v1908, 1
        %v1911 = vor.u32 %v1906, %v1910
        %v1913 = vshll.u32 %v1855, 16
        %v1915 = vrot.slane %v1913, 1
        %v1916 = vsel %vm1868, %v1911, %v1915
        %v1918 = vshrl.u32 %v1840, 16
        %v1920 = vshll.u32 %v1840, 16
        %v1922 = vrot.slane %v1920, 1
        %v1923 = vor.u32 %v1918, %v1922
        %v1925 = vshll.u32 %v1856, 16
        %v1927 = vrot.slane %v1925, 1
        %v1928 = vsel %vm1868, %v1923, %v1927
        %v1930 = vshrl.u32 %v1841, 16
        %v1932 = vshll.u32 %v1841, 16
        %v1934 = vrot.slane %v1932, 1
        %v1935 = vor.u32 %v1930, %v1934
        %v1937 = vshll.u32 %v1857, 16
        %v1939 = vrot.slane %v1937, 1
        %v1940 = vsel %vm1868, %v1935, %v1939
        %v1942 = vshrl.u32 %v1842, 16
        %v1944 = vshll.u32 %v1842, 16
        %v1946 = vrot.slane %v1944, 1
        %v1947 = vor.u32 %v1942, %v1946
        %v1949 = vshll.u32 %v1858, 16
        %v1951 = vrot.slane %v1949, 1
        %v1952 = vsel %vm1868, %v1947, %v1951
        %v1954 = vshrl.u32 %v1843, 16
        %v1956 = vshll.u32 %v1843, 16
        %v1958 = vrot.slane %v1956, 1
        %v1959 = vor.u32 %v1954, %v1958
        %v1961 = vshll.u32 %v1859, 16
        %v1963 = vrot.slane %v1961, 1
        %v1964 = vsel %vm1868, %v1959, %v1963
        %v1966 = vshrl.u32 %v1844, 16
        %v1968 = vshll.u32 %v1844, 16
        %v1970 = vrot.slane %v1968, 1
        %v1971 = vor.u32 %v1966, %v1970
        %v1973 = vshll.u32 %v1860, 16
        %v1975 = vrot.slane %v1973, 1
        %v1976 = vsel %vm1868, %v1971, %v1975
        %v1978 = vshrl.u32 %v1845, 16
        %v1980 = vshll.u32 %v1845, 16
        %v1982 = vrot.slane %v1980, 1
        %v1983 = vor.u32 %v1978, %v1982
        %v1985 = vshll.u32 %v1861, 16
        %v1987 = vrot.slane %v1985, 1
        %v1988 = vsel %vm1868, %v1983, %v1987
        %v1990 = vshrl.u32 %v1846, 16
        %v1992 = vshll.u32 %v1846, 16
        %v1994 = vrot.slane %v1992, 1
        %v1995 = vor.u32 %v1990, %v1994
        %v1997 = vshll.u32 %v1862, 16
        %v1999 = vrot.slane %v1997, 1
        %v2000 = vsel %vm1868, %v1995, %v1999
        %v2002 = vshrl.u32 %v1847, 16
        %v2004 = vshll.u32 %v1847, 16
        %v2006 = vrot.slane %v2004, 1
        %v2007 = vor.u32 %v2002, %v2006
        %v2009 = vshll.u32 %v1863, 16
        %v2011 = vrot.slane %v2009, 1
        %v2012 = vsel %vm1868, %v2007, %v2011
        %v2014 = vshrl.u32 %v1848, 16
        %v2016 = vshll.u32 %v1848, 16
        %v2018 = vrot.slane %v2016, 1
        %v2019 = vor.u32 %v2014, %v2018
        %v2021 = vshll.u32 %v1864, 16
        %v2023 = vrot.slane %v2021, 1
        %v2024 = vsel %vm1868, %v2019, %v2023
        %v2026 = vshrl.u32 %v1849, 16
        %v2028 = vshll.u32 %v1849, 16
        %v2030 = vrot.slane %v2028, 1
        %v2031 = vor.u32 %v2026, %v2030
        %v2033 = vshll.u32 %v1865, 16
        %v2035 = vrot.slane %v2033, 1
        %v2036 = vsel %vm1868, %v2031, %v2035
        %v2038 = vshrl.u32 %v1850, 16
        %v2040 = vshll.u32 %v1850, 16
        %v2042 = vrot.slane %v2040, 1
        %v2043 = vor.u32 %v2038, %v2042
        %v2045 = vshll.u32 %v1866, 16
        %v2047 = vrot.slane %v2045, 1
        %v2048 = vsel %vm1868, %v2043, %v2047
        %v2050 = vshrl.u32 %v1851, 16
        %v2052 = vshll.u32 %v1851, 16
        %v2054 = vrot.slane %v2052, 1
        %v2055 = vor.u32 %v2050, %v2054
        %v2057 = vshll.u32 %v1867, 16
        %v2059 = vrot.slane %v2057, 1
        %v2060 = vsel %vm1868, %v2055, %v2059
        %2061 = vrot.lane.b32.xlu0 %v1880, 8
        %v2062 = vpop.permute.xlu0 %2061
        %2063 = vrot.lane.b32.xlu0 %v1892, 8
        %v2064 = vpop.permute.xlu0 %2063
        %2065 = vrot.lane.b32.xlu0 %v1904, 8
        %v2066 = vpop.permute.xlu0 %2065
        %2067 = vrot.lane.b32.xlu0 %v1916, 8
        %v2068 = vpop.permute.xlu0 %2067
        %2069 = vrot.lane.b32.xlu0 %v1928, 8
        %v2070 = vpop.permute.xlu0 %2069
        %2071 = vrot.lane.b32.xlu0 %v1940, 8
        %v2072 = vpop.permute.xlu0 %2071
        %2073 = vrot.lane.b32.xlu0 %v1952, 8
        %v2074 = vpop.permute.xlu0 %2073
        %2075 = vrot.lane.b32.xlu0 %v1964, 8
        %v2076 = vpop.permute.xlu0 %2075
        %2077 = vrot.lane.b32.xlu0 %v1976, 8
        %v2078 = vpop.permute.xlu0 %2077
        %2079 = vrot.lane.b32.xlu0 %v1988, 8
        %v2080 = vpop.permute.xlu0 %2079
        %2081 = vrot.lane.b32.xlu0 %v2000, 8
        %v2082 = vpop.permute.xlu0 %2081
        %2083 = vrot.lane.b32.xlu0 %v2012, 8
        %v2084 = vpop.permute.xlu0 %2083
        %2085 = vrot.lane.b32.xlu0 %v2024, 8
        %v2086 = vpop.permute.xlu0 %2085
        %2087 = vrot.lane.b32.xlu0 %v2036, 8
        %v2088 = vpop.permute.xlu0 %2087
        %2089 = vrot.lane.b32.xlu0 %v2048, 8
        %v2090 = vpop.permute.xlu0 %2089
        %2091 = vrot.lane.b32.xlu0 %v2060, 8
        %v2092 = vpop.permute.xlu0 %2091
        %vm2125 = vcmask 1046528
        %v2126 = vrot.slane %v1836, 1
        %v2127 = vrot.slane %v1852, 1
        %v2128 = vsel %vm2125, %v2126, %v2127
        %v2129 = vrot.slane %v1837, 1
        %v2130 = vrot.slane %v1853, 1
        %v2131 = vsel %vm2125, %v2129, %v2130
        %v2132 = vrot.slane %v1838, 1
        %v2133 = vrot.slane %v1854, 1
        %v2134 = vsel %vm2125, %v2132, %v2133
        %v2135 = vrot.slane %v1839, 1
        %v2136 = vrot.slane %v1855, 1
        %v2137 = vsel %vm2125, %v2135, %v2136
        %v2138 = vrot.slane %v1840, 1
        %v2139 = vrot.slane %v1856, 1
        %v2140 = vsel %vm2125, %v2138, %v2139
        %v2141 = vrot.slane %v1841, 1
        %v2142 = vrot.slane %v1857, 1
        %v2143 = vsel %vm2125, %v2141, %v2142
        %v2144 = vrot.slane %v1842, 1
        %v2145 = vrot.slane %v1858, 1
        %v2146 = vsel %vm2125, %v2144, %v2145
        %v2147 = vrot.slane %v1843, 1
        %v2148 = vrot.slane %v1859, 1
        %v2149 = vsel %vm2125, %v2147, %v2148
        %v2150 = vrot.slane %v1844, 1
        %v2151 = vrot.slane %v1860, 1
        %v2152 = vsel %vm2125, %v2150, %v2151
        %v2153 = vrot.slane %v1845, 1
        %v2154 = vrot.slane %v1861, 1
        %v2155 = vsel %vm2125, %v2153, %v2154
        %v2156 = vrot.slane %v1846, 1
        %v2157 = vrot.slane %v1862, 1
        %v2158 = vsel %vm2125, %v2156, %v2157
        %v2159 = vrot.slane %v1847, 1
        %v2160 = vrot.slane %v1863, 1
        %v2161 = vsel %vm2125, %v2159, %v2160
        %v2162 = vrot.slane %v1848, 1
        %v2163 = vrot.slane %v1864, 1
        %v2164 = vsel %vm2125, %v2162, %v2163
        %v2165 = vrot.slane %v1849, 1
        %v2166 = vrot.slane %v1865, 1
        %v2167 = vsel %vm2125, %v2165, %v2166
        %v2168 = vrot.slane %v1850, 1
        %v2169 = vrot.slane %v1866, 1
        %v2170 = vsel %vm2125, %v2168, %v2169
        %v2171 = vrot.slane %v1851, 1
        %v2172 = vrot.slane %v1867, 1
        %v2173 = vsel %vm2125, %v2171, %v2172
        %2174 = vrot.lane.b32.xlu0 %v2128, 16
        %v2175 = vpop.permute.xlu0 %2174
        %2176 = vrot.lane.b32.xlu0 %v2131, 16
        %v2177 = vpop.permute.xlu0 %2176
        %2178 = vrot.lane.b32.xlu0 %v2134, 16
        %v2179 = vpop.permute.xlu0 %2178
        %2180 = vrot.lane.b32.xlu0 %v2137, 16
        %v2181 = vpop.permute.xlu0 %2180
        %2182 = vrot.lane.b32.xlu0 %v2140, 16
        %v2183 = vpop.permute.xlu0 %2182
        %2184 = vrot.lane.b32.xlu0 %v2143, 16
        %v2185 = vpop.permute.xlu0 %2184
        %2186 = vrot.lane.b32.xlu0 %v2146, 16
        %v2187 = vpop.permute.xlu0 %2186
        %2188 = vrot.lane.b32.xlu0 %v2149, 16
        %v2189 = vpop.permute.xlu0 %2188
        %2190 = vrot.lane.b32.xlu0 %v2152, 16
        %v2191 = vpop.permute.xlu0 %2190
        %2192 = vrot.lane.b32.xlu0 %v2155, 16
        %v2193 = vpop.permute.xlu0 %2192
        %2194 = vrot.lane.b32.xlu0 %v2158, 16
        %v2195 = vpop.permute.xlu0 %2194
        %2196 = vrot.lane.b32.xlu0 %v2161, 16
        %v2197 = vpop.permute.xlu0 %2196
        %2198 = vrot.lane.b32.xlu0 %v2164, 16
        %v2199 = vpop.permute.xlu0 %2198
        %2200 = vrot.lane.b32.xlu0 %v2167, 16
        %v2201 = vpop.permute.xlu0 %2200
        %2202 = vrot.lane.b32.xlu0 %v2170, 16
        %v2203 = vpop.permute.xlu0 %2202
        %2204 = vrot.lane.b32.xlu0 %v2173, 16
        %v2205 = vpop.permute.xlu0 %2204
        %vm2206 = vsmask.f32 6400
        %v2207 = vrot.slane %v1870, 1
        %v2208 = vrot.slane %v1872, 2
        %v2209 = vor.u32 %v2207, %v2208
        %v2210 = vshrl.u32 %v1852, 16
        %v2212 = vrot.slane %v2210, 1
        %v2213 = vrot.slane %v1877, 2
        %v2214 = vor.u32 %v2212, %v2213
        %v2215 = vsel %vm2206, %v2209, %v2214
        %v2216 = vrot.slane %v1882, 1
        %v2217 = vrot.slane %v1884, 2
        %v2218 = vor.u32 %v2216, %v2217
        %v2219 = vshrl.u32 %v1853, 16
        %v2221 = vrot.slane %v2219, 1
        %v2222 = vrot.slane %v1889, 2
        %v2223 = vor.u32 %v2221, %v2222
        %v2224 = vsel %vm2206, %v2218, %v2223
        %v2225 = vrot.slane %v1894, 1
        %v2226 = vrot.slane %v1896, 2
        %v2227 = vor.u32 %v2225, %v2226
        %v2228 = vshrl.u32 %v1854, 16
        %v2230 = vrot.slane %v2228, 1
        %v2231 = vrot.slane %v1901, 2
        %v2232 = vor.u32 %v2230, %v2231
        %v2233 = vsel %vm2206, %v2227, %v2232
        %v2234 = vrot.slane %v1906, 1
        %v2235 = vrot.slane %v1908, 2
        %v2236 = vor.u32 %v2234, %v2235
        %v2237 = vshrl.u32 %v1855, 16
        %v2239 = vrot.slane %v2237, 1
        %v2240 = vrot.slane %v1913, 2
        %v2241 = vor.u32 %v2239, %v2240
        %v2242 = vsel %vm2206, %v2236, %v2241
        %v2243 = vrot.slane %v1918, 1
        %v2244 = vrot.slane %v1920, 2
        %v2245 = vor.u32 %v2243, %v2244
        %v2246 = vshrl.u32 %v1856, 16
        %v2248 = vrot.slane %v2246, 1
        %v2249 = vrot.slane %v1925, 2
        %v2250 = vor.u32 %v2248, %v2249
        %v2251 = vsel %vm2206, %v2245, %v2250
        %v2252 = vrot.slane %v1930, 1
        %v2253 = vrot.slane %v1932, 2
        %v2254 = vor.u32 %v2252, %v2253
        %v2255 = vshrl.u32 %v1857, 16
        %v2257 = vrot.slane %v2255, 1
        %v2258 = vrot.slane %v1937, 2
        %v2259 = vor.u32 %v2257, %v2258
        %v2260 = vsel %vm2206, %v2254, %v2259
        %v2261 = vrot.slane %v1942, 1
        %v2262 = vrot.slane %v1944, 2
        %v2263 = vor.u32 %v2261, %v2262
        %v2264 = vshrl.u32 %v1858, 16
        %v2266 = vrot.slane %v2264, 1
        %v2267 = vrot.slane %v1949, 2
        %v2268 = vor.u32 %v2266, %v2267
        %v2269 = vsel %vm2206, %v2263, %v2268
        %v2270 = vrot.slane %v1954, 1
        %v2271 = vrot.slane %v1956, 2
        %v2272 = vor.u32 %v2270, %v2271
        %v2273 = vshrl.u32 %v1859, 16
        %v2275 = vrot.slane %v2273, 1
        %v2276 = vrot.slane %v1961, 2
        %v2277 = vor.u32 %v2275, %v2276
        %v2278 = vsel %vm2206, %v2272, %v2277
        %v2279 = vrot.slane %v1966, 1
        %v2280 = vrot.slane %v1968, 2
        %v2281 = vor.u32 %v2279, %v2280
        %v2282 = vshrl.u32 %v1860, 16
        %v2284 = vrot.slane %v2282, 1
        %v2285 = vrot.slane %v1973, 2
        %v2286 = vor.u32 %v2284, %v2285
        %v2287 = vsel %vm2206, %v2281, %v2286
        %v2288 = vrot.slane %v1978, 1
        %v2289 = vrot.slane %v1980, 2
        %v2290 = vor.u32 %v2288, %v2289
        %v2291 = vshrl.u32 %v1861, 16
        %v2293 = vrot.slane %v2291, 1
        %v2294 = vrot.slane %v1985, 2
        %v2295 = vor.u32 %v2293, %v2294
        %v2296 = vsel %vm2206, %v2290, %v2295
        %v2297 = vrot.slane %v1990, 1
        %v2298 = vrot.slane %v1992, 2
        %v2299 = vor.u32 %v2297, %v2298
        %v2300 = vshrl.u32 %v1862, 16
        %v2302 = vrot.slane %v2300, 1
        %v2303 = vrot.slane %v1997, 2
        %v2304 = vor.u32 %v2302, %v2303
        %v2305 = vsel %vm2206, %v2299, %v2304
        %v2306 = vrot.slane %v2002, 1
        %v2307 = vrot.slane %v2004, 2
        %v2308 = vor.u32 %v2306, %v2307
        %v2309 = vshrl.u32 %v1863, 16
        %v2311 = vrot.slane %v2309, 1
        %v2312 = vrot.slane %v2009, 2
        %v2313 = vor.u32 %v2311, %v2312
        %v2314 = vsel %vm2206, %v2308, %v2313
        %v2315 = vrot.slane %v2014, 1
        %v2316 = vrot.slane %v2016, 2
        %v2317 = vor.u32 %v2315, %v2316
        %v2318 = vshrl.u32 %v1864, 16
        %v2320 = vrot.slane %v2318, 1
        %v2321 = vrot.slane %v2021, 2
        %v2322 = vor.u32 %v2320, %v2321
        %v2323 = vsel %vm2206, %v2317, %v2322
        %v2324 = vrot.slane %v2026, 1
        %v2325 = vrot.slane %v2028, 2
        %v2326 = vor.u32 %v2324, %v2325
        %v2327 = vshrl.u32 %v1865, 16
        %v2329 = vrot.slane %v2327, 1
        %v2330 = vrot.slane %v2033, 2
        %v2331 = vor.u32 %v2329, %v2330
        %v2332 = vsel %vm2206, %v2326, %v2331
        %v2333 = vrot.slane %v2038, 1
        %v2334 = vrot.slane %v2040, 2
        %v2335 = vor.u32 %v2333, %v2334
        %v2336 = vshrl.u32 %v1866, 16
        %v2338 = vrot.slane %v2336, 1
        %v2339 = vrot.slane %v2045, 2
        %v2340 = vor.u32 %v2338, %v2339
        %v2341 = vsel %vm2206, %v2335, %v2340
        %v2342 = vrot.slane %v2050, 1
        %v2343 = vrot.slane %v2052, 2
        %v2344 = vor.u32 %v2342, %v2343
        %v2345 = vshrl.u32 %v1867, 16
        %v2347 = vrot.slane %v2345, 1
        %v2348 = vrot.slane %v2057, 2
        %v2349 = vor.u32 %v2347, %v2348
        %v2350 = vsel %vm2206, %v2344, %v2349
        %2351 = vrot.lane.b32.xlu0 %v2215, 24
        %v2352 = vpop.permute.xlu0 %2351
        %2353 = vrot.lane.b32.xlu0 %v2224, 24
        %v2354 = vpop.permute.xlu0 %2353
        %2355 = vrot.lane.b32.xlu0 %v2233, 24
        %v2356 = vpop.permute.xlu0 %2355
        %2357 = vrot.lane.b32.xlu0 %v2242, 24
        %v2358 = vpop.permute.xlu0 %2357
        %2359 = vrot.lane.b32.xlu0 %v2251, 24
        %v2360 = vpop.permute.xlu0 %2359
        %2361 = vrot.lane.b32.xlu0 %v2260, 24
        %v2362 = vpop.permute.xlu0 %2361
        %2363 = vrot.lane.b32.xlu0 %v2269, 24
        %v2364 = vpop.permute.xlu0 %2363
        %2365 = vrot.lane.b32.xlu0 %v2278, 24
        %v2366 = vpop.permute.xlu0 %2365
        %2367 = vrot.lane.b32.xlu0 %v2287, 24
        %v2368 = vpop.permute.xlu0 %2367
        %2369 = vrot.lane.b32.xlu0 %v2296, 24
        %v2370 = vpop.permute.xlu0 %2369
        %2371 = vrot.lane.b32.xlu0 %v2305, 24
        %v2372 = vpop.permute.xlu0 %2371
        %2373 = vrot.lane.b32.xlu0 %v2314, 24
        %v2374 = vpop.permute.xlu0 %2373
        %2375 = vrot.lane.b32.xlu0 %v2323, 24
        %v2376 = vpop.permute.xlu0 %2375
        %2377 = vrot.lane.b32.xlu0 %v2332, 24
        %v2378 = vpop.permute.xlu0 %2377
        %2379 = vrot.lane.b32.xlu0 %v2341, 24
        %v2380 = vpop.permute.xlu0 %2379
        %2381 = vrot.lane.b32.xlu0 %v2350, 24
        %v2382 = vpop.permute.xlu0 %2381
        %vm2383 = vcmask 1045504
        %v2384 = vrot.slane %v1836, 2
        %v2385 = vrot.slane %v1852, 2
        %v2386 = vsel %vm2383, %v2384, %v2385
        %v2387 = vrot.slane %v1837, 2
        %v2388 = vrot.slane %v1853, 2
        %v2389 = vsel %vm2383, %v2387, %v2388
        %v2390 = vrot.slane %v1838, 2
        %v2391 = vrot.slane %v1854, 2
        %v2392 = vsel %vm2383, %v2390, %v2391
        %v2393 = vrot.slane %v1839, 2
        %v2394 = vrot.slane %v1855, 2
        %v2395 = vsel %vm2383, %v2393, %v2394
        %v2396 = vrot.slane %v1840, 2
        %v2397 = vrot.slane %v1856, 2
        %v2398 = vsel %vm2383, %v2396, %v2397
        %v2399 = vrot.slane %v1841, 2
        %v2400 = vrot.slane %v1857, 2
        %v2401 = vsel %vm2383, %v2399, %v2400
        %v2402 = vrot.slane %v1842, 2
        %v2403 = vrot.slane %v1858, 2
        %v2404 = vsel %vm2383, %v2402, %v2403
        %v2405 = vrot.slane %v1843, 2
        %v2406 = vrot.slane %v1859, 2
        %v2407 = vsel %vm2383, %v2405, %v2406
        %v2408 = vrot.slane %v1844, 2
        %v2409 = vrot.slane %v1860, 2
        %v2410 = vsel %vm2383, %v2408, %v2409
        %v2411 = vrot.slane %v1845, 2
        %v2412 = vrot.slane %v1861, 2
        %v2413 = vsel %vm2383, %v2411, %v2412
        %v2414 = vrot.slane %v1846, 2
        %v2415 = vrot.slane %v1862, 2
        %v2416 = vsel %vm2383, %v2414, %v2415
        %v2417 = vrot.slane %v1847, 2
        %v2418 = vrot.slane %v1863, 2
        %v2419 = vsel %vm2383, %v2417, %v2418
        %v2420 = vrot.slane %v1848, 2
        %v2421 = vrot.slane %v1864, 2
        %v2422 = vsel %vm2383, %v2420, %v2421
        %v2423 = vrot.slane %v1849, 2
        %v2424 = vrot.slane %v1865, 2
        %v2425 = vsel %vm2383, %v2423, %v2424
        %v2426 = vrot.slane %v1850, 2
        %v2427 = vrot.slane %v1866, 2
        %v2428 = vsel %vm2383, %v2426, %v2427
        %v2429 = vrot.slane %v1851, 2
        %v2430 = vrot.slane %v1867, 2
        %v2431 = vsel %vm2383, %v2429, %v2430
        %2432 = vrot.lane.b32.xlu0 %v2386, 32
        %v2433 = vpop.permute.xlu0 %2432
        %2434 = vrot.lane.b32.xlu0 %v2389, 32
        %v2435 = vpop.permute.xlu0 %2434
        %2436 = vrot.lane.b32.xlu0 %v2392, 32
        %v2437 = vpop.permute.xlu0 %2436
        %2438 = vrot.lane.b32.xlu0 %v2395, 32
        %v2439 = vpop.permute.xlu0 %2438
        %2440 = vrot.lane.b32.xlu0 %v2398, 32
        %v2441 = vpop.permute.xlu0 %2440
        %2442 = vrot.lane.b32.xlu0 %v2401, 32
        %v2443 = vpop.permute.xlu0 %2442
        %2444 = vrot.lane.b32.xlu0 %v2404, 32
        %v2445 = vpop.permute.xlu0 %2444
        %2446 = vrot.lane.b32.xlu0 %v2407, 32
        %v2447 = vpop.permute.xlu0 %2446
        %2448 = vrot.lane.b32.xlu0 %v2410, 32
        %v2449 = vpop.permute.xlu0 %2448
        %2450 = vrot.lane.b32.xlu0 %v2413, 32
        %v2451 = vpop.permute.xlu0 %2450
        %2452 = vrot.lane.b32.xlu0 %v2416, 32
        %v2453 = vpop.permute.xlu0 %2452
        %2454 = vrot.lane.b32.xlu0 %v2419, 32
        %v2455 = vpop.permute.xlu0 %2454
        %2456 = vrot.lane.b32.xlu0 %v2422, 32
        %v2457 = vpop.permute.xlu0 %2456
        %2458 = vrot.lane.b32.xlu0 %v2425, 32
        %v2459 = vpop.permute.xlu0 %2458
        %2460 = vrot.lane.b32.xlu0 %v2428, 32
        %v2461 = vpop.permute.xlu0 %2460
        %2462 = vrot.lane.b32.xlu0 %v2431, 32
        %v2463 = vpop.permute.xlu0 %2462
        %vm2464 = vsmask.f32 5376
        %v2465 = vrot.slane %v1870, 2
        %v2466 = vrot.slane %v1872, 3
        %v2467 = vor.u32 %v2465, %v2466
        %v2468 = vrot.slane %v2210, 2
        %v2469 = vrot.slane %v1877, 3
        %v2470 = vor.u32 %v2468, %v2469
        %v2471 = vsel %vm2464, %v2467, %v2470
        %v2472 = vrot.slane %v1882, 2
        %v2473 = vrot.slane %v1884, 3
        %v2474 = vor.u32 %v2472, %v2473
        %v2475 = vrot.slane %v2219, 2
        %v2476 = vrot.slane %v1889, 3
        %v2477 = vor.u32 %v2475, %v2476
        %v2478 = vsel %vm2464, %v2474, %v2477
        %v2479 = vrot.slane %v1894, 2
        %v2480 = vrot.slane %v1896, 3
        %v2481 = vor.u32 %v2479, %v2480
        %v2482 = vrot.slane %v2228, 2
        %v2483 = vrot.slane %v1901, 3
        %v2484 = vor.u32 %v2482, %v2483
        %v2485 = vsel %vm2464, %v2481, %v2484
        %v2486 = vrot.slane %v1906, 2
        %v2487 = vrot.slane %v1908, 3
        %v2488 = vor.u32 %v2486, %v2487
        %v2489 = vrot.slane %v2237, 2
        %v2490 = vrot.slane %v1913, 3
        %v2491 = vor.u32 %v2489, %v2490
        %v2492 = vsel %vm2464, %v2488, %v2491
        %v2493 = vrot.slane %v1918, 2
        %v2494 = vrot.slane %v1920, 3
        %v2495 = vor.u32 %v2493, %v2494
        %v2496 = vrot.slane %v2246, 2
        %v2497 = vrot.slane %v1925, 3
        %v2498 = vor.u32 %v2496, %v2497
        %v2499 = vsel %vm2464, %v2495, %v2498
        %v2500 = vrot.slane %v1930, 2
        %v2501 = vrot.slane %v1932, 3
        %v2502 = vor.u32 %v2500, %v2501
        %v2503 = vrot.slane %v2255, 2
        %v2504 = vrot.slane %v1937, 3
        %v2505 = vor.u32 %v2503, %v2504
        %v2506 = vsel %vm2464, %v2502, %v2505
        %v2507 = vrot.slane %v1942, 2
        %v2508 = vrot.slane %v1944, 3
        %v2509 = vor.u32 %v2507, %v2508
        %v2510 = vrot.slane %v2264, 2
        %v2511 = vrot.slane %v1949, 3
        %v2512 = vor.u32 %v2510, %v2511
        %v2513 = vsel %vm2464, %v2509, %v2512
        %v2514 = vrot.slane %v1954, 2
        %v2515 = vrot.slane %v1956, 3
        %v2516 = vor.u32 %v2514, %v2515
        %v2517 = vrot.slane %v2273, 2
        %v2518 = vrot.slane %v1961, 3
        %v2519 = vor.u32 %v2517, %v2518
        %v2520 = vsel %vm2464, %v2516, %v2519
        %v2521 = vrot.slane %v1966, 2
        %v2522 = vrot.slane %v1968, 3
        %v2523 = vor.u32 %v2521, %v2522
        %v2524 = vrot.slane %v2282, 2
        %v2525 = vrot.slane %v1973, 3
        %v2526 = vor.u32 %v2524, %v2525
        %v2527 = vsel %vm2464, %v2523, %v2526
        %v2528 = vrot.slane %v1978, 2
        %v2529 = vrot.slane %v1980, 3
        %v2530 = vor.u32 %v2528, %v2529
        %v2531 = vrot.slane %v2291, 2
        %v2532 = vrot.slane %v1985, 3
        %v2533 = vor.u32 %v2531, %v2532
        %v2534 = vsel %vm2464, %v2530, %v2533
        %v2535 = vrot.slane %v1990, 2
        %v2536 = vrot.slane %v1992, 3
        %v2537 = vor.u32 %v2535, %v2536
        %v2538 = vrot.slane %v2300, 2
        %v2539 = vrot.slane %v1997, 3
        %v2540 = vor.u32 %v2538, %v2539
        %v2541 = vsel %vm2464, %v2537, %v2540
        %v2542 = vrot.slane %v2002, 2
        %v2543 = vrot.slane %v2004, 3
        %v2544 = vor.u32 %v2542, %v2543
        %v2545 = vrot.slane %v2309, 2
        %v2546 = vrot.slane %v2009, 3
        %v2547 = vor.u32 %v2545, %v2546
        %v2548 = vsel %vm2464, %v2544, %v2547
        %v2549 = vrot.slane %v2014, 2
        %v2550 = vrot.slane %v2016, 3
        %v2551 = vor.u32 %v2549, %v2550
        %v2552 = vrot.slane %v2318, 2
        %v2553 = vrot.slane %v2021, 3
        %v2554 = vor.u32 %v2552, %v2553
        %v2555 = vsel %vm2464, %v2551, %v2554
        %v2556 = vrot.slane %v2026, 2
        %v2557 = vrot.slane %v2028, 3
        %v2558 = vor.u32 %v2556, %v2557
        %v2559 = vrot.slane %v2327, 2
        %v2560 = vrot.slane %v2033, 3
        %v2561 = vor.u32 %v2559, %v2560
        %v2562 = vsel %vm2464, %v2558, %v2561
        %v2563 = vrot.slane %v2038, 2
        %v2564 = vrot.slane %v2040, 3
        %v2565 = vor.u32 %v2563, %v2564
        %v2566 = vrot.slane %v2336, 2
        %v2567 = vrot.slane %v2045, 3
        %v2568 = vor.u32 %v2566, %v2567
        %v2569 = vsel %vm2464, %v2565, %v2568
        %v2570 = vrot.slane %v2050, 2
        %v2571 = vrot.slane %v2052, 3
        %v2572 = vor.u32 %v2570, %v2571
        %v2573 = vrot.slane %v2345, 2
        %v2574 = vrot.slane %v2057, 3
        %v2575 = vor.u32 %v2573, %v2574
        %v2576 = vsel %vm2464, %v2572, %v2575
        %2577 = vrot.lane.b32.xlu0 %v2471, 40
        %v2578 = vpop.permute.xlu0 %2577
        %2579 = vrot.lane.b32.xlu0 %v2478, 40
        %v2580 = vpop.permute.xlu0 %2579
        %2581 = vrot.lane.b32.xlu0 %v2485, 40
        %v2582 = vpop.permute.xlu0 %2581
        %2583 = vrot.lane.b32.xlu0 %v2492, 40
        %v2584 = vpop.permute.xlu0 %2583
        %2585 = vrot.lane.b32.xlu0 %v2499, 40
        %v2586 = vpop.permute.xlu0 %2585
        %2587 = vrot.lane.b32.xlu0 %v2506, 40
        %v2588 = vpop.permute.xlu0 %2587
        %2589 = vrot.lane.b32.xlu0 %v2513, 40
        %v2590 = vpop.permute.xlu0 %2589
        %2591 = vrot.lane.b32.xlu0 %v2520, 40
        %v2592 = vpop.permute.xlu0 %2591
        %2593 = vrot.lane.b32.xlu0 %v2527, 40
        %v2594 = vpop.permute.xlu0 %2593
        %2595 = vrot.lane.b32.xlu0 %v2534, 40
        %v2596 = vpop.permute.xlu0 %2595
        %2597 = vrot.lane.b32.xlu0 %v2541, 40
        %v2598 = vpop.permute.xlu0 %2597
        %2599 = vrot.lane.b32.xlu0 %v2548, 40
        %v2600 = vpop.permute.xlu0 %2599
        %2601 = vrot.lane.b32.xlu0 %v2555, 40
        %v2602 = vpop.permute.xlu0 %2601
        %2603 = vrot.lane.b32.xlu0 %v2562, 40
        %v2604 = vpop.permute.xlu0 %2603
        %2605 = vrot.lane.b32.xlu0 %v2569, 40
        %v2606 = vpop.permute.xlu0 %2605
        %2607 = vrot.lane.b32.xlu0 %v2576, 40
        %v2608 = vpop.permute.xlu0 %2607
        %vm2609 = vcmask 1044480
        %v2610 = vrot.slane %v1836, 3
        %v2611 = vrot.slane %v1852, 3
        %v2612 = vsel %vm2609, %v2610, %v2611
        %v2613 = vrot.slane %v1837, 3
        %v2614 = vrot.slane %v1853, 3
        %v2615 = vsel %vm2609, %v2613, %v2614
        %v2616 = vrot.slane %v1838, 3
        %v2617 = vrot.slane %v1854, 3
        %v2618 = vsel %vm2609, %v2616, %v2617
        %v2619 = vrot.slane %v1839, 3
        %v2620 = vrot.slane %v1855, 3
        %v2621 = vsel %vm2609, %v2619, %v2620
        %v2622 = vrot.slane %v1840, 3
        %v2623 = vrot.slane %v1856, 3
        %v2624 = vsel %vm2609, %v2622, %v2623
        %v2625 = vrot.slane %v1841, 3
        %v2626 = vrot.slane %v1857, 3
        %v2627 = vsel %vm2609, %v2625, %v2626
        %v2628 = vrot.slane %v1842, 3
        %v2629 = vrot.slane %v1858, 3
        %v2630 = vsel %vm2609, %v2628, %v2629
        %v2631 = vrot.slane %v1843, 3
        %v2632 = vrot.slane %v1859, 3
        %v2633 = vsel %vm2609, %v2631, %v2632
        %v2634 = vrot.slane %v1844, 3
        %v2635 = vrot.slane %v1860, 3
        %v2636 = vsel %vm2609, %v2634, %v2635
        %v2637 = vrot.slane %v1845, 3
        %v2638 = vrot.slane %v1861, 3
        %v2639 = vsel %vm2609, %v2637, %v2638
        %v2640 = vrot.slane %v1846, 3
        %v2641 = vrot.slane %v1862, 3
        %v2642 = vsel %vm2609, %v2640, %v2641
        %v2643 = vrot.slane %v1847, 3
        %v2644 = vrot.slane %v1863, 3
        %v2645 = vsel %vm2609, %v2643, %v2644
        %v2646 = vrot.slane %v1848, 3
        %v2647 = vrot.slane %v1864, 3
        %v2648 = vsel %vm2609, %v2646, %v2647
        %v2649 = vrot.slane %v1849, 3
        %v2650 = vrot.slane %v1865, 3
        %v2651 = vsel %vm2609, %v2649, %v2650
        %v2652 = vrot.slane %v1850, 3
        %v2653 = vrot.slane %v1866, 3
        %v2654 = vsel %vm2609, %v2652, %v2653
        %v2655 = vrot.slane %v1851, 3
        %v2656 = vrot.slane %v1867, 3
        %v2657 = vsel %vm2609, %v2655, %v2656
        %2658 = vrot.lane.b32.xlu0 %v2612, 48
        %v2659 = vpop.permute.xlu0 %2658
        %2660 = vrot.lane.b32.xlu0 %v2615, 48
        %v2661 = vpop.permute.xlu0 %2660
        %2662 = vrot.lane.b32.xlu0 %v2618, 48
        %v2663 = vpop.permute.xlu0 %2662
        %2664 = vrot.lane.b32.xlu0 %v2621, 48
        %v2665 = vpop.permute.xlu0 %2664
        %2666 = vrot.lane.b32.xlu0 %v2624, 48
        %v2667 = vpop.permute.xlu0 %2666
        %2668 = vrot.lane.b32.xlu0 %v2627, 48
        %v2669 = vpop.permute.xlu0 %2668
        %2670 = vrot.lane.b32.xlu0 %v2630, 48
        %v2671 = vpop.permute.xlu0 %2670
        %2672 = vrot.lane.b32.xlu0 %v2633, 48
        %v2673 = vpop.permute.xlu0 %2672
        %2674 = vrot.lane.b32.xlu0 %v2636, 48
        %v2675 = vpop.permute.xlu0 %2674
        %2676 = vrot.lane.b32.xlu0 %v2639, 48
        %v2677 = vpop.permute.xlu0 %2676
        %2678 = vrot.lane.b32.xlu0 %v2642, 48
        %v2679 = vpop.permute.xlu0 %2678
        %2680 = vrot.lane.b32.xlu0 %v2645, 48
        %v2681 = vpop.permute.xlu0 %2680
        %2682 = vrot.lane.b32.xlu0 %v2648, 48
        %v2683 = vpop.permute.xlu0 %2682
        %2684 = vrot.lane.b32.xlu0 %v2651, 48
        %v2685 = vpop.permute.xlu0 %2684
        %2686 = vrot.lane.b32.xlu0 %v2654, 48
        %v2687 = vpop.permute.xlu0 %2686
        %2688 = vrot.lane.b32.xlu0 %v2657, 48
        %v2689 = vpop.permute.xlu0 %2688
        %vm2690 = vcmask 64512
        %v2692 = vsel %vm2690, %v1836, %v2062
        %v2694 = vsel %vm2690, %v1837, %v2064
        %v2696 = vsel %vm2690, %v1838, %v2066
        %v2698 = vsel %vm2690, %v1839, %v2068
        %v2700 = vsel %vm2690, %v1840, %v2070
        %v2702 = vsel %vm2690, %v1841, %v2072
        %v2704 = vsel %vm2690, %v1842, %v2074
        %v2706 = vsel %vm2690, %v1843, %v2076
        %v2708 = vsel %vm2690, %v1844, %v2078
        %v2710 = vsel %vm2690, %v1845, %v2080
        %v2712 = vsel %vm2690, %v1846, %v2082
        %v2714 = vsel %vm2690, %v1847, %v2084
        %v2716 = vsel %vm2690, %v1848, %v2086
        %v2718 = vsel %vm2690, %v1849, %v2088
        %v2720 = vsel %vm2690, %v1850, %v2090
        %v2722 = vsel %vm2690, %v1851, %v2092
        %vm2723 = vcmask 130048
        %v2725 = vsel %vm2723, %v2692, %v2175
        %v2727 = vsel %vm2723, %v2694, %v2177
        %v2729 = vsel %vm2723, %v2696, %v2179
        %v2731 = vsel %vm2723, %v2698, %v2181
        %v2733 = vsel %vm2723, %v2700, %v2183
        %v2735 = vsel %vm2723, %v2702, %v2185
        %v2737 = vsel %vm2723, %v2704, %v2187
        %v2739 = vsel %vm2723, %v2706, %v2189
        %v2741 = vsel %vm2723, %v2708, %v2191
        %v2743 = vsel %vm2723, %v2710, %v2193
        %v2745 = vsel %vm2723, %v2712, %v2195
        %v2747 = vsel %vm2723, %v2714, %v2197
        %v2749 = vsel %vm2723, %v2716, %v2199
        %v2751 = vsel %vm2723, %v2718, %v2201
        %v2753 = vsel %vm2723, %v2720, %v2203
        %v2755 = vsel %vm2723, %v2722, %v2205
        %vm2756 = vcmask 195584
        %v2758 = vsel %vm2756, %v2725, %v2352
        %v2760 = vsel %vm2756, %v2727, %v2354
        %v2762 = vsel %vm2756, %v2729, %v2356
        %v2764 = vsel %vm2756, %v2731, %v2358
        %v2766 = vsel %vm2756, %v2733, %v2360
        %v2768 = vsel %vm2756, %v2735, %v2362
        %v2770 = vsel %vm2756, %v2737, %v2364
        %v2772 = vsel %vm2756, %v2739, %v2366
        %v2774 = vsel %vm2756, %v2741, %v2368
        %v2776 = vsel %vm2756, %v2743, %v2370
        %v2778 = vsel %vm2756, %v2745, %v2372
        %v2780 = vsel %vm2756, %v2747, %v2374
        %v2782 = vsel %vm2756, %v2749, %v2376
        %v2784 = vsel %vm2756, %v2751, %v2378
        %v2786 = vsel %vm2756, %v2753, %v2380
        %v2788 = vsel %vm2756, %v2755, %v2382
        %vm2789 = vcmask 261120
        %v2791 = vsel %vm2789, %v2758, %v2433
        %v2793 = vsel %vm2789, %v2760, %v2435
        %v2795 = vsel %vm2789, %v2762, %v2437
        %v2797 = vsel %vm2789, %v2764, %v2439
        %v2799 = vsel %vm2789, %v2766, %v2441
        %v2801 = vsel %vm2789, %v2768, %v2443
        %v2803 = vsel %vm2789, %v2770, %v2445
        %v2805 = vsel %vm2789, %v2772, %v2447
        %v2807 = vsel %vm2789, %v2774, %v2449
        %v2809 = vsel %vm2789, %v2776, %v2451
        %v2811 = vsel %vm2789, %v2778, %v2453
        %v2813 = vsel %vm2789, %v2780, %v2455
        %v2815 = vsel %vm2789, %v2782, %v2457
        %v2817 = vsel %vm2789, %v2784, %v2459
        %v2819 = vsel %vm2789, %v2786, %v2461
        %v2821 = vsel %vm2789, %v2788, %v2463
        %vm2822 = vcmask 326656
        %v2824 = vsel %vm2822, %v2791, %v2578
        %v2826 = vsel %vm2822, %v2793, %v2580
        %v2828 = vsel %vm2822, %v2795, %v2582
        %v2830 = vsel %vm2822, %v2797, %v2584
        %v2832 = vsel %vm2822, %v2799, %v2586
        %v2834 = vsel %vm2822, %v2801, %v2588
        %v2836 = vsel %vm2822, %v2803, %v2590
        %v2838 = vsel %vm2822, %v2805, %v2592
        %v2840 = vsel %vm2822, %v2807, %v2594
        %v2842 = vsel %vm2822, %v2809, %v2596
        %v2844 = vsel %vm2822, %v2811, %v2598
        %v2846 = vsel %vm2822, %v2813, %v2600
        %v2848 = vsel %vm2822, %v2815, %v2602
        %v2850 = vsel %vm2822, %v2817, %v2604
        %v2852 = vsel %vm2822, %v2819, %v2606
        %v2854 = vsel %vm2822, %v2821, %v2608
        %vm2855 = vcmask 392192
        %v2857 = vsel %vm2855, %v2824, %v2659
        %v2859 = vsel %vm2855, %v2826, %v2661
        %v2861 = vsel %vm2855, %v2828, %v2663
        %v2863 = vsel %vm2855, %v2830, %v2665
        %v2865 = vsel %vm2855, %v2832, %v2667
        %v2867 = vsel %vm2855, %v2834, %v2669
        %v2869 = vsel %vm2855, %v2836, %v2671
        %v2871 = vsel %vm2855, %v2838, %v2673
        %v2873 = vsel %vm2855, %v2840, %v2675
        %v2875 = vsel %vm2855, %v2842, %v2677
        %v2877 = vsel %vm2855, %v2844, %v2679
        %v2879 = vsel %vm2855, %v2846, %v2681
        %v2881 = vsel %vm2855, %v2848, %v2683
        %v2883 = vsel %vm2855, %v2850, %v2685
        %v2885 = vsel %vm2855, %v2852, %v2687
        %v2887 = vsel %vm2855, %v2854, %v2689
        %v2895 = vunpack.c.l.b16 %v1648
        %v2896 = vunpack.c.l.b16 %v1649
        %v2897 = vunpack.c.l.b16 %v1650
        %v2898 = vunpack.c.l.b16 %v1651
        %v2899 = vunpack.c.l.b16 %v1652
        %v2900 = vunpack.c.l.b16 %v1653
        %v2901 = vunpack.c.l.b16 %v1654
        %v2902 = vpack.c.b16 %v2896, %v2895
        %v2903 = vpack.c.b16 %v2898, %v2897
        %v2904 = vpack.c.b16 %v2900, %v2899
        %v2905 = vpack.c.b16 %v2901, %v2901
        %vm2909 = vcmask 457728
        %v2910 = vsel %vm2909, %v2857, 0
        %v2912 = vsel %vm2909, %v2859, 0
        %v2914 = vsel %vm2909, %v2861, 0
        %v2916 = vsel %vm2909, %v2863, 0
        %v2918 = vsel %vm2909, %v2865, 0
        %v2920 = vsel %vm2909, %v2867, 0
        %v2922 = vsel %vm2909, %v2869, 0
        %v2924 = vsel %vm2909, %v2871, 0
        %v2926 = vsel %vm2909, %v2873, 0
        %v2928 = vsel %vm2909, %v2875, 0
        %v2930 = vsel %vm2909, %v2877, 0
        %v2932 = vsel %vm2909, %v2879, 0
        %v2934 = vsel %vm2909, %v2881, 0
        %v2936 = vsel %vm2909, %v2883, 0
        %v2938 = vsel %vm2909, %v2885, 0
        %v2940 = vsel %vm2909, %v2887, 0
        %vm2942 = vcmask 1043456
        %v2944 = vsel %vm2942, %v2905, 0
        %2946 = vmatprep.subr.bf16.mxu0 0
        %2947 = vmatpush1.bf16.msra.mxu0 0
        %2948 = vmatprep.subr.bf16.mxu0 0
        %2949 = vmatpush1.bf16.msra.mxu0 0
        %2950 = vmatprep.subr.bf16.mxu0 0
        %2951 = vmatpush1.bf16.msra.mxu0 0
        %2952 = vmatprep.subr.bf16.mxu0 0
        %2953 = vmatpush1.bf16.msra.mxu0 0
        %2954 = vmatprep.subr.bf16.mxu0 0
        %2955 = vmatpush1.bf16.msra.mxu0 %v2944
        %2956 = vmatprep.subr.bf16.mxu0 0
        %2957 = vmatpush1.bf16.msra.mxu0 %v2904
        %2958 = vmatprep.subr.bf16.mxu0 0
        %2959 = vmatpush1.bf16.msra.mxu0 %v2903
        %2960 = vmatprep.subr.bf16.mxu0 0
        %2961 = vmatpush1.bf16.msra.mxu0 %v2902
        %2962 = vmatprep.subr.bf16.mxu0 0
        %2963 = vmatpush2.bf16.msra.mxu0 0
        %2964 = vmatprep.subr.bf16.mxu0 0
        %2965 = vmatpush2.bf16.msra.mxu0 0
        %2966 = vmatprep.subr.bf16.mxu0 0
        %2967 = vmatpush2.bf16.msra.mxu0 0
        %2968 = vmatprep.subr.bf16.mxu0 0
        %2969 = vmatpush2.bf16.msra.mxu0 0
        %2970 = vmatprep.subr.bf16.mxu0 0
        %2971 = vmatpush2.bf16.msra.mxu0 0
        %2972 = vmatprep.subr.bf16.mxu0 0
        %2973 = vmatpush2.bf16.msra.mxu0 0
        %2974 = vmatprep.subr.bf16.mxu0 0
        %2975 = vmatpush2.bf16.msra.mxu0 0
        %2976 = vmatprep.subr.bf16.mxu0 0
        %2977 = vmatpush2.bf16.msra.mxu0 0
        %2978 = vmatprep.mubr.bf16.mxu0 0
        %2979 = vmatmul.mubr.bf16.gmra.mxu0 %v2910
        %v2980 = vpop.f32.mrf.mxu0
        %v2981 = vadd.f32 0.0, %v2980
        %v2982 = vpop.f32.mrf.mxu0
        %v2983 = vpop.f32.mrf.mxu0
        %v2984 = vadd.f32 0.0, %v2983
        %v2985 = vpop.f32.mrf.mxu0
        %2986 = vmatprep.mubr.bf16.mxu0 0
        %2987 = vmatmul.mubr.bf16.gmra.mxu0 %v2912
        %v2988 = vpop.f32.mrf.mxu0
        %v2989 = vadd.f32 0.0, %v2988
        %v2990 = vpop.f32.mrf.mxu0
        %v2991 = vpop.f32.mrf.mxu0
        %v2992 = vadd.f32 0.0, %v2991
        %v2993 = vpop.f32.mrf.mxu0
        %2994 = vmatprep.mubr.bf16.mxu0 0
        %2995 = vmatmul.mubr.bf16.gmra.mxu0 %v2914
        %v2996 = vpop.f32.mrf.mxu0
        %v2997 = vadd.f32 0.0, %v2996
        %v2998 = vpop.f32.mrf.mxu0
        %v2999 = vpop.f32.mrf.mxu0
        %v3000 = vadd.f32 0.0, %v2999
        %v3001 = vpop.f32.mrf.mxu0
        %3002 = vmatprep.mubr.bf16.mxu0 0
        %3003 = vmatmul.mubr.bf16.gmra.mxu0 %v2916
        %v3004 = vpop.f32.mrf.mxu0
        %v3005 = vadd.f32 0.0, %v3004
        %v3006 = vpop.f32.mrf.mxu0
        %v3007 = vpop.f32.mrf.mxu0
        %v3008 = vadd.f32 0.0, %v3007
        %v3009 = vpop.f32.mrf.mxu0
        %3010 = vmatprep.mubr.bf16.mxu0 0
        %3011 = vmatmul.mubr.bf16.gmra.mxu0 %v2918
        %v3012 = vpop.f32.mrf.mxu0
        %v3013 = vadd.f32 0.0, %v3012
        %v3014 = vpop.f32.mrf.mxu0
        %v3015 = vpop.f32.mrf.mxu0
        %v3016 = vadd.f32 0.0, %v3015
        %v3017 = vpop.f32.mrf.mxu0
        %3018 = vmatprep.mubr.bf16.mxu0 0
        %3019 = vmatmul.mubr.bf16.gmra.mxu0 %v2920
        %v3020 = vpop.f32.mrf.mxu0
        %v3021 = vadd.f32 0.0, %v3020
        %v3022 = vpop.f32.mrf.mxu0
        %v3023 = vpop.f32.mrf.mxu0
        %v3024 = vadd.f32 0.0, %v3023
        %v3025 = vpop.f32.mrf.mxu0
        %3026 = vmatprep.mubr.bf16.mxu0 0
        %3027 = vmatmul.mubr.bf16.gmra.mxu0 %v2922
        %v3028 = vpop.f32.mrf.mxu0
        %v3029 = vadd.f32 0.0, %v3028
        %v3030 = vpop.f32.mrf.mxu0
        %v3031 = vpop.f32.mrf.mxu0
        %v3032 = vadd.f32 0.0, %v3031
        %v3033 = vpop.f32.mrf.mxu0
        %3034 = vmatprep.mubr.bf16.mxu0 0
        %3035 = vmatmul.mubr.bf16.gmra.mxu0 %v2924
        %v3036 = vpop.f32.mrf.mxu0
        %v3037 = vadd.f32 0.0, %v3036
        %v3038 = vpop.f32.mrf.mxu0
        %v3039 = vpop.f32.mrf.mxu0
        %v3040 = vadd.f32 0.0, %v3039
        %v3041 = vpop.f32.mrf.mxu0
        %3042 = vmatprep.mubr.bf16.mxu0 0
        %3043 = vmatmul.mubr.bf16.gmra.mxu0 %v2926
        %v3044 = vpop.f32.mrf.mxu0
        %v3045 = vadd.f32 0.0, %v3044
        %v3046 = vpop.f32.mrf.mxu0
        %v3047 = vpop.f32.mrf.mxu0
        %v3048 = vadd.f32 0.0, %v3047
        %v3049 = vpop.f32.mrf.mxu0
        %3050 = vmatprep.mubr.bf16.mxu0 0
        %3051 = vmatmul.mubr.bf16.gmra.mxu0 %v2928
        %v3052 = vpop.f32.mrf.mxu0
        %v3053 = vadd.f32 0.0, %v3052
        %v3054 = vpop.f32.mrf.mxu0
        %v3055 = vpop.f32.mrf.mxu0
        %v3056 = vadd.f32 0.0, %v3055
        %v3057 = vpop.f32.mrf.mxu0
        %3058 = vmatprep.mubr.bf16.mxu0 0
        %3059 = vmatmul.mubr.bf16.gmra.mxu0 %v2930
        %v3060 = vpop.f32.mrf.mxu0
        %v3061 = vadd.f32 0.0, %v3060
        %v3062 = vpop.f32.mrf.mxu0
        %v3063 = vpop.f32.mrf.mxu0
        %v3064 = vadd.f32 0.0, %v3063
        %v3065 = vpop.f32.mrf.mxu0
        %3066 = vmatprep.mubr.bf16.mxu0 0
        %3067 = vmatmul.mubr.bf16.gmra.mxu0 %v2932
        %v3068 = vpop.f32.mrf.mxu0
        %v3069 = vadd.f32 0.0, %v3068
        %v3070 = vpop.f32.mrf.mxu0
        %v3071 = vpop.f32.mrf.mxu0
        %v3072 = vadd.f32 0.0, %v3071
        %v3073 = vpop.f32.mrf.mxu0
        %3074 = vmatprep.mubr.bf16.mxu0 0
        %3075 = vmatmul.mubr.bf16.gmra.mxu0 %v2934
        %v3076 = vpop.f32.mrf.mxu0
        %v3077 = vadd.f32 0.0, %v3076
        %v3078 = vpop.f32.mrf.mxu0
        %v3079 = vpop.f32.mrf.mxu0
        %v3080 = vadd.f32 0.0, %v3079
        %v3081 = vpop.f32.mrf.mxu0
        %3082 = vmatprep.mubr.bf16.mxu0 0
        %3083 = vmatmul.mubr.bf16.gmra.mxu0 %v2936
        %v3084 = vpop.f32.mrf.mxu0
        %v3085 = vadd.f32 0.0, %v3084
        %v3086 = vpop.f32.mrf.mxu0
        %v3087 = vpop.f32.mrf.mxu0
        %v3088 = vadd.f32 0.0, %v3087
        %v3089 = vpop.f32.mrf.mxu0
        %3090 = vmatprep.mubr.bf16.mxu0 0
        %3091 = vmatmul.mubr.bf16.gmra.mxu0 %v2938
        %v3092 = vpop.f32.mrf.mxu0
        %v3093 = vadd.f32 0.0, %v3092
        %v3094 = vpop.f32.mrf.mxu0
        %v3095 = vpop.f32.mrf.mxu0
        %v3096 = vadd.f32 0.0, %v3095
        %v3097 = vpop.f32.mrf.mxu0
        %3098 = vmatprep.mubr.bf16.mxu0 0
        %3099 = vmatmul.mubr.bf16.gmra.mxu0 %v2940
        %v3100 = vpop.f32.mrf.mxu0
        %v3101 = vadd.f32 0.0, %v3100
        %v3102 = vpop.f32.mrf.mxu0
        %v3103 = vpop.f32.mrf.mxu0
        %v3104 = vadd.f32 0.0, %v3103
        %v3105 = vpop.f32.mrf.mxu0
        %3106 = vdwg.mxu0
        %v3108 = vlaneseq
        %v3109 = vshrl.u32 %v3108, 7
        %v3110 = vsub.s32 0, %v3109
        %v3111 = vrot.slane %v1655, %v3110
        %v3113 = vmul.f32 %v2981, %v3111
        %v3114 = vmul.f32 %v2984, %v3111
        %v3115 = vmul.f32 %v2989, %v3111
        %v3116 = vmul.f32 %v2992, %v3111
        %v3117 = vmul.f32 %v2997, %v3111
        %v3118 = vmul.f32 %v3000, %v3111
        %v3119 = vmul.f32 %v3005, %v3111
        %v3120 = vmul.f32 %v3008, %v3111
        %v3121 = vmul.f32 %v3013, %v3111
        %v3122 = vmul.f32 %v3016, %v3111
        %v3123 = vmul.f32 %v3021, %v3111
        %v3124 = vmul.f32 %v3024, %v3111
        %v3125 = vmul.f32 %v3029, %v3111
        %v3126 = vmul.f32 %v3032, %v3111
        %v3127 = vmul.f32 %v3037, %v3111
        %v3128 = vmul.f32 %v3040, %v3111
        %v3129 = vmul.f32 %v3045, %v3111
        %v3130 = vmul.f32 %v3048, %v3111
        %v3131 = vmul.f32 %v3053, %v3111
        %v3132 = vmul.f32 %v3056, %v3111
        %v3133 = vmul.f32 %v3061, %v3111
        %v3134 = vmul.f32 %v3064, %v3111
        %v3135 = vmul.f32 %v3069, %v3111
        %v3136 = vmul.f32 %v3072, %v3111
        %v3137 = vmul.f32 %v3077, %v3111
        %v3138 = vmul.f32 %v3080, %v3111
        %v3139 = vmul.f32 %v3085, %v3111
        %v3140 = vmul.f32 %v3088, %v3111
        %v3141 = vmul.f32 %v3093, %v3111
        %v3142 = vmul.f32 %v3096, %v3111
        %v3143 = vmul.f32 %v3101, %v3111
        %v3144 = vmul.f32 %v3104, %v3111
        %v3146 = vlaneseq
        %v3147 = vshrl.u32 %v3146, 7
        %v3148 = vsub.s32 0, %v3147
        %v3149 = vrot.slane %v1656, %v3148
        %v3151 = vadd.f32 %v3113, %v3149
        %v3152 = vadd.f32 %v3114, %v3149
        %v3153 = vadd.f32 %v3115, %v3149
        %v3154 = vadd.f32 %v3116, %v3149
        %v3155 = vadd.f32 %v3117, %v3149
        %v3156 = vadd.f32 %v3118, %v3149
        %v3157 = vadd.f32 %v3119, %v3149
        %v3158 = vadd.f32 %v3120, %v3149
        %v3159 = vadd.f32 %v3121, %v3149
        %v3160 = vadd.f32 %v3122, %v3149
        %v3161 = vadd.f32 %v3123, %v3149
        %v3162 = vadd.f32 %v3124, %v3149
        %v3163 = vadd.f32 %v3125, %v3149
        %v3164 = vadd.f32 %v3126, %v3149
        %v3165 = vadd.f32 %v3127, %v3149
        %v3166 = vadd.f32 %v3128, %v3149
        %v3167 = vadd.f32 %v3129, %v3149
        %v3168 = vadd.f32 %v3130, %v3149
        %v3169 = vadd.f32 %v3131, %v3149
        %v3170 = vadd.f32 %v3132, %v3149
        %v3171 = vadd.f32 %v3133, %v3149
        %v3172 = vadd.f32 %v3134, %v3149
        %v3173 = vadd.f32 %v3135, %v3149
        %v3174 = vadd.f32 %v3136, %v3149
        %v3175 = vadd.f32 %v3137, %v3149
        %v3176 = vadd.f32 %v3138, %v3149
        %v3177 = vadd.f32 %v3139, %v3149
        %v3178 = vadd.f32 %v3140, %v3149
        %v3179 = vadd.f32 %v3141, %v3149
        %v3180 = vadd.f32 %v3142, %v3149
        %v3181 = vadd.f32 %v3143, %v3149
        %v3182 = vadd.f32 %v3144, %v3149
        %vm3183 = vcmp.ge.f32.partialorder %v3151, 0.0
        %vm3184 = vcmp.ge.f32.partialorder %v3152, 0.0
        %vm3185 = vcmp.ge.f32.partialorder %v3153, 0.0
        %vm3186 = vcmp.ge.f32.partialorder %v3154, 0.0
        %vm3187 = vcmp.ge.f32.partialorder %v3155, 0.0
        %vm3188 = vcmp.ge.f32.partialorder %v3156, 0.0
        %vm3189 = vcmp.ge.f32.partialorder %v3157, 0.0
        %vm3190 = vcmp.ge.f32.partialorder %v3158, 0.0
        %vm3191 = vcmp.ge.f32.partialorder %v3159, 0.0
        %vm3192 = vcmp.ge.f32.partialorder %v3160, 0.0
        %vm3193 = vcmp.ge.f32.partialorder %v3161, 0.0
        %vm3194 = vcmp.ge.f32.partialorder %v3162, 0.0
        %vm3195 = vcmp.ge.f32.partialorder %v3163, 0.0
        %vm3196 = vcmp.ge.f32.partialorder %v3164, 0.0
        %vm3197 = vcmp.ge.f32.partialorder %v3165, 0.0
        %vm3198 = vcmp.ge.f32.partialorder %v3166, 0.0
        %vm3199 = vcmp.ge.f32.partialorder %v3167, 0.0
        %vm3200 = vcmp.ge.f32.partialorder %v3168, 0.0
        %vm3201 = vcmp.ge.f32.partialorder %v3169, 0.0
        %vm3202 = vcmp.ge.f32.partialorder %v3170, 0.0
        %vm3203 = vcmp.ge.f32.partialorder %v3171, 0.0
        %vm3204 = vcmp.ge.f32.partialorder %v3172, 0.0
        %vm3205 = vcmp.ge.f32.partialorder %v3173, 0.0
        %vm3206 = vcmp.ge.f32.partialorder %v3174, 0.0
        %vm3207 = vcmp.ge.f32.partialorder %v3175, 0.0
        %vm3208 = vcmp.ge.f32.partialorder %v3176, 0.0
        %vm3209 = vcmp.ge.f32.partialorder %v3177, 0.0
        %vm3210 = vcmp.ge.f32.partialorder %v3178, 0.0
        %vm3211 = vcmp.ge.f32.partialorder %v3179, 0.0
        %vm3212 = vcmp.ge.f32.partialorder %v3180, 0.0
        %vm3213 = vcmp.ge.f32.partialorder %v3181, 0.0
        %vm3214 = vcmp.ge.f32.partialorder %v3182, 0.0
        %v3215 = vmul.f32 %v3151, 0.2
        %v3216 = vmul.f32 %v3152, 0.2
        %v3217 = vmul.f32 %v3153, 0.2
        %v3218 = vmul.f32 %v3154, 0.2
        %v3219 = vmul.f32 %v3155, 0.2
        %v3220 = vmul.f32 %v3156, 0.2
        %v3221 = vmul.f32 %v3157, 0.2
        %v3222 = vmul.f32 %v3158, 0.2
        %v3223 = vmul.f32 %v3159, 0.2
        %v3224 = vmul.f32 %v3160, 0.2
        %v3225 = vmul.f32 %v3161, 0.2
        %v3226 = vmul.f32 %v3162, 0.2
        %v3227 = vmul.f32 %v3163, 0.2
        %v3228 = vmul.f32 %v3164, 0.2
        %v3229 = vmul.f32 %v3165, 0.2
        %v3230 = vmul.f32 %v3166, 0.2
        %v3231 = vmul.f32 %v3167, 0.2
        %v3232 = vmul.f32 %v3168, 0.2
        %v3233 = vmul.f32 %v3169, 0.2
        %v3234 = vmul.f32 %v3170, 0.2
        %v3235 = vmul.f32 %v3171, 0.2
        %v3236 = vmul.f32 %v3172, 0.2
        %v3237 = vmul.f32 %v3173, 0.2
        %v3238 = vmul.f32 %v3174, 0.2
        %v3239 = vmul.f32 %v3175, 0.2
        %v3240 = vmul.f32 %v3176, 0.2
        %v3241 = vmul.f32 %v3177, 0.2
        %v3242 = vmul.f32 %v3178, 0.2
        %v3243 = vmul.f32 %v3179, 0.2
        %v3244 = vmul.f32 %v3180, 0.2
        %v3245 = vmul.f32 %v3181, 0.2
        %v3246 = vmul.f32 %v3182, 0.2
        %v3247 = vsel %vm3183, %v3151, %v3215
        %v3248 = vsel %vm3184, %v3152, %v3216
        %v3249 = vsel %vm3185, %v3153, %v3217
        %v3250 = vsel %vm3186, %v3154, %v3218
        %v3251 = vsel %vm3187, %v3155, %v3219
        %v3252 = vsel %vm3188, %v3156, %v3220
        %v3253 = vsel %vm3189, %v3157, %v3221
        %v3254 = vsel %vm3190, %v3158, %v3222
        %v3255 = vsel %vm3191, %v3159, %v3223
        %v3256 = vsel %vm3192, %v3160, %v3224
        %v3257 = vsel %vm3193, %v3161, %v3225
        %v3258 = vsel %vm3194, %v3162, %v3226
        %v3259 = vsel %vm3195, %v3163, %v3227
        %v3260 = vsel %vm3196, %v3164, %v3228
        %v3261 = vsel %vm3197, %v3165, %v3229
        %v3262 = vsel %vm3198, %v3166, %v3230
        %v3263 = vsel %vm3199, %v3167, %v3231
        %v3264 = vsel %vm3200, %v3168, %v3232
        %v3265 = vsel %vm3201, %v3169, %v3233
        %v3266 = vsel %vm3202, %v3170, %v3234
        %v3267 = vsel %vm3203, %v3171, %v3235
        %v3268 = vsel %vm3204, %v3172, %v3236
        %v3269 = vsel %vm3205, %v3173, %v3237
        %v3270 = vsel %vm3206, %v3174, %v3238
        %v3271 = vsel %vm3207, %v3175, %v3239
        %v3272 = vsel %vm3208, %v3176, %v3240
        %v3273 = vsel %vm3209, %v3177, %v3241
        %v3274 = vsel %vm3210, %v3178, %v3242
        %v3275 = vsel %vm3211, %v3179, %v3243
        %v3276 = vsel %vm3212, %v3180, %v3244
        %v3277 = vsel %vm3213, %v3181, %v3245
        %v3278 = vsel %vm3214, %v3182, %v3246
        %v3279 = vpack.c.bf16 %v3248, %v3247
        %v3280 = vpack.c.bf16 %v3250, %v3249
        %v3281 = vpack.c.bf16 %v3252, %v3251
        %v3282 = vpack.c.bf16 %v3254, %v3253
        %v3283 = vpack.c.bf16 %v3256, %v3255
        %v3284 = vpack.c.bf16 %v3258, %v3257
        %v3285 = vpack.c.bf16 %v3260, %v3259
        %v3286 = vpack.c.bf16 %v3262, %v3261
        %v3287 = vpack.c.bf16 %v3264, %v3263
        %v3288 = vpack.c.bf16 %v3266, %v3265
        %v3289 = vpack.c.bf16 %v3268, %v3267
        %v3290 = vpack.c.bf16 %v3270, %v3269
        %v3291 = vpack.c.bf16 %v3272, %v3271
        %v3292 = vpack.c.bf16 %v3274, %v3273
        %v3293 = vpack.c.bf16 %v3276, %v3275
        %v3294 = vpack.c.bf16 %v3278, %v3277
        %v3295 = vld [vmem:[#allocation7] sm:$0xff]
        %v3296 = vld [vmem:[#allocation7 + $0x8] sm:$0xff]
        %v3297 = vld [vmem:[#allocation7 + $0x10] sm:$0xff]
        %v3298 = vld [vmem:[#allocation7 + $0x18] sm:$0xff]
        %v3299 = vld [vmem:[#allocation7 + $0x20] sm:$0xff]
        %v3300 = vld [vmem:[#allocation7 + $0x28] sm:$0xff]
        %v3301 = vld [vmem:[#allocation7 + $0x30] sm:$0xff]
        %v3302 = vld [vmem:[#allocation8] sm:$0x3]
        %v3303 = vld [vmem:[#allocation10] sm:$0x3]
        %3319 = vrot.lane.b32.xlu0 0, 8
        %v3320 = vpop.permute.xlu0 %3319
        %3321 = vrot.lane.b32.xlu0 %v3279, 8
        %v3322 = vpop.permute.xlu0 %3321
        %3323 = vrot.lane.b32.xlu0 %v3280, 8
        %v3324 = vpop.permute.xlu0 %3323
        %3325 = vrot.lane.b32.xlu0 %v3281, 8
        %v3326 = vpop.permute.xlu0 %3325
        %3327 = vrot.lane.b32.xlu0 %v3282, 8
        %v3328 = vpop.permute.xlu0 %3327
        %3329 = vrot.lane.b32.xlu0 %v3283, 8
        %v3330 = vpop.permute.xlu0 %3329
        %3331 = vrot.lane.b32.xlu0 %v3284, 8
        %v3332 = vpop.permute.xlu0 %3331
        %3333 = vrot.lane.b32.xlu0 %v3285, 8
        %v3334 = vpop.permute.xlu0 %3333
        %3335 = vrot.lane.b32.xlu0 %v3286, 8
        %v3336 = vpop.permute.xlu0 %3335
        %3337 = vrot.lane.b32.xlu0 %v3287, 8
        %v3338 = vpop.permute.xlu0 %3337
        %3339 = vrot.lane.b32.xlu0 %v3288, 8
        %v3340 = vpop.permute.xlu0 %3339
        %3341 = vrot.lane.b32.xlu0 %v3289, 8
        %v3342 = vpop.permute.xlu0 %3341
        %3343 = vrot.lane.b32.xlu0 %v3290, 8
        %v3344 = vpop.permute.xlu0 %3343
        %3345 = vrot.lane.b32.xlu0 %v3291, 8
        %v3346 = vpop.permute.xlu0 %3345
        %3347 = vrot.lane.b32.xlu0 %v3292, 8
        %v3348 = vpop.permute.xlu0 %3347
        %3350 = vrot.lane.b32.xlu0 0, 16
        %v3351 = vpop.permute.xlu0 %3350
        %3352 = vrot.lane.b32.xlu0 %v3279, 16
        %v3353 = vpop.permute.xlu0 %3352
        %3354 = vrot.lane.b32.xlu0 %v3280, 16
        %v3355 = vpop.permute.xlu0 %3354
        %3356 = vrot.lane.b32.xlu0 %v3281, 16
        %v3357 = vpop.permute.xlu0 %3356
        %3358 = vrot.lane.b32.xlu0 %v3282, 16
        %v3359 = vpop.permute.xlu0 %3358
        %3360 = vrot.lane.b32.xlu0 %v3283, 16
        %v3361 = vpop.permute.xlu0 %3360
        %3362 = vrot.lane.b32.xlu0 %v3284, 16
        %v3363 = vpop.permute.xlu0 %3362
        %3364 = vrot.lane.b32.xlu0 %v3285, 16
        %v3365 = vpop.permute.xlu0 %3364
        %3366 = vrot.lane.b32.xlu0 %v3286, 16
        %v3367 = vpop.permute.xlu0 %3366
        %3368 = vrot.lane.b32.xlu0 %v3287, 16
        %v3369 = vpop.permute.xlu0 %3368
        %3370 = vrot.lane.b32.xlu0 %v3288, 16
        %v3371 = vpop.permute.xlu0 %3370
        %3372 = vrot.lane.b32.xlu0 %v3289, 16
        %v3373 = vpop.permute.xlu0 %3372
        %3374 = vrot.lane.b32.xlu0 %v3290, 16
        %v3375 = vpop.permute.xlu0 %3374
        %3376 = vrot.lane.b32.xlu0 %v3291, 16
        %v3377 = vpop.permute.xlu0 %3376
        %3378 = vrot.lane.b32.xlu0 %v3292, 16
        %v3379 = vpop.permute.xlu0 %3378
        %3380 = vrot.lane.b32.xlu0 %v3293, 16
        %v3381 = vpop.permute.xlu0 %3380
        %3383 = vrot.lane.b32.xlu0 %v3279, 24
        %v3384 = vpop.permute.xlu0 %3383
        %3385 = vrot.lane.b32.xlu0 %v3280, 24
        %v3386 = vpop.permute.xlu0 %3385
        %3387 = vrot.lane.b32.xlu0 %v3281, 24
        %v3388 = vpop.permute.xlu0 %3387
        %3389 = vrot.lane.b32.xlu0 %v3282, 24
        %v3390 = vpop.permute.xlu0 %3389
        %3391 = vrot.lane.b32.xlu0 %v3283, 24
        %v3392 = vpop.permute.xlu0 %3391
        %3393 = vrot.lane.b32.xlu0 %v3284, 24
        %v3394 = vpop.permute.xlu0 %3393
        %3395 = vrot.lane.b32.xlu0 %v3285, 24
        %v3396 = vpop.permute.xlu0 %3395
        %3397 = vrot.lane.b32.xlu0 %v3286, 24
        %v3398 = vpop.permute.xlu0 %3397
        %3399 = vrot.lane.b32.xlu0 %v3287, 24
        %v3400 = vpop.permute.xlu0 %3399
        %3401 = vrot.lane.b32.xlu0 %v3288, 24
        %v3402 = vpop.permute.xlu0 %3401
        %3403 = vrot.lane.b32.xlu0 %v3289, 24
        %v3404 = vpop.permute.xlu0 %3403
        %3405 = vrot.lane.b32.xlu0 %v3290, 24
        %v3406 = vpop.permute.xlu0 %3405
        %3407 = vrot.lane.b32.xlu0 %v3291, 24
        %v3408 = vpop.permute.xlu0 %3407
        %3409 = vrot.lane.b32.xlu0 %v3292, 24
        %v3410 = vpop.permute.xlu0 %3409
        %3411 = vrot.lane.b32.xlu0 %v3293, 24
        %v3412 = vpop.permute.xlu0 %3411
        %3413 = vrot.lane.b32.xlu0 %v3294, 24
        %v3414 = vpop.permute.xlu0 %3413
        %3415 = vrot.lane.b32.xlu0 %v3280, 32
        %v3416 = vpop.permute.xlu0 %3415
        %3417 = vrot.lane.b32.xlu0 %v3281, 32
        %v3418 = vpop.permute.xlu0 %3417
        %3419 = vrot.lane.b32.xlu0 %v3282, 32
        %v3420 = vpop.permute.xlu0 %3419
        %3421 = vrot.lane.b32.xlu0 %v3283, 32
        %v3422 = vpop.permute.xlu0 %3421
        %3423 = vrot.lane.b32.xlu0 %v3284, 32
        %v3424 = vpop.permute.xlu0 %3423
        %3425 = vrot.lane.b32.xlu0 %v3285, 32
        %v3426 = vpop.permute.xlu0 %3425
        %3427 = vrot.lane.b32.xlu0 %v3286, 32
        %v3428 = vpop.permute.xlu0 %3427
        %3429 = vrot.lane.b32.xlu0 %v3287, 32
        %v3430 = vpop.permute.xlu0 %3429
        %3431 = vrot.lane.b32.xlu0 %v3288, 32
        %v3432 = vpop.permute.xlu0 %3431
        %3433 = vrot.lane.b32.xlu0 %v3289, 32
        %v3434 = vpop.permute.xlu0 %3433
        %3435 = vrot.lane.b32.xlu0 %v3290, 32
        %v3436 = vpop.permute.xlu0 %3435
        %3437 = vrot.lane.b32.xlu0 %v3291, 32
        %v3438 = vpop.permute.xlu0 %3437
        %3439 = vrot.lane.b32.xlu0 %v3292, 32
        %v3440 = vpop.permute.xlu0 %3439
        %3441 = vrot.lane.b32.xlu0 %v3293, 32
        %v3442 = vpop.permute.xlu0 %3441
        %3443 = vrot.lane.b32.xlu0 %v3294, 32
        %v3444 = vpop.permute.xlu0 %3443
        %3445 = vrot.lane.b32.xlu0 0, 32
        %v3446 = vpop.permute.xlu0 %3445
        %3447 = vrot.lane.b32.xlu0 %v3281, 40
        %v3448 = vpop.permute.xlu0 %3447
        %3449 = vrot.lane.b32.xlu0 %v3282, 40
        %v3450 = vpop.permute.xlu0 %3449
        %3451 = vrot.lane.b32.xlu0 %v3283, 40
        %v3452 = vpop.permute.xlu0 %3451
        %3453 = vrot.lane.b32.xlu0 %v3284, 40
        %v3454 = vpop.permute.xlu0 %3453
        %3455 = vrot.lane.b32.xlu0 %v3285, 40
        %v3456 = vpop.permute.xlu0 %3455
        %3457 = vrot.lane.b32.xlu0 %v3286, 40
        %v3458 = vpop.permute.xlu0 %3457
        %3459 = vrot.lane.b32.xlu0 %v3287, 40
        %v3460 = vpop.permute.xlu0 %3459
        %3461 = vrot.lane.b32.xlu0 %v3288, 40
        %v3462 = vpop.permute.xlu0 %3461
        %3463 = vrot.lane.b32.xlu0 %v3289, 40
        %v3464 = vpop.permute.xlu0 %3463
        %3465 = vrot.lane.b32.xlu0 %v3290, 40
        %v3466 = vpop.permute.xlu0 %3465
        %3467 = vrot.lane.b32.xlu0 %v3291, 40
        %v3468 = vpop.permute.xlu0 %3467
        %3469 = vrot.lane.b32.xlu0 %v3292, 40
        %v3470 = vpop.permute.xlu0 %3469
        %3471 = vrot.lane.b32.xlu0 %v3293, 40
        %v3472 = vpop.permute.xlu0 %3471
        %3473 = vrot.lane.b32.xlu0 %v3294, 40
        %v3474 = vpop.permute.xlu0 %3473
        %3475 = vrot.lane.b32.xlu0 0, 40
        %v3476 = vpop.permute.xlu0 %3475
        %3477 = vrot.lane.b32.xlu0 %v3282, 48
        %v3478 = vpop.permute.xlu0 %3477
        %3479 = vrot.lane.b32.xlu0 %v3283, 48
        %v3480 = vpop.permute.xlu0 %3479
        %3481 = vrot.lane.b32.xlu0 %v3284, 48
        %v3482 = vpop.permute.xlu0 %3481
        %3483 = vrot.lane.b32.xlu0 %v3285, 48
        %v3484 = vpop.permute.xlu0 %3483
        %3485 = vrot.lane.b32.xlu0 %v3286, 48
        %v3486 = vpop.permute.xlu0 %3485
        %3487 = vrot.lane.b32.xlu0 %v3287, 48
        %v3488 = vpop.permute.xlu0 %3487
        %3489 = vrot.lane.b32.xlu0 %v3288, 48
        %v3490 = vpop.permute.xlu0 %3489
        %3491 = vrot.lane.b32.xlu0 %v3289, 48
        %v3492 = vpop.permute.xlu0 %3491
        %3493 = vrot.lane.b32.xlu0 %v3290, 48
        %v3494 = vpop.permute.xlu0 %3493
        %3495 = vrot.lane.b32.xlu0 %v3291, 48
        %v3496 = vpop.permute.xlu0 %3495
        %3497 = vrot.lane.b32.xlu0 %v3292, 48
        %v3498 = vpop.permute.xlu0 %3497
        %3499 = vrot.lane.b32.xlu0 %v3293, 48
        %v3500 = vpop.permute.xlu0 %3499
        %3501 = vrot.lane.b32.xlu0 %v3294, 48
        %v3502 = vpop.permute.xlu0 %3501
        %3503 = vrot.lane.b32.xlu0 0, 48
        %v3504 = vpop.permute.xlu0 %3503
        %v3507 = vsel %vm2690, 0, %v3320
        %v3509 = vsel %vm2690, 0, %v3322
        %v3512 = vsel %vm2690, %v3279, %v3324
        %v3515 = vsel %vm2690, %v3280, %v3326
        %v3518 = vsel %vm2690, %v3281, %v3328
        %v3521 = vsel %vm2690, %v3282, %v3330
        %v3524 = vsel %vm2690, %v3283, %v3332
        %v3527 = vsel %vm2690, %v3284, %v3334
        %v3530 = vsel %vm2690, %v3285, %v3336
        %v3533 = vsel %vm2690, %v3286, %v3338
        %v3536 = vsel %vm2690, %v3287, %v3340
        %v3539 = vsel %vm2690, %v3288, %v3342
        %v3542 = vsel %vm2690, %v3289, %v3344
        %v3545 = vsel %vm2690, %v3290, %v3346
        %v3548 = vsel %vm2690, %v3291, %v3348
        %v3550 = vsel %vm2723, %v3507, %v3351
        %v3552 = vsel %vm2723, %v3507, %v3353
        %v3554 = vsel %vm2723, %v3509, %v3355
        %v3556 = vsel %vm2723, %v3512, %v3357
        %v3558 = vsel %vm2723, %v3515, %v3359
        %v3560 = vsel %vm2723, %v3518, %v3361
        %v3562 = vsel %vm2723, %v3521, %v3363
        %v3564 = vsel %vm2723, %v3524, %v3365
        %v3566 = vsel %vm2723, %v3527, %v3367
        %v3568 = vsel %vm2723, %v3530, %v3369
        %v3570 = vsel %vm2723, %v3533, %v3371
        %v3572 = vsel %vm2723, %v3536, %v3373
        %v3574 = vsel %vm2723, %v3539, %v3375
        %v3576 = vsel %vm2723, %v3542, %v3377
        %v3578 = vsel %vm2723, %v3545, %v3379
        %v3580 = vsel %vm2723, %v3548, %v3381
        %v3582 = vsel %vm2756, %v3550, %v3384
        %v3584 = vsel %vm2756, %v3552, %v3386
        %v3586 = vsel %vm2756, %v3554, %v3388
        %v3588 = vsel %vm2756, %v3556, %v3390
        %v3590 = vsel %vm2756, %v3558, %v3392
        %v3592 = vsel %vm2756, %v3560, %v3394
        %v3594 = vsel %vm2756, %v3562, %v3396
        %v3596 = vsel %vm2756, %v3564, %v3398
        %v3598 = vsel %vm2756, %v3566, %v3400
        %v3600 = vsel %vm2756, %v3568, %v3402
        %v3602 = vsel %vm2756, %v3570, %v3404
        %v3604 = vsel %vm2756, %v3572, %v3406
        %v3606 = vsel %vm2756, %v3574, %v3408
        %v3608 = vsel %vm2756, %v3576, %v3410
        %v3610 = vsel %vm2756, %v3578, %v3412
        %v3612 = vsel %vm2756, %v3580, %v3414
        %v3614 = vsel %vm2789, %v3582, %v3416
        %v3616 = vsel %vm2789, %v3584, %v3418
        %v3618 = vsel %vm2789, %v3586, %v3420
        %v3620 = vsel %vm2789, %v3588, %v3422
        %v3622 = vsel %vm2789, %v3590, %v3424
        %v3624 = vsel %vm2789, %v3592, %v3426
        %v3626 = vsel %vm2789, %v3594, %v3428
        %v3628 = vsel %vm2789, %v3596, %v3430
        %v3630 = vsel %vm2789, %v3598, %v3432
        %v3632 = vsel %vm2789, %v3600, %v3434
        %v3634 = vsel %vm2789, %v3602, %v3436
        %v3636 = vsel %vm2789, %v3604, %v3438
        %v3638 = vsel %vm2789, %v3606, %v3440
        %v3640 = vsel %vm2789, %v3608, %v3442
        %v3642 = vsel %vm2789, %v3610, %v3444
        %v3644 = vsel %vm2789, %v3612, %v3446
        %v3646 = vsel %vm2822, %v3614, %v3448
        %v3648 = vsel %vm2822, %v3616, %v3450
        %v3650 = vsel %vm2822, %v3618, %v3452
        %v3652 = vsel %vm2822, %v3620, %v3454
        %v3654 = vsel %vm2822, %v3622, %v3456
        %v3656 = vsel %vm2822, %v3624, %v3458
        %v3658 = vsel %vm2822, %v3626, %v3460
        %v3660 = vsel %vm2822, %v3628, %v3462
        %v3662 = vsel %vm2822, %v3630, %v3464
        %v3664 = vsel %vm2822, %v3632, %v3466
        %v3666 = vsel %vm2822, %v3634, %v3468
        %v3668 = vsel %vm2822, %v3636, %v3470
        %v3670 = vsel %vm2822, %v3638, %v3472
        %v3672 = vsel %vm2822, %v3640, %v3474
        %v3674 = vsel %vm2822, %v3642, %v3476
        %v3675 = vsel %vm2822, %v3644, %v3476
        %v3677 = vsel %vm2855, %v3646, %v3478
        %v3679 = vsel %vm2855, %v3648, %v3480
        %v3681 = vsel %vm2855, %v3650, %v3482
        %v3683 = vsel %vm2855, %v3652, %v3484
        %v3685 = vsel %vm2855, %v3654, %v3486
        %v3687 = vsel %vm2855, %v3656, %v3488
        %v3689 = vsel %vm2855, %v3658, %v3490
        %v3691 = vsel %vm2855, %v3660, %v3492
        %v3693 = vsel %vm2855, %v3662, %v3494
        %v3695 = vsel %vm2855, %v3664, %v3496
        %v3697 = vsel %vm2855, %v3666, %v3498
        %v3699 = vsel %vm2855, %v3668, %v3500
        %v3701 = vsel %vm2855, %v3670, %v3502
        %v3703 = vsel %vm2855, %v3672, %v3504
        %v3704 = vsel %vm2855, %v3674, %v3504
        %v3705 = vsel %vm2855, %v3675, %v3504
        %v3713 = vunpack.c.l.b16 %v3295
        %v3714 = vunpack.c.h.b16 %v3295
        %v3715 = vunpack.c.l.b16 %v3296
        %v3716 = vunpack.c.h.b16 %v3296
        %v3717 = vunpack.c.l.b16 %v3297
        %v3718 = vunpack.c.h.b16 %v3297
        %v3719 = vunpack.c.l.b16 %v3298
        %v3720 = vunpack.c.h.b16 %v3298
        %v3721 = vunpack.c.l.b16 %v3299
        %v3722 = vunpack.c.h.b16 %v3299
        %v3723 = vunpack.c.l.b16 %v3300
        %v3724 = vunpack.c.h.b16 %v3300
        %v3725 = vunpack.c.l.b16 %v3301
        %v3726 = vunpack.c.h.b16 %v3301
        %v3727 = vpack.c.b16 %v3715, %v3713
        %v3728 = vpack.c.b16 %v3716, %v3714
        %v3729 = vpack.c.b16 %v3719, %v3717
        %v3730 = vpack.c.b16 %v3720, %v3718
        %v3731 = vpack.c.b16 %v3723, %v3721
        %v3732 = vpack.c.b16 %v3724, %v3722
        %v3733 = vpack.c.b16 %v3725, %v3725
        %v3734 = vpack.c.b16 %v3726, %v3726
        %v3741 = vsel %vm2909, %v3677, 0
        %v3743 = vsel %vm2909, %v3679, 0
        %v3745 = vsel %vm2909, %v3681, 0
        %v3747 = vsel %vm2909, %v3683, 0
        %v3749 = vsel %vm2909, %v3685, 0
        %v3751 = vsel %vm2909, %v3687, 0
        %v3753 = vsel %vm2909, %v3689, 0
        %v3755 = vsel %vm2909, %v3691, 0
        %v3757 = vsel %vm2909, %v3693, 0
        %v3759 = vsel %vm2909, %v3695, 0
        %v3761 = vsel %vm2909, %v3697, 0
        %v3763 = vsel %vm2909, %v3699, 0
        %v3765 = vsel %vm2909, %v3701, 0
        %v3767 = vsel %vm2909, %v3703, 0
        %v3769 = vsel %vm2909, %v3704, 0
        %v3771 = vsel %vm2909, %v3705, 0
        %v3774 = vsel %vm2942, %v3733, 0
        %v3777 = vsel %vm2942, %v3734, 0
        %3779 = vmatprep.subr.bf16.mxu0 0
        %3780 = vmatpush1.bf16.msra.mxu0 0
        %3781 = vmatprep.subr.bf16.mxu0 0
        %3782 = vmatpush1.bf16.msra.mxu0 0
        %3783 = vmatprep.subr.bf16.mxu0 0
        %3784 = vmatpush1.bf16.msra.mxu0 0
        %3785 = vmatprep.subr.bf16.mxu0 0
        %3786 = vmatpush1.bf16.msra.mxu0 0
        %3787 = vmatprep.subr.bf16.mxu0 %v3777
        %3788 = vmatpush1.bf16.msra.mxu0 %v3774
        %3789 = vmatprep.subr.bf16.mxu0 %v3732
        %3790 = vmatpush1.bf16.msra.mxu0 %v3731
        %3791 = vmatprep.subr.bf16.mxu0 %v3730
        %3792 = vmatpush1.bf16.msra.mxu0 %v3729
        %3793 = vmatprep.subr.bf16.mxu0 %v3728
        %3794 = vmatpush1.bf16.msra.mxu0 %v3727
        %3795 = vmatprep.subr.bf16.mxu0 0
        %3796 = vmatpush2.bf16.msra.mxu0 0
        %3797 = vmatprep.subr.bf16.mxu0 0
        %3798 = vmatpush2.bf16.msra.mxu0 0
        %3799 = vmatprep.subr.bf16.mxu0 0
        %3800 = vmatpush2.bf16.msra.mxu0 0
        %3801 = vmatprep.subr.bf16.mxu0 0
        %3802 = vmatpush2.bf16.msra.mxu0 0
        %3803 = vmatprep.subr.bf16.mxu0 0
        %3804 = vmatpush2.bf16.msra.mxu0 0
        %3805 = vmatprep.subr.bf16.mxu0 0
        %3806 = vmatpush2.bf16.msra.mxu0 0
        %3807 = vmatprep.subr.bf16.mxu0 0
        %3808 = vmatpush2.bf16.msra.mxu0 0
        %3809 = vmatprep.subr.bf16.mxu0 0
        %3810 = vmatpush2.bf16.msra.mxu0 0
        %3811 = vmatprep.mubr.bf16.mxu0 0
        %3812 = vmatmul.mubr.bf16.gmra.mxu0 %v3741
        %v3813 = vpop.f32.mrf.mxu0
        %v3814 = vadd.f32 0.0, %v3813
        %v3815 = vpop.f32.mrf.mxu0
        %v3816 = vadd.f32 0.0, %v3815
        %v3817 = vpop.f32.mrf.mxu0
        %v3818 = vadd.f32 0.0, %v3817
        %v3819 = vpop.f32.mrf.mxu0
        %v3820 = vadd.f32 0.0, %v3819
        %3821 = vmatprep.mubr.bf16.mxu0 0
        %3822 = vmatmul.mubr.bf16.gmra.mxu0 %v3743
        %v3823 = vpop.f32.mrf.mxu0
        %v3824 = vadd.f32 0.0, %v3823
        %v3825 = vpop.f32.mrf.mxu0
        %v3826 = vadd.f32 0.0, %v3825
        %v3827 = vpop.f32.mrf.mxu0
        %v3828 = vadd.f32 0.0, %v3827
        %v3829 = vpop.f32.mrf.mxu0
        %v3830 = vadd.f32 0.0, %v3829
        %3831 = vmatprep.mubr.bf16.mxu0 0
        %3832 = vmatmul.mubr.bf16.gmra.mxu0 %v3745
        %v3833 = vpop.f32.mrf.mxu0
        %v3834 = vadd.f32 0.0, %v3833
        %v3835 = vpop.f32.mrf.mxu0
        %v3836 = vadd.f32 0.0, %v3835
        %v3837 = vpop.f32.mrf.mxu0
        %v3838 = vadd.f32 0.0, %v3837
        %v3839 = vpop.f32.mrf.mxu0
        %v3840 = vadd.f32 0.0, %v3839
        %3841 = vmatprep.mubr.bf16.mxu0 0
        %3842 = vmatmul.mubr.bf16.gmra.mxu0 %v3747
        %v3843 = vpop.f32.mrf.mxu0
        %v3844 = vadd.f32 0.0, %v3843
        %v3845 = vpop.f32.mrf.mxu0
        %v3846 = vadd.f32 0.0, %v3845
        %v3847 = vpop.f32.mrf.mxu0
        %v3848 = vadd.f32 0.0, %v3847
        %v3849 = vpop.f32.mrf.mxu0
        %v3850 = vadd.f32 0.0, %v3849
        %3851 = vmatprep.mubr.bf16.mxu0 0
        %3852 = vmatmul.mubr.bf16.gmra.mxu0 %v3749
        %v3853 = vpop.f32.mrf.mxu0
        %v3854 = vadd.f32 0.0, %v3853
        %v3855 = vpop.f32.mrf.mxu0
        %v3856 = vadd.f32 0.0, %v3855
        %v3857 = vpop.f32.mrf.mxu0
        %v3858 = vadd.f32 0.0, %v3857
        %v3859 = vpop.f32.mrf.mxu0
        %v3860 = vadd.f32 0.0, %v3859
        %3861 = vmatprep.mubr.bf16.mxu0 0
        %3862 = vmatmul.mubr.bf16.gmra.mxu0 %v3751
        %v3863 = vpop.f32.mrf.mxu0
        %v3864 = vadd.f32 0.0, %v3863
        %v3865 = vpop.f32.mrf.mxu0
        %v3866 = vadd.f32 0.0, %v3865
        %v3867 = vpop.f32.mrf.mxu0
        %v3868 = vadd.f32 0.0, %v3867
        %v3869 = vpop.f32.mrf.mxu0
        %v3870 = vadd.f32 0.0, %v3869
        %3871 = vmatprep.mubr.bf16.mxu0 0
        %3872 = vmatmul.mubr.bf16.gmra.mxu0 %v3753
        %v3873 = vpop.f32.mrf.mxu0
        %v3874 = vadd.f32 0.0, %v3873
        %v3875 = vpop.f32.mrf.mxu0
        %v3876 = vadd.f32 0.0, %v3875
        %v3877 = vpop.f32.mrf.mxu0
        %v3878 = vadd.f32 0.0, %v3877
        %v3879 = vpop.f32.mrf.mxu0
        %v3880 = vadd.f32 0.0, %v3879
        %3881 = vmatprep.mubr.bf16.mxu0 0
        %3882 = vmatmul.mubr.bf16.gmra.mxu0 %v3755
        %v3883 = vpop.f32.mrf.mxu0
        %v3884 = vadd.f32 0.0, %v3883
        %v3885 = vpop.f32.mrf.mxu0
        %v3886 = vadd.f32 0.0, %v3885
        %v3887 = vpop.f32.mrf.mxu0
        %v3888 = vadd.f32 0.0, %v3887
        %v3889 = vpop.f32.mrf.mxu0
        %v3890 = vadd.f32 0.0, %v3889
        %3891 = vmatprep.mubr.bf16.mxu0 0
        %3892 = vmatmul.mubr.bf16.gmra.mxu0 %v3757
        %v3893 = vpop.f32.mrf.mxu0
        %v3894 = vadd.f32 0.0, %v3893
        %v3895 = vpop.f32.mrf.mxu0
        %v3896 = vadd.f32 0.0, %v3895
        %v3897 = vpop.f32.mrf.mxu0
        %v3898 = vadd.f32 0.0, %v3897
        %v3899 = vpop.f32.mrf.mxu0
        %v3900 = vadd.f32 0.0, %v3899
        %3901 = vmatprep.mubr.bf16.mxu0 0
        %3902 = vmatmul.mubr.bf16.gmra.mxu0 %v3759
        %v3903 = vpop.f32.mrf.mxu0
        %v3904 = vadd.f32 0.0, %v3903
        %v3905 = vpop.f32.mrf.mxu0
        %v3906 = vadd.f32 0.0, %v3905
        %v3907 = vpop.f32.mrf.mxu0
        %v3908 = vadd.f32 0.0, %v3907
        %v3909 = vpop.f32.mrf.mxu0
        %v3910 = vadd.f32 0.0, %v3909
        %3911 = vmatprep.mubr.bf16.mxu0 0
        %3912 = vmatmul.mubr.bf16.gmra.mxu0 %v3761
        %v3913 = vpop.f32.mrf.mxu0
        %v3914 = vadd.f32 0.0, %v3913
        %v3915 = vpop.f32.mrf.mxu0
        %v3916 = vadd.f32 0.0, %v3915
        %v3917 = vpop.f32.mrf.mxu0
        %v3918 = vadd.f32 0.0, %v3917
        %v3919 = vpop.f32.mrf.mxu0
        %v3920 = vadd.f32 0.0, %v3919
        %3921 = vmatprep.mubr.bf16.mxu0 0
        %3922 = vmatmul.mubr.bf16.gmra.mxu0 %v3763
        %v3923 = vpop.f32.mrf.mxu0
        %v3924 = vadd.f32 0.0, %v3923
        %v3925 = vpop.f32.mrf.mxu0
        %v3926 = vadd.f32 0.0, %v3925
        %v3927 = vpop.f32.mrf.mxu0
        %v3928 = vadd.f32 0.0, %v3927
        %v3929 = vpop.f32.mrf.mxu0
        %v3930 = vadd.f32 0.0, %v3929
        %3931 = vmatprep.mubr.bf16.mxu0 0
        %3932 = vmatmul.mubr.bf16.gmra.mxu0 %v3765
        %v3933 = vpop.f32.mrf.mxu0
        %v3934 = vadd.f32 0.0, %v3933
        %v3935 = vpop.f32.mrf.mxu0
        %v3936 = vadd.f32 0.0, %v3935
        %v3937 = vpop.f32.mrf.mxu0
        %v3938 = vadd.f32 0.0, %v3937
        %v3939 = vpop.f32.mrf.mxu0
        %v3940 = vadd.f32 0.0, %v3939
        %3941 = vmatprep.mubr.bf16.mxu0 0
        %3942 = vmatmul.mubr.bf16.gmra.mxu0 %v3767
        %v3943 = vpop.f32.mrf.mxu0
        %v3944 = vadd.f32 0.0, %v3943
        %v3945 = vpop.f32.mrf.mxu0
        %v3946 = vadd.f32 0.0, %v3945
        %v3947 = vpop.f32.mrf.mxu0
        %v3948 = vadd.f32 0.0, %v3947
        %v3949 = vpop.f32.mrf.mxu0
        %v3950 = vadd.f32 0.0, %v3949
        %3951 = vmatprep.mubr.bf16.mxu0 0
        %3952 = vmatmul.mubr.bf16.gmra.mxu0 %v3769
        %v3953 = vpop.f32.mrf.mxu0
        %v3954 = vadd.f32 0.0, %v3953
        %v3955 = vpop.f32.mrf.mxu0
        %v3956 = vadd.f32 0.0, %v3955
        %v3957 = vpop.f32.mrf.mxu0
        %v3958 = vadd.f32 0.0, %v3957
        %v3959 = vpop.f32.mrf.mxu0
        %v3960 = vadd.f32 0.0, %v3959
        %3961 = vmatprep.mubr.bf16.mxu0 0
        %3962 = vmatmul.mubr.bf16.gmra.mxu0 %v3771
        %v3963 = vpop.f32.mrf.mxu0
        %v3964 = vadd.f32 0.0, %v3963
        %v3965 = vpop.f32.mrf.mxu0
        %v3966 = vadd.f32 0.0, %v3965
        %v3967 = vpop.f32.mrf.mxu0
        %v3968 = vadd.f32 0.0, %v3967
        %v3969 = vpop.f32.mrf.mxu0
        %v3970 = vadd.f32 0.0, %v3969
        %3971 = vdwg.mxu0
        %v3973 = vlaneseq
        %v3974 = vshrl.u32 %v3973, 7
        %v3975 = vsub.s32 0, %v3974
        %v3976 = vrot.slane %v3302, %v3975
        %v3977 = vlaneseq
        %v3978 = vshrl.u32 %v3977, 7
        %v3979 = vsub.s32 1, %v3978
        %v3980 = vrot.slane %v3302, %v3979
        %v3983 = vmul.f32 %v3814, %v3976
        %v3984 = vmul.f32 %v3816, %v3980
        %v3985 = vmul.f32 %v3818, %v3976
        %v3986 = vmul.f32 %v3820, %v3980
        %v3987 = vmul.f32 %v3824, %v3976
        %v3988 = vmul.f32 %v3826, %v3980
        %v3989 = vmul.f32 %v3828, %v3976
        %v3990 = vmul.f32 %v3830, %v3980
        %v3991 = vmul.f32 %v3834, %v3976
        %v3992 = vmul.f32 %v3836, %v3980
        %v3993 = vmul.f32 %v3838, %v3976
        %v3994 = vmul.f32 %v3840, %v3980
        %v3995 = vmul.f32 %v3844, %v3976
        %v3996 = vmul.f32 %v3846, %v3980
        %v3997 = vmul.f32 %v3848, %v3976
        %v3998 = vmul.f32 %v3850, %v3980
        %v3999 = vmul.f32 %v3854, %v3976
        %v4000 = vmul.f32 %v3856, %v3980
        %v4001 = vmul.f32 %v3858, %v3976
        %v4002 = vmul.f32 %v3860, %v3980
        %v4003 = vmul.f32 %v3864, %v3976
        %v4004 = vmul.f32 %v3866, %v3980
        %v4005 = vmul.f32 %v3868, %v3976
        %v4006 = vmul.f32 %v3870, %v3980
        %v4007 = vmul.f32 %v3874, %v3976
        %v4008 = vmul.f32 %v3876, %v3980
        %v4009 = vmul.f32 %v3878, %v3976
        %v4010 = vmul.f32 %v3880, %v3980
        %v4011 = vmul.f32 %v3884, %v3976
        %v4012 = vmul.f32 %v3886, %v3980
        %v4013 = vmul.f32 %v3888, %v3976
        %v4014 = vmul.f32 %v3890, %v3980
        %v4015 = vmul.f32 %v3894, %v3976
        %v4016 = vmul.f32 %v3896, %v3980
        %v4017 = vmul.f32 %v3898, %v3976
        %v4018 = vmul.f32 %v3900, %v3980
        %v4019 = vmul.f32 %v3904, %v3976
        %v4020 = vmul.f32 %v3906, %v3980
        %v4021 = vmul.f32 %v3908, %v3976
        %v4022 = vmul.f32 %v3910, %v3980
        %v4023 = vmul.f32 %v3914, %v3976
        %v4024 = vmul.f32 %v3916, %v3980
        %v4025 = vmul.f32 %v3918, %v3976
        %v4026 = vmul.f32 %v3920, %v3980
        %v4027 = vmul.f32 %v3924, %v3976
        %v4028 = vmul.f32 %v3926, %v3980
        %v4029 = vmul.f32 %v3928, %v3976
        %v4030 = vmul.f32 %v3930, %v3980
        %v4031 = vmul.f32 %v3934, %v3976
        %v4032 = vmul.f32 %v3936, %v3980
        %v4033 = vmul.f32 %v3938, %v3976
        %v4034 = vmul.f32 %v3940, %v3980
        %v4035 = vmul.f32 %v3944, %v3976
        %v4036 = vmul.f32 %v3946, %v3980
        %v4037 = vmul.f32 %v3948, %v3976
        %v4038 = vmul.f32 %v3950, %v3980
        %v4039 = vmul.f32 %v3954, %v3976
        %v4040 = vmul.f32 %v3956, %v3980
        %v4041 = vmul.f32 %v3958, %v3976
        %v4042 = vmul.f32 %v3960, %v3980
        %v4043 = vmul.f32 %v3964, %v3976
        %v4044 = vmul.f32 %v3966, %v3980
        %v4045 = vmul.f32 %v3968, %v3976
        %v4046 = vmul.f32 %v3970, %v3980
        %v4048 = vlaneseq
        %v4049 = vshrl.u32 %v4048, 7
        %v4050 = vsub.s32 0, %v4049
        %v4051 = vrot.slane %v3303, %v4050
        %v4052 = vlaneseq
        %v4053 = vshrl.u32 %v4052, 7
        %v4054 = vsub.s32 1, %v4053
        %v4055 = vrot.slane %v3303, %v4054
        %v4058 = vadd.f32 %v3983, %v4051
        %v4059 = vadd.f32 %v3984, %v4055
        %v4060 = vadd.f32 %v3985, %v4051
        %v4061 = vadd.f32 %v3986, %v4055
        %v4062 = vadd.f32 %v3987, %v4051
        %v4063 = vadd.f32 %v3988, %v4055
        %v4064 = vadd.f32 %v3989, %v4051
        %v4065 = vadd.f32 %v3990, %v4055
        %v4066 = vadd.f32 %v3991, %v4051
        %v4067 = vadd.f32 %v3992, %v4055
        %v4068 = vadd.f32 %v3993, %v4051
        %v4069 = vadd.f32 %v3994, %v4055
        %v4070 = vadd.f32 %v3995, %v4051
        %v4071 = vadd.f32 %v3996, %v4055
        %v4072 = vadd.f32 %v3997, %v4051
        %v4073 = vadd.f32 %v3998, %v4055
        %v4074 = vadd.f32 %v3999, %v4051
        %v4075 = vadd.f32 %v4000, %v4055
        %v4076 = vadd.f32 %v4001, %v4051
        %v4077 = vadd.f32 %v4002, %v4055
        %v4078 = vadd.f32 %v4003, %v4051
        %v4079 = vadd.f32 %v4004, %v4055
        %v4080 = vadd.f32 %v4005, %v4051
        %v4081 = vadd.f32 %v4006, %v4055
        %v4082 = vadd.f32 %v4007, %v4051
        %v4083 = vadd.f32 %v4008, %v4055
        %v4084 = vadd.f32 %v4009, %v4051
        %v4085 = vadd.f32 %v4010, %v4055
        %v4086 = vadd.f32 %v4011, %v4051
        %v4087 = vadd.f32 %v4012, %v4055
        %v4088 = vadd.f32 %v4013, %v4051
        %v4089 = vadd.f32 %v4014, %v4055
        %v4090 = vadd.f32 %v4015, %v4051
        %v4091 = vadd.f32 %v4016, %v4055
        %v4092 = vadd.f32 %v4017, %v4051
        %v4093 = vadd.f32 %v4018, %v4055
        %v4094 = vadd.f32 %v4019, %v4051
        %v4095 = vadd.f32 %v4020, %v4055
        %v4096 = vadd.f32 %v4021, %v4051
        %v4097 = vadd.f32 %v4022, %v4055
        %v4098 = vadd.f32 %v4023, %v4051
        %v4099 = vadd.f32 %v4024, %v4055
        %v4100 = vadd.f32 %v4025, %v4051
        %v4101 = vadd.f32 %v4026, %v4055
        %v4102 = vadd.f32 %v4027, %v4051
        %v4103 = vadd.f32 %v4028, %v4055
        %v4104 = vadd.f32 %v4029, %v4051
        %v4105 = vadd.f32 %v4030, %v4055
        %v4106 = vadd.f32 %v4031, %v4051
        %v4107 = vadd.f32 %v4032, %v4055
        %v4108 = vadd.f32 %v4033, %v4051
        %v4109 = vadd.f32 %v4034, %v4055
        %v4110 = vadd.f32 %v4035, %v4051
        %v4111 = vadd.f32 %v4036, %v4055
        %v4112 = vadd.f32 %v4037, %v4051
        %v4113 = vadd.f32 %v4038, %v4055
        %v4114 = vadd.f32 %v4039, %v4051
        %v4115 = vadd.f32 %v4040, %v4055
        %v4116 = vadd.f32 %v4041, %v4051
        %v4117 = vadd.f32 %v4042, %v4055
        %v4118 = vadd.f32 %v4043, %v4051
        %v4119 = vadd.f32 %v4044, %v4055
        %v4120 = vadd.f32 %v4045, %v4051
        %v4121 = vadd.f32 %v4046, %v4055
        %vm4122 = vcmp.ge.f32.partialorder %v4058, 0.0
        %vm4123 = vcmp.ge.f32.partialorder %v4059, 0.0
        %vm4124 = vcmp.ge.f32.partialorder %v4060, 0.0
        %vm4125 = vcmp.ge.f32.partialorder %v4061, 0.0
        %vm4126 = vcmp.ge.f32.partialorder %v4062, 0.0
        %vm4127 = vcmp.ge.f32.partialorder %v4063, 0.0
        %vm4128 = vcmp.ge.f32.partialorder %v4064, 0.0
        %vm4129 = vcmp.ge.f32.partialorder %v4065, 0.0
        %vm4130 = vcmp.ge.f32.partialorder %v4066, 0.0
        %vm4131 = vcmp.ge.f32.partialorder %v4067, 0.0
        %vm4132 = vcmp.ge.f32.partialorder %v4068, 0.0
        %vm4133 = vcmp.ge.f32.partialorder %v4069, 0.0
        %vm4134 = vcmp.ge.f32.partialorder %v4070, 0.0
        %vm4135 = vcmp.ge.f32.partialorder %v4071, 0.0
        %vm4136 = vcmp.ge.f32.partialorder %v4072, 0.0
        %vm4137 = vcmp.ge.f32.partialorder %v4073, 0.0
        %vm4138 = vcmp.ge.f32.partialorder %v4074, 0.0
        %vm4139 = vcmp.ge.f32.partialorder %v4075, 0.0
        %vm4140 = vcmp.ge.f32.partialorder %v4076, 0.0
        %vm4141 = vcmp.ge.f32.partialorder %v4077, 0.0
        %vm4142 = vcmp.ge.f32.partialorder %v4078, 0.0
        %vm4143 = vcmp.ge.f32.partialorder %v4079, 0.0
        %vm4144 = vcmp.ge.f32.partialorder %v4080, 0.0
        %vm4145 = vcmp.ge.f32.partialorder %v4081, 0.0
        %vm4146 = vcmp.ge.f32.partialorder %v4082, 0.0
        %vm4147 = vcmp.ge.f32.partialorder %v4083, 0.0
        %vm4148 = vcmp.ge.f32.partialorder %v4084, 0.0
        %vm4149 = vcmp.ge.f32.partialorder %v4085, 0.0
        %vm4150 = vcmp.ge.f32.partialorder %v4086, 0.0
        %vm4151 = vcmp.ge.f32.partialorder %v4087, 0.0
        %vm4152 = vcmp.ge.f32.partialorder %v4088, 0.0
        %vm4153 = vcmp.ge.f32.partialorder %v4089, 0.0
        %vm4154 = vcmp.ge.f32.partialorder %v4090, 0.0
        %vm4155 = vcmp.ge.f32.partialorder %v4091, 0.0
        %vm4156 = vcmp.ge.f32.partialorder %v4092, 0.0
        %vm4157 = vcmp.ge.f32.partialorder %v4093, 0.0
        %vm4158 = vcmp.ge.f32.partialorder %v4094, 0.0
        %vm4159 = vcmp.ge.f32.partialorder %v4095, 0.0
        %vm4160 = vcmp.ge.f32.partialorder %v4096, 0.0
        %vm4161 = vcmp.ge.f32.partialorder %v4097, 0.0
        %vm4162 = vcmp.ge.f32.partialorder %v4098, 0.0
        %vm4163 = vcmp.ge.f32.partialorder %v4099, 0.0
        %vm4164 = vcmp.ge.f32.partialorder %v4100, 0.0
        %vm4165 = vcmp.ge.f32.partialorder %v4101, 0.0
        %vm4166 = vcmp.ge.f32.partialorder %v4102, 0.0
        %vm4167 = vcmp.ge.f32.partialorder %v4103, 0.0
        %vm4168 = vcmp.ge.f32.partialorder %v4104, 0.0
        %vm4169 = vcmp.ge.f32.partialorder %v4105, 0.0
        %vm4170 = vcmp.ge.f32.partialorder %v4106, 0.0
        %vm4171 = vcmp.ge.f32.partialorder %v4107, 0.0
        %vm4172 = vcmp.ge.f32.partialorder %v4108, 0.0
        %vm4173 = vcmp.ge.f32.partialorder %v4109, 0.0
        %vm4174 = vcmp.ge.f32.partialorder %v4110, 0.0
        %vm4175 = vcmp.ge.f32.partialorder %v4111, 0.0
        %vm4176 = vcmp.ge.f32.partialorder %v4112, 0.0
        %vm4177 = vcmp.ge.f32.partialorder %v4113, 0.0
        %vm4178 = vcmp.ge.f32.partialorder %v4114, 0.0
        %vm4179 = vcmp.ge.f32.partialorder %v4115, 0.0
        %vm4180 = vcmp.ge.f32.partialorder %v4116, 0.0
        %vm4181 = vcmp.ge.f32.partialorder %v4117, 0.0
        %vm4182 = vcmp.ge.f32.partialorder %v4118, 0.0
        %vm4183 = vcmp.ge.f32.partialorder %v4119, 0.0
        %vm4184 = vcmp.ge.f32.partialorder %v4120, 0.0
        %vm4185 = vcmp.ge.f32.partialorder %v4121, 0.0
        %v4186 = vmul.f32 %v4058, 0.2
        %v4187 = vmul.f32 %v4059, 0.2
        %v4188 = vmul.f32 %v4060, 0.2
        %v4189 = vmul.f32 %v4061, 0.2
        %v4190 = vmul.f32 %v4062, 0.2
        %v4191 = vmul.f32 %v4063, 0.2
        %v4192 = vmul.f32 %v4064, 0.2
        %v4193 = vmul.f32 %v4065, 0.2
        %v4194 = vmul.f32 %v4066, 0.2
        %v4195 = vmul.f32 %v4067, 0.2
        %v4196 = vmul.f32 %v4068, 0.2
        %v4197 = vmul.f32 %v4069, 0.2
        %v4198 = vmul.f32 %v4070, 0.2
        %v4199 = vmul.f32 %v4071, 0.2
        %v4200 = vmul.f32 %v4072, 0.2
        %v4201 = vmul.f32 %v4073, 0.2
        %v4202 = vmul.f32 %v4074, 0.2
        %v4203 = vmul.f32 %v4075, 0.2
        %v4204 = vmul.f32 %v4076, 0.2
        %v4205 = vmul.f32 %v4077, 0.2
        %v4206 = vmul.f32 %v4078, 0.2
        %v4207 = vmul.f32 %v4079, 0.2
        %v4208 = vmul.f32 %v4080, 0.2
        %v4209 = vmul.f32 %v4081, 0.2
        %v4210 = vmul.f32 %v4082, 0.2
        %v4211 = vmul.f32 %v4083, 0.2
        %v4212 = vmul.f32 %v4084, 0.2
        %v4213 = vmul.f32 %v4085, 0.2
        %v4214 = vmul.f32 %v4086, 0.2
        %v4215 = vmul.f32 %v4087, 0.2
        %v4216 = vmul.f32 %v4088, 0.2
        %v4217 = vmul.f32 %v4089, 0.2
        %v4218 = vmul.f32 %v4090, 0.2
        %v4219 = vmul.f32 %v4091, 0.2
        %v4220 = vmul.f32 %v4092, 0.2
        %v4221 = vmul.f32 %v4093, 0.2
        %v4222 = vmul.f32 %v4094, 0.2
        %v4223 = vmul.f32 %v4095, 0.2
        %v4224 = vmul.f32 %v4096, 0.2
        %v4225 = vmul.f32 %v4097, 0.2
        %v4226 = vmul.f32 %v4098, 0.2
        %v4227 = vmul.f32 %v4099, 0.2
        %v4228 = vmul.f32 %v4100, 0.2
        %v4229 = vmul.f32 %v4101, 0.2
        %v4230 = vmul.f32 %v4102, 0.2
        %v4231 = vmul.f32 %v4103, 0.2
        %v4232 = vmul.f32 %v4104, 0.2
        %v4233 = vmul.f32 %v4105, 0.2
        %v4234 = vmul.f32 %v4106, 0.2
        %v4235 = vmul.f32 %v4107, 0.2
        %v4236 = vmul.f32 %v4108, 0.2
        %v4237 = vmul.f32 %v4109, 0.2
        %v4238 = vmul.f32 %v4110, 0.2
        %v4239 = vmul.f32 %v4111, 0.2
        %v4240 = vmul.f32 %v4112, 0.2
        %v4241 = vmul.f32 %v4113, 0.2
        %v4242 = vmul.f32 %v4114, 0.2
        %v4243 = vmul.f32 %v4115, 0.2
        %v4244 = vmul.f32 %v4116, 0.2
        %v4245 = vmul.f32 %v4117, 0.2
        %v4246 = vmul.f32 %v4118, 0.2
        %v4247 = vmul.f32 %v4119, 0.2
        %v4248 = vmul.f32 %v4120, 0.2
        %v4249 = vmul.f32 %v4121, 0.2
        %v4250 = vsel %vm4122, %v4058, %v4186
        %v4251 = vsel %vm4123, %v4059, %v4187
        %v4252 = vsel %vm4124, %v4060, %v4188
        %v4253 = vsel %vm4125, %v4061, %v4189
        %v4254 = vsel %vm4126, %v4062, %v4190
        %v4255 = vsel %vm4127, %v4063, %v4191
        %v4256 = vsel %vm4128, %v4064, %v4192
        %v4257 = vsel %vm4129, %v4065, %v4193
        %v4258 = vsel %vm4130, %v4066, %v4194
        %v4259 = vsel %vm4131, %v4067, %v4195
        %v4260 = vsel %vm4132, %v4068, %v4196
        %v4261 = vsel %vm4133, %v4069, %v4197
        %v4262 = vsel %vm4134, %v4070, %v4198
        %v4263 = vsel %vm4135, %v4071, %v4199
        %v4264 = vsel %vm4136, %v4072, %v4200
        %v4265 = vsel %vm4137, %v4073, %v4201
        %v4266 = vsel %vm4138, %v4074, %v4202
        %v4267 = vsel %vm4139, %v4075, %v4203
        %v4268 = vsel %vm4140, %v4076, %v4204
        %v4269 = vsel %vm4141, %v4077, %v4205
        %v4270 = vsel %vm4142, %v4078, %v4206
        %v4271 = vsel %vm4143, %v4079, %v4207
        %v4272 = vsel %vm4144, %v4080, %v4208
        %v4273 = vsel %vm4145, %v4081, %v4209
        %v4274 = vsel %vm4146, %v4082, %v4210
        %v4275 = vsel %vm4147, %v4083, %v4211
        %v4276 = vsel %vm4148, %v4084, %v4212
        %v4277 = vsel %vm4149, %v4085, %v4213
        %v4278 = vsel %vm4150, %v4086, %v4214
        %v4279 = vsel %vm4151, %v4087, %v4215
        %v4280 = vsel %vm4152, %v4088, %v4216
        %v4281 = vsel %vm4153, %v4089, %v4217
        %v4282 = vsel %vm4154, %v4090, %v4218
        %v4283 = vsel %vm4155, %v4091, %v4219
        %v4284 = vsel %vm4156, %v4092, %v4220
        %v4285 = vsel %vm4157, %v4093, %v4221
        %v4286 = vsel %vm4158, %v4094, %v4222
        %v4287 = vsel %vm4159, %v4095, %v4223
        %v4288 = vsel %vm4160, %v4096, %v4224
        %v4289 = vsel %vm4161, %v4097, %v4225
        %v4290 = vsel %vm4162, %v4098, %v4226
        %v4291 = vsel %vm4163, %v4099, %v4227
        %v4292 = vsel %vm4164, %v4100, %v4228
        %v4293 = vsel %vm4165, %v4101, %v4229
        %v4294 = vsel %vm4166, %v4102, %v4230
        %v4295 = vsel %vm4167, %v4103, %v4231
        %v4296 = vsel %vm4168, %v4104, %v4232
        %v4297 = vsel %vm4169, %v4105, %v4233
        %v4298 = vsel %vm4170, %v4106, %v4234
        %v4299 = vsel %vm4171, %v4107, %v4235
        %v4300 = vsel %vm4172, %v4108, %v4236
        %v4301 = vsel %vm4173, %v4109, %v4237
        %v4302 = vsel %vm4174, %v4110, %v4238
        %v4303 = vsel %vm4175, %v4111, %v4239
        %v4304 = vsel %vm4176, %v4112, %v4240
        %v4305 = vsel %vm4177, %v4113, %v4241
        %v4306 = vsel %vm4178, %v4114, %v4242
        %v4307 = vsel %vm4179, %v4115, %v4243
        %v4308 = vsel %vm4180, %v4116, %v4244
        %v4309 = vsel %vm4181, %v4117, %v4245
        %v4310 = vsel %vm4182, %v4118, %v4246
        %v4311 = vsel %vm4183, %v4119, %v4247
        %v4312 = vsel %vm4184, %v4120, %v4248
        %v4313 = vsel %vm4185, %v4121, %v4249
        %v4314 = vld [vmem:[%s10] sm:$0xf]
        %v4315 = vld [vmem:[%s10 + $0x4] sm:$0xf]
        %v4316 = vld [vmem:[%s10 + $0x8] sm:$0xf]
        %v4317 = vld [vmem:[%s10 + $0xc] sm:$0xf]
        %v4318 = vld [vmem:[%s10 + $0x10] sm:$0xf]
        %v4319 = vld [vmem:[%s10 + $0x14] sm:$0xf]
        %v4320 = vld [vmem:[%s10 + $0x18] sm:$0xf]
        %v4321 = vld [vmem:[#allocation11] sm:$0x1]
        %v4322 = vld [vmem:[#allocation13] sm:$0x1]
        %4339 = vrot.lane.b32.xlu0 %v1632, 56
        %v4340 = vpop.permute.xlu0 %4339
        %4341 = vrot.lane.b32.xlu0 %v1633, 56
        %v4342 = vpop.permute.xlu0 %4341
        %4343 = vrot.lane.b32.xlu0 %v1634, 56
        %v4344 = vpop.permute.xlu0 %4343
        %4345 = vrot.lane.b32.xlu0 %v1635, 56
        %v4346 = vpop.permute.xlu0 %4345
        %4347 = vrot.lane.b32.xlu0 %v1636, 56
        %v4348 = vpop.permute.xlu0 %4347
        %4349 = vrot.lane.b32.xlu0 %v1637, 56
        %v4350 = vpop.permute.xlu0 %4349
        %4351 = vrot.lane.b32.xlu0 %v1638, 56
        %v4352 = vpop.permute.xlu0 %4351
        %4353 = vrot.lane.b32.xlu0 %v1639, 56
        %v4354 = vpop.permute.xlu0 %4353
        %4355 = vrot.lane.b32.xlu0 %v1640, 56
        %v4356 = vpop.permute.xlu0 %4355
        %4357 = vrot.lane.b32.xlu0 %v1641, 56
        %v4358 = vpop.permute.xlu0 %4357
        %4359 = vrot.lane.b32.xlu0 %v1642, 56
        %v4360 = vpop.permute.xlu0 %4359
        %4361 = vrot.lane.b32.xlu0 %v1643, 56
        %v4362 = vpop.permute.xlu0 %4361
        %4363 = vrot.lane.b32.xlu0 %v1644, 56
        %v4364 = vpop.permute.xlu0 %4363
        %4365 = vrot.lane.b32.xlu0 %v1645, 56
        %v4366 = vpop.permute.xlu0 %4365
        %4367 = vrot.lane.b32.xlu0 %v1646, 56
        %v4368 = vpop.permute.xlu0 %4367
        %4369 = vrot.lane.b32.xlu0 %v1647, 56
        %v4370 = vpop.permute.xlu0 %4369
        %4371 = vrot.lane.b32.xlu0 %v4340, 8
        %v4372 = vpop.permute.xlu0 %4371
        %4373 = vrot.lane.b32.xlu0 %v4342, 8
        %v4374 = vpop.permute.xlu0 %4373
        %4375 = vrot.lane.b32.xlu0 %v4344, 8
        %v4376 = vpop.permute.xlu0 %4375
        %4377 = vrot.lane.b32.xlu0 %v4346, 8
        %v4378 = vpop.permute.xlu0 %4377
        %4379 = vrot.lane.b32.xlu0 %v4348, 8
        %v4380 = vpop.permute.xlu0 %4379
        %4381 = vrot.lane.b32.xlu0 %v4350, 8
        %v4382 = vpop.permute.xlu0 %4381
        %4383 = vrot.lane.b32.xlu0 %v4352, 8
        %v4384 = vpop.permute.xlu0 %4383
        %4385 = vrot.lane.b32.xlu0 %v4354, 8
        %v4386 = vpop.permute.xlu0 %4385
        %4387 = vrot.lane.b32.xlu0 %v4356, 8
        %v4388 = vpop.permute.xlu0 %4387
        %4389 = vrot.lane.b32.xlu0 %v4358, 8
        %v4390 = vpop.permute.xlu0 %4389
        %4391 = vrot.lane.b32.xlu0 %v4360, 8
        %v4392 = vpop.permute.xlu0 %4391
        %4393 = vrot.lane.b32.xlu0 %v4362, 8
        %v4394 = vpop.permute.xlu0 %4393
        %4395 = vrot.lane.b32.xlu0 %v4364, 8
        %v4396 = vpop.permute.xlu0 %4395
        %4397 = vrot.lane.b32.xlu0 %v4366, 8
        %v4398 = vpop.permute.xlu0 %4397
        %4399 = vrot.lane.b32.xlu0 %v4340, 16
        %v4400 = vpop.permute.xlu0 %4399
        %4401 = vrot.lane.b32.xlu0 %v4342, 16
        %v4402 = vpop.permute.xlu0 %4401
        %4403 = vrot.lane.b32.xlu0 %v4344, 16
        %v4404 = vpop.permute.xlu0 %4403
        %4405 = vrot.lane.b32.xlu0 %v4346, 16
        %v4406 = vpop.permute.xlu0 %4405
        %4407 = vrot.lane.b32.xlu0 %v4348, 16
        %v4408 = vpop.permute.xlu0 %4407
        %4409 = vrot.lane.b32.xlu0 %v4350, 16
        %v4410 = vpop.permute.xlu0 %4409
        %4411 = vrot.lane.b32.xlu0 %v4352, 16
        %v4412 = vpop.permute.xlu0 %4411
        %4413 = vrot.lane.b32.xlu0 %v4354, 16
        %v4414 = vpop.permute.xlu0 %4413
        %4415 = vrot.lane.b32.xlu0 %v4356, 16
        %v4416 = vpop.permute.xlu0 %4415
        %4417 = vrot.lane.b32.xlu0 %v4358, 16
        %v4418 = vpop.permute.xlu0 %4417
        %4419 = vrot.lane.b32.xlu0 %v4360, 16
        %v4420 = vpop.permute.xlu0 %4419
        %4421 = vrot.lane.b32.xlu0 %v4362, 16
        %v4422 = vpop.permute.xlu0 %4421
        %4423 = vrot.lane.b32.xlu0 %v4364, 16
        %v4424 = vpop.permute.xlu0 %4423
        %4425 = vrot.lane.b32.xlu0 %v4366, 16
        %v4426 = vpop.permute.xlu0 %4425
        %4427 = vrot.lane.b32.xlu0 %v4368, 16
        %v4428 = vpop.permute.xlu0 %4427
        %4429 = vrot.lane.b32.xlu0 %v4340, 24
        %v4430 = vpop.permute.xlu0 %4429
        %4431 = vrot.lane.b32.xlu0 %v4342, 24
        %v4432 = vpop.permute.xlu0 %4431
        %4433 = vrot.lane.b32.xlu0 %v4344, 24
        %v4434 = vpop.permute.xlu0 %4433
        %4435 = vrot.lane.b32.xlu0 %v4346, 24
        %v4436 = vpop.permute.xlu0 %4435
        %4437 = vrot.lane.b32.xlu0 %v4348, 24
        %v4438 = vpop.permute.xlu0 %4437
        %4439 = vrot.lane.b32.xlu0 %v4350, 24
        %v4440 = vpop.permute.xlu0 %4439
        %4441 = vrot.lane.b32.xlu0 %v4352, 24
        %v4442 = vpop.permute.xlu0 %4441
        %4443 = vrot.lane.b32.xlu0 %v4354, 24
        %v4444 = vpop.permute.xlu0 %4443
        %4445 = vrot.lane.b32.xlu0 %v4356, 24
        %v4446 = vpop.permute.xlu0 %4445
        %4447 = vrot.lane.b32.xlu0 %v4358, 24
        %v4448 = vpop.permute.xlu0 %4447
        %4449 = vrot.lane.b32.xlu0 %v4360, 24
        %v4450 = vpop.permute.xlu0 %4449
        %4451 = vrot.lane.b32.xlu0 %v4362, 24
        %v4452 = vpop.permute.xlu0 %4451
        %4453 = vrot.lane.b32.xlu0 %v4364, 24
        %v4454 = vpop.permute.xlu0 %4453
        %4455 = vrot.lane.b32.xlu0 %v4366, 24
        %v4456 = vpop.permute.xlu0 %4455
        %4457 = vrot.lane.b32.xlu0 %v4368, 24
        %v4458 = vpop.permute.xlu0 %4457
        %4459 = vrot.lane.b32.xlu0 %v4370, 24
        %v4460 = vpop.permute.xlu0 %4459
        %4461 = vrot.lane.b32.xlu0 %v4342, 32
        %v4462 = vpop.permute.xlu0 %4461
        %4463 = vrot.lane.b32.xlu0 %v4344, 32
        %v4464 = vpop.permute.xlu0 %4463
        %4465 = vrot.lane.b32.xlu0 %v4346, 32
        %v4466 = vpop.permute.xlu0 %4465
        %4467 = vrot.lane.b32.xlu0 %v4348, 32
        %v4468 = vpop.permute.xlu0 %4467
        %4469 = vrot.lane.b32.xlu0 %v4350, 32
        %v4470 = vpop.permute.xlu0 %4469
        %4471 = vrot.lane.b32.xlu0 %v4352, 32
        %v4472 = vpop.permute.xlu0 %4471
        %4473 = vrot.lane.b32.xlu0 %v4354, 32
        %v4474 = vpop.permute.xlu0 %4473
        %4475 = vrot.lane.b32.xlu0 %v4356, 32
        %v4476 = vpop.permute.xlu0 %4475
        %4477 = vrot.lane.b32.xlu0 %v4358, 32
        %v4478 = vpop.permute.xlu0 %4477
        %4479 = vrot.lane.b32.xlu0 %v4360, 32
        %v4480 = vpop.permute.xlu0 %4479
        %4481 = vrot.lane.b32.xlu0 %v4362, 32
        %v4482 = vpop.permute.xlu0 %4481
        %4483 = vrot.lane.b32.xlu0 %v4364, 32
        %v4484 = vpop.permute.xlu0 %4483
        %4485 = vrot.lane.b32.xlu0 %v4366, 32
        %v4486 = vpop.permute.xlu0 %4485
        %4487 = vrot.lane.b32.xlu0 %v4368, 32
        %v4488 = vpop.permute.xlu0 %4487
        %4489 = vrot.lane.b32.xlu0 %v4370, 32
        %v4490 = vpop.permute.xlu0 %4489
        %4491 = vrot.lane.b32.xlu0 %v4344, 40
        %v4492 = vpop.permute.xlu0 %4491
        %4493 = vrot.lane.b32.xlu0 %v4346, 40
        %v4494 = vpop.permute.xlu0 %4493
        %4495 = vrot.lane.b32.xlu0 %v4348, 40
        %v4496 = vpop.permute.xlu0 %4495
        %4497 = vrot.lane.b32.xlu0 %v4350, 40
        %v4498 = vpop.permute.xlu0 %4497
        %4499 = vrot.lane.b32.xlu0 %v4352, 40
        %v4500 = vpop.permute.xlu0 %4499
        %4501 = vrot.lane.b32.xlu0 %v4354, 40
        %v4502 = vpop.permute.xlu0 %4501
        %4503 = vrot.lane.b32.xlu0 %v4356, 40
        %v4504 = vpop.permute.xlu0 %4503
        %4505 = vrot.lane.b32.xlu0 %v4358, 40
        %v4506 = vpop.permute.xlu0 %4505
        %4507 = vrot.lane.b32.xlu0 %v4360, 40
        %v4508 = vpop.permute.xlu0 %4507
        %4509 = vrot.lane.b32.xlu0 %v4362, 40
        %v4510 = vpop.permute.xlu0 %4509
        %4511 = vrot.lane.b32.xlu0 %v4364, 40
        %v4512 = vpop.permute.xlu0 %4511
        %4513 = vrot.lane.b32.xlu0 %v4366, 40
        %v4514 = vpop.permute.xlu0 %4513
        %4515 = vrot.lane.b32.xlu0 %v4368, 40
        %v4516 = vpop.permute.xlu0 %4515
        %4517 = vrot.lane.b32.xlu0 %v4370, 40
        %v4518 = vpop.permute.xlu0 %4517
        %4519 = vrot.lane.b32.xlu0 %v4346, 48
        %v4520 = vpop.permute.xlu0 %4519
        %4521 = vrot.lane.b32.xlu0 %v4348, 48
        %v4522 = vpop.permute.xlu0 %4521
        %4523 = vrot.lane.b32.xlu0 %v4350, 48
        %v4524 = vpop.permute.xlu0 %4523
        %4525 = vrot.lane.b32.xlu0 %v4352, 48
        %v4526 = vpop.permute.xlu0 %4525
        %4527 = vrot.lane.b32.xlu0 %v4354, 48
        %v4528 = vpop.permute.xlu0 %4527
        %4529 = vrot.lane.b32.xlu0 %v4356, 48
        %v4530 = vpop.permute.xlu0 %4529
        %4531 = vrot.lane.b32.xlu0 %v4358, 48
        %v4532 = vpop.permute.xlu0 %4531
        %4533 = vrot.lane.b32.xlu0 %v4360, 48
        %v4534 = vpop.permute.xlu0 %4533
        %4535 = vrot.lane.b32.xlu0 %v4362, 48
        %v4536 = vpop.permute.xlu0 %4535
        %4537 = vrot.lane.b32.xlu0 %v4364, 48
        %v4538 = vpop.permute.xlu0 %4537
        %4539 = vrot.lane.b32.xlu0 %v4366, 48
        %v4540 = vpop.permute.xlu0 %4539
        %4541 = vrot.lane.b32.xlu0 %v4368, 48
        %v4542 = vpop.permute.xlu0 %4541
        %4543 = vrot.lane.b32.xlu0 %v4370, 48
        %v4544 = vpop.permute.xlu0 %4543
        %v4546 = vsel %vm2690, 0, %v4372
        %v4549 = vsel %vm2690, %v4340, %v4374
        %v4552 = vsel %vm2690, %v4342, %v4376
        %v4555 = vsel %vm2690, %v4344, %v4378
        %v4558 = vsel %vm2690, %v4346, %v4380
        %v4561 = vsel %vm2690, %v4348, %v4382
        %v4564 = vsel %vm2690, %v4350, %v4384
        %v4567 = vsel %vm2690, %v4352, %v4386
        %v4570 = vsel %vm2690, %v4354, %v4388
        %v4573 = vsel %vm2690, %v4356, %v4390
        %v4576 = vsel %vm2690, %v4358, %v4392
        %v4579 = vsel %vm2690, %v4360, %v4394
        %v4582 = vsel %vm2690, %v4362, %v4396
        %v4585 = vsel %vm2690, %v4364, %v4398
        %v4587 = vsel %vm2723, %v3507, %v4400
        %v4589 = vsel %vm2723, %v4546, %v4402
        %v4591 = vsel %vm2723, %v4549, %v4404
        %v4593 = vsel %vm2723, %v4552, %v4406
        %v4595 = vsel %vm2723, %v4555, %v4408
        %v4597 = vsel %vm2723, %v4558, %v4410
        %v4599 = vsel %vm2723, %v4561, %v4412
        %v4601 = vsel %vm2723, %v4564, %v4414
        %v4603 = vsel %vm2723, %v4567, %v4416
        %v4605 = vsel %vm2723, %v4570, %v4418
        %v4607 = vsel %vm2723, %v4573, %v4420
        %v4609 = vsel %vm2723, %v4576, %v4422
        %v4611 = vsel %vm2723, %v4579, %v4424
        %v4613 = vsel %vm2723, %v4582, %v4426
        %v4615 = vsel %vm2723, %v4585, %v4428
        %v4617 = vsel %vm2756, %v3550, %v4430
        %v4619 = vsel %vm2756, %v4587, %v4432
        %v4621 = vsel %vm2756, %v4589, %v4434
        %v4623 = vsel %vm2756, %v4591, %v4436
        %v4625 = vsel %vm2756, %v4593, %v4438
        %v4627 = vsel %vm2756, %v4595, %v4440
        %v4629 = vsel %vm2756, %v4597, %v4442
        %v4631 = vsel %vm2756, %v4599, %v4444
        %v4633 = vsel %vm2756, %v4601, %v4446
        %v4635 = vsel %vm2756, %v4603, %v4448
        %v4637 = vsel %vm2756, %v4605, %v4450
        %v4639 = vsel %vm2756, %v4607, %v4452
        %v4641 = vsel %vm2756, %v4609, %v4454
        %v4643 = vsel %vm2756, %v4611, %v4456
        %v4645 = vsel %vm2756, %v4613, %v4458
        %v4647 = vsel %vm2756, %v4615, %v4460
        %v4649 = vsel %vm2789, %v4617, %v4462
        %v4651 = vsel %vm2789, %v4619, %v4464
        %v4653 = vsel %vm2789, %v4621, %v4466
        %v4655 = vsel %vm2789, %v4623, %v4468
        %v4657 = vsel %vm2789, %v4625, %v4470
        %v4659 = vsel %vm2789, %v4627, %v4472
        %v4661 = vsel %vm2789, %v4629, %v4474
        %v4663 = vsel %vm2789, %v4631, %v4476
        %v4665 = vsel %vm2789, %v4633, %v4478
        %v4667 = vsel %vm2789, %v4635, %v4480
        %v4669 = vsel %vm2789, %v4637, %v4482
        %v4671 = vsel %vm2789, %v4639, %v4484
        %v4673 = vsel %vm2789, %v4641, %v4486
        %v4675 = vsel %vm2789, %v4643, %v4488
        %v4677 = vsel %vm2789, %v4645, %v4490
        %v4678 = vsel %vm2789, %v4647, %v3446
        %v4680 = vsel %vm2822, %v4649, %v4492
        %v4682 = vsel %vm2822, %v4651, %v4494
        %v4684 = vsel %vm2822, %v4653, %v4496
        %v4686 = vsel %vm2822, %v4655, %v4498
        %v4688 = vsel %vm2822, %v4657, %v4500
        %v4690 = vsel %vm2822, %v4659, %v4502
        %v4692 = vsel %vm2822, %v4661, %v4504
        %v4694 = vsel %vm2822, %v4663, %v4506
        %v4696 = vsel %vm2822, %v4665, %v4508
        %v4698 = vsel %vm2822, %v4667, %v4510
        %v4700 = vsel %vm2822, %v4669, %v4512
        %v4702 = vsel %vm2822, %v4671, %v4514
        %v4704 = vsel %vm2822, %v4673, %v4516
        %v4706 = vsel %vm2822, %v4675, %v4518
        %v4707 = vsel %vm2822, %v4677, %v3476
        %v4708 = vsel %vm2822, %v4678, %v3476
        %v4710 = vsel %vm2855, %v4680, %v4520
        %v4712 = vsel %vm2855, %v4682, %v4522
        %v4714 = vsel %vm2855, %v4684, %v4524
        %v4716 = vsel %vm2855, %v4686, %v4526
        %v4718 = vsel %vm2855, %v4688, %v4528
        %v4720 = vsel %vm2855, %v4690, %v4530
        %v4722 = vsel %vm2855, %v4692, %v4532
        %v4724 = vsel %vm2855, %v4694, %v4534
        %v4726 = vsel %vm2855, %v4696, %v4536
        %v4728 = vsel %vm2855, %v4698, %v4538
        %v4730 = vsel %vm2855, %v4700, %v4540
        %v4732 = vsel %vm2855, %v4702, %v4542
        %v4734 = vsel %vm2855, %v4704, %v4544
        %v4735 = vsel %vm2855, %v4706, %v3504
        %v4736 = vsel %vm2855, %v4707, %v3504
        %v4737 = vsel %vm2855, %v4708, %v3504
        %v4745 = vunpack.c.l.b16 %v4314
        %v4746 = vunpack.c.l.b16 %v4315
        %v4747 = vunpack.c.l.b16 %v4316
        %v4748 = vunpack.c.l.b16 %v4317
        %v4749 = vunpack.c.l.b16 %v4318
        %v4750 = vunpack.c.l.b16 %v4319
        %v4751 = vunpack.c.l.b16 %v4320
        %v4752 = vpack.c.b16 %v4746, %v4745
        %v4753 = vpack.c.b16 %v4748, %v4747
        %v4754 = vpack.c.b16 %v4750, %v4749
        %v4755 = vpack.c.b16 %v4751, %v4751
        %v4759 = vsel %vm2909, %v4710, 0
        %v4761 = vsel %vm2909, %v4712, 0
        %v4763 = vsel %vm2909, %v4714, 0
        %v4765 = vsel %vm2909, %v4716, 0
        %v4767 = vsel %vm2909, %v4718, 0
        %v4769 = vsel %vm2909, %v4720, 0
        %v4771 = vsel %vm2909, %v4722, 0
        %v4773 = vsel %vm2909, %v4724, 0
        %v4775 = vsel %vm2909, %v4726, 0
        %v4777 = vsel %vm2909, %v4728, 0
        %v4779 = vsel %vm2909, %v4730, 0
        %v4781 = vsel %vm2909, %v4732, 0
        %v4783 = vsel %vm2909, %v4734, 0
        %v4785 = vsel %vm2909, %v4735, 0
        %v4787 = vsel %vm2909, %v4736, 0
        %v4789 = vsel %vm2909, %v4737, 0
        %v4792 = vsel %vm2942, %v4755, 0
        %4794 = vmatprep.subr.bf16.mxu0 0
        %4795 = vmatpush1.bf16.msra.mxu0 0
        %4796 = vmatprep.subr.bf16.mxu0 0
        %4797 = vmatpush1.bf16.msra.mxu0 0
        %4798 = vmatprep.subr.bf16.mxu0 0
        %4799 = vmatpush1.bf16.msra.mxu0 0
        %4800 = vmatprep.subr.bf16.mxu0 0
        %4801 = vmatpush1.bf16.msra.mxu0 0
        %4802 = vmatprep.subr.bf16.mxu0 0
        %4803 = vmatpush1.bf16.msra.mxu0 %v4792
        %4804 = vmatprep.subr.bf16.mxu0 0
        %4805 = vmatpush1.bf16.msra.mxu0 %v4754
        %4806 = vmatprep.subr.bf16.mxu0 0
        %4807 = vmatpush1.bf16.msra.mxu0 %v4753
        %4808 = vmatprep.subr.bf16.mxu0 0
        %4809 = vmatpush1.bf16.msra.mxu0 %v4752
        %4810 = vmatprep.subr.bf16.mxu0 0
        %4811 = vmatpush2.bf16.msra.mxu0 0
        %4812 = vmatprep.subr.bf16.mxu0 0
        %4813 = vmatpush2.bf16.msra.mxu0 0
        %4814 = vmatprep.subr.bf16.mxu0 0
        %4815 = vmatpush2.bf16.msra.mxu0 0
        %4816 = vmatprep.subr.bf16.mxu0 0
        %4817 = vmatpush2.bf16.msra.mxu0 0
        %4818 = vmatprep.subr.bf16.mxu0 0
        %4819 = vmatpush2.bf16.msra.mxu0 0
        %4820 = vmatprep.subr.bf16.mxu0 0
        %4821 = vmatpush2.bf16.msra.mxu0 0
        %4822 = vmatprep.subr.bf16.mxu0 0
        %4823 = vmatpush2.bf16.msra.mxu0 0
        %4824 = vmatprep.subr.bf16.mxu0 0
        %4825 = vmatpush2.bf16.msra.mxu0 0
        %4826 = vmatprep.mubr.bf16.mxu0 0
        %4827 = vmatmul.mubr.bf16.gmra.mxu0 %v4759
        %v4828 = vpop.f32.mrf.mxu0
        %v4829 = vadd.f32 0.0, %v4828
        %v4830 = vpop.f32.mrf.mxu0
        %v4831 = vpop.f32.mrf.mxu0
        %v4832 = vadd.f32 0.0, %v4831
        %v4833 = vpop.f32.mrf.mxu0
        %4834 = vmatprep.mubr.bf16.mxu0 0
        %4835 = vmatmul.mubr.bf16.gmra.mxu0 %v4761
        %v4836 = vpop.f32.mrf.mxu0
        %v4837 = vadd.f32 0.0, %v4836
        %v4838 = vpop.f32.mrf.mxu0
        %v4839 = vpop.f32.mrf.mxu0
        %v4840 = vadd.f32 0.0, %v4839
        %v4841 = vpop.f32.mrf.mxu0
        %4842 = vmatprep.mubr.bf16.mxu0 0
        %4843 = vmatmul.mubr.bf16.gmra.mxu0 %v4763
        %v4844 = vpop.f32.mrf.mxu0
        %v4845 = vadd.f32 0.0, %v4844
        %v4846 = vpop.f32.mrf.mxu0
        %v4847 = vpop.f32.mrf.mxu0
        %v4848 = vadd.f32 0.0, %v4847
        %v4849 = vpop.f32.mrf.mxu0
        %4850 = vmatprep.mubr.bf16.mxu0 0
        %4851 = vmatmul.mubr.bf16.gmra.mxu0 %v4765
        %v4852 = vpop.f32.mrf.mxu0
        %v4853 = vadd.f32 0.0, %v4852
        %v4854 = vpop.f32.mrf.mxu0
        %v4855 = vpop.f32.mrf.mxu0
        %v4856 = vadd.f32 0.0, %v4855
        %v4857 = vpop.f32.mrf.mxu0
        %4858 = vmatprep.mubr.bf16.mxu0 0
        %4859 = vmatmul.mubr.bf16.gmra.mxu0 %v4767
        %v4860 = vpop.f32.mrf.mxu0
        %v4861 = vadd.f32 0.0, %v4860
        %v4862 = vpop.f32.mrf.mxu0
        %v4863 = vpop.f32.mrf.mxu0
        %v4864 = vadd.f32 0.0, %v4863
        %v4865 = vpop.f32.mrf.mxu0
        %4866 = vmatprep.mubr.bf16.mxu0 0
        %4867 = vmatmul.mubr.bf16.gmra.mxu0 %v4769
        %v4868 = vpop.f32.mrf.mxu0
        %v4869 = vadd.f32 0.0, %v4868
        %v4870 = vpop.f32.mrf.mxu0
        %v4871 = vpop.f32.mrf.mxu0
        %v4872 = vadd.f32 0.0, %v4871
        %v4873 = vpop.f32.mrf.mxu0
        %4874 = vmatprep.mubr.bf16.mxu0 0
        %4875 = vmatmul.mubr.bf16.gmra.mxu0 %v4771
        %v4876 = vpop.f32.mrf.mxu0
        %v4877 = vadd.f32 0.0, %v4876
        %v4878 = vpop.f32.mrf.mxu0
        %v4879 = vpop.f32.mrf.mxu0
        %v4880 = vadd.f32 0.0, %v4879
        %v4881 = vpop.f32.mrf.mxu0
        %4882 = vmatprep.mubr.bf16.mxu0 0
        %4883 = vmatmul.mubr.bf16.gmra.mxu0 %v4773
        %v4884 = vpop.f32.mrf.mxu0
        %v4885 = vadd.f32 0.0, %v4884
        %v4886 = vpop.f32.mrf.mxu0
        %v4887 = vpop.f32.mrf.mxu0
        %v4888 = vadd.f32 0.0, %v4887
        %v4889 = vpop.f32.mrf.mxu0
        %4890 = vmatprep.mubr.bf16.mxu0 0
        %4891 = vmatmul.mubr.bf16.gmra.mxu0 %v4775
        %v4892 = vpop.f32.mrf.mxu0
        %v4893 = vadd.f32 0.0, %v4892
        %v4894 = vpop.f32.mrf.mxu0
        %v4895 = vpop.f32.mrf.mxu0
        %v4896 = vadd.f32 0.0, %v4895
        %v4897 = vpop.f32.mrf.mxu0
        %4898 = vmatprep.mubr.bf16.mxu0 0
        %4899 = vmatmul.mubr.bf16.gmra.mxu0 %v4777
        %v4900 = vpop.f32.mrf.mxu0
        %v4901 = vadd.f32 0.0, %v4900
        %v4902 = vpop.f32.mrf.mxu0
        %v4903 = vpop.f32.mrf.mxu0
        %v4904 = vadd.f32 0.0, %v4903
        %v4905 = vpop.f32.mrf.mxu0
        %4906 = vmatprep.mubr.bf16.mxu0 0
        %4907 = vmatmul.mubr.bf16.gmra.mxu0 %v4779
        %v4908 = vpop.f32.mrf.mxu0
        %v4909 = vadd.f32 0.0, %v4908
        %v4910 = vpop.f32.mrf.mxu0
        %v4911 = vpop.f32.mrf.mxu0
        %v4912 = vadd.f32 0.0, %v4911
        %v4913 = vpop.f32.mrf.mxu0
        %4914 = vmatprep.mubr.bf16.mxu0 0
        %4915 = vmatmul.mubr.bf16.gmra.mxu0 %v4781
        %v4916 = vpop.f32.mrf.mxu0
        %v4917 = vadd.f32 0.0, %v4916
        %v4918 = vpop.f32.mrf.mxu0
        %v4919 = vpop.f32.mrf.mxu0
        %v4920 = vadd.f32 0.0, %v4919
        %v4921 = vpop.f32.mrf.mxu0
        %4922 = vmatprep.mubr.bf16.mxu0 0
        %4923 = vmatmul.mubr.bf16.gmra.mxu0 %v4783
        %v4924 = vpop.f32.mrf.mxu0
        %v4925 = vadd.f32 0.0, %v4924
        %v4926 = vpop.f32.mrf.mxu0
        %v4927 = vpop.f32.mrf.mxu0
        %v4928 = vadd.f32 0.0, %v4927
        %v4929 = vpop.f32.mrf.mxu0
        %4930 = vmatprep.mubr.bf16.mxu0 0
        %4931 = vmatmul.mubr.bf16.gmra.mxu0 %v4785
        %v4932 = vpop.f32.mrf.mxu0
        %v4933 = vadd.f32 0.0, %v4932
        %v4934 = vpop.f32.mrf.mxu0
        %v4935 = vpop.f32.mrf.mxu0
        %v4936 = vadd.f32 0.0, %v4935
        %v4937 = vpop.f32.mrf.mxu0
        %4938 = vmatprep.mubr.bf16.mxu0 0
        %4939 = vmatmul.mubr.bf16.gmra.mxu0 %v4787
        %v4940 = vpop.f32.mrf.mxu0
        %v4941 = vadd.f32 0.0, %v4940
        %v4942 = vpop.f32.mrf.mxu0
        %v4943 = vpop.f32.mrf.mxu0
        %v4944 = vadd.f32 0.0, %v4943
        %v4945 = vpop.f32.mrf.mxu0
        %4946 = vmatprep.mubr.bf16.mxu0 0
        %4947 = vmatmul.mubr.bf16.gmra.mxu0 %v4789
        %v4948 = vpop.f32.mrf.mxu0
        %v4949 = vadd.f32 0.0, %v4948
        %v4950 = vpop.f32.mrf.mxu0
        %v4951 = vpop.f32.mrf.mxu0
        %v4952 = vadd.f32 0.0, %v4951
        %v4953 = vpop.f32.mrf.mxu0
        %4954 = vdwg.mxu0
        %v4956 = vlaneseq
        %v4957 = vshrl.u32 %v4956, 7
        %v4958 = vsub.s32 0, %v4957
        %v4959 = vrot.slane %v4321, %v4958
        %v4961 = vmul.f32 %v4829, %v4959
        %v4962 = vmul.f32 %v4832, %v4959
        %v4963 = vmul.f32 %v4837, %v4959
        %v4964 = vmul.f32 %v4840, %v4959
        %v4965 = vmul.f32 %v4845, %v4959
        %v4966 = vmul.f32 %v4848, %v4959
        %v4967 = vmul.f32 %v4853, %v4959
        %v4968 = vmul.f32 %v4856, %v4959
        %v4969 = vmul.f32 %v4861, %v4959
        %v4970 = vmul.f32 %v4864, %v4959
        %v4971 = vmul.f32 %v4869, %v4959
        %v4972 = vmul.f32 %v4872, %v4959
        %v4973 = vmul.f32 %v4877, %v4959
        %v4974 = vmul.f32 %v4880, %v4959
        %v4975 = vmul.f32 %v4885, %v4959
        %v4976 = vmul.f32 %v4888, %v4959
        %v4977 = vmul.f32 %v4893, %v4959
        %v4978 = vmul.f32 %v4896, %v4959
        %v4979 = vmul.f32 %v4901, %v4959
        %v4980 = vmul.f32 %v4904, %v4959
        %v4981 = vmul.f32 %v4909, %v4959
        %v4982 = vmul.f32 %v4912, %v4959
        %v4983 = vmul.f32 %v4917, %v4959
        %v4984 = vmul.f32 %v4920, %v4959
        %v4985 = vmul.f32 %v4925, %v4959
        %v4986 = vmul.f32 %v4928, %v4959
        %v4987 = vmul.f32 %v4933, %v4959
        %v4988 = vmul.f32 %v4936, %v4959
        %v4989 = vmul.f32 %v4941, %v4959
        %v4990 = vmul.f32 %v4944, %v4959
        %v4991 = vmul.f32 %v4949, %v4959
        %v4992 = vmul.f32 %v4952, %v4959
        %v4994 = vlaneseq
        %v4995 = vshrl.u32 %v4994, 7
        %v4996 = vsub.s32 0, %v4995
        %v4997 = vrot.slane %v4322, %v4996
        %v4999 = vadd.f32 %v4961, %v4997
        %v5000 = vadd.f32 %v4962, %v4997
        %v5001 = vadd.f32 %v4963, %v4997
        %v5002 = vadd.f32 %v4964, %v4997
        %v5003 = vadd.f32 %v4965, %v4997
        %v5004 = vadd.f32 %v4966, %v4997
        %v5005 = vadd.f32 %v4967, %v4997
        %v5006 = vadd.f32 %v4968, %v4997
        %v5007 = vadd.f32 %v4969, %v4997
        %v5008 = vadd.f32 %v4970, %v4997
        %v5009 = vadd.f32 %v4971, %v4997
        %v5010 = vadd.f32 %v4972, %v4997
        %v5011 = vadd.f32 %v4973, %v4997
        %v5012 = vadd.f32 %v4974, %v4997
        %v5013 = vadd.f32 %v4975, %v4997
        %v5014 = vadd.f32 %v4976, %v4997
        %v5015 = vadd.f32 %v4977, %v4997
        %v5016 = vadd.f32 %v4978, %v4997
        %v5017 = vadd.f32 %v4979, %v4997
        %v5018 = vadd.f32 %v4980, %v4997
        %v5019 = vadd.f32 %v4981, %v4997
        %v5020 = vadd.f32 %v4982, %v4997
        %v5021 = vadd.f32 %v4983, %v4997
        %v5022 = vadd.f32 %v4984, %v4997
        %v5023 = vadd.f32 %v4985, %v4997
        %v5024 = vadd.f32 %v4986, %v4997
        %v5025 = vadd.f32 %v4987, %v4997
        %v5026 = vadd.f32 %v4988, %v4997
        %v5027 = vadd.f32 %v4989, %v4997
        %v5028 = vadd.f32 %v4990, %v4997
        %v5029 = vadd.f32 %v4991, %v4997
        %v5030 = vadd.f32 %v4992, %v4997
        %vm5031 = vcmp.ge.f32.partialorder %v4999, 0.0
        %vm5032 = vcmp.ge.f32.partialorder %v5000, 0.0
        %vm5033 = vcmp.ge.f32.partialorder %v5001, 0.0
        %vm5034 = vcmp.ge.f32.partialorder %v5002, 0.0
        %vm5035 = vcmp.ge.f32.partialorder %v5003, 0.0
        %vm5036 = vcmp.ge.f32.partialorder %v5004, 0.0
        %vm5037 = vcmp.ge.f32.partialorder %v5005, 0.0
        %vm5038 = vcmp.ge.f32.partialorder %v5006, 0.0
        %vm5039 = vcmp.ge.f32.partialorder %v5007, 0.0
        %vm5040 = vcmp.ge.f32.partialorder %v5008, 0.0
        %vm5041 = vcmp.ge.f32.partialorder %v5009, 0.0
        %vm5042 = vcmp.ge.f32.partialorder %v5010, 0.0
        %vm5043 = vcmp.ge.f32.partialorder %v5011, 0.0
        %vm5044 = vcmp.ge.f32.partialorder %v5012, 0.0
        %vm5045 = vcmp.ge.f32.partialorder %v5013, 0.0
        %vm5046 = vcmp.ge.f32.partialorder %v5014, 0.0
        %vm5047 = vcmp.ge.f32.partialorder %v5015, 0.0
        %vm5048 = vcmp.ge.f32.partialorder %v5016, 0.0
        %vm5049 = vcmp.ge.f32.partialorder %v5017, 0.0
        %vm5050 = vcmp.ge.f32.partialorder %v5018, 0.0
        %vm5051 = vcmp.ge.f32.partialorder %v5019, 0.0
        %vm5052 = vcmp.ge.f32.partialorder %v5020, 0.0
        %vm5053 = vcmp.ge.f32.partialorder %v5021, 0.0
        %vm5054 = vcmp.ge.f32.partialorder %v5022, 0.0
        %vm5055 = vcmp.ge.f32.partialorder %v5023, 0.0
        %vm5056 = vcmp.ge.f32.partialorder %v5024, 0.0
        %vm5057 = vcmp.ge.f32.partialorder %v5025, 0.0
        %vm5058 = vcmp.ge.f32.partialorder %v5026, 0.0
        %vm5059 = vcmp.ge.f32.partialorder %v5027, 0.0
        %vm5060 = vcmp.ge.f32.partialorder %v5028, 0.0
        %vm5061 = vcmp.ge.f32.partialorder %v5029, 0.0
        %vm5062 = vcmp.ge.f32.partialorder %v5030, 0.0
        %v5063 = vmul.f32 %v4999, 0.2
        %v5064 = vmul.f32 %v5000, 0.2
        %v5065 = vmul.f32 %v5001, 0.2
        %v5066 = vmul.f32 %v5002, 0.2
        %v5067 = vmul.f32 %v5003, 0.2
        %v5068 = vmul.f32 %v5004, 0.2
        %v5069 = vmul.f32 %v5005, 0.2
        %v5070 = vmul.f32 %v5006, 0.2
        %v5071 = vmul.f32 %v5007, 0.2
        %v5072 = vmul.f32 %v5008, 0.2
        %v5073 = vmul.f32 %v5009, 0.2
        %v5074 = vmul.f32 %v5010, 0.2
        %v5075 = vmul.f32 %v5011, 0.2
        %v5076 = vmul.f32 %v5012, 0.2
        %v5077 = vmul.f32 %v5013, 0.2
        %v5078 = vmul.f32 %v5014, 0.2
        %v5079 = vmul.f32 %v5015, 0.2
        %v5080 = vmul.f32 %v5016, 0.2
        %v5081 = vmul.f32 %v5017, 0.2
        %v5082 = vmul.f32 %v5018, 0.2
        %v5083 = vmul.f32 %v5019, 0.2
        %v5084 = vmul.f32 %v5020, 0.2
        %v5085 = vmul.f32 %v5021, 0.2
        %v5086 = vmul.f32 %v5022, 0.2
        %v5087 = vmul.f32 %v5023, 0.2
        %v5088 = vmul.f32 %v5024, 0.2
        %v5089 = vmul.f32 %v5025, 0.2
        %v5090 = vmul.f32 %v5026, 0.2
        %v5091 = vmul.f32 %v5027, 0.2
        %v5092 = vmul.f32 %v5028, 0.2
        %v5093 = vmul.f32 %v5029, 0.2
        %v5094 = vmul.f32 %v5030, 0.2
        %v5095 = vsel %vm5031, %v4999, %v5063
        %v5096 = vsel %vm5032, %v5000, %v5064
        %v5097 = vsel %vm5033, %v5001, %v5065
        %v5098 = vsel %vm5034, %v5002, %v5066
        %v5099 = vsel %vm5035, %v5003, %v5067
        %v5100 = vsel %vm5036, %v5004, %v5068
        %v5101 = vsel %vm5037, %v5005, %v5069
        %v5102 = vsel %vm5038, %v5006, %v5070
        %v5103 = vsel %vm5039, %v5007, %v5071
        %v5104 = vsel %vm5040, %v5008, %v5072
        %v5105 = vsel %vm5041, %v5009, %v5073
        %v5106 = vsel %vm5042, %v5010, %v5074
        %v5107 = vsel %vm5043, %v5011, %v5075
        %v5108 = vsel %vm5044, %v5012, %v5076
        %v5109 = vsel %vm5045, %v5013, %v5077
        %v5110 = vsel %vm5046, %v5014, %v5078
        %v5111 = vsel %vm5047, %v5015, %v5079
        %v5112 = vsel %vm5048, %v5016, %v5080
        %v5113 = vsel %vm5049, %v5017, %v5081
        %v5114 = vsel %vm5050, %v5018, %v5082
        %v5115 = vsel %vm5051, %v5019, %v5083
        %v5116 = vsel %vm5052, %v5020, %v5084
        %v5117 = vsel %vm5053, %v5021, %v5085
        %v5118 = vsel %vm5054, %v5022, %v5086
        %v5119 = vsel %vm5055, %v5023, %v5087
        %v5120 = vsel %vm5056, %v5024, %v5088
        %v5121 = vsel %vm5057, %v5025, %v5089
        %v5122 = vsel %vm5058, %v5026, %v5090
        %v5123 = vsel %vm5059, %v5027, %v5091
        %v5124 = vsel %vm5060, %v5028, %v5092
        %v5125 = vsel %vm5061, %v5029, %v5093
        %v5126 = vsel %vm5062, %v5030, %v5094
        %v5127 = vpack.c.bf16 %v5096, %v5095
        %v5128 = vpack.c.bf16 %v5098, %v5097
        %v5129 = vpack.c.bf16 %v5100, %v5099
        %v5130 = vpack.c.bf16 %v5102, %v5101
        %v5131 = vpack.c.bf16 %v5104, %v5103
        %v5132 = vpack.c.bf16 %v5106, %v5105
        %v5133 = vpack.c.bf16 %v5108, %v5107
        %v5134 = vpack.c.bf16 %v5110, %v5109
        %v5135 = vpack.c.bf16 %v5112, %v5111
        %v5136 = vpack.c.bf16 %v5114, %v5113
        %v5137 = vpack.c.bf16 %v5116, %v5115
        %v5138 = vpack.c.bf16 %v5118, %v5117
        %v5139 = vpack.c.bf16 %v5120, %v5119
        %v5140 = vpack.c.bf16 %v5122, %v5121
        %v5141 = vpack.c.bf16 %v5124, %v5123
        %v5142 = vpack.c.bf16 %v5126, %v5125
        %v5143 = vld [vmem:[%s13] sm:$0xf]
        %v5144 = vld [vmem:[%s13 + $0x4] sm:$0xf]
        %v5145 = vld [vmem:[%s13 + $0x8] sm:$0xf]
        %v5146 = vld [vmem:[%s13 + $0xc] sm:$0xf]
        %v5147 = vld [vmem:[%s13 + $0x10] sm:$0xf]
        %v5148 = vld [vmem:[%s13 + $0x14] sm:$0xf]
        %v5149 = vld [vmem:[%s13 + $0x18] sm:$0xf]
        %v5150 = vld [vmem:[#allocation14] sm:$0x1]
        %v5151 = vld [vmem:[#allocation16] sm:$0x1]
        %v5153 = vshrl.u32 %v5127, 16
        %v5155 = vrot.slane %v5153, 6
        %v5156 = vshll.u32 %v5127, 16
        %v5158 = vrot.slane %v5156, 7
        %v5159 = vor.u32 %v5155, %v5158
        %v5161 = vshrl.u32 %v5128, 16
        %v5163 = vrot.slane %v5161, 6
        %v5164 = vshll.u32 %v5128, 16
        %v5166 = vrot.slane %v5164, 7
        %v5167 = vor.u32 %v5163, %v5166
        %v5169 = vshrl.u32 %v5129, 16
        %v5171 = vrot.slane %v5169, 6
        %v5172 = vshll.u32 %v5129, 16
        %v5174 = vrot.slane %v5172, 7
        %v5175 = vor.u32 %v5171, %v5174
        %v5177 = vshrl.u32 %v5130, 16
        %v5179 = vrot.slane %v5177, 6
        %v5180 = vshll.u32 %v5130, 16
        %v5182 = vrot.slane %v5180, 7
        %v5183 = vor.u32 %v5179, %v5182
        %v5185 = vshrl.u32 %v5131, 16
        %v5187 = vrot.slane %v5185, 6
        %v5188 = vshll.u32 %v5131, 16
        %v5190 = vrot.slane %v5188, 7
        %v5191 = vor.u32 %v5187, %v5190
        %v5193 = vshrl.u32 %v5132, 16
        %v5195 = vrot.slane %v5193, 6
        %v5196 = vshll.u32 %v5132, 16
        %v5198 = vrot.slane %v5196, 7
        %v5199 = vor.u32 %v5195, %v5198
        %v5201 = vshrl.u32 %v5133, 16
        %v5203 = vrot.slane %v5201, 6
        %v5204 = vshll.u32 %v5133, 16
        %v5206 = vrot.slane %v5204, 7
        %v5207 = vor.u32 %v5203, %v5206
        %v5209 = vshrl.u32 %v5134, 16
        %v5211 = vrot.slane %v5209, 6
        %v5212 = vshll.u32 %v5134, 16
        %v5214 = vrot.slane %v5212, 7
        %v5215 = vor.u32 %v5211, %v5214
        %v5217 = vshrl.u32 %v5135, 16
        %v5219 = vrot.slane %v5217, 6
        %v5220 = vshll.u32 %v5135, 16
        %v5222 = vrot.slane %v5220, 7
        %v5223 = vor.u32 %v5219, %v5222
        %v5225 = vshrl.u32 %v5136, 16
        %v5227 = vrot.slane %v5225, 6
        %v5228 = vshll.u32 %v5136, 16
        %v5230 = vrot.slane %v5228, 7
        %v5231 = vor.u32 %v5227, %v5230
        %v5233 = vshrl.u32 %v5137, 16
        %v5235 = vrot.slane %v5233, 6
        %v5236 = vshll.u32 %v5137, 16
        %v5238 = vrot.slane %v5236, 7
        %v5239 = vor.u32 %v5235, %v5238
        %v5241 = vshrl.u32 %v5138, 16
        %v5243 = vrot.slane %v5241, 6
        %v5244 = vshll.u32 %v5138, 16
        %v5246 = vrot.slane %v5244, 7
        %v5247 = vor.u32 %v5243, %v5246
        %v5249 = vshrl.u32 %v5139, 16
        %v5251 = vrot.slane %v5249, 6
        %v5252 = vshll.u32 %v5139, 16
        %v5254 = vrot.slane %v5252, 7
        %v5255 = vor.u32 %v5251, %v5254
        %v5257 = vshrl.u32 %v5140, 16
        %v5259 = vrot.slane %v5257, 6
        %v5260 = vshll.u32 %v5140, 16
        %v5262 = vrot.slane %v5260, 7
        %v5263 = vor.u32 %v5259, %v5262
        %v5265 = vshrl.u32 %v5141, 16
        %v5267 = vrot.slane %v5265, 6
        %v5268 = vshll.u32 %v5141, 16
        %v5270 = vrot.slane %v5268, 7
        %v5271 = vor.u32 %v5267, %v5270
        %v5273 = vshrl.u32 %v5142, 16
        %v5275 = vrot.slane %v5273, 6
        %v5276 = vshll.u32 %v5142, 16
        %v5278 = vrot.slane %v5276, 7
        %v5279 = vor.u32 %v5275, %v5278
        %v5296 = vsel %vm1835, 0, %v5159
        %v5297 = vsel %vm1835, 0, %v5167
        %v5298 = vsel %vm1835, 0, %v5175
        %v5299 = vsel %vm1835, 0, %v5183
        %v5300 = vsel %vm1835, 0, %v5191
        %v5301 = vsel %vm1835, 0, %v5199
        %v5302 = vsel %vm1835, 0, %v5207
        %v5303 = vsel %vm1835, 0, %v5215
        %v5304 = vsel %vm1835, 0, %v5223
        %v5305 = vsel %vm1835, 0, %v5231
        %v5306 = vsel %vm1835, 0, %v5239
        %v5307 = vsel %vm1835, 0, %v5247
        %v5308 = vsel %vm1835, 0, %v5255
        %v5309 = vsel %vm1835, 0, %v5263
        %v5310 = vsel %vm1835, 0, %v5271
        %v5311 = vsel %vm1835, 0, %v5279
        %v5312 = vsel %vm1835, %v5159, 0
        %v5313 = vsel %vm1835, %v5167, 0
        %v5314 = vsel %vm1835, %v5175, 0
        %v5315 = vsel %vm1835, %v5183, 0
        %v5316 = vsel %vm1835, %v5191, 0
        %v5317 = vsel %vm1835, %v5199, 0
        %v5318 = vsel %vm1835, %v5207, 0
        %v5319 = vsel %vm1835, %v5215, 0
        %v5320 = vsel %vm1835, %v5223, 0
        %v5321 = vsel %vm1835, %v5231, 0
        %v5322 = vsel %vm1835, %v5239, 0
        %v5323 = vsel %vm1835, %v5247, 0
        %v5324 = vsel %vm1835, %v5255, 0
        %v5325 = vsel %vm1835, %v5263, 0
        %v5326 = vsel %vm1835, %v5271, 0
        %v5327 = vsel %vm1835, %v5279, 0
        %v5329 = vshrl.u32 %v5296, 16
        %v5331 = vshll.u32 %v5296, 16
        %v5333 = vrot.slane %v5331, 1
        %v5334 = vor.u32 %v5329, %v5333
        %v5336 = vshll.u32 %v5312, 16
        %v5338 = vrot.slane %v5336, 1
        %v5339 = vsel %vm1868, %v5334, %v5338
        %v5341 = vshrl.u32 %v5297, 16
        %v5343 = vshll.u32 %v5297, 16
        %v5345 = vrot.slane %v5343, 1
        %v5346 = vor.u32 %v5341, %v5345
        %v5348 = vshll.u32 %v5313, 16
        %v5350 = vrot.slane %v5348, 1
        %v5351 = vsel %vm1868, %v5346, %v5350
        %v5353 = vshrl.u32 %v5298, 16
        %v5355 = vshll.u32 %v5298, 16
        %v5357 = vrot.slane %v5355, 1
        %v5358 = vor.u32 %v5353, %v5357
        %v5360 = vshll.u32 %v5314, 16
        %v5362 = vrot.slane %v5360, 1
        %v5363 = vsel %vm1868, %v5358, %v5362
        %v5365 = vshrl.u32 %v5299, 16
        %v5367 = vshll.u32 %v5299, 16
        %v5369 = vrot.slane %v5367, 1
        %v5370 = vor.u32 %v5365, %v5369
        %v5372 = vshll.u32 %v5315, 16
        %v5374 = vrot.slane %v5372, 1
        %v5375 = vsel %vm1868, %v5370, %v5374
        %v5377 = vshrl.u32 %v5300, 16
        %v5379 = vshll.u32 %v5300, 16
        %v5381 = vrot.slane %v5379, 1
        %v5382 = vor.u32 %v5377, %v5381
        %v5384 = vshll.u32 %v5316, 16
        %v5386 = vrot.slane %v5384, 1
        %v5387 = vsel %vm1868, %v5382, %v5386
        %v5389 = vshrl.u32 %v5301, 16
        %v5391 = vshll.u32 %v5301, 16
        %v5393 = vrot.slane %v5391, 1
        %v5394 = vor.u32 %v5389, %v5393
        %v5396 = vshll.u32 %v5317, 16
        %v5398 = vrot.slane %v5396, 1
        %v5399 = vsel %vm1868, %v5394, %v5398
        %v5401 = vshrl.u32 %v5302, 16
        %v5403 = vshll.u32 %v5302, 16
        %v5405 = vrot.slane %v5403, 1
        %v5406 = vor.u32 %v5401, %v5405
        %v5408 = vshll.u32 %v5318, 16
        %v5410 = vrot.slane %v5408, 1
        %v5411 = vsel %vm1868, %v5406, %v5410
        %v5413 = vshrl.u32 %v5303, 16
        %v5415 = vshll.u32 %v5303, 16
        %v5417 = vrot.slane %v5415, 1
        %v5418 = vor.u32 %v5413, %v5417
        %v5420 = vshll.u32 %v5319, 16
        %v5422 = vrot.slane %v5420, 1
        %v5423 = vsel %vm1868, %v5418, %v5422
        %v5425 = vshrl.u32 %v5304, 16
        %v5427 = vshll.u32 %v5304, 16
        %v5429 = vrot.slane %v5427, 1
        %v5430 = vor.u32 %v5425, %v5429
        %v5432 = vshll.u32 %v5320, 16
        %v5434 = vrot.slane %v5432, 1
        %v5435 = vsel %vm1868, %v5430, %v5434
        %v5437 = vshrl.u32 %v5305, 16
        %v5439 = vshll.u32 %v5305, 16
        %v5441 = vrot.slane %v5439, 1
        %v5442 = vor.u32 %v5437, %v5441
        %v5444 = vshll.u32 %v5321, 16
        %v5446 = vrot.slane %v5444, 1
        %v5447 = vsel %vm1868, %v5442, %v5446
        %v5449 = vshrl.u32 %v5306, 16
        %v5451 = vshll.u32 %v5306, 16
        %v5453 = vrot.slane %v5451, 1
        %v5454 = vor.u32 %v5449, %v5453
        %v5456 = vshll.u32 %v5322, 16
        %v5458 = vrot.slane %v5456, 1
        %v5459 = vsel %vm1868, %v5454, %v5458
        %v5461 = vshrl.u32 %v5307, 16
        %v5463 = vshll.u32 %v5307, 16
        %v5465 = vrot.slane %v5463, 1
        %v5466 = vor.u32 %v5461, %v5465
        %v5468 = vshll.u32 %v5323, 16
        %v5470 = vrot.slane %v5468, 1
        %v5471 = vsel %vm1868, %v5466, %v5470
        %v5473 = vshrl.u32 %v5308, 16
        %v5475 = vshll.u32 %v5308, 16
        %v5477 = vrot.slane %v5475, 1
        %v5478 = vor.u32 %v5473, %v5477
        %v5480 = vshll.u32 %v5324, 16
        %v5482 = vrot.slane %v5480, 1
        %v5483 = vsel %vm1868, %v5478, %v5482
        %v5485 = vshrl.u32 %v5309, 16
        %v5487 = vshll.u32 %v5309, 16
        %v5489 = vrot.slane %v5487, 1
        %v5490 = vor.u32 %v5485, %v5489
        %v5492 = vshll.u32 %v5325, 16
        %v5494 = vrot.slane %v5492, 1
        %v5495 = vsel %vm1868, %v5490, %v5494
        %v5497 = vshrl.u32 %v5310, 16
        %v5499 = vshll.u32 %v5310, 16
        %v5501 = vrot.slane %v5499, 1
        %v5502 = vor.u32 %v5497, %v5501
        %v5504 = vshll.u32 %v5326, 16
        %v5506 = vrot.slane %v5504, 1
        %v5507 = vsel %vm1868, %v5502, %v5506
        %v5509 = vshrl.u32 %v5311, 16
        %v5511 = vshll.u32 %v5311, 16
        %v5513 = vrot.slane %v5511, 1
        %v5514 = vor.u32 %v5509, %v5513
        %v5516 = vshll.u32 %v5327, 16
        %v5518 = vrot.slane %v5516, 1
        %v5519 = vsel %vm1868, %v5514, %v5518
        %5520 = vrot.lane.b32.xlu0 %v5339, 8
        %v5521 = vpop.permute.xlu0 %5520
        %5522 = vrot.lane.b32.xlu0 %v5351, 8
        %v5523 = vpop.permute.xlu0 %5522
        %5524 = vrot.lane.b32.xlu0 %v5363, 8
        %v5525 = vpop.permute.xlu0 %5524
        %5526 = vrot.lane.b32.xlu0 %v5375, 8
        %v5527 = vpop.permute.xlu0 %5526
        %5528 = vrot.lane.b32.xlu0 %v5387, 8
        %v5529 = vpop.permute.xlu0 %5528
        %5530 = vrot.lane.b32.xlu0 %v5399, 8
        %v5531 = vpop.permute.xlu0 %5530
        %5532 = vrot.lane.b32.xlu0 %v5411, 8
        %v5533 = vpop.permute.xlu0 %5532
        %5534 = vrot.lane.b32.xlu0 %v5423, 8
        %v5535 = vpop.permute.xlu0 %5534
        %5536 = vrot.lane.b32.xlu0 %v5435, 8
        %v5537 = vpop.permute.xlu0 %5536
        %5538 = vrot.lane.b32.xlu0 %v5447, 8
        %v5539 = vpop.permute.xlu0 %5538
        %5540 = vrot.lane.b32.xlu0 %v5459, 8
        %v5541 = vpop.permute.xlu0 %5540
        %5542 = vrot.lane.b32.xlu0 %v5471, 8
        %v5543 = vpop.permute.xlu0 %5542
        %5544 = vrot.lane.b32.xlu0 %v5483, 8
        %v5545 = vpop.permute.xlu0 %5544
        %5546 = vrot.lane.b32.xlu0 %v5495, 8
        %v5547 = vpop.permute.xlu0 %5546
        %5548 = vrot.lane.b32.xlu0 %v5507, 8
        %v5549 = vpop.permute.xlu0 %5548
        %5550 = vrot.lane.b32.xlu0 %v5519, 8
        %v5551 = vpop.permute.xlu0 %5550
        %v5584 = vrot.slane %v5296, 1
        %v5585 = vrot.slane %v5312, 1
        %v5586 = vsel %vm2125, %v5584, %v5585
        %v5587 = vrot.slane %v5297, 1
        %v5588 = vrot.slane %v5313, 1
        %v5589 = vsel %vm2125, %v5587, %v5588
        %v5590 = vrot.slane %v5298, 1
        %v5591 = vrot.slane %v5314, 1
        %v5592 = vsel %vm2125, %v5590, %v5591
        %v5593 = vrot.slane %v5299, 1
        %v5594 = vrot.slane %v5315, 1
        %v5595 = vsel %vm2125, %v5593, %v5594
        %v5596 = vrot.slane %v5300, 1
        %v5597 = vrot.slane %v5316, 1
        %v5598 = vsel %vm2125, %v5596, %v5597
        %v5599 = vrot.slane %v5301, 1
        %v5600 = vrot.slane %v5317, 1
        %v5601 = vsel %vm2125, %v5599, %v5600
        %v5602 = vrot.slane %v5302, 1
        %v5603 = vrot.slane %v5318, 1
        %v5604 = vsel %vm2125, %v5602, %v5603
        %v5605 = vrot.slane %v5303, 1
        %v5606 = vrot.slane %v5319, 1
        %v5607 = vsel %vm2125, %v5605, %v5606
        %v5608 = vrot.slane %v5304, 1
        %v5609 = vrot.slane %v5320, 1
        %v5610 = vsel %vm2125, %v5608, %v5609
        %v5611 = vrot.slane %v5305, 1
        %v5612 = vrot.slane %v5321, 1
        %v5613 = vsel %vm2125, %v5611, %v5612
        %v5614 = vrot.slane %v5306, 1
        %v5615 = vrot.slane %v5322, 1
        %v5616 = vsel %vm2125, %v5614, %v5615
        %v5617 = vrot.slane %v5307, 1
        %v5618 = vrot.slane %v5323, 1
        %v5619 = vsel %vm2125, %v5617, %v5618
        %v5620 = vrot.slane %v5308, 1
        %v5621 = vrot.slane %v5324, 1
        %v5622 = vsel %vm2125, %v5620, %v5621
        %v5623 = vrot.slane %v5309, 1
        %v5624 = vrot.slane %v5325, 1
        %v5625 = vsel %vm2125, %v5623, %v5624
        %v5626 = vrot.slane %v5310, 1
        %v5627 = vrot.slane %v5326, 1
        %v5628 = vsel %vm2125, %v5626, %v5627
        %v5629 = vrot.slane %v5311, 1
        %v5630 = vrot.slane %v5327, 1
        %v5631 = vsel %vm2125, %v5629, %v5630
        %5632 = vrot.lane.b32.xlu0 %v5586, 16
        %v5633 = vpop.permute.xlu0 %5632
        %5634 = vrot.lane.b32.xlu0 %v5589, 16
        %v5635 = vpop.permute.xlu0 %5634
        %5636 = vrot.lane.b32.xlu0 %v5592, 16
        %v5637 = vpop.permute.xlu0 %5636
        %5638 = vrot.lane.b32.xlu0 %v5595, 16
        %v5639 = vpop.permute.xlu0 %5638
        %5640 = vrot.lane.b32.xlu0 %v5598, 16
        %v5641 = vpop.permute.xlu0 %5640
        %5642 = vrot.lane.b32.xlu0 %v5601, 16
        %v5643 = vpop.permute.xlu0 %5642
        %5644 = vrot.lane.b32.xlu0 %v5604, 16
        %v5645 = vpop.permute.xlu0 %5644
        %5646 = vrot.lane.b32.xlu0 %v5607, 16
        %v5647 = vpop.permute.xlu0 %5646
        %5648 = vrot.lane.b32.xlu0 %v5610, 16
        %v5649 = vpop.permute.xlu0 %5648
        %5650 = vrot.lane.b32.xlu0 %v5613, 16
        %v5651 = vpop.permute.xlu0 %5650
        %5652 = vrot.lane.b32.xlu0 %v5616, 16
        %v5653 = vpop.permute.xlu0 %5652
        %5654 = vrot.lane.b32.xlu0 %v5619, 16
        %v5655 = vpop.permute.xlu0 %5654
        %5656 = vrot.lane.b32.xlu0 %v5622, 16
        %v5657 = vpop.permute.xlu0 %5656
        %5658 = vrot.lane.b32.xlu0 %v5625, 16
        %v5659 = vpop.permute.xlu0 %5658
        %5660 = vrot.lane.b32.xlu0 %v5628, 16
        %v5661 = vpop.permute.xlu0 %5660
        %5662 = vrot.lane.b32.xlu0 %v5631, 16
        %v5663 = vpop.permute.xlu0 %5662
        %v5664 = vrot.slane %v5329, 1
        %v5665 = vrot.slane %v5331, 2
        %v5666 = vor.u32 %v5664, %v5665
        %v5667 = vshrl.u32 %v5312, 16
        %v5669 = vrot.slane %v5667, 1
        %v5670 = vrot.slane %v5336, 2
        %v5671 = vor.u32 %v5669, %v5670
        %v5672 = vsel %vm2206, %v5666, %v5671
        %v5673 = vrot.slane %v5341, 1
        %v5674 = vrot.slane %v5343, 2
        %v5675 = vor.u32 %v5673, %v5674
        %v5676 = vshrl.u32 %v5313, 16
        %v5678 = vrot.slane %v5676, 1
        %v5679 = vrot.slane %v5348, 2
        %v5680 = vor.u32 %v5678, %v5679
        %v5681 = vsel %vm2206, %v5675, %v5680
        %v5682 = vrot.slane %v5353, 1
        %v5683 = vrot.slane %v5355, 2
        %v5684 = vor.u32 %v5682, %v5683
        %v5685 = vshrl.u32 %v5314, 16
        %v5687 = vrot.slane %v5685, 1
        %v5688 = vrot.slane %v5360, 2
        %v5689 = vor.u32 %v5687, %v5688
        %v5690 = vsel %vm2206, %v5684, %v5689
        %v5691 = vrot.slane %v5365, 1
        %v5692 = vrot.slane %v5367, 2
        %v5693 = vor.u32 %v5691, %v5692
        %v5694 = vshrl.u32 %v5315, 16
        %v5696 = vrot.slane %v5694, 1
        %v5697 = vrot.slane %v5372, 2
        %v5698 = vor.u32 %v5696, %v5697
        %v5699 = vsel %vm2206, %v5693, %v5698
        %v5700 = vrot.slane %v5377, 1
        %v5701 = vrot.slane %v5379, 2
        %v5702 = vor.u32 %v5700, %v5701
        %v5703 = vshrl.u32 %v5316, 16
        %v5705 = vrot.slane %v5703, 1
        %v5706 = vrot.slane %v5384, 2
        %v5707 = vor.u32 %v5705, %v5706
        %v5708 = vsel %vm2206, %v5702, %v5707
        %v5709 = vrot.slane %v5389, 1
        %v5710 = vrot.slane %v5391, 2
        %v5711 = vor.u32 %v5709, %v5710
        %v5712 = vshrl.u32 %v5317, 16
        %v5714 = vrot.slane %v5712, 1
        %v5715 = vrot.slane %v5396, 2
        %v5716 = vor.u32 %v5714, %v5715
        %v5717 = vsel %vm2206, %v5711, %v5716
        %v5718 = vrot.slane %v5401, 1
        %v5719 = vrot.slane %v5403, 2
        %v5720 = vor.u32 %v5718, %v5719
        %v5721 = vshrl.u32 %v5318, 16
        %v5723 = vrot.slane %v5721, 1
        %v5724 = vrot.slane %v5408, 2
        %v5725 = vor.u32 %v5723, %v5724
        %v5726 = vsel %vm2206, %v5720, %v5725
        %v5727 = vrot.slane %v5413, 1
        %v5728 = vrot.slane %v5415, 2
        %v5729 = vor.u32 %v5727, %v5728
        %v5730 = vshrl.u32 %v5319, 16
        %v5732 = vrot.slane %v5730, 1
        %v5733 = vrot.slane %v5420, 2
        %v5734 = vor.u32 %v5732, %v5733
        %v5735 = vsel %vm2206, %v5729, %v5734
        %v5736 = vrot.slane %v5425, 1
        %v5737 = vrot.slane %v5427, 2
        %v5738 = vor.u32 %v5736, %v5737
        %v5739 = vshrl.u32 %v5320, 16
        %v5741 = vrot.slane %v5739, 1
        %v5742 = vrot.slane %v5432, 2
        %v5743 = vor.u32 %v5741, %v5742
        %v5744 = vsel %vm2206, %v5738, %v5743
        %v5745 = vrot.slane %v5437, 1
        %v5746 = vrot.slane %v5439, 2
        %v5747 = vor.u32 %v5745, %v5746
        %v5748 = vshrl.u32 %v5321, 16
        %v5750 = vrot.slane %v5748, 1
        %v5751 = vrot.slane %v5444, 2
        %v5752 = vor.u32 %v5750, %v5751
        %v5753 = vsel %vm2206, %v5747, %v5752
        %v5754 = vrot.slane %v5449, 1
        %v5755 = vrot.slane %v5451, 2
        %v5756 = vor.u32 %v5754, %v5755
        %v5757 = vshrl.u32 %v5322, 16
        %v5759 = vrot.slane %v5757, 1
        %v5760 = vrot.slane %v5456, 2
        %v5761 = vor.u32 %v5759, %v5760
        %v5762 = vsel %vm2206, %v5756, %v5761
        %v5763 = vrot.slane %v5461, 1
        %v5764 = vrot.slane %v5463, 2
        %v5765 = vor.u32 %v5763, %v5764
        %v5766 = vshrl.u32 %v5323, 16
        %v5768 = vrot.slane %v5766, 1
        %v5769 = vrot.slane %v5468, 2
        %v5770 = vor.u32 %v5768, %v5769
        %v5771 = vsel %vm2206, %v5765, %v5770
        %v5772 = vrot.slane %v5473, 1
        %v5773 = vrot.slane %v5475, 2
        %v5774 = vor.u32 %v5772, %v5773
        %v5775 = vshrl.u32 %v5324, 16
        %v5777 = vrot.slane %v5775, 1
        %v5778 = vrot.slane %v5480, 2
        %v5779 = vor.u32 %v5777, %v5778
        %v5780 = vsel %vm2206, %v5774, %v5779
        %v5781 = vrot.slane %v5485, 1
        %v5782 = vrot.slane %v5487, 2
        %v5783 = vor.u32 %v5781, %v5782
        %v5784 = vshrl.u32 %v5325, 16
        %v5786 = vrot.slane %v5784, 1
        %v5787 = vrot.slane %v5492, 2
        %v5788 = vor.u32 %v5786, %v5787
        %v5789 = vsel %vm2206, %v5783, %v5788
        %v5790 = vrot.slane %v5497, 1
        %v5791 = vrot.slane %v5499, 2
        %v5792 = vor.u32 %v5790, %v5791
        %v5793 = vshrl.u32 %v5326, 16
        %v5795 = vrot.slane %v5793, 1
        %v5796 = vrot.slane %v5504, 2
        %v5797 = vor.u32 %v5795, %v5796
        %v5798 = vsel %vm2206, %v5792, %v5797
        %v5799 = vrot.slane %v5509, 1
        %v5800 = vrot.slane %v5511, 2
        %v5801 = vor.u32 %v5799, %v5800
        %v5802 = vshrl.u32 %v5327, 16
        %v5804 = vrot.slane %v5802, 1
        %v5805 = vrot.slane %v5516, 2
        %v5806 = vor.u32 %v5804, %v5805
        %v5807 = vsel %vm2206, %v5801, %v5806
        %5808 = vrot.lane.b32.xlu0 %v5672, 24
        %v5809 = vpop.permute.xlu0 %5808
        %5810 = vrot.lane.b32.xlu0 %v5681, 24
        %v5811 = vpop.permute.xlu0 %5810
        %5812 = vrot.lane.b32.xlu0 %v5690, 24
        %v5813 = vpop.permute.xlu0 %5812
        %5814 = vrot.lane.b32.xlu0 %v5699, 24
        %v5815 = vpop.permute.xlu0 %5814
        %5816 = vrot.lane.b32.xlu0 %v5708, 24
        %v5817 = vpop.permute.xlu0 %5816
        %5818 = vrot.lane.b32.xlu0 %v5717, 24
        %v5819 = vpop.permute.xlu0 %5818
        %5820 = vrot.lane.b32.xlu0 %v5726, 24
        %v5821 = vpop.permute.xlu0 %5820
        %5822 = vrot.lane.b32.xlu0 %v5735, 24
        %v5823 = vpop.permute.xlu0 %5822
        %5824 = vrot.lane.b32.xlu0 %v5744, 24
        %v5825 = vpop.permute.xlu0 %5824
        %5826 = vrot.lane.b32.xlu0 %v5753, 24
        %v5827 = vpop.permute.xlu0 %5826
        %5828 = vrot.lane.b32.xlu0 %v5762, 24
        %v5829 = vpop.permute.xlu0 %5828
        %5830 = vrot.lane.b32.xlu0 %v5771, 24
        %v5831 = vpop.permute.xlu0 %5830
        %5832 = vrot.lane.b32.xlu0 %v5780, 24
        %v5833 = vpop.permute.xlu0 %5832
        %5834 = vrot.lane.b32.xlu0 %v5789, 24
        %v5835 = vpop.permute.xlu0 %5834
        %5836 = vrot.lane.b32.xlu0 %v5798, 24
        %v5837 = vpop.permute.xlu0 %5836
        %5838 = vrot.lane.b32.xlu0 %v5807, 24
        %v5839 = vpop.permute.xlu0 %5838
        %v5840 = vrot.slane %v5296, 2
        %v5841 = vrot.slane %v5312, 2
        %v5842 = vsel %vm2383, %v5840, %v5841
        %v5843 = vrot.slane %v5297, 2
        %v5844 = vrot.slane %v5313, 2
        %v5845 = vsel %vm2383, %v5843, %v5844
        %v5846 = vrot.slane %v5298, 2
        %v5847 = vrot.slane %v5314, 2
        %v5848 = vsel %vm2383, %v5846, %v5847
        %v5849 = vrot.slane %v5299, 2
        %v5850 = vrot.slane %v5315, 2
        %v5851 = vsel %vm2383, %v5849, %v5850
        %v5852 = vrot.slane %v5300, 2
        %v5853 = vrot.slane %v5316, 2
        %v5854 = vsel %vm2383, %v5852, %v5853
        %v5855 = vrot.slane %v5301, 2
        %v5856 = vrot.slane %v5317, 2
        %v5857 = vsel %vm2383, %v5855, %v5856
        %v5858 = vrot.slane %v5302, 2
        %v5859 = vrot.slane %v5318, 2
        %v5860 = vsel %vm2383, %v5858, %v5859
        %v5861 = vrot.slane %v5303, 2
        %v5862 = vrot.slane %v5319, 2
        %v5863 = vsel %vm2383, %v5861, %v5862
        %v5864 = vrot.slane %v5304, 2
        %v5865 = vrot.slane %v5320, 2
        %v5866 = vsel %vm2383, %v5864, %v5865
        %v5867 = vrot.slane %v5305, 2
        %v5868 = vrot.slane %v5321, 2
        %v5869 = vsel %vm2383, %v5867, %v5868
        %v5870 = vrot.slane %v5306, 2
        %v5871 = vrot.slane %v5322, 2
        %v5872 = vsel %vm2383, %v5870, %v5871
        %v5873 = vrot.slane %v5307, 2
        %v5874 = vrot.slane %v5323, 2
        %v5875 = vsel %vm2383, %v5873, %v5874
        %v5876 = vrot.slane %v5308, 2
        %v5877 = vrot.slane %v5324, 2
        %v5878 = vsel %vm2383, %v5876, %v5877
        %v5879 = vrot.slane %v5309, 2
        %v5880 = vrot.slane %v5325, 2
        %v5881 = vsel %vm2383, %v5879, %v5880
        %v5882 = vrot.slane %v5310, 2
        %v5883 = vrot.slane %v5326, 2
        %v5884 = vsel %vm2383, %v5882, %v5883
        %v5885 = vrot.slane %v5311, 2
        %v5886 = vrot.slane %v5327, 2
        %v5887 = vsel %vm2383, %v5885, %v5886
        %5888 = vrot.lane.b32.xlu0 %v5842, 32
        %v5889 = vpop.permute.xlu0 %5888
        %5890 = vrot.lane.b32.xlu0 %v5845, 32
        %v5891 = vpop.permute.xlu0 %5890
        %5892 = vrot.lane.b32.xlu0 %v5848, 32
        %v5893 = vpop.permute.xlu0 %5892
        %5894 = vrot.lane.b32.xlu0 %v5851, 32
        %v5895 = vpop.permute.xlu0 %5894
        %5896 = vrot.lane.b32.xlu0 %v5854, 32
        %v5897 = vpop.permute.xlu0 %5896
        %5898 = vrot.lane.b32.xlu0 %v5857, 32
        %v5899 = vpop.permute.xlu0 %5898
        %5900 = vrot.lane.b32.xlu0 %v5860, 32
        %v5901 = vpop.permute.xlu0 %5900
        %5902 = vrot.lane.b32.xlu0 %v5863, 32
        %v5903 = vpop.permute.xlu0 %5902
        %5904 = vrot.lane.b32.xlu0 %v5866, 32
        %v5905 = vpop.permute.xlu0 %5904
        %5906 = vrot.lane.b32.xlu0 %v5869, 32
        %v5907 = vpop.permute.xlu0 %5906
        %5908 = vrot.lane.b32.xlu0 %v5872, 32
        %v5909 = vpop.permute.xlu0 %5908
        %5910 = vrot.lane.b32.xlu0 %v5875, 32
        %v5911 = vpop.permute.xlu0 %5910
        %5912 = vrot.lane.b32.xlu0 %v5878, 32
        %v5913 = vpop.permute.xlu0 %5912
        %5914 = vrot.lane.b32.xlu0 %v5881, 32
        %v5915 = vpop.permute.xlu0 %5914
        %5916 = vrot.lane.b32.xlu0 %v5884, 32
        %v5917 = vpop.permute.xlu0 %5916
        %5918 = vrot.lane.b32.xlu0 %v5887, 32
        %v5919 = vpop.permute.xlu0 %5918
        %v5920 = vrot.slane %v5329, 2
        %v5921 = vrot.slane %v5331, 3
        %v5922 = vor.u32 %v5920, %v5921
        %v5923 = vrot.slane %v5667, 2
        %v5924 = vrot.slane %v5336, 3
        %v5925 = vor.u32 %v5923, %v5924
        %v5926 = vsel %vm2464, %v5922, %v5925
        %v5927 = vrot.slane %v5341, 2
        %v5928 = vrot.slane %v5343, 3
        %v5929 = vor.u32 %v5927, %v5928
        %v5930 = vrot.slane %v5676, 2
        %v5931 = vrot.slane %v5348, 3
        %v5932 = vor.u32 %v5930, %v5931
        %v5933 = vsel %vm2464, %v5929, %v5932
        %v5934 = vrot.slane %v5353, 2
        %v5935 = vrot.slane %v5355, 3
        %v5936 = vor.u32 %v5934, %v5935
        %v5937 = vrot.slane %v5685, 2
        %v5938 = vrot.slane %v5360, 3
        %v5939 = vor.u32 %v5937, %v5938
        %v5940 = vsel %vm2464, %v5936, %v5939
        %v5941 = vrot.slane %v5365, 2
        %v5942 = vrot.slane %v5367, 3
        %v5943 = vor.u32 %v5941, %v5942
        %v5944 = vrot.slane %v5694, 2
        %v5945 = vrot.slane %v5372, 3
        %v5946 = vor.u32 %v5944, %v5945
        %v5947 = vsel %vm2464, %v5943, %v5946
        %v5948 = vrot.slane %v5377, 2
        %v5949 = vrot.slane %v5379, 3
        %v5950 = vor.u32 %v5948, %v5949
        %v5951 = vrot.slane %v5703, 2
        %v5952 = vrot.slane %v5384, 3
        %v5953 = vor.u32 %v5951, %v5952
        %v5954 = vsel %vm2464, %v5950, %v5953
        %v5955 = vrot.slane %v5389, 2
        %v5956 = vrot.slane %v5391, 3
        %v5957 = vor.u32 %v5955, %v5956
        %v5958 = vrot.slane %v5712, 2
        %v5959 = vrot.slane %v5396, 3
        %v5960 = vor.u32 %v5958, %v5959
        %v5961 = vsel %vm2464, %v5957, %v5960
        %v5962 = vrot.slane %v5401, 2
        %v5963 = vrot.slane %v5403, 3
        %v5964 = vor.u32 %v5962, %v5963
        %v5965 = vrot.slane %v5721, 2
        %v5966 = vrot.slane %v5408, 3
        %v5967 = vor.u32 %v5965, %v5966
        %v5968 = vsel %vm2464, %v5964, %v5967
        %v5969 = vrot.slane %v5413, 2
        %v5970 = vrot.slane %v5415, 3
        %v5971 = vor.u32 %v5969, %v5970
        %v5972 = vrot.slane %v5730, 2
        %v5973 = vrot.slane %v5420, 3
        %v5974 = vor.u32 %v5972, %v5973
        %v5975 = vsel %vm2464, %v5971, %v5974
        %v5976 = vrot.slane %v5425, 2
        %v5977 = vrot.slane %v5427, 3
        %v5978 = vor.u32 %v5976, %v5977
        %v5979 = vrot.slane %v5739, 2
        %v5980 = vrot.slane %v5432, 3
        %v5981 = vor.u32 %v5979, %v5980
        %v5982 = vsel %vm2464, %v5978, %v5981
        %v5983 = vrot.slane %v5437, 2
        %v5984 = vrot.slane %v5439, 3
        %v5985 = vor.u32 %v5983, %v5984
        %v5986 = vrot.slane %v5748, 2
        %v5987 = vrot.slane %v5444, 3
        %v5988 = vor.u32 %v5986, %v5987
        %v5989 = vsel %vm2464, %v5985, %v5988
        %v5990 = vrot.slane %v5449, 2
        %v5991 = vrot.slane %v5451, 3
        %v5992 = vor.u32 %v5990, %v5991
        %v5993 = vrot.slane %v5757, 2
        %v5994 = vrot.slane %v5456, 3
        %v5995 = vor.u32 %v5993, %v5994
        %v5996 = vsel %vm2464, %v5992, %v5995
        %v5997 = vrot.slane %v5461, 2
        %v5998 = vrot.slane %v5463, 3
        %v5999 = vor.u32 %v5997, %v5998
        %v6000 = vrot.slane %v5766, 2
        %v6001 = vrot.slane %v5468, 3
        %v6002 = vor.u32 %v6000, %v6001
        %v6003 = vsel %vm2464, %v5999, %v6002
        %v6004 = vrot.slane %v5473, 2
        %v6005 = vrot.slane %v5475, 3
        %v6006 = vor.u32 %v6004, %v6005
        %v6007 = vrot.slane %v5775, 2
        %v6008 = vrot.slane %v5480, 3
        %v6009 = vor.u32 %v6007, %v6008
        %v6010 = vsel %vm2464, %v6006, %v6009
        %v6011 = vrot.slane %v5485, 2
        %v6012 = vrot.slane %v5487, 3
        %v6013 = vor.u32 %v6011, %v6012
        %v6014 = vrot.slane %v5784, 2
        %v6015 = vrot.slane %v5492, 3
        %v6016 = vor.u32 %v6014, %v6015
        %v6017 = vsel %vm2464, %v6013, %v6016
        %v6018 = vrot.slane %v5497, 2
        %v6019 = vrot.slane %v5499, 3
        %v6020 = vor.u32 %v6018, %v6019
        %v6021 = vrot.slane %v5793, 2
        %v6022 = vrot.slane %v5504, 3
        %v6023 = vor.u32 %v6021, %v6022
        %v6024 = vsel %vm2464, %v6020, %v6023
        %v6025 = vrot.slane %v5509, 2
        %v6026 = vrot.slane %v5511, 3
        %v6027 = vor.u32 %v6025, %v6026
        %v6028 = vrot.slane %v5802, 2
        %v6029 = vrot.slane %v5516, 3
        %v6030 = vor.u32 %v6028, %v6029
        %v6031 = vsel %vm2464, %v6027, %v6030
        %6032 = vrot.lane.b32.xlu0 %v5926, 40
        %v6033 = vpop.permute.xlu0 %6032
        %6034 = vrot.lane.b32.xlu0 %v5933, 40
        %v6035 = vpop.permute.xlu0 %6034
        %6036 = vrot.lane.b32.xlu0 %v5940, 40
        %v6037 = vpop.permute.xlu0 %6036
        %6038 = vrot.lane.b32.xlu0 %v5947, 40
        %v6039 = vpop.permute.xlu0 %6038
        %6040 = vrot.lane.b32.xlu0 %v5954, 40
        %v6041 = vpop.permute.xlu0 %6040
        %6042 = vrot.lane.b32.xlu0 %v5961, 40
        %v6043 = vpop.permute.xlu0 %6042
        %6044 = vrot.lane.b32.xlu0 %v5968, 40
        %v6045 = vpop.permute.xlu0 %6044
        %6046 = vrot.lane.b32.xlu0 %v5975, 40
        %v6047 = vpop.permute.xlu0 %6046
        %6048 = vrot.lane.b32.xlu0 %v5982, 40
        %v6049 = vpop.permute.xlu0 %6048
        %6050 = vrot.lane.b32.xlu0 %v5989, 40
        %v6051 = vpop.permute.xlu0 %6050
        %6052 = vrot.lane.b32.xlu0 %v5996, 40
        %v6053 = vpop.permute.xlu0 %6052
        %6054 = vrot.lane.b32.xlu0 %v6003, 40
        %v6055 = vpop.permute.xlu0 %6054
        %6056 = vrot.lane.b32.xlu0 %v6010, 40
        %v6057 = vpop.permute.xlu0 %6056
        %6058 = vrot.lane.b32.xlu0 %v6017, 40
        %v6059 = vpop.permute.xlu0 %6058
        %6060 = vrot.lane.b32.xlu0 %v6024, 40
        %v6061 = vpop.permute.xlu0 %6060
        %6062 = vrot.lane.b32.xlu0 %v6031, 40
        %v6063 = vpop.permute.xlu0 %6062
        %v6064 = vrot.slane %v5296, 3
        %v6065 = vrot.slane %v5312, 3
        %v6066 = vsel %vm2609, %v6064, %v6065
        %v6067 = vrot.slane %v5297, 3
        %v6068 = vrot.slane %v5313, 3
        %v6069 = vsel %vm2609, %v6067, %v6068
        %v6070 = vrot.slane %v5298, 3
        %v6071 = vrot.slane %v5314, 3
        %v6072 = vsel %vm2609, %v6070, %v6071
        %v6073 = vrot.slane %v5299, 3
        %v6074 = vrot.slane %v5315, 3
        %v6075 = vsel %vm2609, %v6073, %v6074
        %v6076 = vrot.slane %v5300, 3
        %v6077 = vrot.slane %v5316, 3
        %v6078 = vsel %vm2609, %v6076, %v6077
        %v6079 = vrot.slane %v5301, 3
        %v6080 = vrot.slane %v5317, 3
        %v6081 = vsel %vm2609, %v6079, %v6080
        %v6082 = vrot.slane %v5302, 3
        %v6083 = vrot.slane %v5318, 3
        %v6084 = vsel %vm2609, %v6082, %v6083
        %v6085 = vrot.slane %v5303, 3
        %v6086 = vrot.slane %v5319, 3
        %v6087 = vsel %vm2609, %v6085, %v6086
        %v6088 = vrot.slane %v5304, 3
        %v6089 = vrot.slane %v5320, 3
        %v6090 = vsel %vm2609, %v6088, %v6089
        %v6091 = vrot.slane %v5305, 3
        %v6092 = vrot.slane %v5321, 3
        %v6093 = vsel %vm2609, %v6091, %v6092
        %v6094 = vrot.slane %v5306, 3
        %v6095 = vrot.slane %v5322, 3
        %v6096 = vsel %vm2609, %v6094, %v6095
        %v6097 = vrot.slane %v5307, 3
        %v6098 = vrot.slane %v5323, 3
        %v6099 = vsel %vm2609, %v6097, %v6098
        %v6100 = vrot.slane %v5308, 3
        %v6101 = vrot.slane %v5324, 3
        %v6102 = vsel %vm2609, %v6100, %v6101
        %v6103 = vrot.slane %v5309, 3
        %v6104 = vrot.slane %v5325, 3
        %v6105 = vsel %vm2609, %v6103, %v6104
        %v6106 = vrot.slane %v5310, 3
        %v6107 = vrot.slane %v5326, 3
        %v6108 = vsel %vm2609, %v6106, %v6107
        %v6109 = vrot.slane %v5311, 3
        %v6110 = vrot.slane %v5327, 3
        %v6111 = vsel %vm2609, %v6109, %v6110
        %6112 = vrot.lane.b32.xlu0 %v6066, 48
        %v6113 = vpop.permute.xlu0 %6112
        %6114 = vrot.lane.b32.xlu0 %v6069, 48
        %v6115 = vpop.permute.xlu0 %6114
        %6116 = vrot.lane.b32.xlu0 %v6072, 48
        %v6117 = vpop.permute.xlu0 %6116
        %6118 = vrot.lane.b32.xlu0 %v6075, 48
        %v6119 = vpop.permute.xlu0 %6118
        %6120 = vrot.lane.b32.xlu0 %v6078, 48
        %v6121 = vpop.permute.xlu0 %6120
        %6122 = vrot.lane.b32.xlu0 %v6081, 48
        %v6123 = vpop.permute.xlu0 %6122
        %6124 = vrot.lane.b32.xlu0 %v6084, 48
        %v6125 = vpop.permute.xlu0 %6124
        %6126 = vrot.lane.b32.xlu0 %v6087, 48
        %v6127 = vpop.permute.xlu0 %6126
        %6128 = vrot.lane.b32.xlu0 %v6090, 48
        %v6129 = vpop.permute.xlu0 %6128
        %6130 = vrot.lane.b32.xlu0 %v6093, 48
        %v6131 = vpop.permute.xlu0 %6130
        %6132 = vrot.lane.b32.xlu0 %v6096, 48
        %v6133 = vpop.permute.xlu0 %6132
        %6134 = vrot.lane.b32.xlu0 %v6099, 48
        %v6135 = vpop.permute.xlu0 %6134
        %6136 = vrot.lane.b32.xlu0 %v6102, 48
        %v6137 = vpop.permute.xlu0 %6136
        %6138 = vrot.lane.b32.xlu0 %v6105, 48
        %v6139 = vpop.permute.xlu0 %6138
        %6140 = vrot.lane.b32.xlu0 %v6108, 48
        %v6141 = vpop.permute.xlu0 %6140
        %6142 = vrot.lane.b32.xlu0 %v6111, 48
        %v6143 = vpop.permute.xlu0 %6142
        %v6145 = vsel %vm2690, %v5296, %v5521
        %v6147 = vsel %vm2690, %v5297, %v5523
        %v6149 = vsel %vm2690, %v5298, %v5525
        %v6151 = vsel %vm2690, %v5299, %v5527
        %v6153 = vsel %vm2690, %v5300, %v5529
        %v6155 = vsel %vm2690, %v5301, %v5531
        %v6157 = vsel %vm2690, %v5302, %v5533
        %v6159 = vsel %vm2690, %v5303, %v5535
        %v6161 = vsel %vm2690, %v5304, %v5537
        %v6163 = vsel %vm2690, %v5305, %v5539
        %v6165 = vsel %vm2690, %v5306, %v5541
        %v6167 = vsel %vm2690, %v5307, %v5543
        %v6169 = vsel %vm2690, %v5308, %v5545
        %v6171 = vsel %vm2690, %v5309, %v5547
        %v6173 = vsel %vm2690, %v5310, %v5549
        %v6175 = vsel %vm2690, %v5311, %v5551
        %v6177 = vsel %vm2723, %v6145, %v5633
        %v6179 = vsel %vm2723, %v6147, %v5635
        %v6181 = vsel %vm2723, %v6149, %v5637
        %v6183 = vsel %vm2723, %v6151, %v5639
        %v6185 = vsel %vm2723, %v6153, %v5641
        %v6187 = vsel %vm2723, %v6155, %v5643
        %v6189 = vsel %vm2723, %v6157, %v5645
        %v6191 = vsel %vm2723, %v6159, %v5647
        %v6193 = vsel %vm2723, %v6161, %v5649
        %v6195 = vsel %vm2723, %v6163, %v5651
        %v6197 = vsel %vm2723, %v6165, %v5653
        %v6199 = vsel %vm2723, %v6167, %v5655
        %v6201 = vsel %vm2723, %v6169, %v5657
        %v6203 = vsel %vm2723, %v6171, %v5659
        %v6205 = vsel %vm2723, %v6173, %v5661
        %v6207 = vsel %vm2723, %v6175, %v5663
        %v6209 = vsel %vm2756, %v6177, %v5809
        %v6211 = vsel %vm2756, %v6179, %v5811
        %v6213 = vsel %vm2756, %v6181, %v5813
        %v6215 = vsel %vm2756, %v6183, %v5815
        %v6217 = vsel %vm2756, %v6185, %v5817
        %v6219 = vsel %vm2756, %v6187, %v5819
        %v6221 = vsel %vm2756, %v6189, %v5821
        %v6223 = vsel %vm2756, %v6191, %v5823
        %v6225 = vsel %vm2756, %v6193, %v5825
        %v6227 = vsel %vm2756, %v6195, %v5827
        %v6229 = vsel %vm2756, %v6197, %v5829
        %v6231 = vsel %vm2756, %v6199, %v5831
        %v6233 = vsel %vm2756, %v6201, %v5833
        %v6235 = vsel %vm2756, %v6203, %v5835
        %v6237 = vsel %vm2756, %v6205, %v5837
        %v6239 = vsel %vm2756, %v6207, %v5839
        %v6241 = vsel %vm2789, %v6209, %v5889
        %v6243 = vsel %vm2789, %v6211, %v5891
        %v6245 = vsel %vm2789, %v6213, %v5893
        %v6247 = vsel %vm2789, %v6215, %v5895
        %v6249 = vsel %vm2789, %v6217, %v5897
        %v6251 = vsel %vm2789, %v6219, %v5899
        %v6253 = vsel %vm2789, %v6221, %v5901
        %v6255 = vsel %vm2789, %v6223, %v5903
        %v6257 = vsel %vm2789, %v6225, %v5905
        %v6259 = vsel %vm2789, %v6227, %v5907
        %v6261 = vsel %vm2789, %v6229, %v5909
        %v6263 = vsel %vm2789, %v6231, %v5911
        %v6265 = vsel %vm2789, %v6233, %v5913
        %v6267 = vsel %vm2789, %v6235, %v5915
        %v6269 = vsel %vm2789, %v6237, %v5917
        %v6271 = vsel %vm2789, %v6239, %v5919
        %v6273 = vsel %vm2822, %v6241, %v6033
        %v6275 = vsel %vm2822, %v6243, %v6035
        %v6277 = vsel %vm2822, %v6245, %v6037
        %v6279 = vsel %vm2822, %v6247, %v6039
        %v6281 = vsel %vm2822, %v6249, %v6041
        %v6283 = vsel %vm2822, %v6251, %v6043
        %v6285 = vsel %vm2822, %v6253, %v6045
        %v6287 = vsel %vm2822, %v6255, %v6047
        %v6289 = vsel %vm2822, %v6257, %v6049
        %v6291 = vsel %vm2822, %v6259, %v6051
        %v6293 = vsel %vm2822, %v6261, %v6053
        %v6295 = vsel %vm2822, %v6263, %v6055
        %v6297 = vsel %vm2822, %v6265, %v6057
        %v6299 = vsel %vm2822, %v6267, %v6059
        %v6301 = vsel %vm2822, %v6269, %v6061
        %v6303 = vsel %vm2822, %v6271, %v6063
        %v6305 = vsel %vm2855, %v6273, %v6113
        %v6307 = vsel %vm2855, %v6275, %v6115
        %v6309 = vsel %vm2855, %v6277, %v6117
        %v6311 = vsel %vm2855, %v6279, %v6119
        %v6313 = vsel %vm2855, %v6281, %v6121
        %v6315 = vsel %vm2855, %v6283, %v6123
        %v6317 = vsel %vm2855, %v6285, %v6125
        %v6319 = vsel %vm2855, %v6287, %v6127
        %v6321 = vsel %vm2855, %v6289, %v6129
        %v6323 = vsel %vm2855, %v6291, %v6131
        %v6325 = vsel %vm2855, %v6293, %v6133
        %v6327 = vsel %vm2855, %v6295, %v6135
        %v6329 = vsel %vm2855, %v6297, %v6137
        %v6331 = vsel %vm2855, %v6299, %v6139
        %v6333 = vsel %vm2855, %v6301, %v6141
        %v6335 = vsel %vm2855, %v6303, %v6143
        %v6343 = vunpack.c.l.b16 %v5143
        %v6344 = vunpack.c.l.b16 %v5144
        %v6345 = vunpack.c.l.b16 %v5145
        %v6346 = vunpack.c.l.b16 %v5146
        %v6347 = vunpack.c.l.b16 %v5147
        %v6348 = vunpack.c.l.b16 %v5148
        %v6349 = vunpack.c.l.b16 %v5149
        %v6350 = vpack.c.b16 %v6344, %v6343
        %v6351 = vpack.c.b16 %v6346, %v6345
        %v6352 = vpack.c.b16 %v6348, %v6347
        %v6353 = vpack.c.b16 %v6349, %v6349
        %v6357 = vsel %vm2909, %v6305, 0
        %v6359 = vsel %vm2909, %v6307, 0
        %v6361 = vsel %vm2909, %v6309, 0
        %v6363 = vsel %vm2909, %v6311, 0
        %v6365 = vsel %vm2909, %v6313, 0
        %v6367 = vsel %vm2909, %v6315, 0
        %v6369 = vsel %vm2909, %v6317, 0
        %v6371 = vsel %vm2909, %v6319, 0
        %v6373 = vsel %vm2909, %v6321, 0
        %v6375 = vsel %vm2909, %v6323, 0
        %v6377 = vsel %vm2909, %v6325, 0
        %v6379 = vsel %vm2909, %v6327, 0
        %v6381 = vsel %vm2909, %v6329, 0
        %v6383 = vsel %vm2909, %v6331, 0
        %v6385 = vsel %vm2909, %v6333, 0
        %v6387 = vsel %vm2909, %v6335, 0
        %v6390 = vsel %vm2942, %v6353, 0
        %6392 = vmatprep.subr.bf16.mxu0 0
        %6393 = vmatpush1.bf16.msra.mxu0 0
        %6394 = vmatprep.subr.bf16.mxu0 0
        %6395 = vmatpush1.bf16.msra.mxu0 0
        %6396 = vmatprep.subr.bf16.mxu0 0
        %6397 = vmatpush1.bf16.msra.mxu0 0
        %6398 = vmatprep.subr.bf16.mxu0 0
        %6399 = vmatpush1.bf16.msra.mxu0 0
        %6400 = vmatprep.subr.bf16.mxu0 0
        %6401 = vmatpush1.bf16.msra.mxu0 %v6390
        %6402 = vmatprep.subr.bf16.mxu0 0
        %6403 = vmatpush1.bf16.msra.mxu0 %v6352
        %6404 = vmatprep.subr.bf16.mxu0 0
        %6405 = vmatpush1.bf16.msra.mxu0 %v6351
        %6406 = vmatprep.subr.bf16.mxu0 0
        %6407 = vmatpush1.bf16.msra.mxu0 %v6350
        %6408 = vmatprep.subr.bf16.mxu0 0
        %6409 = vmatpush2.bf16.msra.mxu0 0
        %6410 = vmatprep.subr.bf16.mxu0 0
        %6411 = vmatpush2.bf16.msra.mxu0 0
        %6412 = vmatprep.subr.bf16.mxu0 0
        %6413 = vmatpush2.bf16.msra.mxu0 0
        %6414 = vmatprep.subr.bf16.mxu0 0
        %6415 = vmatpush2.bf16.msra.mxu0 0
        %6416 = vmatprep.subr.bf16.mxu0 0
        %6417 = vmatpush2.bf16.msra.mxu0 0
        %6418 = vmatprep.subr.bf16.mxu0 0
        %6419 = vmatpush2.bf16.msra.mxu0 0
        %6420 = vmatprep.subr.bf16.mxu0 0
        %6421 = vmatpush2.bf16.msra.mxu0 0
        %6422 = vmatprep.subr.bf16.mxu0 0
        %6423 = vmatpush2.bf16.msra.mxu0 0
        %6424 = vmatprep.mubr.bf16.mxu0 0
        %6425 = vmatmul.mubr.bf16.gmra.mxu0 %v6357
        %v6426 = vpop.f32.mrf.mxu0
        %v6427 = vadd.f32 0.0, %v6426
        %v6428 = vpop.f32.mrf.mxu0
        %v6429 = vpop.f32.mrf.mxu0
        %v6430 = vadd.f32 0.0, %v6429
        %v6431 = vpop.f32.mrf.mxu0
        %6432 = vmatprep.mubr.bf16.mxu0 0
        %6433 = vmatmul.mubr.bf16.gmra.mxu0 %v6359
        %v6434 = vpop.f32.mrf.mxu0
        %v6435 = vadd.f32 0.0, %v6434
        %v6436 = vpop.f32.mrf.mxu0
        %v6437 = vpop.f32.mrf.mxu0
        %v6438 = vadd.f32 0.0, %v6437
        %v6439 = vpop.f32.mrf.mxu0
        %6440 = vmatprep.mubr.bf16.mxu0 0
        %6441 = vmatmul.mubr.bf16.gmra.mxu0 %v6361
        %v6442 = vpop.f32.mrf.mxu0
        %v6443 = vadd.f32 0.0, %v6442
        %v6444 = vpop.f32.mrf.mxu0
        %v6445 = vpop.f32.mrf.mxu0
        %v6446 = vadd.f32 0.0, %v6445
        %v6447 = vpop.f32.mrf.mxu0
        %6448 = vmatprep.mubr.bf16.mxu0 0
        %6449 = vmatmul.mubr.bf16.gmra.mxu0 %v6363
        %v6450 = vpop.f32.mrf.mxu0
        %v6451 = vadd.f32 0.0, %v6450
        %v6452 = vpop.f32.mrf.mxu0
        %v6453 = vpop.f32.mrf.mxu0
        %v6454 = vadd.f32 0.0, %v6453
        %v6455 = vpop.f32.mrf.mxu0
        %6456 = vmatprep.mubr.bf16.mxu0 0
        %6457 = vmatmul.mubr.bf16.gmra.mxu0 %v6365
        %v6458 = vpop.f32.mrf.mxu0
        %v6459 = vadd.f32 0.0, %v6458
        %v6460 = vpop.f32.mrf.mxu0
        %v6461 = vpop.f32.mrf.mxu0
        %v6462 = vadd.f32 0.0, %v6461
        %v6463 = vpop.f32.mrf.mxu0
        %6464 = vmatprep.mubr.bf16.mxu0 0
        %6465 = vmatmul.mubr.bf16.gmra.mxu0 %v6367
        %v6466 = vpop.f32.mrf.mxu0
        %v6467 = vadd.f32 0.0, %v6466
        %v6468 = vpop.f32.mrf.mxu0
        %v6469 = vpop.f32.mrf.mxu0
        %v6470 = vadd.f32 0.0, %v6469
        %v6471 = vpop.f32.mrf.mxu0
        %6472 = vmatprep.mubr.bf16.mxu0 0
        %6473 = vmatmul.mubr.bf16.gmra.mxu0 %v6369
        %v6474 = vpop.f32.mrf.mxu0
        %v6475 = vadd.f32 0.0, %v6474
        %v6476 = vpop.f32.mrf.mxu0
        %v6477 = vpop.f32.mrf.mxu0
        %v6478 = vadd.f32 0.0, %v6477
        %v6479 = vpop.f32.mrf.mxu0
        %6480 = vmatprep.mubr.bf16.mxu0 0
        %6481 = vmatmul.mubr.bf16.gmra.mxu0 %v6371
        %v6482 = vpop.f32.mrf.mxu0
        %v6483 = vadd.f32 0.0, %v6482
        %v6484 = vpop.f32.mrf.mxu0
        %v6485 = vpop.f32.mrf.mxu0
        %v6486 = vadd.f32 0.0, %v6485
        %v6487 = vpop.f32.mrf.mxu0
        %6488 = vmatprep.mubr.bf16.mxu0 0
        %6489 = vmatmul.mubr.bf16.gmra.mxu0 %v6373
        %v6490 = vpop.f32.mrf.mxu0
        %v6491 = vadd.f32 0.0, %v6490
        %v6492 = vpop.f32.mrf.mxu0
        %v6493 = vpop.f32.mrf.mxu0
        %v6494 = vadd.f32 0.0, %v6493
        %v6495 = vpop.f32.mrf.mxu0
        %6496 = vmatprep.mubr.bf16.mxu0 0
        %6497 = vmatmul.mubr.bf16.gmra.mxu0 %v6375
        %v6498 = vpop.f32.mrf.mxu0
        %v6499 = vadd.f32 0.0, %v6498
        %v6500 = vpop.f32.mrf.mxu0
        %v6501 = vpop.f32.mrf.mxu0
        %v6502 = vadd.f32 0.0, %v6501
        %v6503 = vpop.f32.mrf.mxu0
        %6504 = vmatprep.mubr.bf16.mxu0 0
        %6505 = vmatmul.mubr.bf16.gmra.mxu0 %v6377
        %v6506 = vpop.f32.mrf.mxu0
        %v6507 = vadd.f32 0.0, %v6506
        %v6508 = vpop.f32.mrf.mxu0
        %v6509 = vpop.f32.mrf.mxu0
        %v6510 = vadd.f32 0.0, %v6509
        %v6511 = vpop.f32.mrf.mxu0
        %6512 = vmatprep.mubr.bf16.mxu0 0
        %6513 = vmatmul.mubr.bf16.gmra.mxu0 %v6379
        %v6514 = vpop.f32.mrf.mxu0
        %v6515 = vadd.f32 0.0, %v6514
        %v6516 = vpop.f32.mrf.mxu0
        %v6517 = vpop.f32.mrf.mxu0
        %v6518 = vadd.f32 0.0, %v6517
        %v6519 = vpop.f32.mrf.mxu0
        %6520 = vmatprep.mubr.bf16.mxu0 0
        %6521 = vmatmul.mubr.bf16.gmra.mxu0 %v6381
        %v6522 = vpop.f32.mrf.mxu0
        %v6523 = vadd.f32 0.0, %v6522
        %v6524 = vpop.f32.mrf.mxu0
        %v6525 = vpop.f32.mrf.mxu0
        %v6526 = vadd.f32 0.0, %v6525
        %v6527 = vpop.f32.mrf.mxu0
        %6528 = vmatprep.mubr.bf16.mxu0 0
        %6529 = vmatmul.mubr.bf16.gmra.mxu0 %v6383
        %v6530 = vpop.f32.mrf.mxu0
        %v6531 = vadd.f32 0.0, %v6530
        %v6532 = vpop.f32.mrf.mxu0
        %v6533 = vpop.f32.mrf.mxu0
        %v6534 = vadd.f32 0.0, %v6533
        %v6535 = vpop.f32.mrf.mxu0
        %6536 = vmatprep.mubr.bf16.mxu0 0
        %6537 = vmatmul.mubr.bf16.gmra.mxu0 %v6385
        %v6538 = vpop.f32.mrf.mxu0
        %v6539 = vadd.f32 0.0, %v6538
        %v6540 = vpop.f32.mrf.mxu0
        %v6541 = vpop.f32.mrf.mxu0
        %v6542 = vadd.f32 0.0, %v6541
        %v6543 = vpop.f32.mrf.mxu0
        %6544 = vmatprep.mubr.bf16.mxu0 0
        %6545 = vmatmul.mubr.bf16.gmra.mxu0 %v6387
        %v6546 = vpop.f32.mrf.mxu0
        %v6547 = vadd.f32 0.0, %v6546
        %v6548 = vpop.f32.mrf.mxu0
        %v6549 = vpop.f32.mrf.mxu0
        %v6550 = vadd.f32 0.0, %v6549
        %v6551 = vpop.f32.mrf.mxu0
        %6552 = vdwg.mxu0
        %v6554 = vlaneseq
        %v6555 = vshrl.u32 %v6554, 7
        %v6556 = vsub.s32 0, %v6555
        %v6557 = vrot.slane %v5150, %v6556
        %v6559 = vmul.f32 %v6427, %v6557
        %v6560 = vmul.f32 %v6430, %v6557
        %v6561 = vmul.f32 %v6435, %v6557
        %v6562 = vmul.f32 %v6438, %v6557
        %v6563 = vmul.f32 %v6443, %v6557
        %v6564 = vmul.f32 %v6446, %v6557
        %v6565 = vmul.f32 %v6451, %v6557
        %v6566 = vmul.f32 %v6454, %v6557
        %v6567 = vmul.f32 %v6459, %v6557
        %v6568 = vmul.f32 %v6462, %v6557
        %v6569 = vmul.f32 %v6467, %v6557
        %v6570 = vmul.f32 %v6470, %v6557
        %v6571 = vmul.f32 %v6475, %v6557
        %v6572 = vmul.f32 %v6478, %v6557
        %v6573 = vmul.f32 %v6483, %v6557
        %v6574 = vmul.f32 %v6486, %v6557
        %v6575 = vmul.f32 %v6491, %v6557
        %v6576 = vmul.f32 %v6494, %v6557
        %v6577 = vmul.f32 %v6499, %v6557
        %v6578 = vmul.f32 %v6502, %v6557
        %v6579 = vmul.f32 %v6507, %v6557
        %v6580 = vmul.f32 %v6510, %v6557
        %v6581 = vmul.f32 %v6515, %v6557
        %v6582 = vmul.f32 %v6518, %v6557
        %v6583 = vmul.f32 %v6523, %v6557
        %v6584 = vmul.f32 %v6526, %v6557
        %v6585 = vmul.f32 %v6531, %v6557
        %v6586 = vmul.f32 %v6534, %v6557
        %v6587 = vmul.f32 %v6539, %v6557
        %v6588 = vmul.f32 %v6542, %v6557
        %v6589 = vmul.f32 %v6547, %v6557
        %v6590 = vmul.f32 %v6550, %v6557
        %v6592 = vlaneseq
        %v6593 = vshrl.u32 %v6592, 7
        %v6594 = vsub.s32 0, %v6593
        %v6595 = vrot.slane %v5151, %v6594
        %v6597 = vadd.f32 %v6559, %v6595
        %v6598 = vadd.f32 %v6560, %v6595
        %v6599 = vadd.f32 %v6561, %v6595
        %v6600 = vadd.f32 %v6562, %v6595
        %v6601 = vadd.f32 %v6563, %v6595
        %v6602 = vadd.f32 %v6564, %v6595
        %v6603 = vadd.f32 %v6565, %v6595
        %v6604 = vadd.f32 %v6566, %v6595
        %v6605 = vadd.f32 %v6567, %v6595
        %v6606 = vadd.f32 %v6568, %v6595
        %v6607 = vadd.f32 %v6569, %v6595
        %v6608 = vadd.f32 %v6570, %v6595
        %v6609 = vadd.f32 %v6571, %v6595
        %v6610 = vadd.f32 %v6572, %v6595
        %v6611 = vadd.f32 %v6573, %v6595
        %v6612 = vadd.f32 %v6574, %v6595
        %v6613 = vadd.f32 %v6575, %v6595
        %v6614 = vadd.f32 %v6576, %v6595
        %v6615 = vadd.f32 %v6577, %v6595
        %v6616 = vadd.f32 %v6578, %v6595
        %v6617 = vadd.f32 %v6579, %v6595
        %v6618 = vadd.f32 %v6580, %v6595
        %v6619 = vadd.f32 %v6581, %v6595
        %v6620 = vadd.f32 %v6582, %v6595
        %v6621 = vadd.f32 %v6583, %v6595
        %v6622 = vadd.f32 %v6584, %v6595
        %v6623 = vadd.f32 %v6585, %v6595
        %v6624 = vadd.f32 %v6586, %v6595
        %v6625 = vadd.f32 %v6587, %v6595
        %v6626 = vadd.f32 %v6588, %v6595
        %v6627 = vadd.f32 %v6589, %v6595
        %v6628 = vadd.f32 %v6590, %v6595
        %vm6629 = vcmp.ge.f32.partialorder %v6597, 0.0
        %vm6630 = vcmp.ge.f32.partialorder %v6598, 0.0
        %vm6631 = vcmp.ge.f32.partialorder %v6599, 0.0
        %vm6632 = vcmp.ge.f32.partialorder %v6600, 0.0
        %vm6633 = vcmp.ge.f32.partialorder %v6601, 0.0
        %vm6634 = vcmp.ge.f32.partialorder %v6602, 0.0
        %vm6635 = vcmp.ge.f32.partialorder %v6603, 0.0
        %vm6636 = vcmp.ge.f32.partialorder %v6604, 0.0
        %vm6637 = vcmp.ge.f32.partialorder %v6605, 0.0
        %vm6638 = vcmp.ge.f32.partialorder %v6606, 0.0
        %vm6639 = vcmp.ge.f32.partialorder %v6607, 0.0
        %vm6640 = vcmp.ge.f32.partialorder %v6608, 0.0
        %vm6641 = vcmp.ge.f32.partialorder %v6609, 0.0
        %vm6642 = vcmp.ge.f32.partialorder %v6610, 0.0
        %vm6643 = vcmp.ge.f32.partialorder %v6611, 0.0
        %vm6644 = vcmp.ge.f32.partialorder %v6612, 0.0
        %vm6645 = vcmp.ge.f32.partialorder %v6613, 0.0
        %vm6646 = vcmp.ge.f32.partialorder %v6614, 0.0
        %vm6647 = vcmp.ge.f32.partialorder %v6615, 0.0
        %vm6648 = vcmp.ge.f32.partialorder %v6616, 0.0
        %vm6649 = vcmp.ge.f32.partialorder %v6617, 0.0
        %vm6650 = vcmp.ge.f32.partialorder %v6618, 0.0
        %vm6651 = vcmp.ge.f32.partialorder %v6619, 0.0
        %vm6652 = vcmp.ge.f32.partialorder %v6620, 0.0
        %vm6653 = vcmp.ge.f32.partialorder %v6621, 0.0
        %vm6654 = vcmp.ge.f32.partialorder %v6622, 0.0
        %vm6655 = vcmp.ge.f32.partialorder %v6623, 0.0
        %vm6656 = vcmp.ge.f32.partialorder %v6624, 0.0
        %vm6657 = vcmp.ge.f32.partialorder %v6625, 0.0
        %vm6658 = vcmp.ge.f32.partialorder %v6626, 0.0
        %vm6659 = vcmp.ge.f32.partialorder %v6627, 0.0
        %vm6660 = vcmp.ge.f32.partialorder %v6628, 0.0
        %v6661 = vmul.f32 %v6597, 0.2
        %v6662 = vmul.f32 %v6598, 0.2
        %v6663 = vmul.f32 %v6599, 0.2
        %v6664 = vmul.f32 %v6600, 0.2
        %v6665 = vmul.f32 %v6601, 0.2
        %v6666 = vmul.f32 %v6602, 0.2
        %v6667 = vmul.f32 %v6603, 0.2
        %v6668 = vmul.f32 %v6604, 0.2
        %v6669 = vmul.f32 %v6605, 0.2
        %v6670 = vmul.f32 %v6606, 0.2
        %v6671 = vmul.f32 %v6607, 0.2
        %v6672 = vmul.f32 %v6608, 0.2
        %v6673 = vmul.f32 %v6609, 0.2
        %v6674 = vmul.f32 %v6610, 0.2
        %v6675 = vmul.f32 %v6611, 0.2
        %v6676 = vmul.f32 %v6612, 0.2
        %v6677 = vmul.f32 %v6613, 0.2
        %v6678 = vmul.f32 %v6614, 0.2
        %v6679 = vmul.f32 %v6615, 0.2
        %v6680 = vmul.f32 %v6616, 0.2
        %v6681 = vmul.f32 %v6617, 0.2
        %v6682 = vmul.f32 %v6618, 0.2
        %v6683 = vmul.f32 %v6619, 0.2
        %v6684 = vmul.f32 %v6620, 0.2
        %v6685 = vmul.f32 %v6621, 0.2
        %v6686 = vmul.f32 %v6622, 0.2
        %v6687 = vmul.f32 %v6623, 0.2
        %v6688 = vmul.f32 %v6624, 0.2
        %v6689 = vmul.f32 %v6625, 0.2
        %v6690 = vmul.f32 %v6626, 0.2
        %v6691 = vmul.f32 %v6627, 0.2
        %v6692 = vmul.f32 %v6628, 0.2
        %v6693 = vsel %vm6629, %v6597, %v6661
        %v6694 = vsel %vm6630, %v6598, %v6662
        %v6695 = vsel %vm6631, %v6599, %v6663
        %v6696 = vsel %vm6632, %v6600, %v6664
        %v6697 = vsel %vm6633, %v6601, %v6665
        %v6698 = vsel %vm6634, %v6602, %v6666
        %v6699 = vsel %vm6635, %v6603, %v6667
        %v6700 = vsel %vm6636, %v6604, %v6668
        %v6701 = vsel %vm6637, %v6605, %v6669
        %v6702 = vsel %vm6638, %v6606, %v6670
        %v6703 = vsel %vm6639, %v6607, %v6671
        %v6704 = vsel %vm6640, %v6608, %v6672
        %v6705 = vsel %vm6641, %v6609, %v6673
        %v6706 = vsel %vm6642, %v6610, %v6674
        %v6707 = vsel %vm6643, %v6611, %v6675
        %v6708 = vsel %vm6644, %v6612, %v6676
        %v6709 = vsel %vm6645, %v6613, %v6677
        %v6710 = vsel %vm6646, %v6614, %v6678
        %v6711 = vsel %vm6647, %v6615, %v6679
        %v6712 = vsel %vm6648, %v6616, %v6680
        %v6713 = vsel %vm6649, %v6617, %v6681
        %v6714 = vsel %vm6650, %v6618, %v6682
        %v6715 = vsel %vm6651, %v6619, %v6683
        %v6716 = vsel %vm6652, %v6620, %v6684
        %v6717 = vsel %vm6653, %v6621, %v6685
        %v6718 = vsel %vm6654, %v6622, %v6686
        %v6719 = vsel %vm6655, %v6623, %v6687
        %v6720 = vsel %vm6656, %v6624, %v6688
        %v6721 = vsel %vm6657, %v6625, %v6689
        %v6722 = vsel %vm6658, %v6626, %v6690
        %v6723 = vsel %vm6659, %v6627, %v6691
        %v6724 = vsel %vm6660, %v6628, %v6692
        %v6725 = vpack.c.bf16 %v6694, %v6693
        %v6726 = vpack.c.bf16 %v6696, %v6695
        %v6727 = vpack.c.bf16 %v6698, %v6697
        %v6728 = vpack.c.bf16 %v6700, %v6699
        %v6729 = vpack.c.bf16 %v6702, %v6701
        %v6730 = vpack.c.bf16 %v6704, %v6703
        %v6731 = vpack.c.bf16 %v6706, %v6705
        %v6732 = vpack.c.bf16 %v6708, %v6707
        %v6733 = vpack.c.bf16 %v6710, %v6709
        %v6734 = vpack.c.bf16 %v6712, %v6711
        %v6735 = vpack.c.bf16 %v6714, %v6713
        %v6736 = vpack.c.bf16 %v6716, %v6715
        %v6737 = vpack.c.bf16 %v6718, %v6717
        %v6738 = vpack.c.bf16 %v6720, %v6719
        %v6739 = vpack.c.bf16 %v6722, %v6721
        %v6740 = vpack.c.bf16 %v6724, %v6723
        %v6741 = vld [vmem:[%s16] sm:$0xf]
        %v6742 = vld [vmem:[%s16 + $0x4] sm:$0xf]
        %v6743 = vld [vmem:[%s16 + $0x8] sm:$0xf]
        %v6744 = vld [vmem:[%s16 + $0xc] sm:$0xf]
        %v6745 = vld [vmem:[%s16 + $0x10] sm:$0xf]
        %v6746 = vld [vmem:[%s16 + $0x14] sm:$0xf]
        %v6747 = vld [vmem:[%s16 + $0x18] sm:$0xf]
        %v6748 = vld [vmem:[#allocation17] sm:$0x1]
        %v6749 = vld [vmem:[#allocation19] sm:$0x1]
        %6764 = vrot.lane.b32.xlu0 %v6725, 8
        %v6765 = vpop.permute.xlu0 %6764
        %6766 = vrot.lane.b32.xlu0 %v6726, 8
        %v6767 = vpop.permute.xlu0 %6766
        %6768 = vrot.lane.b32.xlu0 %v6727, 8
        %v6769 = vpop.permute.xlu0 %6768
        %6770 = vrot.lane.b32.xlu0 %v6728, 8
        %v6771 = vpop.permute.xlu0 %6770
        %6772 = vrot.lane.b32.xlu0 %v6729, 8
        %v6773 = vpop.permute.xlu0 %6772
        %6774 = vrot.lane.b32.xlu0 %v6730, 8
        %v6775 = vpop.permute.xlu0 %6774
        %6776 = vrot.lane.b32.xlu0 %v6731, 8
        %v6777 = vpop.permute.xlu0 %6776
        %6778 = vrot.lane.b32.xlu0 %v6732, 8
        %v6779 = vpop.permute.xlu0 %6778
        %6780 = vrot.lane.b32.xlu0 %v6733, 8
        %v6781 = vpop.permute.xlu0 %6780
        %6782 = vrot.lane.b32.xlu0 %v6734, 8
        %v6783 = vpop.permute.xlu0 %6782
        %6784 = vrot.lane.b32.xlu0 %v6735, 8
        %v6785 = vpop.permute.xlu0 %6784
        %6786 = vrot.lane.b32.xlu0 %v6736, 8
        %v6787 = vpop.permute.xlu0 %6786
        %6788 = vrot.lane.b32.xlu0 %v6737, 8
        %v6789 = vpop.permute.xlu0 %6788
        %6790 = vrot.lane.b32.xlu0 %v6738, 8
        %v6791 = vpop.permute.xlu0 %6790
        %6793 = vrot.lane.b32.xlu0 %v6725, 16
        %v6794 = vpop.permute.xlu0 %6793
        %6795 = vrot.lane.b32.xlu0 %v6726, 16
        %v6796 = vpop.permute.xlu0 %6795
        %6797 = vrot.lane.b32.xlu0 %v6727, 16
        %v6798 = vpop.permute.xlu0 %6797
        %6799 = vrot.lane.b32.xlu0 %v6728, 16
        %v6800 = vpop.permute.xlu0 %6799
        %6801 = vrot.lane.b32.xlu0 %v6729, 16
        %v6802 = vpop.permute.xlu0 %6801
        %6803 = vrot.lane.b32.xlu0 %v6730, 16
        %v6804 = vpop.permute.xlu0 %6803
        %6805 = vrot.lane.b32.xlu0 %v6731, 16
        %v6806 = vpop.permute.xlu0 %6805
        %6807 = vrot.lane.b32.xlu0 %v6732, 16
        %v6808 = vpop.permute.xlu0 %6807
        %6809 = vrot.lane.b32.xlu0 %v6733, 16
        %v6810 = vpop.permute.xlu0 %6809
        %6811 = vrot.lane.b32.xlu0 %v6734, 16
        %v6812 = vpop.permute.xlu0 %6811
        %6813 = vrot.lane.b32.xlu0 %v6735, 16
        %v6814 = vpop.permute.xlu0 %6813
        %6815 = vrot.lane.b32.xlu0 %v6736, 16
        %v6816 = vpop.permute.xlu0 %6815
        %6817 = vrot.lane.b32.xlu0 %v6737, 16
        %v6818 = vpop.permute.xlu0 %6817
        %6819 = vrot.lane.b32.xlu0 %v6738, 16
        %v6820 = vpop.permute.xlu0 %6819
        %6821 = vrot.lane.b32.xlu0 %v6739, 16
        %v6822 = vpop.permute.xlu0 %6821
        %6824 = vrot.lane.b32.xlu0 %v6725, 24
        %v6825 = vpop.permute.xlu0 %6824
        %6826 = vrot.lane.b32.xlu0 %v6726, 24
        %v6827 = vpop.permute.xlu0 %6826
        %6828 = vrot.lane.b32.xlu0 %v6727, 24
        %v6829 = vpop.permute.xlu0 %6828
        %6830 = vrot.lane.b32.xlu0 %v6728, 24
        %v6831 = vpop.permute.xlu0 %6830
        %6832 = vrot.lane.b32.xlu0 %v6729, 24
        %v6833 = vpop.permute.xlu0 %6832
        %6834 = vrot.lane.b32.xlu0 %v6730, 24
        %v6835 = vpop.permute.xlu0 %6834
        %6836 = vrot.lane.b32.xlu0 %v6731, 24
        %v6837 = vpop.permute.xlu0 %6836
        %6838 = vrot.lane.b32.xlu0 %v6732, 24
        %v6839 = vpop.permute.xlu0 %6838
        %6840 = vrot.lane.b32.xlu0 %v6733, 24
        %v6841 = vpop.permute.xlu0 %6840
        %6842 = vrot.lane.b32.xlu0 %v6734, 24
        %v6843 = vpop.permute.xlu0 %6842
        %6844 = vrot.lane.b32.xlu0 %v6735, 24
        %v6845 = vpop.permute.xlu0 %6844
        %6846 = vrot.lane.b32.xlu0 %v6736, 24
        %v6847 = vpop.permute.xlu0 %6846
        %6848 = vrot.lane.b32.xlu0 %v6737, 24
        %v6849 = vpop.permute.xlu0 %6848
        %6850 = vrot.lane.b32.xlu0 %v6738, 24
        %v6851 = vpop.permute.xlu0 %6850
        %6852 = vrot.lane.b32.xlu0 %v6739, 24
        %v6853 = vpop.permute.xlu0 %6852
        %6854 = vrot.lane.b32.xlu0 %v6740, 24
        %v6855 = vpop.permute.xlu0 %6854
        %6856 = vrot.lane.b32.xlu0 %v6726, 32
        %v6857 = vpop.permute.xlu0 %6856
        %6858 = vrot.lane.b32.xlu0 %v6727, 32
        %v6859 = vpop.permute.xlu0 %6858
        %6860 = vrot.lane.b32.xlu0 %v6728, 32
        %v6861 = vpop.permute.xlu0 %6860
        %6862 = vrot.lane.b32.xlu0 %v6729, 32
        %v6863 = vpop.permute.xlu0 %6862
        %6864 = vrot.lane.b32.xlu0 %v6730, 32
        %v6865 = vpop.permute.xlu0 %6864
        %6866 = vrot.lane.b32.xlu0 %v6731, 32
        %v6867 = vpop.permute.xlu0 %6866
        %6868 = vrot.lane.b32.xlu0 %v6732, 32
        %v6869 = vpop.permute.xlu0 %6868
        %6870 = vrot.lane.b32.xlu0 %v6733, 32
        %v6871 = vpop.permute.xlu0 %6870
        %6872 = vrot.lane.b32.xlu0 %v6734, 32
        %v6873 = vpop.permute.xlu0 %6872
        %6874 = vrot.lane.b32.xlu0 %v6735, 32
        %v6875 = vpop.permute.xlu0 %6874
        %6876 = vrot.lane.b32.xlu0 %v6736, 32
        %v6877 = vpop.permute.xlu0 %6876
        %6878 = vrot.lane.b32.xlu0 %v6737, 32
        %v6879 = vpop.permute.xlu0 %6878
        %6880 = vrot.lane.b32.xlu0 %v6738, 32
        %v6881 = vpop.permute.xlu0 %6880
        %6882 = vrot.lane.b32.xlu0 %v6739, 32
        %v6883 = vpop.permute.xlu0 %6882
        %6884 = vrot.lane.b32.xlu0 %v6740, 32
        %v6885 = vpop.permute.xlu0 %6884
        %6886 = vrot.lane.b32.xlu0 %v6727, 40
        %v6887 = vpop.permute.xlu0 %6886
        %6888 = vrot.lane.b32.xlu0 %v6728, 40
        %v6889 = vpop.permute.xlu0 %6888
        %6890 = vrot.lane.b32.xlu0 %v6729, 40
        %v6891 = vpop.permute.xlu0 %6890
        %6892 = vrot.lane.b32.xlu0 %v6730, 40
        %v6893 = vpop.permute.xlu0 %6892
        %6894 = vrot.lane.b32.xlu0 %v6731, 40
        %v6895 = vpop.permute.xlu0 %6894
        %6896 = vrot.lane.b32.xlu0 %v6732, 40
        %v6897 = vpop.permute.xlu0 %6896
        %6898 = vrot.lane.b32.xlu0 %v6733, 40
        %v6899 = vpop.permute.xlu0 %6898
        %6900 = vrot.lane.b32.xlu0 %v6734, 40
        %v6901 = vpop.permute.xlu0 %6900
        %6902 = vrot.lane.b32.xlu0 %v6735, 40
        %v6903 = vpop.permute.xlu0 %6902
        %6904 = vrot.lane.b32.xlu0 %v6736, 40
        %v6905 = vpop.permute.xlu0 %6904
        %6906 = vrot.lane.b32.xlu0 %v6737, 40
        %v6907 = vpop.permute.xlu0 %6906
        %6908 = vrot.lane.b32.xlu0 %v6738, 40
        %v6909 = vpop.permute.xlu0 %6908
        %6910 = vrot.lane.b32.xlu0 %v6739, 40
        %v6911 = vpop.permute.xlu0 %6910
        %6912 = vrot.lane.b32.xlu0 %v6740, 40
        %v6913 = vpop.permute.xlu0 %6912
        %6914 = vrot.lane.b32.xlu0 %v6728, 48
        %v6915 = vpop.permute.xlu0 %6914
        %6916 = vrot.lane.b32.xlu0 %v6729, 48
        %v6917 = vpop.permute.xlu0 %6916
        %6918 = vrot.lane.b32.xlu0 %v6730, 48
        %v6919 = vpop.permute.xlu0 %6918
        %6920 = vrot.lane.b32.xlu0 %v6731, 48
        %v6921 = vpop.permute.xlu0 %6920
        %6922 = vrot.lane.b32.xlu0 %v6732, 48
        %v6923 = vpop.permute.xlu0 %6922
        %6924 = vrot.lane.b32.xlu0 %v6733, 48
        %v6925 = vpop.permute.xlu0 %6924
        %6926 = vrot.lane.b32.xlu0 %v6734, 48
        %v6927 = vpop.permute.xlu0 %6926
        %6928 = vrot.lane.b32.xlu0 %v6735, 48
        %v6929 = vpop.permute.xlu0 %6928
        %6930 = vrot.lane.b32.xlu0 %v6736, 48
        %v6931 = vpop.permute.xlu0 %6930
        %6932 = vrot.lane.b32.xlu0 %v6737, 48
        %v6933 = vpop.permute.xlu0 %6932
        %6934 = vrot.lane.b32.xlu0 %v6738, 48
        %v6935 = vpop.permute.xlu0 %6934
        %6936 = vrot.lane.b32.xlu0 %v6739, 48
        %v6937 = vpop.permute.xlu0 %6936
        %6938 = vrot.lane.b32.xlu0 %v6740, 48
        %v6939 = vpop.permute.xlu0 %6938
        %v6941 = vsel %vm2690, 0, %v6765
        %v6944 = vsel %vm2690, %v6725, %v6767
        %v6947 = vsel %vm2690, %v6726, %v6769
        %v6950 = vsel %vm2690, %v6727, %v6771
        %v6953 = vsel %vm2690, %v6728, %v6773
        %v6956 = vsel %vm2690, %v6729, %v6775
        %v6959 = vsel %vm2690, %v6730, %v6777
        %v6962 = vsel %vm2690, %v6731, %v6779
        %v6965 = vsel %vm2690, %v6732, %v6781
        %v6968 = vsel %vm2690, %v6733, %v6783
        %v6971 = vsel %vm2690, %v6734, %v6785
        %v6974 = vsel %vm2690, %v6735, %v6787
        %v6977 = vsel %vm2690, %v6736, %v6789
        %v6980 = vsel %vm2690, %v6737, %v6791
        %v6982 = vsel %vm2723, %v3507, %v6794
        %v6984 = vsel %vm2723, %v6941, %v6796
        %v6986 = vsel %vm2723, %v6944, %v6798
        %v6988 = vsel %vm2723, %v6947, %v6800
        %v6990 = vsel %vm2723, %v6950, %v6802
        %v6992 = vsel %vm2723, %v6953, %v6804
        %v6994 = vsel %vm2723, %v6956, %v6806
        %v6996 = vsel %vm2723, %v6959, %v6808
        %v6998 = vsel %vm2723, %v6962, %v6810
        %v7000 = vsel %vm2723, %v6965, %v6812
        %v7002 = vsel %vm2723, %v6968, %v6814
        %v7004 = vsel %vm2723, %v6971, %v6816
        %v7006 = vsel %vm2723, %v6974, %v6818
        %v7008 = vsel %vm2723, %v6977, %v6820
        %v7010 = vsel %vm2723, %v6980, %v6822
        %v7012 = vsel %vm2756, %v3550, %v6825
        %v7014 = vsel %vm2756, %v6982, %v6827
        %v7016 = vsel %vm2756, %v6984, %v6829
        %v7018 = vsel %vm2756, %v6986, %v6831
        %v7020 = vsel %vm2756, %v6988, %v6833
        %v7022 = vsel %vm2756, %v6990, %v6835
        %v7024 = vsel %vm2756, %v6992, %v6837
        %v7026 = vsel %vm2756, %v6994, %v6839
        %v7028 = vsel %vm2756, %v6996, %v6841
        %v7030 = vsel %vm2756, %v6998, %v6843
        %v7032 = vsel %vm2756, %v7000, %v6845
        %v7034 = vsel %vm2756, %v7002, %v6847
        %v7036 = vsel %vm2756, %v7004, %v6849
        %v7038 = vsel %vm2756, %v7006, %v6851
        %v7040 = vsel %vm2756, %v7008, %v6853
        %v7042 = vsel %vm2756, %v7010, %v6855
        %v7044 = vsel %vm2789, %v7012, %v6857
        %v7046 = vsel %vm2789, %v7014, %v6859
        %v7048 = vsel %vm2789, %v7016, %v6861
        %v7050 = vsel %vm2789, %v7018, %v6863
        %v7052 = vsel %vm2789, %v7020, %v6865
        %v7054 = vsel %vm2789, %v7022, %v6867
        %v7056 = vsel %vm2789, %v7024, %v6869
        %v7058 = vsel %vm2789, %v7026, %v6871
        %v7060 = vsel %vm2789, %v7028, %v6873
        %v7062 = vsel %vm2789, %v7030, %v6875
        %v7064 = vsel %vm2789, %v7032, %v6877
        %v7066 = vsel %vm2789, %v7034, %v6879
        %v7068 = vsel %vm2789, %v7036, %v6881
        %v7070 = vsel %vm2789, %v7038, %v6883
        %v7072 = vsel %vm2789, %v7040, %v6885
        %v7073 = vsel %vm2789, %v7042, %v3446
        %v7075 = vsel %vm2822, %v7044, %v6887
        %v7077 = vsel %vm2822, %v7046, %v6889
        %v7079 = vsel %vm2822, %v7048, %v6891
        %v7081 = vsel %vm2822, %v7050, %v6893
        %v7083 = vsel %vm2822, %v7052, %v6895
        %v7085 = vsel %vm2822, %v7054, %v6897
        %v7087 = vsel %vm2822, %v7056, %v6899
        %v7089 = vsel %vm2822, %v7058, %v6901
        %v7091 = vsel %vm2822, %v7060, %v6903
        %v7093 = vsel %vm2822, %v7062, %v6905
        %v7095 = vsel %vm2822, %v7064, %v6907
        %v7097 = vsel %vm2822, %v7066, %v6909
        %v7099 = vsel %vm2822, %v7068, %v6911
        %v7101 = vsel %vm2822, %v7070, %v6913
        %v7102 = vsel %vm2822, %v7072, %v3476
        %v7103 = vsel %vm2822, %v7073, %v3476
        %v7105 = vsel %vm2855, %v7075, %v6915
        %v7107 = vsel %vm2855, %v7077, %v6917
        %v7109 = vsel %vm2855, %v7079, %v6919
        %v7111 = vsel %vm2855, %v7081, %v6921
        %v7113 = vsel %vm2855, %v7083, %v6923
        %v7115 = vsel %vm2855, %v7085, %v6925
        %v7117 = vsel %vm2855, %v7087, %v6927
        %v7119 = vsel %vm2855, %v7089, %v6929
        %v7121 = vsel %vm2855, %v7091, %v6931
        %v7123 = vsel %vm2855, %v7093, %v6933
        %v7125 = vsel %vm2855, %v7095, %v6935
        %v7127 = vsel %vm2855, %v7097, %v6937
        %v7129 = vsel %vm2855, %v7099, %v6939
        %v7130 = vsel %vm2855, %v7101, %v3504
        %v7131 = vsel %vm2855, %v7102, %v3504
        %v7132 = vsel %vm2855, %v7103, %v3504
        %v7140 = vunpack.c.l.b16 %v6741
        %v7141 = vunpack.c.l.b16 %v6742
        %v7142 = vunpack.c.l.b16 %v6743
        %v7143 = vunpack.c.l.b16 %v6744
        %v7144 = vunpack.c.l.b16 %v6745
        %v7145 = vunpack.c.l.b16 %v6746
        %v7146 = vunpack.c.l.b16 %v6747
        %v7147 = vpack.c.b16 %v7141, %v7140
        %v7148 = vpack.c.b16 %v7143, %v7142
        %v7149 = vpack.c.b16 %v7145, %v7144
        %v7150 = vpack.c.b16 %v7146, %v7146
        %v7154 = vsel %vm2909, %v7105, 0
        %v7156 = vsel %vm2909, %v7107, 0
        %v7158 = vsel %vm2909, %v7109, 0
        %v7160 = vsel %vm2909, %v7111, 0
        %v7162 = vsel %vm2909, %v7113, 0
        %v7164 = vsel %vm2909, %v7115, 0
        %v7166 = vsel %vm2909, %v7117, 0
        %v7168 = vsel %vm2909, %v7119, 0
        %v7170 = vsel %vm2909, %v7121, 0
        %v7172 = vsel %vm2909, %v7123, 0
        %v7174 = vsel %vm2909, %v7125, 0
        %v7176 = vsel %vm2909, %v7127, 0
        %v7178 = vsel %vm2909, %v7129, 0
        %v7180 = vsel %vm2909, %v7130, 0
        %v7182 = vsel %vm2909, %v7131, 0
        %v7184 = vsel %vm2909, %v7132, 0
        %v7187 = vsel %vm2942, %v7150, 0
        %7189 = vmatprep.subr.bf16.mxu0 0
        %7190 = vmatpush1.bf16.msra.mxu0 0
        %7191 = vmatprep.subr.bf16.mxu0 0
        %7192 = vmatpush1.bf16.msra.mxu0 0
        %7193 = vmatprep.subr.bf16.mxu0 0
        %7194 = vmatpush1.bf16.msra.mxu0 0
        %7195 = vmatprep.subr.bf16.mxu0 0
        %7196 = vmatpush1.bf16.msra.mxu0 0
        %7197 = vmatprep.subr.bf16.mxu0 0
        %7198 = vmatpush1.bf16.msra.mxu0 %v7187
        %7199 = vmatprep.subr.bf16.mxu0 0
        %7200 = vmatpush1.bf16.msra.mxu0 %v7149
        %7201 = vmatprep.subr.bf16.mxu0 0
        %7202 = vmatpush1.bf16.msra.mxu0 %v7148
        %7203 = vmatprep.subr.bf16.mxu0 0
        %7204 = vmatpush1.bf16.msra.mxu0 %v7147
        %7205 = vmatprep.subr.bf16.mxu0 0
        %7206 = vmatpush2.bf16.msra.mxu0 0
        %7207 = vmatprep.subr.bf16.mxu0 0
        %7208 = vmatpush2.bf16.msra.mxu0 0
        %7209 = vmatprep.subr.bf16.mxu0 0
        %7210 = vmatpush2.bf16.msra.mxu0 0
        %7211 = vmatprep.subr.bf16.mxu0 0
        %7212 = vmatpush2.bf16.msra.mxu0 0
        %7213 = vmatprep.subr.bf16.mxu0 0
        %7214 = vmatpush2.bf16.msra.mxu0 0
        %7215 = vmatprep.subr.bf16.mxu0 0
        %7216 = vmatpush2.bf16.msra.mxu0 0
        %7217 = vmatprep.subr.bf16.mxu0 0
        %7218 = vmatpush2.bf16.msra.mxu0 0
        %7219 = vmatprep.subr.bf16.mxu0 0
        %7220 = vmatpush2.bf16.msra.mxu0 0
        %7221 = vmatprep.mubr.bf16.mxu0 0
        %7222 = vmatmul.mubr.bf16.gmra.mxu0 %v7154
        %v7223 = vpop.f32.mrf.mxu0
        %v7224 = vadd.f32 0.0, %v7223
        %v7225 = vpop.f32.mrf.mxu0
        %v7226 = vpop.f32.mrf.mxu0
        %v7227 = vadd.f32 0.0, %v7226
        %v7228 = vpop.f32.mrf.mxu0
        %7229 = vmatprep.mubr.bf16.mxu0 0
        %7230 = vmatmul.mubr.bf16.gmra.mxu0 %v7156
        %v7231 = vpop.f32.mrf.mxu0
        %v7232 = vadd.f32 0.0, %v7231
        %v7233 = vpop.f32.mrf.mxu0
        %v7234 = vpop.f32.mrf.mxu0
        %v7235 = vadd.f32 0.0, %v7234
        %v7236 = vpop.f32.mrf.mxu0
        %7237 = vmatprep.mubr.bf16.mxu0 0
        %7238 = vmatmul.mubr.bf16.gmra.mxu0 %v7158
        %v7239 = vpop.f32.mrf.mxu0
        %v7240 = vadd.f32 0.0, %v7239
        %v7241 = vpop.f32.mrf.mxu0
        %v7242 = vpop.f32.mrf.mxu0
        %v7243 = vadd.f32 0.0, %v7242
        %v7244 = vpop.f32.mrf.mxu0
        %7245 = vmatprep.mubr.bf16.mxu0 0
        %7246 = vmatmul.mubr.bf16.gmra.mxu0 %v7160
        %v7247 = vpop.f32.mrf.mxu0
        %v7248 = vadd.f32 0.0, %v7247
        %v7249 = vpop.f32.mrf.mxu0
        %v7250 = vpop.f32.mrf.mxu0
        %v7251 = vadd.f32 0.0, %v7250
        %v7252 = vpop.f32.mrf.mxu0
        %7253 = vmatprep.mubr.bf16.mxu0 0
        %7254 = vmatmul.mubr.bf16.gmra.mxu0 %v7162
        %v7255 = vpop.f32.mrf.mxu0
        %v7256 = vadd.f32 0.0, %v7255
        %v7257 = vpop.f32.mrf.mxu0
        %v7258 = vpop.f32.mrf.mxu0
        %v7259 = vadd.f32 0.0, %v7258
        %v7260 = vpop.f32.mrf.mxu0
        %7261 = vmatprep.mubr.bf16.mxu0 0
        %7262 = vmatmul.mubr.bf16.gmra.mxu0 %v7164
        %v7263 = vpop.f32.mrf.mxu0
        %v7264 = vadd.f32 0.0, %v7263
        %v7265 = vpop.f32.mrf.mxu0
        %v7266 = vpop.f32.mrf.mxu0
        %v7267 = vadd.f32 0.0, %v7266
        %v7268 = vpop.f32.mrf.mxu0
        %7269 = vmatprep.mubr.bf16.mxu0 0
        %7270 = vmatmul.mubr.bf16.gmra.mxu0 %v7166
        %v7271 = vpop.f32.mrf.mxu0
        %v7272 = vadd.f32 0.0, %v7271
        %v7273 = vpop.f32.mrf.mxu0
        %v7274 = vpop.f32.mrf.mxu0
        %v7275 = vadd.f32 0.0, %v7274
        %v7276 = vpop.f32.mrf.mxu0
        %7277 = vmatprep.mubr.bf16.mxu0 0
        %7278 = vmatmul.mubr.bf16.gmra.mxu0 %v7168
        %v7279 = vpop.f32.mrf.mxu0
        %v7280 = vadd.f32 0.0, %v7279
        %v7281 = vpop.f32.mrf.mxu0
        %v7282 = vpop.f32.mrf.mxu0
        %v7283 = vadd.f32 0.0, %v7282
        %v7284 = vpop.f32.mrf.mxu0
        %7285 = vmatprep.mubr.bf16.mxu0 0
        %7286 = vmatmul.mubr.bf16.gmra.mxu0 %v7170
        %v7287 = vpop.f32.mrf.mxu0
        %v7288 = vadd.f32 0.0, %v7287
        %v7289 = vpop.f32.mrf.mxu0
        %v7290 = vpop.f32.mrf.mxu0
        %v7291 = vadd.f32 0.0, %v7290
        %v7292 = vpop.f32.mrf.mxu0
        %7293 = vmatprep.mubr.bf16.mxu0 0
        %7294 = vmatmul.mubr.bf16.gmra.mxu0 %v7172
        %v7295 = vpop.f32.mrf.mxu0
        %v7296 = vadd.f32 0.0, %v7295
        %v7297 = vpop.f32.mrf.mxu0
        %v7298 = vpop.f32.mrf.mxu0
        %v7299 = vadd.f32 0.0, %v7298
        %v7300 = vpop.f32.mrf.mxu0
        %7301 = vmatprep.mubr.bf16.mxu0 0
        %7302 = vmatmul.mubr.bf16.gmra.mxu0 %v7174
        %v7303 = vpop.f32.mrf.mxu0
        %v7304 = vadd.f32 0.0, %v7303
        %v7305 = vpop.f32.mrf.mxu0
        %v7306 = vpop.f32.mrf.mxu0
        %v7307 = vadd.f32 0.0, %v7306
        %v7308 = vpop.f32.mrf.mxu0
        %7309 = vmatprep.mubr.bf16.mxu0 0
        %7310 = vmatmul.mubr.bf16.gmra.mxu0 %v7176
        %v7311 = vpop.f32.mrf.mxu0
        %v7312 = vadd.f32 0.0, %v7311
        %v7313 = vpop.f32.mrf.mxu0
        %v7314 = vpop.f32.mrf.mxu0
        %v7315 = vadd.f32 0.0, %v7314
        %v7316 = vpop.f32.mrf.mxu0
        %7317 = vmatprep.mubr.bf16.mxu0 0
        %7318 = vmatmul.mubr.bf16.gmra.mxu0 %v7178
        %v7319 = vpop.f32.mrf.mxu0
        %v7320 = vadd.f32 0.0, %v7319
        %v7321 = vpop.f32.mrf.mxu0
        %v7322 = vpop.f32.mrf.mxu0
        %v7323 = vadd.f32 0.0, %v7322
        %v7324 = vpop.f32.mrf.mxu0
        %7325 = vmatprep.mubr.bf16.mxu0 0
        %7326 = vmatmul.mubr.bf16.gmra.mxu0 %v7180
        %v7327 = vpop.f32.mrf.mxu0
        %v7328 = vadd.f32 0.0, %v7327
        %v7329 = vpop.f32.mrf.mxu0
        %v7330 = vpop.f32.mrf.mxu0
        %v7331 = vadd.f32 0.0, %v7330
        %v7332 = vpop.f32.mrf.mxu0
        %7333 = vmatprep.mubr.bf16.mxu0 0
        %7334 = vmatmul.mubr.bf16.gmra.mxu0 %v7182
        %v7335 = vpop.f32.mrf.mxu0
        %v7336 = vadd.f32 0.0, %v7335
        %v7337 = vpop.f32.mrf.mxu0
        %v7338 = vpop.f32.mrf.mxu0
        %v7339 = vadd.f32 0.0, %v7338
        %v7340 = vpop.f32.mrf.mxu0
        %7341 = vmatprep.mubr.bf16.mxu0 0
        %7342 = vmatmul.mubr.bf16.gmra.mxu0 %v7184
        %v7343 = vpop.f32.mrf.mxu0
        %v7344 = vadd.f32 0.0, %v7343
        %v7345 = vpop.f32.mrf.mxu0
        %v7346 = vpop.f32.mrf.mxu0
        %v7347 = vadd.f32 0.0, %v7346
        %v7348 = vpop.f32.mrf.mxu0
        %7349 = vdwg.mxu0
        %v7351 = vlaneseq
        %v7352 = vshrl.u32 %v7351, 7
        %v7353 = vsub.s32 0, %v7352
        %v7354 = vrot.slane %v6748, %v7353
        %v7356 = vmul.f32 %v7224, %v7354
        %v7357 = vmul.f32 %v7227, %v7354
        %v7358 = vmul.f32 %v7232, %v7354
        %v7359 = vmul.f32 %v7235, %v7354
        %v7360 = vmul.f32 %v7240, %v7354
        %v7361 = vmul.f32 %v7243, %v7354
        %v7362 = vmul.f32 %v7248, %v7354
        %v7363 = vmul.f32 %v7251, %v7354
        %v7364 = vmul.f32 %v7256, %v7354
        %v7365 = vmul.f32 %v7259, %v7354
        %v7366 = vmul.f32 %v7264, %v7354
        %v7367 = vmul.f32 %v7267, %v7354
        %v7368 = vmul.f32 %v7272, %v7354
        %v7369 = vmul.f32 %v7275, %v7354
        %v7370 = vmul.f32 %v7280, %v7354
        %v7371 = vmul.f32 %v7283, %v7354
        %v7372 = vmul.f32 %v7288, %v7354
        %v7373 = vmul.f32 %v7291, %v7354
        %v7374 = vmul.f32 %v7296, %v7354
        %v7375 = vmul.f32 %v7299, %v7354
        %v7376 = vmul.f32 %v7304, %v7354
        %v7377 = vmul.f32 %v7307, %v7354
        %v7378 = vmul.f32 %v7312, %v7354
        %v7379 = vmul.f32 %v7315, %v7354
        %v7380 = vmul.f32 %v7320, %v7354
        %v7381 = vmul.f32 %v7323, %v7354
        %v7382 = vmul.f32 %v7328, %v7354
        %v7383 = vmul.f32 %v7331, %v7354
        %v7384 = vmul.f32 %v7336, %v7354
        %v7385 = vmul.f32 %v7339, %v7354
        %v7386 = vmul.f32 %v7344, %v7354
        %v7387 = vmul.f32 %v7347, %v7354
        %v7389 = vlaneseq
        %v7390 = vshrl.u32 %v7389, 7
        %v7391 = vsub.s32 0, %v7390
        %v7392 = vrot.slane %v6749, %v7391
        %v7394 = vadd.f32 %v7356, %v7392
        %v7395 = vadd.f32 %v7357, %v7392
        %v7396 = vadd.f32 %v7358, %v7392
        %v7397 = vadd.f32 %v7359, %v7392
        %v7398 = vadd.f32 %v7360, %v7392
        %v7399 = vadd.f32 %v7361, %v7392
        %v7400 = vadd.f32 %v7362, %v7392
        %v7401 = vadd.f32 %v7363, %v7392
        %v7402 = vadd.f32 %v7364, %v7392
        %v7403 = vadd.f32 %v7365, %v7392
        %v7404 = vadd.f32 %v7366, %v7392
        %v7405 = vadd.f32 %v7367, %v7392
        %v7406 = vadd.f32 %v7368, %v7392
        %v7407 = vadd.f32 %v7369, %v7392
        %v7408 = vadd.f32 %v7370, %v7392
        %v7409 = vadd.f32 %v7371, %v7392
        %v7410 = vadd.f32 %v7372, %v7392
        %v7411 = vadd.f32 %v7373, %v7392
        %v7412 = vadd.f32 %v7374, %v7392
        %v7413 = vadd.f32 %v7375, %v7392
        %v7414 = vadd.f32 %v7376, %v7392
        %v7415 = vadd.f32 %v7377, %v7392
        %v7416 = vadd.f32 %v7378, %v7392
        %v7417 = vadd.f32 %v7379, %v7392
        %v7418 = vadd.f32 %v7380, %v7392
        %v7419 = vadd.f32 %v7381, %v7392
        %v7420 = vadd.f32 %v7382, %v7392
        %v7421 = vadd.f32 %v7383, %v7392
        %v7422 = vadd.f32 %v7384, %v7392
        %v7423 = vadd.f32 %v7385, %v7392
        %v7424 = vadd.f32 %v7386, %v7392
        %v7425 = vadd.f32 %v7387, %v7392
        %vm7426 = vcmp.ge.f32.partialorder %v7394, 0.0
        %vm7427 = vcmp.ge.f32.partialorder %v7395, 0.0
        %vm7428 = vcmp.ge.f32.partialorder %v7396, 0.0
        %vm7429 = vcmp.ge.f32.partialorder %v7397, 0.0
        %vm7430 = vcmp.ge.f32.partialorder %v7398, 0.0
        %vm7431 = vcmp.ge.f32.partialorder %v7399, 0.0
        %vm7432 = vcmp.ge.f32.partialorder %v7400, 0.0
        %vm7433 = vcmp.ge.f32.partialorder %v7401, 0.0
        %vm7434 = vcmp.ge.f32.partialorder %v7402, 0.0
        %vm7435 = vcmp.ge.f32.partialorder %v7403, 0.0
        %vm7436 = vcmp.ge.f32.partialorder %v7404, 0.0
        %vm7437 = vcmp.ge.f32.partialorder %v7405, 0.0
        %vm7438 = vcmp.ge.f32.partialorder %v7406, 0.0
        %vm7439 = vcmp.ge.f32.partialorder %v7407, 0.0
        %vm7440 = vcmp.ge.f32.partialorder %v7408, 0.0
        %vm7441 = vcmp.ge.f32.partialorder %v7409, 0.0
        %vm7442 = vcmp.ge.f32.partialorder %v7410, 0.0
        %vm7443 = vcmp.ge.f32.partialorder %v7411, 0.0
        %vm7444 = vcmp.ge.f32.partialorder %v7412, 0.0
        %vm7445 = vcmp.ge.f32.partialorder %v7413, 0.0
        %vm7446 = vcmp.ge.f32.partialorder %v7414, 0.0
        %vm7447 = vcmp.ge.f32.partialorder %v7415, 0.0
        %vm7448 = vcmp.ge.f32.partialorder %v7416, 0.0
        %vm7449 = vcmp.ge.f32.partialorder %v7417, 0.0
        %vm7450 = vcmp.ge.f32.partialorder %v7418, 0.0
        %vm7451 = vcmp.ge.f32.partialorder %v7419, 0.0
        %vm7452 = vcmp.ge.f32.partialorder %v7420, 0.0
        %vm7453 = vcmp.ge.f32.partialorder %v7421, 0.0
        %vm7454 = vcmp.ge.f32.partialorder %v7422, 0.0
        %vm7455 = vcmp.ge.f32.partialorder %v7423, 0.0
        %vm7456 = vcmp.ge.f32.partialorder %v7424, 0.0
        %vm7457 = vcmp.ge.f32.partialorder %v7425, 0.0
        %v7458 = vmul.f32 %v7394, 0.2
        %v7459 = vmul.f32 %v7395, 0.2
        %v7460 = vmul.f32 %v7396, 0.2
        %v7461 = vmul.f32 %v7397, 0.2
        %v7462 = vmul.f32 %v7398, 0.2
        %v7463 = vmul.f32 %v7399, 0.2
        %v7464 = vmul.f32 %v7400, 0.2
        %v7465 = vmul.f32 %v7401, 0.2
        %v7466 = vmul.f32 %v7402, 0.2
        %v7467 = vmul.f32 %v7403, 0.2
        %v7468 = vmul.f32 %v7404, 0.2
        %v7469 = vmul.f32 %v7405, 0.2
        %v7470 = vmul.f32 %v7406, 0.2
        %v7471 = vmul.f32 %v7407, 0.2
        %v7472 = vmul.f32 %v7408, 0.2
        %v7473 = vmul.f32 %v7409, 0.2
        %v7474 = vmul.f32 %v7410, 0.2
        %v7475 = vmul.f32 %v7411, 0.2
        %v7476 = vmul.f32 %v7412, 0.2
        %v7477 = vmul.f32 %v7413, 0.2
        %v7478 = vmul.f32 %v7414, 0.2
        %v7479 = vmul.f32 %v7415, 0.2
        %v7480 = vmul.f32 %v7416, 0.2
        %v7481 = vmul.f32 %v7417, 0.2
        %v7482 = vmul.f32 %v7418, 0.2
        %v7483 = vmul.f32 %v7419, 0.2
        %v7484 = vmul.f32 %v7420, 0.2
        %v7485 = vmul.f32 %v7421, 0.2
        %v7486 = vmul.f32 %v7422, 0.2
        %v7487 = vmul.f32 %v7423, 0.2
        %v7488 = vmul.f32 %v7424, 0.2
        %v7489 = vmul.f32 %v7425, 0.2
        %v7490 = vsel %vm7426, %v7394, %v7458
        %v7491 = vsel %vm7427, %v7395, %v7459
        %v7492 = vsel %vm7428, %v7396, %v7460
        %v7493 = vsel %vm7429, %v7397, %v7461
        %v7494 = vsel %vm7430, %v7398, %v7462
        %v7495 = vsel %vm7431, %v7399, %v7463
        %v7496 = vsel %vm7432, %v7400, %v7464
        %v7497 = vsel %vm7433, %v7401, %v7465
        %v7498 = vsel %vm7434, %v7402, %v7466
        %v7499 = vsel %vm7435, %v7403, %v7467
        %v7500 = vsel %vm7436, %v7404, %v7468
        %v7501 = vsel %vm7437, %v7405, %v7469
        %v7502 = vsel %vm7438, %v7406, %v7470
        %v7503 = vsel %vm7439, %v7407, %v7471
        %v7504 = vsel %vm7440, %v7408, %v7472
        %v7505 = vsel %vm7441, %v7409, %v7473
        %v7506 = vsel %vm7442, %v7410, %v7474
        %v7507 = vsel %vm7443, %v7411, %v7475
        %v7508 = vsel %vm7444, %v7412, %v7476
        %v7509 = vsel %vm7445, %v7413, %v7477
        %v7510 = vsel %vm7446, %v7414, %v7478
        %v7511 = vsel %vm7447, %v7415, %v7479
        %v7512 = vsel %vm7448, %v7416, %v7480
        %v7513 = vsel %vm7449, %v7417, %v7481
        %v7514 = vsel %vm7450, %v7418, %v7482
        %v7515 = vsel %vm7451, %v7419, %v7483
        %v7516 = vsel %vm7452, %v7420, %v7484
        %v7517 = vsel %vm7453, %v7421, %v7485
        %v7518 = vsel %vm7454, %v7422, %v7486
        %v7519 = vsel %vm7455, %v7423, %v7487
        %v7520 = vsel %vm7456, %v7424, %v7488
        %v7521 = vsel %vm7457, %v7425, %v7489
        %v7522 = vpack.c.bf16 %v7491, %v7490
        %v7523 = vpack.c.bf16 %v7493, %v7492
        %v7524 = vpack.c.bf16 %v7495, %v7494
        %v7525 = vpack.c.bf16 %v7497, %v7496
        %v7526 = vpack.c.bf16 %v7499, %v7498
        %v7527 = vpack.c.bf16 %v7501, %v7500
        %v7528 = vpack.c.bf16 %v7503, %v7502
        %v7529 = vpack.c.bf16 %v7505, %v7504
        %v7530 = vpack.c.bf16 %v7507, %v7506
        %v7531 = vpack.c.bf16 %v7509, %v7508
        %v7532 = vpack.c.bf16 %v7511, %v7510
        %v7533 = vpack.c.bf16 %v7513, %v7512
        %v7534 = vpack.c.bf16 %v7515, %v7514
        %v7535 = vpack.c.bf16 %v7517, %v7516
        %v7536 = vpack.c.bf16 %v7519, %v7518
        %v7537 = vpack.c.bf16 %v7521, %v7520
        %v7538 = vld [vmem:[#allocation20] sm:$0xff]
        %v7539 = vld [vmem:[#allocation20 + $0x8] sm:$0xff]
        %v7540 = vld [vmem:[#allocation20 + $0x10] sm:$0xff]
        %v7541 = vld [vmem:[#allocation20 + $0x18] sm:$0xff]
        %v7542 = vld [vmem:[#allocation20 + $0x20] sm:$0xff]
        %v7543 = vld [vmem:[#allocation20 + $0x28] sm:$0xff]
        %v7544 = vld [vmem:[#allocation20 + $0x30] sm:$0xff]
        %v7545 = vld [vmem:[#allocation22] sm:$0x3]
        %v7546 = vld [vmem:[#allocation23] sm:$0x3]
        %v7548 = vshrl.u32 %v7522, 16
        %v7550 = vrot.slane %v7548, 6
        %v7551 = vshll.u32 %v7522, 16
        %v7553 = vrot.slane %v7551, 7
        %v7554 = vor.u32 %v7550, %v7553
        %v7556 = vshrl.u32 %v7523, 16
        %v7558 = vrot.slane %v7556, 6
        %v7559 = vshll.u32 %v7523, 16
        %v7561 = vrot.slane %v7559, 7
        %v7562 = vor.u32 %v7558, %v7561
        %v7564 = vshrl.u32 %v7524, 16
        %v7566 = vrot.slane %v7564, 6
        %v7567 = vshll.u32 %v7524, 16
        %v7569 = vrot.slane %v7567, 7
        %v7570 = vor.u32 %v7566, %v7569
        %v7572 = vshrl.u32 %v7525, 16
        %v7574 = vrot.slane %v7572, 6
        %v7575 = vshll.u32 %v7525, 16
        %v7577 = vrot.slane %v7575, 7
        %v7578 = vor.u32 %v7574, %v7577
        %v7580 = vshrl.u32 %v7526, 16
        %v7582 = vrot.slane %v7580, 6
        %v7583 = vshll.u32 %v7526, 16
        %v7585 = vrot.slane %v7583, 7
        %v7586 = vor.u32 %v7582, %v7585
        %v7588 = vshrl.u32 %v7527, 16
        %v7590 = vrot.slane %v7588, 6
        %v7591 = vshll.u32 %v7527, 16
        %v7593 = vrot.slane %v7591, 7
        %v7594 = vor.u32 %v7590, %v7593
        %v7596 = vshrl.u32 %v7528, 16
        %v7598 = vrot.slane %v7596, 6
        %v7599 = vshll.u32 %v7528, 16
        %v7601 = vrot.slane %v7599, 7
        %v7602 = vor.u32 %v7598, %v7601
        %v7604 = vshrl.u32 %v7529, 16
        %v7606 = vrot.slane %v7604, 6
        %v7607 = vshll.u32 %v7529, 16
        %v7609 = vrot.slane %v7607, 7
        %v7610 = vor.u32 %v7606, %v7609
        %v7612 = vshrl.u32 %v7530, 16
        %v7614 = vrot.slane %v7612, 6
        %v7615 = vshll.u32 %v7530, 16
        %v7617 = vrot.slane %v7615, 7
        %v7618 = vor.u32 %v7614, %v7617
        %v7620 = vshrl.u32 %v7531, 16
        %v7622 = vrot.slane %v7620, 6
        %v7623 = vshll.u32 %v7531, 16
        %v7625 = vrot.slane %v7623, 7
        %v7626 = vor.u32 %v7622, %v7625
        %v7628 = vshrl.u32 %v7532, 16
        %v7630 = vrot.slane %v7628, 6
        %v7631 = vshll.u32 %v7532, 16
        %v7633 = vrot.slane %v7631, 7
        %v7634 = vor.u32 %v7630, %v7633
        %v7636 = vshrl.u32 %v7533, 16
        %v7638 = vrot.slane %v7636, 6
        %v7639 = vshll.u32 %v7533, 16
        %v7641 = vrot.slane %v7639, 7
        %v7642 = vor.u32 %v7638, %v7641
        %v7644 = vshrl.u32 %v7534, 16
        %v7646 = vrot.slane %v7644, 6
        %v7647 = vshll.u32 %v7534, 16
        %v7649 = vrot.slane %v7647, 7
        %v7650 = vor.u32 %v7646, %v7649
        %v7652 = vshrl.u32 %v7535, 16
        %v7654 = vrot.slane %v7652, 6
        %v7655 = vshll.u32 %v7535, 16
        %v7657 = vrot.slane %v7655, 7
        %v7658 = vor.u32 %v7654, %v7657
        %v7660 = vshrl.u32 %v7536, 16
        %v7662 = vrot.slane %v7660, 6
        %v7663 = vshll.u32 %v7536, 16
        %v7665 = vrot.slane %v7663, 7
        %v7666 = vor.u32 %v7662, %v7665
        %v7668 = vshrl.u32 %v7537, 16
        %v7670 = vrot.slane %v7668, 6
        %v7671 = vshll.u32 %v7537, 16
        %v7673 = vrot.slane %v7671, 7
        %v7674 = vor.u32 %v7670, %v7673
        %v7691 = vsel %vm1835, 0, %v7554
        %v7692 = vsel %vm1835, 0, %v7562
        %v7693 = vsel %vm1835, 0, %v7570
        %v7694 = vsel %vm1835, 0, %v7578
        %v7695 = vsel %vm1835, 0, %v7586
        %v7696 = vsel %vm1835, 0, %v7594
        %v7697 = vsel %vm1835, 0, %v7602
        %v7698 = vsel %vm1835, 0, %v7610
        %v7699 = vsel %vm1835, 0, %v7618
        %v7700 = vsel %vm1835, 0, %v7626
        %v7701 = vsel %vm1835, 0, %v7634
        %v7702 = vsel %vm1835, 0, %v7642
        %v7703 = vsel %vm1835, 0, %v7650
        %v7704 = vsel %vm1835, 0, %v7658
        %v7705 = vsel %vm1835, 0, %v7666
        %v7706 = vsel %vm1835, 0, %v7674
        %v7707 = vsel %vm1835, %v7554, 0
        %v7708 = vsel %vm1835, %v7562, 0
        %v7709 = vsel %vm1835, %v7570, 0
        %v7710 = vsel %vm1835, %v7578, 0
        %v7711 = vsel %vm1835, %v7586, 0
        %v7712 = vsel %vm1835, %v7594, 0
        %v7713 = vsel %vm1835, %v7602, 0
        %v7714 = vsel %vm1835, %v7610, 0
        %v7715 = vsel %vm1835, %v7618, 0
        %v7716 = vsel %vm1835, %v7626, 0
        %v7717 = vsel %vm1835, %v7634, 0
        %v7718 = vsel %vm1835, %v7642, 0
        %v7719 = vsel %vm1835, %v7650, 0
        %v7720 = vsel %vm1835, %v7658, 0
        %v7721 = vsel %vm1835, %v7666, 0
        %v7722 = vsel %vm1835, %v7674, 0
        %v7724 = vshrl.u32 %v7691, 16
        %v7726 = vshll.u32 %v7691, 16
        %v7728 = vrot.slane %v7726, 1
        %v7729 = vor.u32 %v7724, %v7728
        %v7731 = vshll.u32 %v7707, 16
        %v7733 = vrot.slane %v7731, 1
        %v7734 = vsel %vm1868, %v7729, %v7733
        %v7736 = vshrl.u32 %v7692, 16
        %v7738 = vshll.u32 %v7692, 16
        %v7740 = vrot.slane %v7738, 1
        %v7741 = vor.u32 %v7736, %v7740
        %v7743 = vshll.u32 %v7708, 16
        %v7745 = vrot.slane %v7743, 1
        %v7746 = vsel %vm1868, %v7741, %v7745
        %v7748 = vshrl.u32 %v7693, 16
        %v7750 = vshll.u32 %v7693, 16
        %v7752 = vrot.slane %v7750, 1
        %v7753 = vor.u32 %v7748, %v7752
        %v7755 = vshll.u32 %v7709, 16
        %v7757 = vrot.slane %v7755, 1
        %v7758 = vsel %vm1868, %v7753, %v7757
        %v7760 = vshrl.u32 %v7694, 16
        %v7762 = vshll.u32 %v7694, 16
        %v7764 = vrot.slane %v7762, 1
        %v7765 = vor.u32 %v7760, %v7764
        %v7767 = vshll.u32 %v7710, 16
        %v7769 = vrot.slane %v7767, 1
        %v7770 = vsel %vm1868, %v7765, %v7769
        %v7772 = vshrl.u32 %v7695, 16
        %v7774 = vshll.u32 %v7695, 16
        %v7776 = vrot.slane %v7774, 1
        %v7777 = vor.u32 %v7772, %v7776
        %v7779 = vshll.u32 %v7711, 16
        %v7781 = vrot.slane %v7779, 1
        %v7782 = vsel %vm1868, %v7777, %v7781
        %v7784 = vshrl.u32 %v7696, 16
        %v7786 = vshll.u32 %v7696, 16
        %v7788 = vrot.slane %v7786, 1
        %v7789 = vor.u32 %v7784, %v7788
        %v7791 = vshll.u32 %v7712, 16
        %v7793 = vrot.slane %v7791, 1
        %v7794 = vsel %vm1868, %v7789, %v7793
        %v7796 = vshrl.u32 %v7697, 16
        %v7798 = vshll.u32 %v7697, 16
        %v7800 = vrot.slane %v7798, 1
        %v7801 = vor.u32 %v7796, %v7800
        %v7803 = vshll.u32 %v7713, 16
        %v7805 = vrot.slane %v7803, 1
        %v7806 = vsel %vm1868, %v7801, %v7805
        %v7808 = vshrl.u32 %v7698, 16
        %v7810 = vshll.u32 %v7698, 16
        %v7812 = vrot.slane %v7810, 1
        %v7813 = vor.u32 %v7808, %v7812
        %v7815 = vshll.u32 %v7714, 16
        %v7817 = vrot.slane %v7815, 1
        %v7818 = vsel %vm1868, %v7813, %v7817
        %v7820 = vshrl.u32 %v7699, 16
        %v7822 = vshll.u32 %v7699, 16
        %v7824 = vrot.slane %v7822, 1
        %v7825 = vor.u32 %v7820, %v7824
        %v7827 = vshll.u32 %v7715, 16
        %v7829 = vrot.slane %v7827, 1
        %v7830 = vsel %vm1868, %v7825, %v7829
        %v7832 = vshrl.u32 %v7700, 16
        %v7834 = vshll.u32 %v7700, 16
        %v7836 = vrot.slane %v7834, 1
        %v7837 = vor.u32 %v7832, %v7836
        %v7839 = vshll.u32 %v7716, 16
        %v7841 = vrot.slane %v7839, 1
        %v7842 = vsel %vm1868, %v7837, %v7841
        %v7844 = vshrl.u32 %v7701, 16
        %v7846 = vshll.u32 %v7701, 16
        %v7848 = vrot.slane %v7846, 1
        %v7849 = vor.u32 %v7844, %v7848
        %v7851 = vshll.u32 %v7717, 16
        %v7853 = vrot.slane %v7851, 1
        %v7854 = vsel %vm1868, %v7849, %v7853
        %v7856 = vshrl.u32 %v7702, 16
        %v7858 = vshll.u32 %v7702, 16
        %v7860 = vrot.slane %v7858, 1
        %v7861 = vor.u32 %v7856, %v7860
        %v7863 = vshll.u32 %v7718, 16
        %v7865 = vrot.slane %v7863, 1
        %v7866 = vsel %vm1868, %v7861, %v7865
        %v7868 = vshrl.u32 %v7703, 16
        %v7870 = vshll.u32 %v7703, 16
        %v7872 = vrot.slane %v7870, 1
        %v7873 = vor.u32 %v7868, %v7872
        %v7875 = vshll.u32 %v7719, 16
        %v7877 = vrot.slane %v7875, 1
        %v7878 = vsel %vm1868, %v7873, %v7877
        %v7880 = vshrl.u32 %v7704, 16
        %v7882 = vshll.u32 %v7704, 16
        %v7884 = vrot.slane %v7882, 1
        %v7885 = vor.u32 %v7880, %v7884
        %v7887 = vshll.u32 %v7720, 16
        %v7889 = vrot.slane %v7887, 1
        %v7890 = vsel %vm1868, %v7885, %v7889
        %v7892 = vshrl.u32 %v7705, 16
        %v7894 = vshll.u32 %v7705, 16
        %v7896 = vrot.slane %v7894, 1
        %v7897 = vor.u32 %v7892, %v7896
        %v7899 = vshll.u32 %v7721, 16
        %v7901 = vrot.slane %v7899, 1
        %v7902 = vsel %vm1868, %v7897, %v7901
        %v7904 = vshrl.u32 %v7706, 16
        %v7906 = vshll.u32 %v7706, 16
        %v7908 = vrot.slane %v7906, 1
        %v7909 = vor.u32 %v7904, %v7908
        %v7911 = vshll.u32 %v7722, 16
        %v7913 = vrot.slane %v7911, 1
        %v7914 = vsel %vm1868, %v7909, %v7913
        %7915 = vrot.lane.b32.xlu0 %v7734, 8
        %v7916 = vpop.permute.xlu0 %7915
        %7917 = vrot.lane.b32.xlu0 %v7746, 8
        %v7918 = vpop.permute.xlu0 %7917
        %7919 = vrot.lane.b32.xlu0 %v7758, 8
        %v7920 = vpop.permute.xlu0 %7919
        %7921 = vrot.lane.b32.xlu0 %v7770, 8
        %v7922 = vpop.permute.xlu0 %7921
        %7923 = vrot.lane.b32.xlu0 %v7782, 8
        %v7924 = vpop.permute.xlu0 %7923
        %7925 = vrot.lane.b32.xlu0 %v7794, 8
        %v7926 = vpop.permute.xlu0 %7925
        %7927 = vrot.lane.b32.xlu0 %v7806, 8
        %v7928 = vpop.permute.xlu0 %7927
        %7929 = vrot.lane.b32.xlu0 %v7818, 8
        %v7930 = vpop.permute.xlu0 %7929
        %7931 = vrot.lane.b32.xlu0 %v7830, 8
        %v7932 = vpop.permute.xlu0 %7931
        %7933 = vrot.lane.b32.xlu0 %v7842, 8
        %v7934 = vpop.permute.xlu0 %7933
        %7935 = vrot.lane.b32.xlu0 %v7854, 8
        %v7936 = vpop.permute.xlu0 %7935
        %7937 = vrot.lane.b32.xlu0 %v7866, 8
        %v7938 = vpop.permute.xlu0 %7937
        %7939 = vrot.lane.b32.xlu0 %v7878, 8
        %v7940 = vpop.permute.xlu0 %7939
        %7941 = vrot.lane.b32.xlu0 %v7890, 8
        %v7942 = vpop.permute.xlu0 %7941
        %7943 = vrot.lane.b32.xlu0 %v7902, 8
        %v7944 = vpop.permute.xlu0 %7943
        %7945 = vrot.lane.b32.xlu0 %v7914, 8
        %v7946 = vpop.permute.xlu0 %7945
        %v7979 = vrot.slane %v7691, 1
        %v7980 = vrot.slane %v7707, 1
        %v7981 = vsel %vm2125, %v7979, %v7980
        %v7982 = vrot.slane %v7692, 1
        %v7983 = vrot.slane %v7708, 1
        %v7984 = vsel %vm2125, %v7982, %v7983
        %v7985 = vrot.slane %v7693, 1
        %v7986 = vrot.slane %v7709, 1
        %v7987 = vsel %vm2125, %v7985, %v7986
        %v7988 = vrot.slane %v7694, 1
        %v7989 = vrot.slane %v7710, 1
        %v7990 = vsel %vm2125, %v7988, %v7989
        %v7991 = vrot.slane %v7695, 1
        %v7992 = vrot.slane %v7711, 1
        %v7993 = vsel %vm2125, %v7991, %v7992
        %v7994 = vrot.slane %v7696, 1
        %v7995 = vrot.slane %v7712, 1
        %v7996 = vsel %vm2125, %v7994, %v7995
        %v7997 = vrot.slane %v7697, 1
        %v7998 = vrot.slane %v7713, 1
        %v7999 = vsel %vm2125, %v7997, %v7998
        %v8000 = vrot.slane %v7698, 1
        %v8001 = vrot.slane %v7714, 1
        %v8002 = vsel %vm2125, %v8000, %v8001
        %v8003 = vrot.slane %v7699, 1
        %v8004 = vrot.slane %v7715, 1
        %v8005 = vsel %vm2125, %v8003, %v8004
        %v8006 = vrot.slane %v7700, 1
        %v8007 = vrot.slane %v7716, 1
        %v8008 = vsel %vm2125, %v8006, %v8007
        %v8009 = vrot.slane %v7701, 1
        %v8010 = vrot.slane %v7717, 1
        %v8011 = vsel %vm2125, %v8009, %v8010
        %v8012 = vrot.slane %v7702, 1
        %v8013 = vrot.slane %v7718, 1
        %v8014 = vsel %vm2125, %v8012, %v8013
        %v8015 = vrot.slane %v7703, 1
        %v8016 = vrot.slane %v7719, 1
        %v8017 = vsel %vm2125, %v8015, %v8016
        %v8018 = vrot.slane %v7704, 1
        %v8019 = vrot.slane %v7720, 1
        %v8020 = vsel %vm2125, %v8018, %v8019
        %v8021 = vrot.slane %v7705, 1
        %v8022 = vrot.slane %v7721, 1
        %v8023 = vsel %vm2125, %v8021, %v8022
        %v8024 = vrot.slane %v7706, 1
        %v8025 = vrot.slane %v7722, 1
        %v8026 = vsel %vm2125, %v8024, %v8025
        %8027 = vrot.lane.b32.xlu0 %v7981, 16
        %v8028 = vpop.permute.xlu0 %8027
        %8029 = vrot.lane.b32.xlu0 %v7984, 16
        %v8030 = vpop.permute.xlu0 %8029
        %8031 = vrot.lane.b32.xlu0 %v7987, 16
        %v8032 = vpop.permute.xlu0 %8031
        %8033 = vrot.lane.b32.xlu0 %v7990, 16
        %v8034 = vpop.permute.xlu0 %8033
        %8035 = vrot.lane.b32.xlu0 %v7993, 16
        %v8036 = vpop.permute.xlu0 %8035
        %8037 = vrot.lane.b32.xlu0 %v7996, 16
        %v8038 = vpop.permute.xlu0 %8037
        %8039 = vrot.lane.b32.xlu0 %v7999, 16
        %v8040 = vpop.permute.xlu0 %8039
        %8041 = vrot.lane.b32.xlu0 %v8002, 16
        %v8042 = vpop.permute.xlu0 %8041
        %8043 = vrot.lane.b32.xlu0 %v8005, 16
        %v8044 = vpop.permute.xlu0 %8043
        %8045 = vrot.lane.b32.xlu0 %v8008, 16
        %v8046 = vpop.permute.xlu0 %8045
        %8047 = vrot.lane.b32.xlu0 %v8011, 16
        %v8048 = vpop.permute.xlu0 %8047
        %8049 = vrot.lane.b32.xlu0 %v8014, 16
        %v8050 = vpop.permute.xlu0 %8049
        %8051 = vrot.lane.b32.xlu0 %v8017, 16
        %v8052 = vpop.permute.xlu0 %8051
        %8053 = vrot.lane.b32.xlu0 %v8020, 16
        %v8054 = vpop.permute.xlu0 %8053
        %8055 = vrot.lane.b32.xlu0 %v8023, 16
        %v8056 = vpop.permute.xlu0 %8055
        %8057 = vrot.lane.b32.xlu0 %v8026, 16
        %v8058 = vpop.permute.xlu0 %8057
        %v8059 = vrot.slane %v7724, 1
        %v8060 = vrot.slane %v7726, 2
        %v8061 = vor.u32 %v8059, %v8060
        %v8062 = vshrl.u32 %v7707, 16
        %v8064 = vrot.slane %v8062, 1
        %v8065 = vrot.slane %v7731, 2
        %v8066 = vor.u32 %v8064, %v8065
        %v8067 = vsel %vm2206, %v8061, %v8066
        %v8068 = vrot.slane %v7736, 1
        %v8069 = vrot.slane %v7738, 2
        %v8070 = vor.u32 %v8068, %v8069
        %v8071 = vshrl.u32 %v7708, 16
        %v8073 = vrot.slane %v8071, 1
        %v8074 = vrot.slane %v7743, 2
        %v8075 = vor.u32 %v8073, %v8074
        %v8076 = vsel %vm2206, %v8070, %v8075
        %v8077 = vrot.slane %v7748, 1
        %v8078 = vrot.slane %v7750, 2
        %v8079 = vor.u32 %v8077, %v8078
        %v8080 = vshrl.u32 %v7709, 16
        %v8082 = vrot.slane %v8080, 1
        %v8083 = vrot.slane %v7755, 2
        %v8084 = vor.u32 %v8082, %v8083
        %v8085 = vsel %vm2206, %v8079, %v8084
        %v8086 = vrot.slane %v7760, 1
        %v8087 = vrot.slane %v7762, 2
        %v8088 = vor.u32 %v8086, %v8087
        %v8089 = vshrl.u32 %v7710, 16
        %v8091 = vrot.slane %v8089, 1
        %v8092 = vrot.slane %v7767, 2
        %v8093 = vor.u32 %v8091, %v8092
        %v8094 = vsel %vm2206, %v8088, %v8093
        %v8095 = vrot.slane %v7772, 1
        %v8096 = vrot.slane %v7774, 2
        %v8097 = vor.u32 %v8095, %v8096
        %v8098 = vshrl.u32 %v7711, 16
        %v8100 = vrot.slane %v8098, 1
        %v8101 = vrot.slane %v7779, 2
        %v8102 = vor.u32 %v8100, %v8101
        %v8103 = vsel %vm2206, %v8097, %v8102
        %v8104 = vrot.slane %v7784, 1
        %v8105 = vrot.slane %v7786, 2
        %v8106 = vor.u32 %v8104, %v8105
        %v8107 = vshrl.u32 %v7712, 16
        %v8109 = vrot.slane %v8107, 1
        %v8110 = vrot.slane %v7791, 2
        %v8111 = vor.u32 %v8109, %v8110
        %v8112 = vsel %vm2206, %v8106, %v8111
        %v8113 = vrot.slane %v7796, 1
        %v8114 = vrot.slane %v7798, 2
        %v8115 = vor.u32 %v8113, %v8114
        %v8116 = vshrl.u32 %v7713, 16
        %v8118 = vrot.slane %v8116, 1
        %v8119 = vrot.slane %v7803, 2
        %v8120 = vor.u32 %v8118, %v8119
        %v8121 = vsel %vm2206, %v8115, %v8120
        %v8122 = vrot.slane %v7808, 1
        %v8123 = vrot.slane %v7810, 2
        %v8124 = vor.u32 %v8122, %v8123
        %v8125 = vshrl.u32 %v7714, 16
        %v8127 = vrot.slane %v8125, 1
        %v8128 = vrot.slane %v7815, 2
        %v8129 = vor.u32 %v8127, %v8128
        %v8130 = vsel %vm2206, %v8124, %v8129
        %v8131 = vrot.slane %v7820, 1
        %v8132 = vrot.slane %v7822, 2
        %v8133 = vor.u32 %v8131, %v8132
        %v8134 = vshrl.u32 %v7715, 16
        %v8136 = vrot.slane %v8134, 1
        %v8137 = vrot.slane %v7827, 2
        %v8138 = vor.u32 %v8136, %v8137
        %v8139 = vsel %vm2206, %v8133, %v8138
        %v8140 = vrot.slane %v7832, 1
        %v8141 = vrot.slane %v7834, 2
        %v8142 = vor.u32 %v8140, %v8141
        %v8143 = vshrl.u32 %v7716, 16
        %v8145 = vrot.slane %v8143, 1
        %v8146 = vrot.slane %v7839, 2
        %v8147 = vor.u32 %v8145, %v8146
        %v8148 = vsel %vm2206, %v8142, %v8147
        %v8149 = vrot.slane %v7844, 1
        %v8150 = vrot.slane %v7846, 2
        %v8151 = vor.u32 %v8149, %v8150
        %v8152 = vshrl.u32 %v7717, 16
        %v8154 = vrot.slane %v8152, 1
        %v8155 = vrot.slane %v7851, 2
        %v8156 = vor.u32 %v8154, %v8155
        %v8157 = vsel %vm2206, %v8151, %v8156
        %v8158 = vrot.slane %v7856, 1
        %v8159 = vrot.slane %v7858, 2
        %v8160 = vor.u32 %v8158, %v8159
        %v8161 = vshrl.u32 %v7718, 16
        %v8163 = vrot.slane %v8161, 1
        %v8164 = vrot.slane %v7863, 2
        %v8165 = vor.u32 %v8163, %v8164
        %v8166 = vsel %vm2206, %v8160, %v8165
        %v8167 = vrot.slane %v7868, 1
        %v8168 = vrot.slane %v7870, 2
        %v8169 = vor.u32 %v8167, %v8168
        %v8170 = vshrl.u32 %v7719, 16
        %v8172 = vrot.slane %v8170, 1
        %v8173 = vrot.slane %v7875, 2
        %v8174 = vor.u32 %v8172, %v8173
        %v8175 = vsel %vm2206, %v8169, %v8174
        %v8176 = vrot.slane %v7880, 1
        %v8177 = vrot.slane %v7882, 2
        %v8178 = vor.u32 %v8176, %v8177
        %v8179 = vshrl.u32 %v7720, 16
        %v8181 = vrot.slane %v8179, 1
        %v8182 = vrot.slane %v7887, 2
        %v8183 = vor.u32 %v8181, %v8182
        %v8184 = vsel %vm2206, %v8178, %v8183
        %v8185 = vrot.slane %v7892, 1
        %v8186 = vrot.slane %v7894, 2
        %v8187 = vor.u32 %v8185, %v8186
        %v8188 = vshrl.u32 %v7721, 16
        %v8190 = vrot.slane %v8188, 1
        %v8191 = vrot.slane %v7899, 2
        %v8192 = vor.u32 %v8190, %v8191
        %v8193 = vsel %vm2206, %v8187, %v8192
        %v8194 = vrot.slane %v7904, 1
        %v8195 = vrot.slane %v7906, 2
        %v8196 = vor.u32 %v8194, %v8195
        %v8197 = vshrl.u32 %v7722, 16
        %v8199 = vrot.slane %v8197, 1
        %v8200 = vrot.slane %v7911, 2
        %v8201 = vor.u32 %v8199, %v8200
        %v8202 = vsel %vm2206, %v8196, %v8201
        %8203 = vrot.lane.b32.xlu0 %v8067, 24
        %v8204 = vpop.permute.xlu0 %8203
        %8205 = vrot.lane.b32.xlu0 %v8076, 24
        %v8206 = vpop.permute.xlu0 %8205
        %8207 = vrot.lane.b32.xlu0 %v8085, 24
        %v8208 = vpop.permute.xlu0 %8207
        %8209 = vrot.lane.b32.xlu0 %v8094, 24
        %v8210 = vpop.permute.xlu0 %8209
        %8211 = vrot.lane.b32.xlu0 %v8103, 24
        %v8212 = vpop.permute.xlu0 %8211
        %8213 = vrot.lane.b32.xlu0 %v8112, 24
        %v8214 = vpop.permute.xlu0 %8213
        %8215 = vrot.lane.b32.xlu0 %v8121, 24
        %v8216 = vpop.permute.xlu0 %8215
        %8217 = vrot.lane.b32.xlu0 %v8130, 24
        %v8218 = vpop.permute.xlu0 %8217
        %8219 = vrot.lane.b32.xlu0 %v8139, 24
        %v8220 = vpop.permute.xlu0 %8219
        %8221 = vrot.lane.b32.xlu0 %v8148, 24
        %v8222 = vpop.permute.xlu0 %8221
        %8223 = vrot.lane.b32.xlu0 %v8157, 24
        %v8224 = vpop.permute.xlu0 %8223
        %8225 = vrot.lane.b32.xlu0 %v8166, 24
        %v8226 = vpop.permute.xlu0 %8225
        %8227 = vrot.lane.b32.xlu0 %v8175, 24
        %v8228 = vpop.permute.xlu0 %8227
        %8229 = vrot.lane.b32.xlu0 %v8184, 24
        %v8230 = vpop.permute.xlu0 %8229
        %8231 = vrot.lane.b32.xlu0 %v8193, 24
        %v8232 = vpop.permute.xlu0 %8231
        %8233 = vrot.lane.b32.xlu0 %v8202, 24
        %v8234 = vpop.permute.xlu0 %8233
        %v8235 = vrot.slane %v7691, 2
        %v8236 = vrot.slane %v7707, 2
        %v8237 = vsel %vm2383, %v8235, %v8236
        %v8238 = vrot.slane %v7692, 2
        %v8239 = vrot.slane %v7708, 2
        %v8240 = vsel %vm2383, %v8238, %v8239
        %v8241 = vrot.slane %v7693, 2
        %v8242 = vrot.slane %v7709, 2
        %v8243 = vsel %vm2383, %v8241, %v8242
        %v8244 = vrot.slane %v7694, 2
        %v8245 = vrot.slane %v7710, 2
        %v8246 = vsel %vm2383, %v8244, %v8245
        %v8247 = vrot.slane %v7695, 2
        %v8248 = vrot.slane %v7711, 2
        %v8249 = vsel %vm2383, %v8247, %v8248
        %v8250 = vrot.slane %v7696, 2
        %v8251 = vrot.slane %v7712, 2
        %v8252 = vsel %vm2383, %v8250, %v8251
        %v8253 = vrot.slane %v7697, 2
        %v8254 = vrot.slane %v7713, 2
        %v8255 = vsel %vm2383, %v8253, %v8254
        %v8256 = vrot.slane %v7698, 2
        %v8257 = vrot.slane %v7714, 2
        %v8258 = vsel %vm2383, %v8256, %v8257
        %v8259 = vrot.slane %v7699, 2
        %v8260 = vrot.slane %v7715, 2
        %v8261 = vsel %vm2383, %v8259, %v8260
        %v8262 = vrot.slane %v7700, 2
        %v8263 = vrot.slane %v7716, 2
        %v8264 = vsel %vm2383, %v8262, %v8263
        %v8265 = vrot.slane %v7701, 2
        %v8266 = vrot.slane %v7717, 2
        %v8267 = vsel %vm2383, %v8265, %v8266
        %v8268 = vrot.slane %v7702, 2
        %v8269 = vrot.slane %v7718, 2
        %v8270 = vsel %vm2383, %v8268, %v8269
        %v8271 = vrot.slane %v7703, 2
        %v8272 = vrot.slane %v7719, 2
        %v8273 = vsel %vm2383, %v8271, %v8272
        %v8274 = vrot.slane %v7704, 2
        %v8275 = vrot.slane %v7720, 2
        %v8276 = vsel %vm2383, %v8274, %v8275
        %v8277 = vrot.slane %v7705, 2
        %v8278 = vrot.slane %v7721, 2
        %v8279 = vsel %vm2383, %v8277, %v8278
        %v8280 = vrot.slane %v7706, 2
        %v8281 = vrot.slane %v7722, 2
        %v8282 = vsel %vm2383, %v8280, %v8281
        %8283 = vrot.lane.b32.xlu0 %v8237, 32
        %v8284 = vpop.permute.xlu0 %8283
        %8285 = vrot.lane.b32.xlu0 %v8240, 32
        %v8286 = vpop.permute.xlu0 %8285
        %8287 = vrot.lane.b32.xlu0 %v8243, 32
        %v8288 = vpop.permute.xlu0 %8287
        %8289 = vrot.lane.b32.xlu0 %v8246, 32
        %v8290 = vpop.permute.xlu0 %8289
        %8291 = vrot.lane.b32.xlu0 %v8249, 32
        %v8292 = vpop.permute.xlu0 %8291
        %8293 = vrot.lane.b32.xlu0 %v8252, 32
        %v8294 = vpop.permute.xlu0 %8293
        %8295 = vrot.lane.b32.xlu0 %v8255, 32
        %v8296 = vpop.permute.xlu0 %8295
        %8297 = vrot.lane.b32.xlu0 %v8258, 32
        %v8298 = vpop.permute.xlu0 %8297
        %8299 = vrot.lane.b32.xlu0 %v8261, 32
        %v8300 = vpop.permute.xlu0 %8299
        %8301 = vrot.lane.b32.xlu0 %v8264, 32
        %v8302 = vpop.permute.xlu0 %8301
        %8303 = vrot.lane.b32.xlu0 %v8267, 32
        %v8304 = vpop.permute.xlu0 %8303
        %8305 = vrot.lane.b32.xlu0 %v8270, 32
        %v8306 = vpop.permute.xlu0 %8305
        %8307 = vrot.lane.b32.xlu0 %v8273, 32
        %v8308 = vpop.permute.xlu0 %8307
        %8309 = vrot.lane.b32.xlu0 %v8276, 32
        %v8310 = vpop.permute.xlu0 %8309
        %8311 = vrot.lane.b32.xlu0 %v8279, 32
        %v8312 = vpop.permute.xlu0 %8311
        %8313 = vrot.lane.b32.xlu0 %v8282, 32
        %v8314 = vpop.permute.xlu0 %8313
        %v8315 = vrot.slane %v7724, 2
        %v8316 = vrot.slane %v7726, 3
        %v8317 = vor.u32 %v8315, %v8316
        %v8318 = vrot.slane %v8062, 2
        %v8319 = vrot.slane %v7731, 3
        %v8320 = vor.u32 %v8318, %v8319
        %v8321 = vsel %vm2464, %v8317, %v8320
        %v8322 = vrot.slane %v7736, 2
        %v8323 = vrot.slane %v7738, 3
        %v8324 = vor.u32 %v8322, %v8323
        %v8325 = vrot.slane %v8071, 2
        %v8326 = vrot.slane %v7743, 3
        %v8327 = vor.u32 %v8325, %v8326
        %v8328 = vsel %vm2464, %v8324, %v8327
        %v8329 = vrot.slane %v7748, 2
        %v8330 = vrot.slane %v7750, 3
        %v8331 = vor.u32 %v8329, %v8330
        %v8332 = vrot.slane %v8080, 2
        %v8333 = vrot.slane %v7755, 3
        %v8334 = vor.u32 %v8332, %v8333
        %v8335 = vsel %vm2464, %v8331, %v8334
        %v8336 = vrot.slane %v7760, 2
        %v8337 = vrot.slane %v7762, 3
        %v8338 = vor.u32 %v8336, %v8337
        %v8339 = vrot.slane %v8089, 2
        %v8340 = vrot.slane %v7767, 3
        %v8341 = vor.u32 %v8339, %v8340
        %v8342 = vsel %vm2464, %v8338, %v8341
        %v8343 = vrot.slane %v7772, 2
        %v8344 = vrot.slane %v7774, 3
        %v8345 = vor.u32 %v8343, %v8344
        %v8346 = vrot.slane %v8098, 2
        %v8347 = vrot.slane %v7779, 3
        %v8348 = vor.u32 %v8346, %v8347
        %v8349 = vsel %vm2464, %v8345, %v8348
        %v8350 = vrot.slane %v7784, 2
        %v8351 = vrot.slane %v7786, 3
        %v8352 = vor.u32 %v8350, %v8351
        %v8353 = vrot.slane %v8107, 2
        %v8354 = vrot.slane %v7791, 3
        %v8355 = vor.u32 %v8353, %v8354
        %v8356 = vsel %vm2464, %v8352, %v8355
        %v8357 = vrot.slane %v7796, 2
        %v8358 = vrot.slane %v7798, 3
        %v8359 = vor.u32 %v8357, %v8358
        %v8360 = vrot.slane %v8116, 2
        %v8361 = vrot.slane %v7803, 3
        %v8362 = vor.u32 %v8360, %v8361
        %v8363 = vsel %vm2464, %v8359, %v8362
        %v8364 = vrot.slane %v7808, 2
        %v8365 = vrot.slane %v7810, 3
        %v8366 = vor.u32 %v8364, %v8365
        %v8367 = vrot.slane %v8125, 2
        %v8368 = vrot.slane %v7815, 3
        %v8369 = vor.u32 %v8367, %v8368
        %v8370 = vsel %vm2464, %v8366, %v8369
        %v8371 = vrot.slane %v7820, 2
        %v8372 = vrot.slane %v7822, 3
        %v8373 = vor.u32 %v8371, %v8372
        %v8374 = vrot.slane %v8134, 2
        %v8375 = vrot.slane %v7827, 3
        %v8376 = vor.u32 %v8374, %v8375
        %v8377 = vsel %vm2464, %v8373, %v8376
        %v8378 = vrot.slane %v7832, 2
        %v8379 = vrot.slane %v7834, 3
        %v8380 = vor.u32 %v8378, %v8379
        %v8381 = vrot.slane %v8143, 2
        %v8382 = vrot.slane %v7839, 3
        %v8383 = vor.u32 %v8381, %v8382
        %v8384 = vsel %vm2464, %v8380, %v8383
        %v8385 = vrot.slane %v7844, 2
        %v8386 = vrot.slane %v7846, 3
        %v8387 = vor.u32 %v8385, %v8386
        %v8388 = vrot.slane %v8152, 2
        %v8389 = vrot.slane %v7851, 3
        %v8390 = vor.u32 %v8388, %v8389
        %v8391 = vsel %vm2464, %v8387, %v8390
        %v8392 = vrot.slane %v7856, 2
        %v8393 = vrot.slane %v7858, 3
        %v8394 = vor.u32 %v8392, %v8393
        %v8395 = vrot.slane %v8161, 2
        %v8396 = vrot.slane %v7863, 3
        %v8397 = vor.u32 %v8395, %v8396
        %v8398 = vsel %vm2464, %v8394, %v8397
        %v8399 = vrot.slane %v7868, 2
        %v8400 = vrot.slane %v7870, 3
        %v8401 = vor.u32 %v8399, %v8400
        %v8402 = vrot.slane %v8170, 2
        %v8403 = vrot.slane %v7875, 3
        %v8404 = vor.u32 %v8402, %v8403
        %v8405 = vsel %vm2464, %v8401, %v8404
        %v8406 = vrot.slane %v7880, 2
        %v8407 = vrot.slane %v7882, 3
        %v8408 = vor.u32 %v8406, %v8407
        %v8409 = vrot.slane %v8179, 2
        %v8410 = vrot.slane %v7887, 3
        %v8411 = vor.u32 %v8409, %v8410
        %v8412 = vsel %vm2464, %v8408, %v8411
        %v8413 = vrot.slane %v7892, 2
        %v8414 = vrot.slane %v7894, 3
        %v8415 = vor.u32 %v8413, %v8414
        %v8416 = vrot.slane %v8188, 2
        %v8417 = vrot.slane %v7899, 3
        %v8418 = vor.u32 %v8416, %v8417
        %v8419 = vsel %vm2464, %v8415, %v8418
        %v8420 = vrot.slane %v7904, 2
        %v8421 = vrot.slane %v7906, 3
        %v8422 = vor.u32 %v8420, %v8421
        %v8423 = vrot.slane %v8197, 2
        %v8424 = vrot.slane %v7911, 3
        %v8425 = vor.u32 %v8423, %v8424
        %v8426 = vsel %vm2464, %v8422, %v8425
        %8427 = vrot.lane.b32.xlu0 %v8321, 40
        %v8428 = vpop.permute.xlu0 %8427
        %8429 = vrot.lane.b32.xlu0 %v8328, 40
        %v8430 = vpop.permute.xlu0 %8429
        %8431 = vrot.lane.b32.xlu0 %v8335, 40
        %v8432 = vpop.permute.xlu0 %8431
        %8433 = vrot.lane.b32.xlu0 %v8342, 40
        %v8434 = vpop.permute.xlu0 %8433
        %8435 = vrot.lane.b32.xlu0 %v8349, 40
        %v8436 = vpop.permute.xlu0 %8435
        %8437 = vrot.lane.b32.xlu0 %v8356, 40
        %v8438 = vpop.permute.xlu0 %8437
        %8439 = vrot.lane.b32.xlu0 %v8363, 40
        %v8440 = vpop.permute.xlu0 %8439
        %8441 = vrot.lane.b32.xlu0 %v8370, 40
        %v8442 = vpop.permute.xlu0 %8441
        %8443 = vrot.lane.b32.xlu0 %v8377, 40
        %v8444 = vpop.permute.xlu0 %8443
        %8445 = vrot.lane.b32.xlu0 %v8384, 40
        %v8446 = vpop.permute.xlu0 %8445
        %8447 = vrot.lane.b32.xlu0 %v8391, 40
        %v8448 = vpop.permute.xlu0 %8447
        %8449 = vrot.lane.b32.xlu0 %v8398, 40
        %v8450 = vpop.permute.xlu0 %8449
        %8451 = vrot.lane.b32.xlu0 %v8405, 40
        %v8452 = vpop.permute.xlu0 %8451
        %8453 = vrot.lane.b32.xlu0 %v8412, 40
        %v8454 = vpop.permute.xlu0 %8453
        %8455 = vrot.lane.b32.xlu0 %v8419, 40
        %v8456 = vpop.permute.xlu0 %8455
        %8457 = vrot.lane.b32.xlu0 %v8426, 40
        %v8458 = vpop.permute.xlu0 %8457
        %v8459 = vrot.slane %v7691, 3
        %v8460 = vrot.slane %v7707, 3
        %v8461 = vsel %vm2609, %v8459, %v8460
        %v8462 = vrot.slane %v7692, 3
        %v8463 = vrot.slane %v7708, 3
        %v8464 = vsel %vm2609, %v8462, %v8463
        %v8465 = vrot.slane %v7693, 3
        %v8466 = vrot.slane %v7709, 3
        %v8467 = vsel %vm2609, %v8465, %v8466
        %v8468 = vrot.slane %v7694, 3
        %v8469 = vrot.slane %v7710, 3
        %v8470 = vsel %vm2609, %v8468, %v8469
        %v8471 = vrot.slane %v7695, 3
        %v8472 = vrot.slane %v7711, 3
        %v8473 = vsel %vm2609, %v8471, %v8472
        %v8474 = vrot.slane %v7696, 3
        %v8475 = vrot.slane %v7712, 3
        %v8476 = vsel %vm2609, %v8474, %v8475
        %v8477 = vrot.slane %v7697, 3
        %v8478 = vrot.slane %v7713, 3
        %v8479 = vsel %vm2609, %v8477, %v8478
        %v8480 = vrot.slane %v7698, 3
        %v8481 = vrot.slane %v7714, 3
        %v8482 = vsel %vm2609, %v8480, %v8481
        %v8483 = vrot.slane %v7699, 3
        %v8484 = vrot.slane %v7715, 3
        %v8485 = vsel %vm2609, %v8483, %v8484
        %v8486 = vrot.slane %v7700, 3
        %v8487 = vrot.slane %v7716, 3
        %v8488 = vsel %vm2609, %v8486, %v8487
        %v8489 = vrot.slane %v7701, 3
        %v8490 = vrot.slane %v7717, 3
        %v8491 = vsel %vm2609, %v8489, %v8490
        %v8492 = vrot.slane %v7702, 3
        %v8493 = vrot.slane %v7718, 3
        %v8494 = vsel %vm2609, %v8492, %v8493
        %v8495 = vrot.slane %v7703, 3
        %v8496 = vrot.slane %v7719, 3
        %v8497 = vsel %vm2609, %v8495, %v8496
        %v8498 = vrot.slane %v7704, 3
        %v8499 = vrot.slane %v7720, 3
        %v8500 = vsel %vm2609, %v8498, %v8499
        %v8501 = vrot.slane %v7705, 3
        %v8502 = vrot.slane %v7721, 3
        %v8503 = vsel %vm2609, %v8501, %v8502
        %v8504 = vrot.slane %v7706, 3
        %v8505 = vrot.slane %v7722, 3
        %v8506 = vsel %vm2609, %v8504, %v8505
        %8507 = vrot.lane.b32.xlu0 %v8461, 48
        %v8508 = vpop.permute.xlu0 %8507
        %8509 = vrot.lane.b32.xlu0 %v8464, 48
        %v8510 = vpop.permute.xlu0 %8509
        %8511 = vrot.lane.b32.xlu0 %v8467, 48
        %v8512 = vpop.permute.xlu0 %8511
        %8513 = vrot.lane.b32.xlu0 %v8470, 48
        %v8514 = vpop.permute.xlu0 %8513
        %8515 = vrot.lane.b32.xlu0 %v8473, 48
        %v8516 = vpop.permute.xlu0 %8515
        %8517 = vrot.lane.b32.xlu0 %v8476, 48
        %v8518 = vpop.permute.xlu0 %8517
        %8519 = vrot.lane.b32.xlu0 %v8479, 48
        %v8520 = vpop.permute.xlu0 %8519
        %8521 = vrot.lane.b32.xlu0 %v8482, 48
        %v8522 = vpop.permute.xlu0 %8521
        %8523 = vrot.lane.b32.xlu0 %v8485, 48
        %v8524 = vpop.permute.xlu0 %8523
        %8525 = vrot.lane.b32.xlu0 %v8488, 48
        %v8526 = vpop.permute.xlu0 %8525
        %8527 = vrot.lane.b32.xlu0 %v8491, 48
        %v8528 = vpop.permute.xlu0 %8527
        %8529 = vrot.lane.b32.xlu0 %v8494, 48
        %v8530 = vpop.permute.xlu0 %8529
        %8531 = vrot.lane.b32.xlu0 %v8497, 48
        %v8532 = vpop.permute.xlu0 %8531
        %8533 = vrot.lane.b32.xlu0 %v8500, 48
        %v8534 = vpop.permute.xlu0 %8533
        %8535 = vrot.lane.b32.xlu0 %v8503, 48
        %v8536 = vpop.permute.xlu0 %8535
        %8537 = vrot.lane.b32.xlu0 %v8506, 48
        %v8538 = vpop.permute.xlu0 %8537
        %v8540 = vsel %vm2690, %v7691, %v7916
        %v8542 = vsel %vm2690, %v7692, %v7918
        %v8544 = vsel %vm2690, %v7693, %v7920
        %v8546 = vsel %vm2690, %v7694, %v7922
        %v8548 = vsel %vm2690, %v7695, %v7924
        %v8550 = vsel %vm2690, %v7696, %v7926
        %v8552 = vsel %vm2690, %v7697, %v7928
        %v8554 = vsel %vm2690, %v7698, %v7930
        %v8556 = vsel %vm2690, %v7699, %v7932
        %v8558 = vsel %vm2690, %v7700, %v7934
        %v8560 = vsel %vm2690, %v7701, %v7936
        %v8562 = vsel %vm2690, %v7702, %v7938
        %v8564 = vsel %vm2690, %v7703, %v7940
        %v8566 = vsel %vm2690, %v7704, %v7942
        %v8568 = vsel %vm2690, %v7705, %v7944
        %v8570 = vsel %vm2690, %v7706, %v7946
        %v8572 = vsel %vm2723, %v8540, %v8028
        %v8574 = vsel %vm2723, %v8542, %v8030
        %v8576 = vsel %vm2723, %v8544, %v8032
        %v8578 = vsel %vm2723, %v8546, %v8034
        %v8580 = vsel %vm2723, %v8548, %v8036
        %v8582 = vsel %vm2723, %v8550, %v8038
        %v8584 = vsel %vm2723, %v8552, %v8040
        %v8586 = vsel %vm2723, %v8554, %v8042
        %v8588 = vsel %vm2723, %v8556, %v8044
        %v8590 = vsel %vm2723, %v8558, %v8046
        %v8592 = vsel %vm2723, %v8560, %v8048
        %v8594 = vsel %vm2723, %v8562, %v8050
        %v8596 = vsel %vm2723, %v8564, %v8052
        %v8598 = vsel %vm2723, %v8566, %v8054
        %v8600 = vsel %vm2723, %v8568, %v8056
        %v8602 = vsel %vm2723, %v8570, %v8058
        %v8604 = vsel %vm2756, %v8572, %v8204
        %v8606 = vsel %vm2756, %v8574, %v8206
        %v8608 = vsel %vm2756, %v8576, %v8208
        %v8610 = vsel %vm2756, %v8578, %v8210
        %v8612 = vsel %vm2756, %v8580, %v8212
        %v8614 = vsel %vm2756, %v8582, %v8214
        %v8616 = vsel %vm2756, %v8584, %v8216
        %v8618 = vsel %vm2756, %v8586, %v8218
        %v8620 = vsel %vm2756, %v8588, %v8220
        %v8622 = vsel %vm2756, %v8590, %v8222
        %v8624 = vsel %vm2756, %v8592, %v8224
        %v8626 = vsel %vm2756, %v8594, %v8226
        %v8628 = vsel %vm2756, %v8596, %v8228
        %v8630 = vsel %vm2756, %v8598, %v8230
        %v8632 = vsel %vm2756, %v8600, %v8232
        %v8634 = vsel %vm2756, %v8602, %v8234
        %v8636 = vsel %vm2789, %v8604, %v8284
        %v8638 = vsel %vm2789, %v8606, %v8286
        %v8640 = vsel %vm2789, %v8608, %v8288
        %v8642 = vsel %vm2789, %v8610, %v8290
        %v8644 = vsel %vm2789, %v8612, %v8292
        %v8646 = vsel %vm2789, %v8614, %v8294
        %v8648 = vsel %vm2789, %v8616, %v8296
        %v8650 = vsel %vm2789, %v8618, %v8298
        %v8652 = vsel %vm2789, %v8620, %v8300
        %v8654 = vsel %vm2789, %v8622, %v8302
        %v8656 = vsel %vm2789, %v8624, %v8304
        %v8658 = vsel %vm2789, %v8626, %v8306
        %v8660 = vsel %vm2789, %v8628, %v8308
        %v8662 = vsel %vm2789, %v8630, %v8310
        %v8664 = vsel %vm2789, %v8632, %v8312
        %v8666 = vsel %vm2789, %v8634, %v8314
        %v8668 = vsel %vm2822, %v8636, %v8428
        %v8670 = vsel %vm2822, %v8638, %v8430
        %v8672 = vsel %vm2822, %v8640, %v8432
        %v8674 = vsel %vm2822, %v8642, %v8434
        %v8676 = vsel %vm2822, %v8644, %v8436
        %v8678 = vsel %vm2822, %v8646, %v8438
        %v8680 = vsel %vm2822, %v8648, %v8440
        %v8682 = vsel %vm2822, %v8650, %v8442
        %v8684 = vsel %vm2822, %v8652, %v8444
        %v8686 = vsel %vm2822, %v8654, %v8446
        %v8688 = vsel %vm2822, %v8656, %v8448
        %v8690 = vsel %vm2822, %v8658, %v8450
        %v8692 = vsel %vm2822, %v8660, %v8452
        %v8694 = vsel %vm2822, %v8662, %v8454
        %v8696 = vsel %vm2822, %v8664, %v8456
        %v8698 = vsel %vm2822, %v8666, %v8458
        %v8700 = vsel %vm2855, %v8668, %v8508
        %v8702 = vsel %vm2855, %v8670, %v8510
        %v8704 = vsel %vm2855, %v8672, %v8512
        %v8706 = vsel %vm2855, %v8674, %v8514
        %v8708 = vsel %vm2855, %v8676, %v8516
        %v8710 = vsel %vm2855, %v8678, %v8518
        %v8712 = vsel %vm2855, %v8680, %v8520
        %v8714 = vsel %vm2855, %v8682, %v8522
        %v8716 = vsel %vm2855, %v8684, %v8524
        %v8718 = vsel %vm2855, %v8686, %v8526
        %v8720 = vsel %vm2855, %v8688, %v8528
        %v8722 = vsel %vm2855, %v8690, %v8530
        %v8724 = vsel %vm2855, %v8692, %v8532
        %v8726 = vsel %vm2855, %v8694, %v8534
        %v8728 = vsel %vm2855, %v8696, %v8536
        %v8730 = vsel %vm2855, %v8698, %v8538
        %v8738 = vunpack.c.l.b16 %v7538
        %v8739 = vunpack.c.h.b16 %v7538
        %v8740 = vunpack.c.l.b16 %v7539
        %v8741 = vunpack.c.h.b16 %v7539
        %v8742 = vunpack.c.l.b16 %v7540
        %v8743 = vunpack.c.h.b16 %v7540
        %v8744 = vunpack.c.l.b16 %v7541
        %v8745 = vunpack.c.h.b16 %v7541
        %v8746 = vunpack.c.l.b16 %v7542
        %v8747 = vunpack.c.h.b16 %v7542
        %v8748 = vunpack.c.l.b16 %v7543
        %v8749 = vunpack.c.h.b16 %v7543
        %v8750 = vunpack.c.l.b16 %v7544
        %v8751 = vunpack.c.h.b16 %v7544
        %v8752 = vpack.c.b16 %v8740, %v8738
        %v8753 = vpack.c.b16 %v8741, %v8739
        %v8754 = vpack.c.b16 %v8744, %v8742
        %v8755 = vpack.c.b16 %v8745, %v8743
        %v8756 = vpack.c.b16 %v8748, %v8746
        %v8757 = vpack.c.b16 %v8749, %v8747
        %v8758 = vpack.c.b16 %v8750, %v8750
        %v8759 = vpack.c.b16 %v8751, %v8751
        %v8766 = vsel %vm2909, %v8700, 0
        %v8768 = vsel %vm2909, %v8702, 0
        %v8770 = vsel %vm2909, %v8704, 0
        %v8772 = vsel %vm2909, %v8706, 0
        %v8774 = vsel %vm2909, %v8708, 0
        %v8776 = vsel %vm2909, %v8710, 0
        %v8778 = vsel %vm2909, %v8712, 0
        %v8780 = vsel %vm2909, %v8714, 0
        %v8782 = vsel %vm2909, %v8716, 0
        %v8784 = vsel %vm2909, %v8718, 0
        %v8786 = vsel %vm2909, %v8720, 0
        %v8788 = vsel %vm2909, %v8722, 0
        %v8790 = vsel %vm2909, %v8724, 0
        %v8792 = vsel %vm2909, %v8726, 0
        %v8794 = vsel %vm2909, %v8728, 0
        %v8796 = vsel %vm2909, %v8730, 0
        %v8799 = vsel %vm2942, %v8758, 0
        %v8802 = vsel %vm2942, %v8759, 0
        %8804 = vmatprep.subr.bf16.mxu0 0
        %8805 = vmatpush1.bf16.msra.mxu0 0
        %8806 = vmatprep.subr.bf16.mxu0 0
        %8807 = vmatpush1.bf16.msra.mxu0 0
        %8808 = vmatprep.subr.bf16.mxu0 0
        %8809 = vmatpush1.bf16.msra.mxu0 0
        %8810 = vmatprep.subr.bf16.mxu0 0
        %8811 = vmatpush1.bf16.msra.mxu0 0
        %8812 = vmatprep.subr.bf16.mxu0 %v8802
        %8813 = vmatpush1.bf16.msra.mxu0 %v8799
        %8814 = vmatprep.subr.bf16.mxu0 %v8757
        %8815 = vmatpush1.bf16.msra.mxu0 %v8756
        %8816 = vmatprep.subr.bf16.mxu0 %v8755
        %8817 = vmatpush1.bf16.msra.mxu0 %v8754
        %8818 = vmatprep.subr.bf16.mxu0 %v8753
        %8819 = vmatpush1.bf16.msra.mxu0 %v8752
        %8820 = vmatprep.subr.bf16.mxu0 0
        %8821 = vmatpush2.bf16.msra.mxu0 0
        %8822 = vmatprep.subr.bf16.mxu0 0
        %8823 = vmatpush2.bf16.msra.mxu0 0
        %8824 = vmatprep.subr.bf16.mxu0 0
        %8825 = vmatpush2.bf16.msra.mxu0 0
        %8826 = vmatprep.subr.bf16.mxu0 0
        %8827 = vmatpush2.bf16.msra.mxu0 0
        %8828 = vmatprep.subr.bf16.mxu0 0
        %8829 = vmatpush2.bf16.msra.mxu0 0
        %8830 = vmatprep.subr.bf16.mxu0 0
        %8831 = vmatpush2.bf16.msra.mxu0 0
        %8832 = vmatprep.subr.bf16.mxu0 0
        %8833 = vmatpush2.bf16.msra.mxu0 0
        %8834 = vmatprep.subr.bf16.mxu0 0
        %8835 = vmatpush2.bf16.msra.mxu0 0
        %8836 = vmatprep.mubr.bf16.mxu0 0
        %8837 = vmatmul.mubr.bf16.gmra.mxu0 %v8766
        %v8838 = vpop.f32.mrf.mxu0
        %v8839 = vadd.f32 0.0, %v8838
        %v8840 = vpop.f32.mrf.mxu0
        %v8841 = vadd.f32 0.0, %v8840
        %v8842 = vpop.f32.mrf.mxu0
        %v8843 = vadd.f32 0.0, %v8842
        %v8844 = vpop.f32.mrf.mxu0
        %v8845 = vadd.f32 0.0, %v8844
        %8846 = vmatprep.mubr.bf16.mxu0 0
        %8847 = vmatmul.mubr.bf16.gmra.mxu0 %v8768
        %v8848 = vpop.f32.mrf.mxu0
        %v8849 = vadd.f32 0.0, %v8848
        %v8850 = vpop.f32.mrf.mxu0
        %v8851 = vadd.f32 0.0, %v8850
        %v8852 = vpop.f32.mrf.mxu0
        %v8853 = vadd.f32 0.0, %v8852
        %v8854 = vpop.f32.mrf.mxu0
        %v8855 = vadd.f32 0.0, %v8854
        %8856 = vmatprep.mubr.bf16.mxu0 0
        %8857 = vmatmul.mubr.bf16.gmra.mxu0 %v8770
        %v8858 = vpop.f32.mrf.mxu0
        %v8859 = vadd.f32 0.0, %v8858
        %v8860 = vpop.f32.mrf.mxu0
        %v8861 = vadd.f32 0.0, %v8860
        %v8862 = vpop.f32.mrf.mxu0
        %v8863 = vadd.f32 0.0, %v8862
        %v8864 = vpop.f32.mrf.mxu0
        %v8865 = vadd.f32 0.0, %v8864
        %8866 = vmatprep.mubr.bf16.mxu0 0
        %8867 = vmatmul.mubr.bf16.gmra.mxu0 %v8772
        %v8868 = vpop.f32.mrf.mxu0
        %v8869 = vadd.f32 0.0, %v8868
        %v8870 = vpop.f32.mrf.mxu0
        %v8871 = vadd.f32 0.0, %v8870
        %v8872 = vpop.f32.mrf.mxu0
        %v8873 = vadd.f32 0.0, %v8872
        %v8874 = vpop.f32.mrf.mxu0
        %v8875 = vadd.f32 0.0, %v8874
        %8876 = vmatprep.mubr.bf16.mxu0 0
        %8877 = vmatmul.mubr.bf16.gmra.mxu0 %v8774
        %v8878 = vpop.f32.mrf.mxu0
        %v8879 = vadd.f32 0.0, %v8878
        %v8880 = vpop.f32.mrf.mxu0
        %v8881 = vadd.f32 0.0, %v8880
        %v8882 = vpop.f32.mrf.mxu0
        %v8883 = vadd.f32 0.0, %v8882
        %v8884 = vpop.f32.mrf.mxu0
        %v8885 = vadd.f32 0.0, %v8884
        %8886 = vmatprep.mubr.bf16.mxu0 0
        %8887 = vmatmul.mubr.bf16.gmra.mxu0 %v8776
        %v8888 = vpop.f32.mrf.mxu0
        %v8889 = vadd.f32 0.0, %v8888
        %v8890 = vpop.f32.mrf.mxu0
        %v8891 = vadd.f32 0.0, %v8890
        %v8892 = vpop.f32.mrf.mxu0
        %v8893 = vadd.f32 0.0, %v8892
        %v8894 = vpop.f32.mrf.mxu0
        %v8895 = vadd.f32 0.0, %v8894
        %8896 = vmatprep.mubr.bf16.mxu0 0
        %8897 = vmatmul.mubr.bf16.gmra.mxu0 %v8778
        %v8898 = vpop.f32.mrf.mxu0
        %v8899 = vadd.f32 0.0, %v8898
        %v8900 = vpop.f32.mrf.mxu0
        %v8901 = vadd.f32 0.0, %v8900
        %v8902 = vpop.f32.mrf.mxu0
        %v8903 = vadd.f32 0.0, %v8902
        %v8904 = vpop.f32.mrf.mxu0
        %v8905 = vadd.f32 0.0, %v8904
        %8906 = vmatprep.mubr.bf16.mxu0 0
        %8907 = vmatmul.mubr.bf16.gmra.mxu0 %v8780
        %v8908 = vpop.f32.mrf.mxu0
        %v8909 = vadd.f32 0.0, %v8908
        %v8910 = vpop.f32.mrf.mxu0
        %v8911 = vadd.f32 0.0, %v8910
        %v8912 = vpop.f32.mrf.mxu0
        %v8913 = vadd.f32 0.0, %v8912
        %v8914 = vpop.f32.mrf.mxu0
        %v8915 = vadd.f32 0.0, %v8914
        %8916 = vmatprep.mubr.bf16.mxu0 0
        %8917 = vmatmul.mubr.bf16.gmra.mxu0 %v8782
        %v8918 = vpop.f32.mrf.mxu0
        %v8919 = vadd.f32 0.0, %v8918
        %v8920 = vpop.f32.mrf.mxu0
        %v8921 = vadd.f32 0.0, %v8920
        %v8922 = vpop.f32.mrf.mxu0
        %v8923 = vadd.f32 0.0, %v8922
        %v8924 = vpop.f32.mrf.mxu0
        %v8925 = vadd.f32 0.0, %v8924
        %8926 = vmatprep.mubr.bf16.mxu0 0
        %8927 = vmatmul.mubr.bf16.gmra.mxu0 %v8784
        %v8928 = vpop.f32.mrf.mxu0
        %v8929 = vadd.f32 0.0, %v8928
        %v8930 = vpop.f32.mrf.mxu0
        %v8931 = vadd.f32 0.0, %v8930
        %v8932 = vpop.f32.mrf.mxu0
        %v8933 = vadd.f32 0.0, %v8932
        %v8934 = vpop.f32.mrf.mxu0
        %v8935 = vadd.f32 0.0, %v8934
        %8936 = vmatprep.mubr.bf16.mxu0 0
        %8937 = vmatmul.mubr.bf16.gmra.mxu0 %v8786
        %v8938 = vpop.f32.mrf.mxu0
        %v8939 = vadd.f32 0.0, %v8938
        %v8940 = vpop.f32.mrf.mxu0
        %v8941 = vadd.f32 0.0, %v8940
        %v8942 = vpop.f32.mrf.mxu0
        %v8943 = vadd.f32 0.0, %v8942
        %v8944 = vpop.f32.mrf.mxu0
        %v8945 = vadd.f32 0.0, %v8944
        %8946 = vmatprep.mubr.bf16.mxu0 0
        %8947 = vmatmul.mubr.bf16.gmra.mxu0 %v8788
        %v8948 = vpop.f32.mrf.mxu0
        %v8949 = vadd.f32 0.0, %v8948
        %v8950 = vpop.f32.mrf.mxu0
        %v8951 = vadd.f32 0.0, %v8950
        %v8952 = vpop.f32.mrf.mxu0
        %v8953 = vadd.f32 0.0, %v8952
        %v8954 = vpop.f32.mrf.mxu0
        %v8955 = vadd.f32 0.0, %v8954
        %8956 = vmatprep.mubr.bf16.mxu0 0
        %8957 = vmatmul.mubr.bf16.gmra.mxu0 %v8790
        %v8958 = vpop.f32.mrf.mxu0
        %v8959 = vadd.f32 0.0, %v8958
        %v8960 = vpop.f32.mrf.mxu0
        %v8961 = vadd.f32 0.0, %v8960
        %v8962 = vpop.f32.mrf.mxu0
        %v8963 = vadd.f32 0.0, %v8962
        %v8964 = vpop.f32.mrf.mxu0
        %v8965 = vadd.f32 0.0, %v8964
        %8966 = vmatprep.mubr.bf16.mxu0 0
        %8967 = vmatmul.mubr.bf16.gmra.mxu0 %v8792
        %v8968 = vpop.f32.mrf.mxu0
        %v8969 = vadd.f32 0.0, %v8968
        %v8970 = vpop.f32.mrf.mxu0
        %v8971 = vadd.f32 0.0, %v8970
        %v8972 = vpop.f32.mrf.mxu0
        %v8973 = vadd.f32 0.0, %v8972
        %v8974 = vpop.f32.mrf.mxu0
        %v8975 = vadd.f32 0.0, %v8974
        %8976 = vmatprep.mubr.bf16.mxu0 0
        %8977 = vmatmul.mubr.bf16.gmra.mxu0 %v8794
        %v8978 = vpop.f32.mrf.mxu0
        %v8979 = vadd.f32 0.0, %v8978
        %v8980 = vpop.f32.mrf.mxu0
        %v8981 = vadd.f32 0.0, %v8980
        %v8982 = vpop.f32.mrf.mxu0
        %v8983 = vadd.f32 0.0, %v8982
        %v8984 = vpop.f32.mrf.mxu0
        %v8985 = vadd.f32 0.0, %v8984
        %8986 = vmatprep.mubr.bf16.mxu0 0
        %8987 = vmatmul.mubr.bf16.gmra.mxu0 %v8796
        %v8988 = vpop.f32.mrf.mxu0
        %v8989 = vadd.f32 0.0, %v8988
        %v8990 = vpop.f32.mrf.mxu0
        %v8991 = vadd.f32 0.0, %v8990
        %v8992 = vpop.f32.mrf.mxu0
        %v8993 = vadd.f32 0.0, %v8992
        %v8994 = vpop.f32.mrf.mxu0
        %v8995 = vadd.f32 0.0, %v8994
        %8996 = vdwg.mxu0
        %v8998 = vlaneseq
        %v8999 = vshrl.u32 %v8998, 7
        %v9000 = vsub.s32 0, %v8999
        %v9001 = vrot.slane %v7545, %v9000
        %v9002 = vlaneseq
        %v9003 = vshrl.u32 %v9002, 7
        %v9004 = vsub.s32 1, %v9003
        %v9005 = vrot.slane %v7545, %v9004
        %v9008 = vmul.f32 %v8839, %v9001
        %v9009 = vmul.f32 %v8841, %v9005
        %v9010 = vmul.f32 %v8843, %v9001
        %v9011 = vmul.f32 %v8845, %v9005
        %v9012 = vmul.f32 %v8849, %v9001
        %v9013 = vmul.f32 %v8851, %v9005
        %v9014 = vmul.f32 %v8853, %v9001
        %v9015 = vmul.f32 %v8855, %v9005
        %v9016 = vmul.f32 %v8859, %v9001
        %v9017 = vmul.f32 %v8861, %v9005
        %v9018 = vmul.f32 %v8863, %v9001
        %v9019 = vmul.f32 %v8865, %v9005
        %v9020 = vmul.f32 %v8869, %v9001
        %v9021 = vmul.f32 %v8871, %v9005
        %v9022 = vmul.f32 %v8873, %v9001
        %v9023 = vmul.f32 %v8875, %v9005
        %v9024 = vmul.f32 %v8879, %v9001
        %v9025 = vmul.f32 %v8881, %v9005
        %v9026 = vmul.f32 %v8883, %v9001
        %v9027 = vmul.f32 %v8885, %v9005
        %v9028 = vmul.f32 %v8889, %v9001
        %v9029 = vmul.f32 %v8891, %v9005
        %v9030 = vmul.f32 %v8893, %v9001
        %v9031 = vmul.f32 %v8895, %v9005
        %v9032 = vmul.f32 %v8899, %v9001
        %v9033 = vmul.f32 %v8901, %v9005
        %v9034 = vmul.f32 %v8903, %v9001
        %v9035 = vmul.f32 %v8905, %v9005
        %v9036 = vmul.f32 %v8909, %v9001
        %v9037 = vmul.f32 %v8911, %v9005
        %v9038 = vmul.f32 %v8913, %v9001
        %v9039 = vmul.f32 %v8915, %v9005
        %v9040 = vmul.f32 %v8919, %v9001
        %v9041 = vmul.f32 %v8921, %v9005
        %v9042 = vmul.f32 %v8923, %v9001
        %v9043 = vmul.f32 %v8925, %v9005
        %v9044 = vmul.f32 %v8929, %v9001
        %v9045 = vmul.f32 %v8931, %v9005
        %v9046 = vmul.f32 %v8933, %v9001
        %v9047 = vmul.f32 %v8935, %v9005
        %v9048 = vmul.f32 %v8939, %v9001
        %v9049 = vmul.f32 %v8941, %v9005
        %v9050 = vmul.f32 %v8943, %v9001
        %v9051 = vmul.f32 %v8945, %v9005
        %v9052 = vmul.f32 %v8949, %v9001
        %v9053 = vmul.f32 %v8951, %v9005
        %v9054 = vmul.f32 %v8953, %v9001
        %v9055 = vmul.f32 %v8955, %v9005
        %v9056 = vmul.f32 %v8959, %v9001
        %v9057 = vmul.f32 %v8961, %v9005
        %v9058 = vmul.f32 %v8963, %v9001
        %v9059 = vmul.f32 %v8965, %v9005
        %v9060 = vmul.f32 %v8969, %v9001
        %v9061 = vmul.f32 %v8971, %v9005
        %v9062 = vmul.f32 %v8973, %v9001
        %v9063 = vmul.f32 %v8975, %v9005
        %v9064 = vmul.f32 %v8979, %v9001
        %v9065 = vmul.f32 %v8981, %v9005
        %v9066 = vmul.f32 %v8983, %v9001
        %v9067 = vmul.f32 %v8985, %v9005
        %v9068 = vmul.f32 %v8989, %v9001
        %v9069 = vmul.f32 %v8991, %v9005
        %v9070 = vmul.f32 %v8993, %v9001
        %v9071 = vmul.f32 %v8995, %v9005
        %v9073 = vlaneseq
        %v9074 = vshrl.u32 %v9073, 7
        %v9075 = vsub.s32 0, %v9074
        %v9076 = vrot.slane %v7546, %v9075
        %v9077 = vlaneseq
        %v9078 = vshrl.u32 %v9077, 7
        %v9079 = vsub.s32 1, %v9078
        %v9080 = vrot.slane %v7546, %v9079
        %v9083 = vadd.f32 %v9008, %v9076
        %v9084 = vadd.f32 %v9009, %v9080
        %v9085 = vadd.f32 %v9010, %v9076
        %v9086 = vadd.f32 %v9011, %v9080
        %v9087 = vadd.f32 %v9012, %v9076
        %v9088 = vadd.f32 %v9013, %v9080
        %v9089 = vadd.f32 %v9014, %v9076
        %v9090 = vadd.f32 %v9015, %v9080
        %v9091 = vadd.f32 %v9016, %v9076
        %v9092 = vadd.f32 %v9017, %v9080
        %v9093 = vadd.f32 %v9018, %v9076
        %v9094 = vadd.f32 %v9019, %v9080
        %v9095 = vadd.f32 %v9020, %v9076
        %v9096 = vadd.f32 %v9021, %v9080
        %v9097 = vadd.f32 %v9022, %v9076
        %v9098 = vadd.f32 %v9023, %v9080
        %v9099 = vadd.f32 %v9024, %v9076
        %v9100 = vadd.f32 %v9025, %v9080
        %v9101 = vadd.f32 %v9026, %v9076
        %v9102 = vadd.f32 %v9027, %v9080
        %v9103 = vadd.f32 %v9028, %v9076
        %v9104 = vadd.f32 %v9029, %v9080
        %v9105 = vadd.f32 %v9030, %v9076
        %v9106 = vadd.f32 %v9031, %v9080
        %v9107 = vadd.f32 %v9032, %v9076
        %v9108 = vadd.f32 %v9033, %v9080
        %v9109 = vadd.f32 %v9034, %v9076
        %v9110 = vadd.f32 %v9035, %v9080
        %v9111 = vadd.f32 %v9036, %v9076
        %v9112 = vadd.f32 %v9037, %v9080
        %v9113 = vadd.f32 %v9038, %v9076
        %v9114 = vadd.f32 %v9039, %v9080
        %v9115 = vadd.f32 %v9040, %v9076
        %v9116 = vadd.f32 %v9041, %v9080
        %v9117 = vadd.f32 %v9042, %v9076
        %v9118 = vadd.f32 %v9043, %v9080
        %v9119 = vadd.f32 %v9044, %v9076
        %v9120 = vadd.f32 %v9045, %v9080
        %v9121 = vadd.f32 %v9046, %v9076
        %v9122 = vadd.f32 %v9047, %v9080
        %v9123 = vadd.f32 %v9048, %v9076
        %v9124 = vadd.f32 %v9049, %v9080
        %v9125 = vadd.f32 %v9050, %v9076
        %v9126 = vadd.f32 %v9051, %v9080
        %v9127 = vadd.f32 %v9052, %v9076
        %v9128 = vadd.f32 %v9053, %v9080
        %v9129 = vadd.f32 %v9054, %v9076
        %v9130 = vadd.f32 %v9055, %v9080
        %v9131 = vadd.f32 %v9056, %v9076
        %v9132 = vadd.f32 %v9057, %v9080
        %v9133 = vadd.f32 %v9058, %v9076
        %v9134 = vadd.f32 %v9059, %v9080
        %v9135 = vadd.f32 %v9060, %v9076
        %v9136 = vadd.f32 %v9061, %v9080
        %v9137 = vadd.f32 %v9062, %v9076
        %v9138 = vadd.f32 %v9063, %v9080
        %v9139 = vadd.f32 %v9064, %v9076
        %v9140 = vadd.f32 %v9065, %v9080
        %v9141 = vadd.f32 %v9066, %v9076
        %v9142 = vadd.f32 %v9067, %v9080
        %v9143 = vadd.f32 %v9068, %v9076
        %v9144 = vadd.f32 %v9069, %v9080
        %v9145 = vadd.f32 %v9070, %v9076
        %v9146 = vadd.f32 %v9071, %v9080
        %vm9147 = vcmp.ge.f32.partialorder %v9083, 0.0
        %vm9148 = vcmp.ge.f32.partialorder %v9084, 0.0
        %vm9149 = vcmp.ge.f32.partialorder %v9085, 0.0
        %vm9150 = vcmp.ge.f32.partialorder %v9086, 0.0
        %vm9151 = vcmp.ge.f32.partialorder %v9087, 0.0
        %vm9152 = vcmp.ge.f32.partialorder %v9088, 0.0
        %vm9153 = vcmp.ge.f32.partialorder %v9089, 0.0
        %vm9154 = vcmp.ge.f32.partialorder %v9090, 0.0
        %vm9155 = vcmp.ge.f32.partialorder %v9091, 0.0
        %vm9156 = vcmp.ge.f32.partialorder %v9092, 0.0
        %vm9157 = vcmp.ge.f32.partialorder %v9093, 0.0
        %vm9158 = vcmp.ge.f32.partialorder %v9094, 0.0
        %vm9159 = vcmp.ge.f32.partialorder %v9095, 0.0
        %vm9160 = vcmp.ge.f32.partialorder %v9096, 0.0
        %vm9161 = vcmp.ge.f32.partialorder %v9097, 0.0
        %vm9162 = vcmp.ge.f32.partialorder %v9098, 0.0
        %vm9163 = vcmp.ge.f32.partialorder %v9099, 0.0
        %vm9164 = vcmp.ge.f32.partialorder %v9100, 0.0
        %vm9165 = vcmp.ge.f32.partialorder %v9101, 0.0
        %vm9166 = vcmp.ge.f32.partialorder %v9102, 0.0
        %vm9167 = vcmp.ge.f32.partialorder %v9103, 0.0
        %vm9168 = vcmp.ge.f32.partialorder %v9104, 0.0
        %vm9169 = vcmp.ge.f32.partialorder %v9105, 0.0
        %vm9170 = vcmp.ge.f32.partialorder %v9106, 0.0
        %vm9171 = vcmp.ge.f32.partialorder %v9107, 0.0
        %vm9172 = vcmp.ge.f32.partialorder %v9108, 0.0
        %vm9173 = vcmp.ge.f32.partialorder %v9109, 0.0
        %vm9174 = vcmp.ge.f32.partialorder %v9110, 0.0
        %vm9175 = vcmp.ge.f32.partialorder %v9111, 0.0
        %vm9176 = vcmp.ge.f32.partialorder %v9112, 0.0
        %vm9177 = vcmp.ge.f32.partialorder %v9113, 0.0
        %vm9178 = vcmp.ge.f32.partialorder %v9114, 0.0
        %vm9179 = vcmp.ge.f32.partialorder %v9115, 0.0
        %vm9180 = vcmp.ge.f32.partialorder %v9116, 0.0
        %vm9181 = vcmp.ge.f32.partialorder %v9117, 0.0
        %vm9182 = vcmp.ge.f32.partialorder %v9118, 0.0
        %vm9183 = vcmp.ge.f32.partialorder %v9119, 0.0
        %vm9184 = vcmp.ge.f32.partialorder %v9120, 0.0
        %vm9185 = vcmp.ge.f32.partialorder %v9121, 0.0
        %vm9186 = vcmp.ge.f32.partialorder %v9122, 0.0
        %vm9187 = vcmp.ge.f32.partialorder %v9123, 0.0
        %vm9188 = vcmp.ge.f32.partialorder %v9124, 0.0
        %vm9189 = vcmp.ge.f32.partialorder %v9125, 0.0
        %vm9190 = vcmp.ge.f32.partialorder %v9126, 0.0
        %vm9191 = vcmp.ge.f32.partialorder %v9127, 0.0
        %vm9192 = vcmp.ge.f32.partialorder %v9128, 0.0
        %vm9193 = vcmp.ge.f32.partialorder %v9129, 0.0
        %vm9194 = vcmp.ge.f32.partialorder %v9130, 0.0
        %vm9195 = vcmp.ge.f32.partialorder %v9131, 0.0
        %vm9196 = vcmp.ge.f32.partialorder %v9132, 0.0
        %vm9197 = vcmp.ge.f32.partialorder %v9133, 0.0
        %vm9198 = vcmp.ge.f32.partialorder %v9134, 0.0
        %vm9199 = vcmp.ge.f32.partialorder %v9135, 0.0
        %vm9200 = vcmp.ge.f32.partialorder %v9136, 0.0
        %vm9201 = vcmp.ge.f32.partialorder %v9137, 0.0
        %vm9202 = vcmp.ge.f32.partialorder %v9138, 0.0
        %vm9203 = vcmp.ge.f32.partialorder %v9139, 0.0
        %vm9204 = vcmp.ge.f32.partialorder %v9140, 0.0
        %vm9205 = vcmp.ge.f32.partialorder %v9141, 0.0
        %vm9206 = vcmp.ge.f32.partialorder %v9142, 0.0
        %vm9207 = vcmp.ge.f32.partialorder %v9143, 0.0
        %vm9208 = vcmp.ge.f32.partialorder %v9144, 0.0
        %vm9209 = vcmp.ge.f32.partialorder %v9145, 0.0
        %vm9210 = vcmp.ge.f32.partialorder %v9146, 0.0
        %v9211 = vmul.f32 %v9083, 0.2
        %v9212 = vmul.f32 %v9084, 0.2
        %v9213 = vmul.f32 %v9085, 0.2
        %v9214 = vmul.f32 %v9086, 0.2
        %v9215 = vmul.f32 %v9087, 0.2
        %v9216 = vmul.f32 %v9088, 0.2
        %v9217 = vmul.f32 %v9089, 0.2
        %v9218 = vmul.f32 %v9090, 0.2
        %v9219 = vmul.f32 %v9091, 0.2
        %v9220 = vmul.f32 %v9092, 0.2
        %v9221 = vmul.f32 %v9093, 0.2
        %v9222 = vmul.f32 %v9094, 0.2
        %v9223 = vmul.f32 %v9095, 0.2
        %v9224 = vmul.f32 %v9096, 0.2
        %v9225 = vmul.f32 %v9097, 0.2
        %v9226 = vmul.f32 %v9098, 0.2
        %v9227 = vmul.f32 %v9099, 0.2
        %v9228 = vmul.f32 %v9100, 0.2
        %v9229 = vmul.f32 %v9101, 0.2
        %v9230 = vmul.f32 %v9102, 0.2
        %v9231 = vmul.f32 %v9103, 0.2
        %v9232 = vmul.f32 %v9104, 0.2
        %v9233 = vmul.f32 %v9105, 0.2
        %v9234 = vmul.f32 %v9106, 0.2
        %v9235 = vmul.f32 %v9107, 0.2
        %v9236 = vmul.f32 %v9108, 0.2
        %v9237 = vmul.f32 %v9109, 0.2
        %v9238 = vmul.f32 %v9110, 0.2
        %v9239 = vmul.f32 %v9111, 0.2
        %v9240 = vmul.f32 %v9112, 0.2
        %v9241 = vmul.f32 %v9113, 0.2
        %v9242 = vmul.f32 %v9114, 0.2
        %v9243 = vmul.f32 %v9115, 0.2
        %v9244 = vmul.f32 %v9116, 0.2
        %v9245 = vmul.f32 %v9117, 0.2
        %v9246 = vmul.f32 %v9118, 0.2
        %v9247 = vmul.f32 %v9119, 0.2
        %v9248 = vmul.f32 %v9120, 0.2
        %v9249 = vmul.f32 %v9121, 0.2
        %v9250 = vmul.f32 %v9122, 0.2
        %v9251 = vmul.f32 %v9123, 0.2
        %v9252 = vmul.f32 %v9124, 0.2
        %v9253 = vmul.f32 %v9125, 0.2
        %v9254 = vmul.f32 %v9126, 0.2
        %v9255 = vmul.f32 %v9127, 0.2
        %v9256 = vmul.f32 %v9128, 0.2
        %v9257 = vmul.f32 %v9129, 0.2
        %v9258 = vmul.f32 %v9130, 0.2
        %v9259 = vmul.f32 %v9131, 0.2
        %v9260 = vmul.f32 %v9132, 0.2
        %v9261 = vmul.f32 %v9133, 0.2
        %v9262 = vmul.f32 %v9134, 0.2
        %v9263 = vmul.f32 %v9135, 0.2
        %v9264 = vmul.f32 %v9136, 0.2
        %v9265 = vmul.f32 %v9137, 0.2
        %v9266 = vmul.f32 %v9138, 0.2
        %v9267 = vmul.f32 %v9139, 0.2
        %v9268 = vmul.f32 %v9140, 0.2
        %v9269 = vmul.f32 %v9141, 0.2
        %v9270 = vmul.f32 %v9142, 0.2
        %v9271 = vmul.f32 %v9143, 0.2
        %v9272 = vmul.f32 %v9144, 0.2
        %v9273 = vmul.f32 %v9145, 0.2
        %v9274 = vmul.f32 %v9146, 0.2
        %v9275 = vsel %vm9147, %v9083, %v9211
        %v9276 = vsel %vm9148, %v9084, %v9212
        %v9277 = vsel %vm9149, %v9085, %v9213
        %v9278 = vsel %vm9150, %v9086, %v9214
        %v9279 = vsel %vm9151, %v9087, %v9215
        %v9280 = vsel %vm9152, %v9088, %v9216
        %v9281 = vsel %vm9153, %v9089, %v9217
        %v9282 = vsel %vm9154, %v9090, %v9218
        %v9283 = vsel %vm9155, %v9091, %v9219
        %v9284 = vsel %vm9156, %v9092, %v9220
        %v9285 = vsel %vm9157, %v9093, %v9221
        %v9286 = vsel %vm9158, %v9094, %v9222
        %v9287 = vsel %vm9159, %v9095, %v9223
        %v9288 = vsel %vm9160, %v9096, %v9224
        %v9289 = vsel %vm9161, %v9097, %v9225
        %v9290 = vsel %vm9162, %v9098, %v9226
        %v9291 = vsel %vm9163, %v9099, %v9227
        %v9292 = vsel %vm9164, %v9100, %v9228
        %v9293 = vsel %vm9165, %v9101, %v9229
        %v9294 = vsel %vm9166, %v9102, %v9230
        %v9295 = vsel %vm9167, %v9103, %v9231
        %v9296 = vsel %vm9168, %v9104, %v9232
        %v9297 = vsel %vm9169, %v9105, %v9233
        %v9298 = vsel %vm9170, %v9106, %v9234
        %v9299 = vsel %vm9171, %v9107, %v9235
        %v9300 = vsel %vm9172, %v9108, %v9236
        %v9301 = vsel %vm9173, %v9109, %v9237
        %v9302 = vsel %vm9174, %v9110, %v9238
        %v9303 = vsel %vm9175, %v9111, %v9239
        %v9304 = vsel %vm9176, %v9112, %v9240
        %v9305 = vsel %vm9177, %v9113, %v9241
        %v9306 = vsel %vm9178, %v9114, %v9242
        %v9307 = vsel %vm9179, %v9115, %v9243
        %v9308 = vsel %vm9180, %v9116, %v9244
        %v9309 = vsel %vm9181, %v9117, %v9245
        %v9310 = vsel %vm9182, %v9118, %v9246
        %v9311 = vsel %vm9183, %v9119, %v9247
        %v9312 = vsel %vm9184, %v9120, %v9248
        %v9313 = vsel %vm9185, %v9121, %v9249
        %v9314 = vsel %vm9186, %v9122, %v9250
        %v9315 = vsel %vm9187, %v9123, %v9251
        %v9316 = vsel %vm9188, %v9124, %v9252
        %v9317 = vsel %vm9189, %v9125, %v9253
        %v9318 = vsel %vm9190, %v9126, %v9254
        %v9319 = vsel %vm9191, %v9127, %v9255
        %v9320 = vsel %vm9192, %v9128, %v9256
        %v9321 = vsel %vm9193, %v9129, %v9257
        %v9322 = vsel %vm9194, %v9130, %v9258
        %v9323 = vsel %vm9195, %v9131, %v9259
        %v9324 = vsel %vm9196, %v9132, %v9260
        %v9325 = vsel %vm9197, %v9133, %v9261
        %v9326 = vsel %vm9198, %v9134, %v9262
        %v9327 = vsel %vm9199, %v9135, %v9263
        %v9328 = vsel %vm9200, %v9136, %v9264
        %v9329 = vsel %vm9201, %v9137, %v9265
        %v9330 = vsel %vm9202, %v9138, %v9266
        %v9331 = vsel %vm9203, %v9139, %v9267
        %v9332 = vsel %vm9204, %v9140, %v9268
        %v9333 = vsel %vm9205, %v9141, %v9269
        %v9334 = vsel %vm9206, %v9142, %v9270
        %v9335 = vsel %vm9207, %v9143, %v9271
        %v9336 = vsel %vm9208, %v9144, %v9272
        %v9337 = vsel %vm9209, %v9145, %v9273
        %v9338 = vsel %vm9210, %v9146, %v9274
        %v9339 = vld [vmem:[#allocation25] sm:$0xf]
        %v9340 = vld [vmem:[#allocation26] sm:$0x3]
        %v9341 = vld [vmem:[#allocation28] sm:$0x3]
        %vm9375 = vcmask 1040384
        %v9376 = vrot.slane 0.0, 7
        %v9377 = vsel %vm9375, %v9376, %v9376
        %v9378 = vrot.slane %v981, 7
        %v9379 = vrot.slane %v982, 7
        %v9380 = vsel %vm9375, %v9378, %v9379
        %v9381 = vrot.slane %v983, 7
        %v9382 = vrot.slane %v984, 7
        %v9383 = vsel %vm9375, %v9381, %v9382
        %v9384 = vrot.slane %v985, 7
        %v9385 = vrot.slane %v986, 7
        %v9386 = vsel %vm9375, %v9384, %v9385
        %v9387 = vrot.slane %v987, 7
        %v9388 = vrot.slane %v988, 7
        %v9389 = vsel %vm9375, %v9387, %v9388
        %v9390 = vrot.slane %v989, 7
        %v9391 = vrot.slane %v990, 7
        %v9392 = vsel %vm9375, %v9390, %v9391
        %v9393 = vrot.slane %v991, 7
        %v9394 = vrot.slane %v992, 7
        %v9395 = vsel %vm9375, %v9393, %v9394
        %v9396 = vrot.slane %v993, 7
        %v9397 = vrot.slane %v994, 7
        %v9398 = vsel %vm9375, %v9396, %v9397
        %v9399 = vrot.slane %v995, 7
        %v9400 = vrot.slane %v996, 7
        %v9401 = vsel %vm9375, %v9399, %v9400
        %v9402 = vrot.slane %v997, 7
        %v9403 = vrot.slane %v998, 7
        %v9404 = vsel %vm9375, %v9402, %v9403
        %v9405 = vrot.slane %v999, 7
        %v9406 = vrot.slane %v1000, 7
        %v9407 = vsel %vm9375, %v9405, %v9406
        %v9408 = vrot.slane %v1001, 7
        %v9409 = vrot.slane %v1002, 7
        %v9410 = vsel %vm9375, %v9408, %v9409
        %v9411 = vrot.slane %v1003, 7
        %v9412 = vrot.slane %v1004, 7
        %v9413 = vsel %vm9375, %v9411, %v9412
        %v9414 = vrot.slane %v1005, 7
        %v9415 = vrot.slane %v1006, 7
        %v9416 = vsel %vm9375, %v9414, %v9415
        %v9417 = vrot.slane %v1007, 7
        %v9418 = vrot.slane %v1008, 7
        %v9419 = vsel %vm9375, %v9417, %v9418
        %v9420 = vrot.slane %v1009, 7
        %v9421 = vrot.slane %v1010, 7
        %v9422 = vsel %vm9375, %v9420, %v9421
        %v9423 = vrot.slane %v1011, 7
        %v9424 = vrot.slane %v1012, 7
        %v9425 = vsel %vm9375, %v9423, %v9424
        %v9476 = vsel %vm9375, 0.0, %v9376
        %v9477 = vsel %vm9375, 0.0, %v9378
        %v9478 = vsel %vm9375, 0.0, %v9381
        %v9479 = vsel %vm9375, 0.0, %v9384
        %v9480 = vsel %vm9375, 0.0, %v9387
        %v9481 = vsel %vm9375, 0.0, %v9390
        %v9482 = vsel %vm9375, 0.0, %v9393
        %v9483 = vsel %vm9375, 0.0, %v9396
        %v9484 = vsel %vm9375, 0.0, %v9399
        %v9485 = vsel %vm9375, 0.0, %v9402
        %v9486 = vsel %vm9375, 0.0, %v9405
        %v9487 = vsel %vm9375, 0.0, %v9408
        %v9488 = vsel %vm9375, 0.0, %v9411
        %v9489 = vsel %vm9375, 0.0, %v9414
        %v9490 = vsel %vm9375, 0.0, %v9417
        %v9491 = vsel %vm9375, 0.0, %v9420
        %v9492 = vsel %vm9375, 0.0, %v9423
        %v9493 = vsel %vm9375, %v9376, 0.0
        %v9494 = vsel %vm9375, %v9379, 0.0
        %v9495 = vsel %vm9375, %v9382, 0.0
        %v9496 = vsel %vm9375, %v9385, 0.0
        %v9497 = vsel %vm9375, %v9388, 0.0
        %v9498 = vsel %vm9375, %v9391, 0.0
        %v9499 = vsel %vm9375, %v9394, 0.0
        %v9500 = vsel %vm9375, %v9397, 0.0
        %v9501 = vsel %vm9375, %v9400, 0.0
        %v9502 = vsel %vm9375, %v9403, 0.0
        %v9503 = vsel %vm9375, %v9406, 0.0
        %v9504 = vsel %vm9375, %v9409, 0.0
        %v9505 = vsel %vm9375, %v9412, 0.0
        %v9506 = vsel %vm9375, %v9415, 0.0
        %v9507 = vsel %vm9375, %v9418, 0.0
        %v9508 = vsel %vm9375, %v9421, 0.0
        %v9509 = vsel %vm9375, %v9424, 0.0
        %vm9544 = vcmask 1046528
        %v9545 = vrot.slane %v9476, 1
        %v9546 = vrot.slane %v9377, 1
        %v9547 = vsel %vm9544, %v9545, %v9546
        %v9548 = vrot.slane %v9493, 1
        %v9549 = vsel %vm9544, %v9546, %v9548
        %v9550 = vrot.slane %v9477, 1
        %v9551 = vrot.slane %v9380, 1
        %v9552 = vsel %vm9544, %v9550, %v9551
        %v9553 = vrot.slane %v9494, 1
        %v9554 = vsel %vm9544, %v9551, %v9553
        %v9555 = vrot.slane %v9478, 1
        %v9556 = vrot.slane %v9383, 1
        %v9557 = vsel %vm9544, %v9555, %v9556
        %v9558 = vrot.slane %v9495, 1
        %v9559 = vsel %vm9544, %v9556, %v9558
        %v9560 = vrot.slane %v9479, 1
        %v9561 = vrot.slane %v9386, 1
        %v9562 = vsel %vm9544, %v9560, %v9561
        %v9563 = vrot.slane %v9496, 1
        %v9564 = vsel %vm9544, %v9561, %v9563
        %v9565 = vrot.slane %v9480, 1
        %v9566 = vrot.slane %v9389, 1
        %v9567 = vsel %vm9544, %v9565, %v9566
        %v9568 = vrot.slane %v9497, 1
        %v9569 = vsel %vm9544, %v9566, %v9568
        %v9570 = vrot.slane %v9481, 1
        %v9571 = vrot.slane %v9392, 1
        %v9572 = vsel %vm9544, %v9570, %v9571
        %v9573 = vrot.slane %v9498, 1
        %v9574 = vsel %vm9544, %v9571, %v9573
        %v9575 = vrot.slane %v9482, 1
        %v9576 = vrot.slane %v9395, 1
        %v9577 = vsel %vm9544, %v9575, %v9576
        %v9578 = vrot.slane %v9499, 1
        %v9579 = vsel %vm9544, %v9576, %v9578
        %v9580 = vrot.slane %v9483, 1
        %v9581 = vrot.slane %v9398, 1
        %v9582 = vsel %vm9544, %v9580, %v9581
        %v9583 = vrot.slane %v9500, 1
        %v9584 = vsel %vm9544, %v9581, %v9583
        %v9585 = vrot.slane %v9484, 1
        %v9586 = vrot.slane %v9401, 1
        %v9587 = vsel %vm9544, %v9585, %v9586
        %v9588 = vrot.slane %v9501, 1
        %v9589 = vsel %vm9544, %v9586, %v9588
        %v9590 = vrot.slane %v9485, 1
        %v9591 = vrot.slane %v9404, 1
        %v9592 = vsel %vm9544, %v9590, %v9591
        %v9593 = vrot.slane %v9502, 1
        %v9594 = vsel %vm9544, %v9591, %v9593
        %v9595 = vrot.slane %v9486, 1
        %v9596 = vrot.slane %v9407, 1
        %v9597 = vsel %vm9544, %v9595, %v9596
        %v9598 = vrot.slane %v9503, 1
        %v9599 = vsel %vm9544, %v9596, %v9598
        %v9600 = vrot.slane %v9487, 1
        %v9601 = vrot.slane %v9410, 1
        %v9602 = vsel %vm9544, %v9600, %v9601
        %v9603 = vrot.slane %v9504, 1
        %v9604 = vsel %vm9544, %v9601, %v9603
        %v9605 = vrot.slane %v9488, 1
        %v9606 = vrot.slane %v9413, 1
        %v9607 = vsel %vm9544, %v9605, %v9606
        %v9608 = vrot.slane %v9505, 1
        %v9609 = vsel %vm9544, %v9606, %v9608
        %v9610 = vrot.slane %v9489, 1
        %v9611 = vrot.slane %v9416, 1
        %v9612 = vsel %vm9544, %v9610, %v9611
        %v9613 = vrot.slane %v9506, 1
        %v9614 = vsel %vm9544, %v9611, %v9613
        %v9615 = vrot.slane %v9490, 1
        %v9616 = vrot.slane %v9419, 1
        %v9617 = vsel %vm9544, %v9615, %v9616
        %v9618 = vrot.slane %v9507, 1
        %v9619 = vsel %vm9544, %v9616, %v9618
        %v9620 = vrot.slane %v9491, 1
        %v9621 = vrot.slane %v9422, 1
        %v9622 = vsel %vm9544, %v9620, %v9621
        %v9623 = vrot.slane %v9508, 1
        %v9624 = vsel %vm9544, %v9621, %v9623
        %v9625 = vrot.slane %v9492, 1
        %v9626 = vrot.slane %v9425, 1
        %v9627 = vsel %vm9544, %v9625, %v9626
        %v9628 = vrot.slane %v9509, 1
        %v9629 = vsel %vm9544, %v9626, %v9628
        %v9664 = vadd.f32 %v9476, %v9547
        %v9665 = vadd.f32 %v9377, %v9549
        %v9666 = vadd.f32 %v9477, %v9552
        %v9667 = vadd.f32 %v9380, %v9554
        %v9668 = vadd.f32 %v9478, %v9557
        %v9669 = vadd.f32 %v9383, %v9559
        %v9670 = vadd.f32 %v9479, %v9562
        %v9671 = vadd.f32 %v9386, %v9564
        %v9672 = vadd.f32 %v9480, %v9567
        %v9673 = vadd.f32 %v9389, %v9569
        %v9674 = vadd.f32 %v9481, %v9572
        %v9675 = vadd.f32 %v9392, %v9574
        %v9676 = vadd.f32 %v9482, %v9577
        %v9677 = vadd.f32 %v9395, %v9579
        %v9678 = vadd.f32 %v9483, %v9582
        %v9679 = vadd.f32 %v9398, %v9584
        %v9680 = vadd.f32 %v9484, %v9587
        %v9681 = vadd.f32 %v9401, %v9589
        %v9682 = vadd.f32 %v9485, %v9592
        %v9683 = vadd.f32 %v9404, %v9594
        %v9684 = vadd.f32 %v9486, %v9597
        %v9685 = vadd.f32 %v9407, %v9599
        %v9686 = vadd.f32 %v9487, %v9602
        %v9687 = vadd.f32 %v9410, %v9604
        %v9688 = vadd.f32 %v9488, %v9607
        %v9689 = vadd.f32 %v9413, %v9609
        %v9690 = vadd.f32 %v9489, %v9612
        %v9691 = vadd.f32 %v9416, %v9614
        %v9692 = vadd.f32 %v9490, %v9617
        %v9693 = vadd.f32 %v9419, %v9619
        %v9694 = vadd.f32 %v9491, %v9622
        %v9695 = vadd.f32 %v9422, %v9624
        %v9696 = vadd.f32 %v9492, %v9627
        %v9697 = vadd.f32 %v9425, %v9629
        %vm9698 = vcmask 1045504
        %v9699 = vrot.slane %v9476, 2
        %v9700 = vrot.slane %v9377, 2
        %v9701 = vsel %vm9698, %v9699, %v9700
        %v9702 = vrot.slane %v9493, 2
        %v9703 = vsel %vm9698, %v9700, %v9702
        %v9704 = vrot.slane %v9477, 2
        %v9705 = vrot.slane %v9380, 2
        %v9706 = vsel %vm9698, %v9704, %v9705
        %v9707 = vrot.slane %v9494, 2
        %v9708 = vsel %vm9698, %v9705, %v9707
        %v9709 = vrot.slane %v9478, 2
        %v9710 = vrot.slane %v9383, 2
        %v9711 = vsel %vm9698, %v9709, %v9710
        %v9712 = vrot.slane %v9495, 2
        %v9713 = vsel %vm9698, %v9710, %v9712
        %v9714 = vrot.slane %v9479, 2
        %v9715 = vrot.slane %v9386, 2
        %v9716 = vsel %vm9698, %v9714, %v9715
        %v9717 = vrot.slane %v9496, 2
        %v9718 = vsel %vm9698, %v9715, %v9717
        %v9719 = vrot.slane %v9480, 2
        %v9720 = vrot.slane %v9389, 2
        %v9721 = vsel %vm9698, %v9719, %v9720
        %v9722 = vrot.slane %v9497, 2
        %v9723 = vsel %vm9698, %v9720, %v9722
        %v9724 = vrot.slane %v9481, 2
        %v9725 = vrot.slane %v9392, 2
        %v9726 = vsel %vm9698, %v9724, %v9725
        %v9727 = vrot.slane %v9498, 2
        %v9728 = vsel %vm9698, %v9725, %v9727
        %v9729 = vrot.slane %v9482, 2
        %v9730 = vrot.slane %v9395, 2
        %v9731 = vsel %vm9698, %v9729, %v9730
        %v9732 = vrot.slane %v9499, 2
        %v9733 = vsel %vm9698, %v9730, %v9732
        %v9734 = vrot.slane %v9483, 2
        %v9735 = vrot.slane %v9398, 2
        %v9736 = vsel %vm9698, %v9734, %v9735
        %v9737 = vrot.slane %v9500, 2
        %v9738 = vsel %vm9698, %v9735, %v9737
        %v9739 = vrot.slane %v9484, 2
        %v9740 = vrot.slane %v9401, 2
        %v9741 = vsel %vm9698, %v9739, %v9740
        %v9742 = vrot.slane %v9501, 2
        %v9743 = vsel %vm9698, %v9740, %v9742
        %v9744 = vrot.slane %v9485, 2
        %v9745 = vrot.slane %v9404, 2
        %v9746 = vsel %vm9698, %v9744, %v9745
        %v9747 = vrot.slane %v9502, 2
        %v9748 = vsel %vm9698, %v9745, %v9747
        %v9749 = vrot.slane %v9486, 2
        %v9750 = vrot.slane %v9407, 2
        %v9751 = vsel %vm9698, %v9749, %v9750
        %v9752 = vrot.slane %v9503, 2
        %v9753 = vsel %vm9698, %v9750, %v9752
        %v9754 = vrot.slane %v9487, 2
        %v9755 = vrot.slane %v9410, 2
        %v9756 = vsel %vm9698, %v9754, %v9755
        %v9757 = vrot.slane %v9504, 2
        %v9758 = vsel %vm9698, %v9755, %v9757
        %v9759 = vrot.slane %v9488, 2
        %v9760 = vrot.slane %v9413, 2
        %v9761 = vsel %vm9698, %v9759, %v9760
        %v9762 = vrot.slane %v9505, 2
        %v9763 = vsel %vm9698, %v9760, %v9762
        %v9764 = vrot.slane %v9489, 2
        %v9765 = vrot.slane %v9416, 2
        %v9766 = vsel %vm9698, %v9764, %v9765
        %v9767 = vrot.slane %v9506, 2
        %v9768 = vsel %vm9698, %v9765, %v9767
        %v9769 = vrot.slane %v9490, 2
        %v9770 = vrot.slane %v9419, 2
        %v9771 = vsel %vm9698, %v9769, %v9770
        %v9772 = vrot.slane %v9507, 2
        %v9773 = vsel %vm9698, %v9770, %v9772
        %v9774 = vrot.slane %v9491, 2
        %v9775 = vrot.slane %v9422, 2
        %v9776 = vsel %vm9698, %v9774, %v9775
        %v9777 = vrot.slane %v9508, 2
        %v9778 = vsel %vm9698, %v9775, %v9777
        %v9779 = vrot.slane %v9492, 2
        %v9780 = vrot.slane %v9425, 2
        %v9781 = vsel %vm9698, %v9779, %v9780
        %v9782 = vrot.slane %v9509, 2
        %v9783 = vsel %vm9698, %v9780, %v9782
        %v9818 = vadd.f32 %v9664, %v9701
        %v9819 = vadd.f32 %v9665, %v9703
        %v9820 = vadd.f32 %v9666, %v9706
        %v9821 = vadd.f32 %v9667, %v9708
        %v9822 = vadd.f32 %v9668, %v9711
        %v9823 = vadd.f32 %v9669, %v9713
        %v9824 = vadd.f32 %v9670, %v9716
        %v9825 = vadd.f32 %v9671, %v9718
        %v9826 = vadd.f32 %v9672, %v9721
        %v9827 = vadd.f32 %v9673, %v9723
        %v9828 = vadd.f32 %v9674, %v9726
        %v9829 = vadd.f32 %v9675, %v9728
        %v9830 = vadd.f32 %v9676, %v9731
        %v9831 = vadd.f32 %v9677, %v9733
        %v9832 = vadd.f32 %v9678, %v9736
        %v9833 = vadd.f32 %v9679, %v9738
        %v9834 = vadd.f32 %v9680, %v9741
        %v9835 = vadd.f32 %v9681, %v9743
        %v9836 = vadd.f32 %v9682, %v9746
        %v9837 = vadd.f32 %v9683, %v9748
        %v9838 = vadd.f32 %v9684, %v9751
        %v9839 = vadd.f32 %v9685, %v9753
        %v9840 = vadd.f32 %v9686, %v9756
        %v9841 = vadd.f32 %v9687, %v9758
        %v9842 = vadd.f32 %v9688, %v9761
        %v9843 = vadd.f32 %v9689, %v9763
        %v9844 = vadd.f32 %v9690, %v9766
        %v9845 = vadd.f32 %v9691, %v9768
        %v9846 = vadd.f32 %v9692, %v9771
        %v9847 = vadd.f32 %v9693, %v9773
        %v9848 = vadd.f32 %v9694, %v9776
        %v9849 = vadd.f32 %v9695, %v9778
        %v9850 = vadd.f32 %v9696, %v9781
        %v9851 = vadd.f32 %v9697, %v9783
        %v9852 = vadd.f32 %v9818, %v9820
        %v9853 = vadd.f32 %v9819, %v9821
        %v9854 = vadd.f32 %v9820, %v9822
        %v9855 = vadd.f32 %v9821, %v9823
        %v9856 = vadd.f32 %v9822, %v9824
        %v9857 = vadd.f32 %v9823, %v9825
        %v9858 = vadd.f32 %v9824, %v9826
        %v9859 = vadd.f32 %v9825, %v9827
        %v9860 = vadd.f32 %v9826, %v9828
        %v9861 = vadd.f32 %v9827, %v9829
        %v9862 = vadd.f32 %v9828, %v9830
        %v9863 = vadd.f32 %v9829, %v9831
        %v9864 = vadd.f32 %v9830, %v9832
        %v9865 = vadd.f32 %v9831, %v9833
        %v9866 = vadd.f32 %v9832, %v9834
        %v9867 = vadd.f32 %v9833, %v9835
        %v9868 = vadd.f32 %v9834, %v9836
        %v9869 = vadd.f32 %v9835, %v9837
        %v9870 = vadd.f32 %v9836, %v9838
        %v9871 = vadd.f32 %v9837, %v9839
        %v9872 = vadd.f32 %v9838, %v9840
        %v9873 = vadd.f32 %v9839, %v9841
        %v9874 = vadd.f32 %v9840, %v9842
        %v9875 = vadd.f32 %v9841, %v9843
        %v9876 = vadd.f32 %v9842, %v9844
        %v9877 = vadd.f32 %v9843, %v9845
        %v9878 = vadd.f32 %v9844, %v9846
        %v9879 = vadd.f32 %v9845, %v9847
        %v9880 = vadd.f32 %v9846, %v9848
        %v9881 = vadd.f32 %v9847, %v9849
        %v9882 = vadd.f32 %v9848, %v9850
        %v9883 = vadd.f32 %v9849, %v9851
        %v9884 = vadd.f32 %v9852, %v9822
        %v9885 = vadd.f32 %v9853, %v9823
        %v9886 = vadd.f32 %v9854, %v9824
        %v9887 = vadd.f32 %v9855, %v9825
        %v9888 = vadd.f32 %v9856, %v9826
        %v9889 = vadd.f32 %v9857, %v9827
        %v9890 = vadd.f32 %v9858, %v9828
        %v9891 = vadd.f32 %v9859, %v9829
        %v9892 = vadd.f32 %v9860, %v9830
        %v9893 = vadd.f32 %v9861, %v9831
        %v9894 = vadd.f32 %v9862, %v9832
        %v9895 = vadd.f32 %v9863, %v9833
        %v9896 = vadd.f32 %v9864, %v9834
        %v9897 = vadd.f32 %v9865, %v9835
        %v9898 = vadd.f32 %v9866, %v9836
        %v9899 = vadd.f32 %v9867, %v9837
        %v9900 = vadd.f32 %v9868, %v9838
        %v9901 = vadd.f32 %v9869, %v9839
        %v9902 = vadd.f32 %v9870, %v9840
        %v9903 = vadd.f32 %v9871, %v9841
        %v9904 = vadd.f32 %v9872, %v9842
        %v9905 = vadd.f32 %v9873, %v9843
        %v9906 = vadd.f32 %v9874, %v9844
        %v9907 = vadd.f32 %v9875, %v9845
        %v9908 = vadd.f32 %v9876, %v9846
        %v9909 = vadd.f32 %v9877, %v9847
        %v9910 = vadd.f32 %v9878, %v9848
        %v9911 = vadd.f32 %v9879, %v9849
        %v9912 = vadd.f32 %v9880, %v9850
        %v9913 = vadd.f32 %v9881, %v9851
        %v9914 = vadd.f32 %v9882, %v9818
        %v9915 = vadd.f32 %v9883, %v9819
        %v9916 = vmul.f32 %v9340, 0.11111111
        %v9917 = vpack.c.bf16 %v9885, %v9884
        %v9918 = vpack.c.bf16 %v9887, %v9886
        %v9919 = vpack.c.bf16 %v9889, %v9888
        %v9920 = vpack.c.bf16 %v9891, %v9890
        %v9921 = vpack.c.bf16 %v9893, %v9892
        %v9922 = vpack.c.bf16 %v9895, %v9894
        %v9923 = vpack.c.bf16 %v9897, %v9896
        %v9924 = vpack.c.bf16 %v9899, %v9898
        %v9925 = vpack.c.bf16 %v9901, %v9900
        %v9926 = vpack.c.bf16 %v9903, %v9902
        %v9927 = vpack.c.bf16 %v9905, %v9904
        %v9928 = vpack.c.bf16 %v9907, %v9906
        %v9929 = vpack.c.bf16 %v9909, %v9908
        %v9930 = vpack.c.bf16 %v9911, %v9910
        %v9931 = vpack.c.bf16 %v9913, %v9912
        %v9932 = vpack.c.bf16 %v9915, %v9914
        %v9935 = vunpack.c.l.s4 1983009808
        %v9936 = vunpack.c.0.s8 %v9935
        %v9937 = vlaneseq
        %v9938 = vshrl.u32 %v9937, 7
        %v9939 = vsub.s32 %v9936, %v9938
        %v9940 = vrot.slane %v9339, %v9939
        %v9941 = vcombine.high %v9940, %v9940
        %v9943 = vsel %vm1041, %v9917, 0
        %v9946 = vsel %vm1041, %v9918, 0
        %v9949 = vsel %vm1041, %v9919, 0
        %v9952 = vsel %vm1041, %v9920, 0
        %v9955 = vsel %vm1041, %v9921, 0
        %v9958 = vsel %vm1041, %v9922, 0
        %v9961 = vsel %vm1041, %v9923, 0
        %v9964 = vsel %vm1041, %v9924, 0
        %v9967 = vsel %vm1041, %v9925, 0
        %v9970 = vsel %vm1041, %v9926, 0
        %v9973 = vsel %vm1041, %v9927, 0
        %v9976 = vsel %vm1041, %v9928, 0
        %v9979 = vsel %vm1041, %v9929, 0
        %v9982 = vsel %vm1041, %v9930, 0
        %v9985 = vsel %vm1041, %v9931, 0
        %v9988 = vsel %vm1041, %v9932, 0
        %v9991 = vsel %vm1090, %v9940, 0
        %v9994 = vsel %vm1090, %v9941, 0
        %9996 = vmatprep.subr.bf16.mxu0 0
        %9997 = vmatpush1.bf16.msra.mxu0 0
        %9998 = vmatprep.subr.bf16.mxu0 0
        %9999 = vmatpush1.bf16.msra.mxu0 0
        %10000 = vmatprep.subr.bf16.mxu0 0
        %10001 = vmatpush1.bf16.msra.mxu0 0
        %10002 = vmatprep.subr.bf16.mxu0 0
        %10003 = vmatpush1.bf16.msra.mxu0 0
        %10004 = vmatprep.subr.bf16.mxu0 0
        %10005 = vmatpush1.bf16.msra.mxu0 0
        %10006 = vmatprep.subr.bf16.mxu0 0
        %10007 = vmatpush1.bf16.msra.mxu0 0
        %10008 = vmatprep.subr.bf16.mxu0 0
        %10009 = vmatpush1.bf16.msra.mxu0 0
        %10010 = vmatprep.subr.bf16.mxu0 %v9994
        %10011 = vmatpush1.bf16.msra.mxu0 %v9991
        %10012 = vmatprep.subr.bf16.mxu0 0
        %10013 = vmatpush2.bf16.msra.mxu0 0
        %10014 = vmatprep.subr.bf16.mxu0 0
        %10015 = vmatpush2.bf16.msra.mxu0 0
        %10016 = vmatprep.subr.bf16.mxu0 0
        %10017 = vmatpush2.bf16.msra.mxu0 0
        %10018 = vmatprep.subr.bf16.mxu0 0
        %10019 = vmatpush2.bf16.msra.mxu0 0
        %10020 = vmatprep.subr.bf16.mxu0 0
        %10021 = vmatpush2.bf16.msra.mxu0 0
        %10022 = vmatprep.subr.bf16.mxu0 0
        %10023 = vmatpush2.bf16.msra.mxu0 0
        %10024 = vmatprep.subr.bf16.mxu0 0
        %10025 = vmatpush2.bf16.msra.mxu0 0
        %10026 = vmatprep.subr.bf16.mxu0 0
        %10027 = vmatpush2.bf16.msra.mxu0 0
        %10028 = vmatprep.mubr.bf16.mxu0 0
        %10029 = vmatmul.mubr.bf16.gmra.mxu0 %v9943
        %v10030 = vpop.f32.mrf.mxu0
        %v10031 = vadd.f32 0.0, %v10030
        %v10032 = vpop.f32.mrf.mxu0
        %v10033 = vadd.f32 0.0, %v10032
        %v10034 = vpop.f32.mrf.mxu0
        %v10035 = vadd.f32 0.0, %v10034
        %v10036 = vpop.f32.mrf.mxu0
        %v10037 = vadd.f32 0.0, %v10036
        %10038 = vmatprep.mubr.bf16.mxu0 0
        %10039 = vmatmul.mubr.bf16.gmra.mxu0 %v9946
        %v10040 = vpop.f32.mrf.mxu0
        %v10041 = vadd.f32 0.0, %v10040
        %v10042 = vpop.f32.mrf.mxu0
        %v10043 = vadd.f32 0.0, %v10042
        %v10044 = vpop.f32.mrf.mxu0
        %v10045 = vadd.f32 0.0, %v10044
        %v10046 = vpop.f32.mrf.mxu0
        %v10047 = vadd.f32 0.0, %v10046
        %10048 = vmatprep.mubr.bf16.mxu0 0
        %10049 = vmatmul.mubr.bf16.gmra.mxu0 %v9949
        %v10050 = vpop.f32.mrf.mxu0
        %v10051 = vadd.f32 0.0, %v10050
        %v10052 = vpop.f32.mrf.mxu0
        %v10053 = vadd.f32 0.0, %v10052
        %v10054 = vpop.f32.mrf.mxu0
        %v10055 = vadd.f32 0.0, %v10054
        %v10056 = vpop.f32.mrf.mxu0
        %v10057 = vadd.f32 0.0, %v10056
        %10058 = vmatprep.mubr.bf16.mxu0 0
        %10059 = vmatmul.mubr.bf16.gmra.mxu0 %v9952
        %v10060 = vpop.f32.mrf.mxu0
        %v10061 = vadd.f32 0.0, %v10060
        %v10062 = vpop.f32.mrf.mxu0
        %v10063 = vadd.f32 0.0, %v10062
        %v10064 = vpop.f32.mrf.mxu0
        %v10065 = vadd.f32 0.0, %v10064
        %v10066 = vpop.f32.mrf.mxu0
        %v10067 = vadd.f32 0.0, %v10066
        %10068 = vmatprep.mubr.bf16.mxu0 0
        %10069 = vmatmul.mubr.bf16.gmra.mxu0 %v9955
        %v10070 = vpop.f32.mrf.mxu0
        %v10071 = vadd.f32 0.0, %v10070
        %v10072 = vpop.f32.mrf.mxu0
        %v10073 = vadd.f32 0.0, %v10072
        %v10074 = vpop.f32.mrf.mxu0
        %v10075 = vadd.f32 0.0, %v10074
        %v10076 = vpop.f32.mrf.mxu0
        %v10077 = vadd.f32 0.0, %v10076
        %10078 = vmatprep.mubr.bf16.mxu0 0
        %10079 = vmatmul.mubr.bf16.gmra.mxu0 %v9958
        %v10080 = vpop.f32.mrf.mxu0
        %v10081 = vadd.f32 0.0, %v10080
        %v10082 = vpop.f32.mrf.mxu0
        %v10083 = vadd.f32 0.0, %v10082
        %v10084 = vpop.f32.mrf.mxu0
        %v10085 = vadd.f32 0.0, %v10084
        %v10086 = vpop.f32.mrf.mxu0
        %v10087 = vadd.f32 0.0, %v10086
        %10088 = vmatprep.mubr.bf16.mxu0 0
        %10089 = vmatmul.mubr.bf16.gmra.mxu0 %v9961
        %v10090 = vpop.f32.mrf.mxu0
        %v10091 = vadd.f32 0.0, %v10090
        %v10092 = vpop.f32.mrf.mxu0
        %v10093 = vadd.f32 0.0, %v10092
        %v10094 = vpop.f32.mrf.mxu0
        %v10095 = vadd.f32 0.0, %v10094
        %v10096 = vpop.f32.mrf.mxu0
        %v10097 = vadd.f32 0.0, %v10096
        %10098 = vmatprep.mubr.bf16.mxu0 0
        %10099 = vmatmul.mubr.bf16.gmra.mxu0 %v9964
        %v10100 = vpop.f32.mrf.mxu0
        %v10101 = vadd.f32 0.0, %v10100
        %v10102 = vpop.f32.mrf.mxu0
        %v10103 = vadd.f32 0.0, %v10102
        %v10104 = vpop.f32.mrf.mxu0
        %v10105 = vadd.f32 0.0, %v10104
        %v10106 = vpop.f32.mrf.mxu0
        %v10107 = vadd.f32 0.0, %v10106
        %10108 = vmatprep.mubr.bf16.mxu0 0
        %10109 = vmatmul.mubr.bf16.gmra.mxu0 %v9967
        %v10110 = vpop.f32.mrf.mxu0
        %v10111 = vadd.f32 0.0, %v10110
        %v10112 = vpop.f32.mrf.mxu0
        %v10113 = vadd.f32 0.0, %v10112
        %v10114 = vpop.f32.mrf.mxu0
        %v10115 = vadd.f32 0.0, %v10114
        %v10116 = vpop.f32.mrf.mxu0
        %v10117 = vadd.f32 0.0, %v10116
        %10118 = vmatprep.mubr.bf16.mxu0 0
        %10119 = vmatmul.mubr.bf16.gmra.mxu0 %v9970
        %v10120 = vpop.f32.mrf.mxu0
        %v10121 = vadd.f32 0.0, %v10120
        %v10122 = vpop.f32.mrf.mxu0
        %v10123 = vadd.f32 0.0, %v10122
        %v10124 = vpop.f32.mrf.mxu0
        %v10125 = vadd.f32 0.0, %v10124
        %v10126 = vpop.f32.mrf.mxu0
        %v10127 = vadd.f32 0.0, %v10126
        %10128 = vmatprep.mubr.bf16.mxu0 0
        %10129 = vmatmul.mubr.bf16.gmra.mxu0 %v9973
        %v10130 = vpop.f32.mrf.mxu0
        %v10131 = vadd.f32 0.0, %v10130
        %v10132 = vpop.f32.mrf.mxu0
        %v10133 = vadd.f32 0.0, %v10132
        %v10134 = vpop.f32.mrf.mxu0
        %v10135 = vadd.f32 0.0, %v10134
        %v10136 = vpop.f32.mrf.mxu0
        %v10137 = vadd.f32 0.0, %v10136
        %10138 = vmatprep.mubr.bf16.mxu0 0
        %10139 = vmatmul.mubr.bf16.gmra.mxu0 %v9976
        %v10140 = vpop.f32.mrf.mxu0
        %v10141 = vadd.f32 0.0, %v10140
        %v10142 = vpop.f32.mrf.mxu0
        %v10143 = vadd.f32 0.0, %v10142
        %v10144 = vpop.f32.mrf.mxu0
        %v10145 = vadd.f32 0.0, %v10144
        %v10146 = vpop.f32.mrf.mxu0
        %v10147 = vadd.f32 0.0, %v10146
        %10148 = vmatprep.mubr.bf16.mxu0 0
        %10149 = vmatmul.mubr.bf16.gmra.mxu0 %v9979
        %v10150 = vpop.f32.mrf.mxu0
        %v10151 = vadd.f32 0.0, %v10150
        %v10152 = vpop.f32.mrf.mxu0
        %v10153 = vadd.f32 0.0, %v10152
        %v10154 = vpop.f32.mrf.mxu0
        %v10155 = vadd.f32 0.0, %v10154
        %v10156 = vpop.f32.mrf.mxu0
        %v10157 = vadd.f32 0.0, %v10156
        %10158 = vmatprep.mubr.bf16.mxu0 0
        %10159 = vmatmul.mubr.bf16.gmra.mxu0 %v9982
        %v10160 = vpop.f32.mrf.mxu0
        %v10161 = vadd.f32 0.0, %v10160
        %v10162 = vpop.f32.mrf.mxu0
        %v10163 = vadd.f32 0.0, %v10162
        %v10164 = vpop.f32.mrf.mxu0
        %v10165 = vadd.f32 0.0, %v10164
        %v10166 = vpop.f32.mrf.mxu0
        %v10167 = vadd.f32 0.0, %v10166
        %10168 = vmatprep.mubr.bf16.mxu0 0
        %10169 = vmatmul.mubr.bf16.gmra.mxu0 %v9985
        %v10170 = vpop.f32.mrf.mxu0
        %v10171 = vadd.f32 0.0, %v10170
        %v10172 = vpop.f32.mrf.mxu0
        %v10173 = vadd.f32 0.0, %v10172
        %v10174 = vpop.f32.mrf.mxu0
        %v10175 = vadd.f32 0.0, %v10174
        %v10176 = vpop.f32.mrf.mxu0
        %v10177 = vadd.f32 0.0, %v10176
        %10178 = vmatprep.mubr.bf16.mxu0 0
        %10179 = vmatmul.mubr.bf16.gmra.mxu0 %v9988
        %v10180 = vpop.f32.mrf.mxu0
        %v10181 = vadd.f32 0.0, %v10180
        %v10182 = vpop.f32.mrf.mxu0
        %v10183 = vadd.f32 0.0, %v10182
        %v10184 = vpop.f32.mrf.mxu0
        %v10185 = vadd.f32 0.0, %v10184
        %v10186 = vpop.f32.mrf.mxu0
        %v10187 = vadd.f32 0.0, %v10186
        %10188 = vdwg.mxu0
        %v10190 = vlaneseq
        %v10191 = vshrl.u32 %v10190, 7
        %v10192 = vsub.s32 0, %v10191
        %v10193 = vrot.slane %v9916, %v10192
        %v10194 = vlaneseq
        %v10195 = vshrl.u32 %v10194, 7
        %v10196 = vsub.s32 1, %v10195
        %v10197 = vrot.slane %v9916, %v10196
        %v10200 = vmul.f32 %v10031, %v10193
        %v10201 = vmul.f32 %v10033, %v10197
        %v10202 = vmul.f32 %v10035, %v10193
        %v10203 = vmul.f32 %v10037, %v10197
        %v10204 = vmul.f32 %v10041, %v10193
        %v10205 = vmul.f32 %v10043, %v10197
        %v10206 = vmul.f32 %v10045, %v10193
        %v10207 = vmul.f32 %v10047, %v10197
        %v10208 = vmul.f32 %v10051, %v10193
        %v10209 = vmul.f32 %v10053, %v10197
        %v10210 = vmul.f32 %v10055, %v10193
        %v10211 = vmul.f32 %v10057, %v10197
        %v10212 = vmul.f32 %v10061, %v10193
        %v10213 = vmul.f32 %v10063, %v10197
        %v10214 = vmul.f32 %v10065, %v10193
        %v10215 = vmul.f32 %v10067, %v10197
        %v10216 = vmul.f32 %v10071, %v10193
        %v10217 = vmul.f32 %v10073, %v10197
        %v10218 = vmul.f32 %v10075, %v10193
        %v10219 = vmul.f32 %v10077, %v10197
        %v10220 = vmul.f32 %v10081, %v10193
        %v10221 = vmul.f32 %v10083, %v10197
        %v10222 = vmul.f32 %v10085, %v10193
        %v10223 = vmul.f32 %v10087, %v10197
        %v10224 = vmul.f32 %v10091, %v10193
        %v10225 = vmul.f32 %v10093, %v10197
        %v10226 = vmul.f32 %v10095, %v10193
        %v10227 = vmul.f32 %v10097, %v10197
        %v10228 = vmul.f32 %v10101, %v10193
        %v10229 = vmul.f32 %v10103, %v10197
        %v10230 = vmul.f32 %v10105, %v10193
        %v10231 = vmul.f32 %v10107, %v10197
        %v10232 = vmul.f32 %v10111, %v10193
        %v10233 = vmul.f32 %v10113, %v10197
        %v10234 = vmul.f32 %v10115, %v10193
        %v10235 = vmul.f32 %v10117, %v10197
        %v10236 = vmul.f32 %v10121, %v10193
        %v10237 = vmul.f32 %v10123, %v10197
        %v10238 = vmul.f32 %v10125, %v10193
        %v10239 = vmul.f32 %v10127, %v10197
        %v10240 = vmul.f32 %v10131, %v10193
        %v10241 = vmul.f32 %v10133, %v10197
        %v10242 = vmul.f32 %v10135, %v10193
        %v10243 = vmul.f32 %v10137, %v10197
        %v10244 = vmul.f32 %v10141, %v10193
        %v10245 = vmul.f32 %v10143, %v10197
        %v10246 = vmul.f32 %v10145, %v10193
        %v10247 = vmul.f32 %v10147, %v10197
        %v10248 = vmul.f32 %v10151, %v10193
        %v10249 = vmul.f32 %v10153, %v10197
        %v10250 = vmul.f32 %v10155, %v10193
        %v10251 = vmul.f32 %v10157, %v10197
        %v10252 = vmul.f32 %v10161, %v10193
        %v10253 = vmul.f32 %v10163, %v10197
        %v10254 = vmul.f32 %v10165, %v10193
        %v10255 = vmul.f32 %v10167, %v10197
        %v10256 = vmul.f32 %v10171, %v10193
        %v10257 = vmul.f32 %v10173, %v10197
        %v10258 = vmul.f32 %v10175, %v10193
        %v10259 = vmul.f32 %v10177, %v10197
        %v10260 = vmul.f32 %v10181, %v10193
        %v10261 = vmul.f32 %v10183, %v10197
        %v10262 = vmul.f32 %v10185, %v10193
        %v10263 = vmul.f32 %v10187, %v10197
        %v10265 = vlaneseq
        %v10266 = vshrl.u32 %v10265, 7
        %v10267 = vsub.s32 0, %v10266
        %v10268 = vrot.slane %v9341, %v10267
        %v10269 = vlaneseq
        %v10270 = vshrl.u32 %v10269, 7
        %v10271 = vsub.s32 1, %v10270
        %v10272 = vrot.slane %v9341, %v10271
        %v10275 = vadd.f32 %v10200, %v10268
        %v10276 = vadd.f32 %v10201, %v10272
        %v10277 = vadd.f32 %v10202, %v10268
        %v10278 = vadd.f32 %v10203, %v10272
        %v10279 = vadd.f32 %v10204, %v10268
        %v10280 = vadd.f32 %v10205, %v10272
        %v10281 = vadd.f32 %v10206, %v10268
        %v10282 = vadd.f32 %v10207, %v10272
        %v10283 = vadd.f32 %v10208, %v10268
        %v10284 = vadd.f32 %v10209, %v10272
        %v10285 = vadd.f32 %v10210, %v10268
        %v10286 = vadd.f32 %v10211, %v10272
        %v10287 = vadd.f32 %v10212, %v10268
        %v10288 = vadd.f32 %v10213, %v10272
        %v10289 = vadd.f32 %v10214, %v10268
        %v10290 = vadd.f32 %v10215, %v10272
        %v10291 = vadd.f32 %v10216, %v10268
        %v10292 = vadd.f32 %v10217, %v10272
        %v10293 = vadd.f32 %v10218, %v10268
        %v10294 = vadd.f32 %v10219, %v10272
        %v10295 = vadd.f32 %v10220, %v10268
        %v10296 = vadd.f32 %v10221, %v10272
        %v10297 = vadd.f32 %v10222, %v10268
        %v10298 = vadd.f32 %v10223, %v10272
        %v10299 = vadd.f32 %v10224, %v10268
        %v10300 = vadd.f32 %v10225, %v10272
        %v10301 = vadd.f32 %v10226, %v10268
        %v10302 = vadd.f32 %v10227, %v10272
        %v10303 = vadd.f32 %v10228, %v10268
        %v10304 = vadd.f32 %v10229, %v10272
        %v10305 = vadd.f32 %v10230, %v10268
        %v10306 = vadd.f32 %v10231, %v10272
        %v10307 = vadd.f32 %v10232, %v10268
        %v10308 = vadd.f32 %v10233, %v10272
        %v10309 = vadd.f32 %v10234, %v10268
        %v10310 = vadd.f32 %v10235, %v10272
        %v10311 = vadd.f32 %v10236, %v10268
        %v10312 = vadd.f32 %v10237, %v10272
        %v10313 = vadd.f32 %v10238, %v10268
        %v10314 = vadd.f32 %v10239, %v10272
        %v10315 = vadd.f32 %v10240, %v10268
        %v10316 = vadd.f32 %v10241, %v10272
        %v10317 = vadd.f32 %v10242, %v10268
        %v10318 = vadd.f32 %v10243, %v10272
        %v10319 = vadd.f32 %v10244, %v10268
        %v10320 = vadd.f32 %v10245, %v10272
        %v10321 = vadd.f32 %v10246, %v10268
        %v10322 = vadd.f32 %v10247, %v10272
        %v10323 = vadd.f32 %v10248, %v10268
        %v10324 = vadd.f32 %v10249, %v10272
        %v10325 = vadd.f32 %v10250, %v10268
        %v10326 = vadd.f32 %v10251, %v10272
        %v10327 = vadd.f32 %v10252, %v10268
        %v10328 = vadd.f32 %v10253, %v10272
        %v10329 = vadd.f32 %v10254, %v10268
        %v10330 = vadd.f32 %v10255, %v10272
        %v10331 = vadd.f32 %v10256, %v10268
        %v10332 = vadd.f32 %v10257, %v10272
        %v10333 = vadd.f32 %v10258, %v10268
        %v10334 = vadd.f32 %v10259, %v10272
        %v10335 = vadd.f32 %v10260, %v10268
        %v10336 = vadd.f32 %v10261, %v10272
        %v10337 = vadd.f32 %v10262, %v10268
        %v10338 = vadd.f32 %v10263, %v10272
        %vm10339 = vcmp.ge.f32.partialorder %v10275, 0.0
        %vm10340 = vcmp.ge.f32.partialorder %v10276, 0.0
        %vm10341 = vcmp.ge.f32.partialorder %v10277, 0.0
        %vm10342 = vcmp.ge.f32.partialorder %v10278, 0.0
        %vm10343 = vcmp.ge.f32.partialorder %v10279, 0.0
        %vm10344 = vcmp.ge.f32.partialorder %v10280, 0.0
        %vm10345 = vcmp.ge.f32.partialorder %v10281, 0.0
        %vm10346 = vcmp.ge.f32.partialorder %v10282, 0.0
        %vm10347 = vcmp.ge.f32.partialorder %v10283, 0.0
        %vm10348 = vcmp.ge.f32.partialorder %v10284, 0.0
        %vm10349 = vcmp.ge.f32.partialorder %v10285, 0.0
        %vm10350 = vcmp.ge.f32.partialorder %v10286, 0.0
        %vm10351 = vcmp.ge.f32.partialorder %v10287, 0.0
        %vm10352 = vcmp.ge.f32.partialorder %v10288, 0.0
        %vm10353 = vcmp.ge.f32.partialorder %v10289, 0.0
        %vm10354 = vcmp.ge.f32.partialorder %v10290, 0.0
        %vm10355 = vcmp.ge.f32.partialorder %v10291, 0.0
        %vm10356 = vcmp.ge.f32.partialorder %v10292, 0.0
        %vm10357 = vcmp.ge.f32.partialorder %v10293, 0.0
        %vm10358 = vcmp.ge.f32.partialorder %v10294, 0.0
        %vm10359 = vcmp.ge.f32.partialorder %v10295, 0.0
        %vm10360 = vcmp.ge.f32.partialorder %v10296, 0.0
        %vm10361 = vcmp.ge.f32.partialorder %v10297, 0.0
        %vm10362 = vcmp.ge.f32.partialorder %v10298, 0.0
        %vm10363 = vcmp.ge.f32.partialorder %v10299, 0.0
        %vm10364 = vcmp.ge.f32.partialorder %v10300, 0.0
        %vm10365 = vcmp.ge.f32.partialorder %v10301, 0.0
        %vm10366 = vcmp.ge.f32.partialorder %v10302, 0.0
        %vm10367 = vcmp.ge.f32.partialorder %v10303, 0.0
        %vm10368 = vcmp.ge.f32.partialorder %v10304, 0.0
        %vm10369 = vcmp.ge.f32.partialorder %v10305, 0.0
        %vm10370 = vcmp.ge.f32.partialorder %v10306, 0.0
        %vm10371 = vcmp.ge.f32.partialorder %v10307, 0.0
        %vm10372 = vcmp.ge.f32.partialorder %v10308, 0.0
        %vm10373 = vcmp.ge.f32.partialorder %v10309, 0.0
        %vm10374 = vcmp.ge.f32.partialorder %v10310, 0.0
        %vm10375 = vcmp.ge.f32.partialorder %v10311, 0.0
        %vm10376 = vcmp.ge.f32.partialorder %v10312, 0.0
        %vm10377 = vcmp.ge.f32.partialorder %v10313, 0.0
        %vm10378 = vcmp.ge.f32.partialorder %v10314, 0.0
        %vm10379 = vcmp.ge.f32.partialorder %v10315, 0.0
        %vm10380 = vcmp.ge.f32.partialorder %v10316, 0.0
        %vm10381 = vcmp.ge.f32.partialorder %v10317, 0.0
        %vm10382 = vcmp.ge.f32.partialorder %v10318, 0.0
        %vm10383 = vcmp.ge.f32.partialorder %v10319, 0.0
        %vm10384 = vcmp.ge.f32.partialorder %v10320, 0.0
        %vm10385 = vcmp.ge.f32.partialorder %v10321, 0.0
        %vm10386 = vcmp.ge.f32.partialorder %v10322, 0.0
        %vm10387 = vcmp.ge.f32.partialorder %v10323, 0.0
        %vm10388 = vcmp.ge.f32.partialorder %v10324, 0.0
        %vm10389 = vcmp.ge.f32.partialorder %v10325, 0.0
        %vm10390 = vcmp.ge.f32.partialorder %v10326, 0.0
        %vm10391 = vcmp.ge.f32.partialorder %v10327, 0.0
        %vm10392 = vcmp.ge.f32.partialorder %v10328, 0.0
        %vm10393 = vcmp.ge.f32.partialorder %v10329, 0.0
        %vm10394 = vcmp.ge.f32.partialorder %v10330, 0.0
        %vm10395 = vcmp.ge.f32.partialorder %v10331, 0.0
        %vm10396 = vcmp.ge.f32.partialorder %v10332, 0.0
        %vm10397 = vcmp.ge.f32.partialorder %v10333, 0.0
        %vm10398 = vcmp.ge.f32.partialorder %v10334, 0.0
        %vm10399 = vcmp.ge.f32.partialorder %v10335, 0.0
        %vm10400 = vcmp.ge.f32.partialorder %v10336, 0.0
        %vm10401 = vcmp.ge.f32.partialorder %v10337, 0.0
        %vm10402 = vcmp.ge.f32.partialorder %v10338, 0.0
        %v10403 = vmul.f32 %v10275, 0.2
        %v10404 = vmul.f32 %v10276, 0.2
        %v10405 = vmul.f32 %v10277, 0.2
        %v10406 = vmul.f32 %v10278, 0.2
        %v10407 = vmul.f32 %v10279, 0.2
        %v10408 = vmul.f32 %v10280, 0.2
        %v10409 = vmul.f32 %v10281, 0.2
        %v10410 = vmul.f32 %v10282, 0.2
        %v10411 = vmul.f32 %v10283, 0.2
        %v10412 = vmul.f32 %v10284, 0.2
        %v10413 = vmul.f32 %v10285, 0.2
        %v10414 = vmul.f32 %v10286, 0.2
        %v10415 = vmul.f32 %v10287, 0.2
        %v10416 = vmul.f32 %v10288, 0.2
        %v10417 = vmul.f32 %v10289, 0.2
        %v10418 = vmul.f32 %v10290, 0.2
        %v10419 = vmul.f32 %v10291, 0.2
        %v10420 = vmul.f32 %v10292, 0.2
        %v10421 = vmul.f32 %v10293, 0.2
        %v10422 = vmul.f32 %v10294, 0.2
        %v10423 = vmul.f32 %v10295, 0.2
        %v10424 = vmul.f32 %v10296, 0.2
        %v10425 = vmul.f32 %v10297, 0.2
        %v10426 = vmul.f32 %v10298, 0.2
        %v10427 = vmul.f32 %v10299, 0.2
        %v10428 = vmul.f32 %v10300, 0.2
        %v10429 = vmul.f32 %v10301, 0.2
        %v10430 = vmul.f32 %v10302, 0.2
        %v10431 = vmul.f32 %v10303, 0.2
        %v10432 = vmul.f32 %v10304, 0.2
        %v10433 = vmul.f32 %v10305, 0.2
        %v10434 = vmul.f32 %v10306, 0.2
        %v10435 = vmul.f32 %v10307, 0.2
        %v10436 = vmul.f32 %v10308, 0.2
        %v10437 = vmul.f32 %v10309, 0.2
        %v10438 = vmul.f32 %v10310, 0.2
        %v10439 = vmul.f32 %v10311, 0.2
        %v10440 = vmul.f32 %v10312, 0.2
        %v10441 = vmul.f32 %v10313, 0.2
        %v10442 = vmul.f32 %v10314, 0.2
        %v10443 = vmul.f32 %v10315, 0.2
        %v10444 = vmul.f32 %v10316, 0.2
        %v10445 = vmul.f32 %v10317, 0.2
        %v10446 = vmul.f32 %v10318, 0.2
        %v10447 = vmul.f32 %v10319, 0.2
        %v10448 = vmul.f32 %v10320, 0.2
        %v10449 = vmul.f32 %v10321, 0.2
        %v10450 = vmul.f32 %v10322, 0.2
        %v10451 = vmul.f32 %v10323, 0.2
        %v10452 = vmul.f32 %v10324, 0.2
        %v10453 = vmul.f32 %v10325, 0.2
        %v10454 = vmul.f32 %v10326, 0.2
        %v10455 = vmul.f32 %v10327, 0.2
        %v10456 = vmul.f32 %v10328, 0.2
        %v10457 = vmul.f32 %v10329, 0.2
        %v10458 = vmul.f32 %v10330, 0.2
        %v10459 = vmul.f32 %v10331, 0.2
        %v10460 = vmul.f32 %v10332, 0.2
        %v10461 = vmul.f32 %v10333, 0.2
        %v10462 = vmul.f32 %v10334, 0.2
        %v10463 = vmul.f32 %v10335, 0.2
        %v10464 = vmul.f32 %v10336, 0.2
        %v10465 = vmul.f32 %v10337, 0.2
        %v10466 = vmul.f32 %v10338, 0.2
        %v10467 = vsel %vm10339, %v10275, %v10403
        %v10468 = vsel %vm10340, %v10276, %v10404
        %v10469 = vsel %vm10341, %v10277, %v10405
        %v10470 = vsel %vm10342, %v10278, %v10406
        %v10471 = vsel %vm10343, %v10279, %v10407
        %v10472 = vsel %vm10344, %v10280, %v10408
        %v10473 = vsel %vm10345, %v10281, %v10409
        %v10474 = vsel %vm10346, %v10282, %v10410
        %v10475 = vsel %vm10347, %v10283, %v10411
        %v10476 = vsel %vm10348, %v10284, %v10412
        %v10477 = vsel %vm10349, %v10285, %v10413
        %v10478 = vsel %vm10350, %v10286, %v10414
        %v10479 = vsel %vm10351, %v10287, %v10415
        %v10480 = vsel %vm10352, %v10288, %v10416
        %v10481 = vsel %vm10353, %v10289, %v10417
        %v10482 = vsel %vm10354, %v10290, %v10418
        %v10483 = vsel %vm10355, %v10291, %v10419
        %v10484 = vsel %vm10356, %v10292, %v10420
        %v10485 = vsel %vm10357, %v10293, %v10421
        %v10486 = vsel %vm10358, %v10294, %v10422
        %v10487 = vsel %vm10359, %v10295, %v10423
        %v10488 = vsel %vm10360, %v10296, %v10424
        %v10489 = vsel %vm10361, %v10297, %v10425
        %v10490 = vsel %vm10362, %v10298, %v10426
        %v10491 = vsel %vm10363, %v10299, %v10427
        %v10492 = vsel %vm10364, %v10300, %v10428
        %v10493 = vsel %vm10365, %v10301, %v10429
        %v10494 = vsel %vm10366, %v10302, %v10430
        %v10495 = vsel %vm10367, %v10303, %v10431
        %v10496 = vsel %vm10368, %v10304, %v10432
        %v10497 = vsel %vm10369, %v10305, %v10433
        %v10498 = vsel %vm10370, %v10306, %v10434
        %v10499 = vsel %vm10371, %v10307, %v10435
        %v10500 = vsel %vm10372, %v10308, %v10436
        %v10501 = vsel %vm10373, %v10309, %v10437
        %v10502 = vsel %vm10374, %v10310, %v10438
        %v10503 = vsel %vm10375, %v10311, %v10439
        %v10504 = vsel %vm10376, %v10312, %v10440
        %v10505 = vsel %vm10377, %v10313, %v10441
        %v10506 = vsel %vm10378, %v10314, %v10442
        %v10507 = vsel %vm10379, %v10315, %v10443
        %v10508 = vsel %vm10380, %v10316, %v10444
        %v10509 = vsel %vm10381, %v10317, %v10445
        %v10510 = vsel %vm10382, %v10318, %v10446
        %v10511 = vsel %vm10383, %v10319, %v10447
        %v10512 = vsel %vm10384, %v10320, %v10448
        %v10513 = vsel %vm10385, %v10321, %v10449
        %v10514 = vsel %vm10386, %v10322, %v10450
        %v10515 = vsel %vm10387, %v10323, %v10451
        %v10516 = vsel %vm10388, %v10324, %v10452
        %v10517 = vsel %vm10389, %v10325, %v10453
        %v10518 = vsel %vm10390, %v10326, %v10454
        %v10519 = vsel %vm10391, %v10327, %v10455
        %v10520 = vsel %vm10392, %v10328, %v10456
        %v10521 = vsel %vm10393, %v10329, %v10457
        %v10522 = vsel %vm10394, %v10330, %v10458
        %v10523 = vsel %vm10395, %v10331, %v10459
        %v10524 = vsel %vm10396, %v10332, %v10460
        %v10525 = vsel %vm10397, %v10333, %v10461
        %v10526 = vsel %vm10398, %v10334, %v10462
        %v10527 = vsel %vm10399, %v10335, %v10463
        %v10528 = vsel %vm10400, %v10336, %v10464
        %v10529 = vsel %vm10401, %v10337, %v10465
        %v10530 = vsel %vm10402, %v10338, %v10466
        %10595 = vrot.lane.b32.xlu0 %v4250, 64
        %v10596 = vpop.permute.xlu0 %10595
        %10597 = vrot.lane.b32.xlu0 %v4251, 64
        %v10598 = vpop.permute.xlu0 %10597
        %10599 = vrot.lane.b32.xlu0 %v4252, 64
        %v10600 = vpop.permute.xlu0 %10599
        %10601 = vrot.lane.b32.xlu0 %v4253, 64
        %v10602 = vpop.permute.xlu0 %10601
        %10603 = vrot.lane.b32.xlu0 %v4254, 64
        %v10604 = vpop.permute.xlu0 %10603
        %10605 = vrot.lane.b32.xlu0 %v4255, 64
        %v10606 = vpop.permute.xlu0 %10605
        %10607 = vrot.lane.b32.xlu0 %v4256, 64
        %v10608 = vpop.permute.xlu0 %10607
        %10609 = vrot.lane.b32.xlu0 %v4257, 64
        %v10610 = vpop.permute.xlu0 %10609
        %10611 = vrot.lane.b32.xlu0 %v4258, 64
        %v10612 = vpop.permute.xlu0 %10611
        %10613 = vrot.lane.b32.xlu0 %v4259, 64
        %v10614 = vpop.permute.xlu0 %10613
        %10615 = vrot.lane.b32.xlu0 %v4260, 64
        %v10616 = vpop.permute.xlu0 %10615
        %10617 = vrot.lane.b32.xlu0 %v4261, 64
        %v10618 = vpop.permute.xlu0 %10617
        %10619 = vrot.lane.b32.xlu0 %v4262, 64
        %v10620 = vpop.permute.xlu0 %10619
        %10621 = vrot.lane.b32.xlu0 %v4263, 64
        %v10622 = vpop.permute.xlu0 %10621
        %10623 = vrot.lane.b32.xlu0 %v4264, 64
        %v10624 = vpop.permute.xlu0 %10623
        %10625 = vrot.lane.b32.xlu0 %v4265, 64
        %v10626 = vpop.permute.xlu0 %10625
        %10627 = vrot.lane.b32.xlu0 %v4266, 64
        %v10628 = vpop.permute.xlu0 %10627
        %10629 = vrot.lane.b32.xlu0 %v4267, 64
        %v10630 = vpop.permute.xlu0 %10629
        %10631 = vrot.lane.b32.xlu0 %v4268, 64
        %v10632 = vpop.permute.xlu0 %10631
        %10633 = vrot.lane.b32.xlu0 %v4269, 64
        %v10634 = vpop.permute.xlu0 %10633
        %10635 = vrot.lane.b32.xlu0 %v4270, 64
        %v10636 = vpop.permute.xlu0 %10635
        %10637 = vrot.lane.b32.xlu0 %v4271, 64
        %v10638 = vpop.permute.xlu0 %10637
        %10639 = vrot.lane.b32.xlu0 %v4272, 64
        %v10640 = vpop.permute.xlu0 %10639
        %10641 = vrot.lane.b32.xlu0 %v4273, 64
        %v10642 = vpop.permute.xlu0 %10641
        %10643 = vrot.lane.b32.xlu0 %v4274, 64
        %v10644 = vpop.permute.xlu0 %10643
        %10645 = vrot.lane.b32.xlu0 %v4275, 64
        %v10646 = vpop.permute.xlu0 %10645
        %10647 = vrot.lane.b32.xlu0 %v4276, 64
        %v10648 = vpop.permute.xlu0 %10647
        %10649 = vrot.lane.b32.xlu0 %v4277, 64
        %v10650 = vpop.permute.xlu0 %10649
        %10651 = vrot.lane.b32.xlu0 %v4278, 64
        %v10652 = vpop.permute.xlu0 %10651
        %10653 = vrot.lane.b32.xlu0 %v4279, 64
        %v10654 = vpop.permute.xlu0 %10653
        %10655 = vrot.lane.b32.xlu0 %v4280, 64
        %v10656 = vpop.permute.xlu0 %10655
        %10657 = vrot.lane.b32.xlu0 %v4281, 64
        %v10658 = vpop.permute.xlu0 %10657
        %10659 = vrot.lane.b32.xlu0 %v4282, 64
        %v10660 = vpop.permute.xlu0 %10659
        %10661 = vrot.lane.b32.xlu0 %v4283, 64
        %v10662 = vpop.permute.xlu0 %10661
        %10663 = vrot.lane.b32.xlu0 %v4284, 64
        %v10664 = vpop.permute.xlu0 %10663
        %10665 = vrot.lane.b32.xlu0 %v4285, 64
        %v10666 = vpop.permute.xlu0 %10665
        %10667 = vrot.lane.b32.xlu0 %v4286, 64
        %v10668 = vpop.permute.xlu0 %10667
        %10669 = vrot.lane.b32.xlu0 %v4287, 64
        %v10670 = vpop.permute.xlu0 %10669
        %10671 = vrot.lane.b32.xlu0 %v4288, 64
        %v10672 = vpop.permute.xlu0 %10671
        %10673 = vrot.lane.b32.xlu0 %v4289, 64
        %v10674 = vpop.permute.xlu0 %10673
        %10675 = vrot.lane.b32.xlu0 %v4290, 64
        %v10676 = vpop.permute.xlu0 %10675
        %10677 = vrot.lane.b32.xlu0 %v4291, 64
        %v10678 = vpop.permute.xlu0 %10677
        %10679 = vrot.lane.b32.xlu0 %v4292, 64
        %v10680 = vpop.permute.xlu0 %10679
        %10681 = vrot.lane.b32.xlu0 %v4293, 64
        %v10682 = vpop.permute.xlu0 %10681
        %10683 = vrot.lane.b32.xlu0 %v4294, 64
        %v10684 = vpop.permute.xlu0 %10683
        %10685 = vrot.lane.b32.xlu0 %v4295, 64
        %v10686 = vpop.permute.xlu0 %10685
        %10687 = vrot.lane.b32.xlu0 %v4296, 64
        %v10688 = vpop.permute.xlu0 %10687
        %10689 = vrot.lane.b32.xlu0 %v4297, 64
        %v10690 = vpop.permute.xlu0 %10689
        %10691 = vrot.lane.b32.xlu0 %v4298, 64
        %v10692 = vpop.permute.xlu0 %10691
        %10693 = vrot.lane.b32.xlu0 %v4299, 64
        %v10694 = vpop.permute.xlu0 %10693
        %10695 = vrot.lane.b32.xlu0 %v4300, 64
        %v10696 = vpop.permute.xlu0 %10695
        %10697 = vrot.lane.b32.xlu0 %v4301, 64
        %v10698 = vpop.permute.xlu0 %10697
        %10699 = vrot.lane.b32.xlu0 %v4302, 64
        %v10700 = vpop.permute.xlu0 %10699
        %10701 = vrot.lane.b32.xlu0 %v4303, 64
        %v10702 = vpop.permute.xlu0 %10701
        %10703 = vrot.lane.b32.xlu0 %v4304, 64
        %v10704 = vpop.permute.xlu0 %10703
        %10705 = vrot.lane.b32.xlu0 %v4305, 64
        %v10706 = vpop.permute.xlu0 %10705
        %10707 = vrot.lane.b32.xlu0 %v4306, 64
        %v10708 = vpop.permute.xlu0 %10707
        %10709 = vrot.lane.b32.xlu0 %v4307, 64
        %v10710 = vpop.permute.xlu0 %10709
        %10711 = vrot.lane.b32.xlu0 %v4308, 64
        %v10712 = vpop.permute.xlu0 %10711
        %10713 = vrot.lane.b32.xlu0 %v4309, 64
        %v10714 = vpop.permute.xlu0 %10713
        %10715 = vrot.lane.b32.xlu0 %v4310, 64
        %v10716 = vpop.permute.xlu0 %10715
        %10717 = vrot.lane.b32.xlu0 %v4311, 64
        %v10718 = vpop.permute.xlu0 %10717
        %10719 = vrot.lane.b32.xlu0 %v4312, 64
        %v10720 = vpop.permute.xlu0 %10719
        %10721 = vrot.lane.b32.xlu0 %v4313, 64
        %v10722 = vpop.permute.xlu0 %10721
        %vm10723 = vcmask 523264
        %v10724 = vsel %vm10723, %v10596, %v10598
        %v10725 = vsel %vm10723, %v10600, %v10602
        %v10726 = vsel %vm10723, %v10604, %v10606
        %v10727 = vsel %vm10723, %v10608, %v10610
        %v10728 = vsel %vm10723, %v10612, %v10614
        %v10729 = vsel %vm10723, %v10616, %v10618
        %v10730 = vsel %vm10723, %v10620, %v10622
        %v10731 = vsel %vm10723, %v10624, %v10626
        %v10732 = vsel %vm10723, %v10628, %v10630
        %v10733 = vsel %vm10723, %v10632, %v10634
        %v10734 = vsel %vm10723, %v10636, %v10638
        %v10735 = vsel %vm10723, %v10640, %v10642
        %v10736 = vsel %vm10723, %v10644, %v10646
        %v10737 = vsel %vm10723, %v10648, %v10650
        %v10738 = vsel %vm10723, %v10652, %v10654
        %v10739 = vsel %vm10723, %v10656, %v10658
        %v10740 = vsel %vm10723, %v10660, %v10662
        %v10741 = vsel %vm10723, %v10664, %v10666
        %v10742 = vsel %vm10723, %v10668, %v10670
        %v10743 = vsel %vm10723, %v10672, %v10674
        %v10744 = vsel %vm10723, %v10676, %v10678
        %v10745 = vsel %vm10723, %v10680, %v10682
        %v10746 = vsel %vm10723, %v10684, %v10686
        %v10747 = vsel %vm10723, %v10688, %v10690
        %v10748 = vsel %vm10723, %v10692, %v10694
        %v10749 = vsel %vm10723, %v10696, %v10698
        %v10750 = vsel %vm10723, %v10700, %v10702
        %v10751 = vsel %vm10723, %v10704, %v10706
        %v10752 = vsel %vm10723, %v10708, %v10710
        %v10753 = vsel %vm10723, %v10712, %v10714
        %v10754 = vsel %vm10723, %v10716, %v10718
        %v10755 = vsel %vm10723, %v10720, %v10722
        %10884 = vrot.lane.b32.xlu0 %v10467, 64
        %v10885 = vpop.permute.xlu0 %10884
        %10886 = vrot.lane.b32.xlu0 %v10468, 64
        %v10887 = vpop.permute.xlu0 %10886
        %10888 = vrot.lane.b32.xlu0 %v10469, 64
        %v10889 = vpop.permute.xlu0 %10888
        %10890 = vrot.lane.b32.xlu0 %v10470, 64
        %v10891 = vpop.permute.xlu0 %10890
        %10892 = vrot.lane.b32.xlu0 %v10471, 64
        %v10893 = vpop.permute.xlu0 %10892
        %10894 = vrot.lane.b32.xlu0 %v10472, 64
        %v10895 = vpop.permute.xlu0 %10894
        %10896 = vrot.lane.b32.xlu0 %v10473, 64
        %v10897 = vpop.permute.xlu0 %10896
        %10898 = vrot.lane.b32.xlu0 %v10474, 64
        %v10899 = vpop.permute.xlu0 %10898
        %10900 = vrot.lane.b32.xlu0 %v10475, 64
        %v10901 = vpop.permute.xlu0 %10900
        %10902 = vrot.lane.b32.xlu0 %v10476, 64
        %v10903 = vpop.permute.xlu0 %10902
        %10904 = vrot.lane.b32.xlu0 %v10477, 64
        %v10905 = vpop.permute.xlu0 %10904
        %10906 = vrot.lane.b32.xlu0 %v10478, 64
        %v10907 = vpop.permute.xlu0 %10906
        %10908 = vrot.lane.b32.xlu0 %v10479, 64
        %v10909 = vpop.permute.xlu0 %10908
        %10910 = vrot.lane.b32.xlu0 %v10480, 64
        %v10911 = vpop.permute.xlu0 %10910
        %10912 = vrot.lane.b32.xlu0 %v10481, 64
        %v10913 = vpop.permute.xlu0 %10912
        %10914 = vrot.lane.b32.xlu0 %v10482, 64
        %v10915 = vpop.permute.xlu0 %10914
        %10916 = vrot.lane.b32.xlu0 %v10483, 64
        %v10917 = vpop.permute.xlu0 %10916
        %10918 = vrot.lane.b32.xlu0 %v10484, 64
        %v10919 = vpop.permute.xlu0 %10918
        %10920 = vrot.lane.b32.xlu0 %v10485, 64
        %v10921 = vpop.permute.xlu0 %10920
        %10922 = vrot.lane.b32.xlu0 %v10486, 64
        %v10923 = vpop.permute.xlu0 %10922
        %10924 = vrot.lane.b32.xlu0 %v10487, 64
        %v10925 = vpop.permute.xlu0 %10924
        %10926 = vrot.lane.b32.xlu0 %v10488, 64
        %v10927 = vpop.permute.xlu0 %10926
        %10928 = vrot.lane.b32.xlu0 %v10489, 64
        %v10929 = vpop.permute.xlu0 %10928
        %10930 = vrot.lane.b32.xlu0 %v10490, 64
        %v10931 = vpop.permute.xlu0 %10930
        %10932 = vrot.lane.b32.xlu0 %v10491, 64
        %v10933 = vpop.permute.xlu0 %10932
        %10934 = vrot.lane.b32.xlu0 %v10492, 64
        %v10935 = vpop.permute.xlu0 %10934
        %10936 = vrot.lane.b32.xlu0 %v10493, 64
        %v10937 = vpop.permute.xlu0 %10936
        %10938 = vrot.lane.b32.xlu0 %v10494, 64
        %v10939 = vpop.permute.xlu0 %10938
        %10940 = vrot.lane.b32.xlu0 %v10495, 64
        %v10941 = vpop.permute.xlu0 %10940
        %10942 = vrot.lane.b32.xlu0 %v10496, 64
        %v10943 = vpop.permute.xlu0 %10942
        %10944 = vrot.lane.b32.xlu0 %v10497, 64
        %v10945 = vpop.permute.xlu0 %10944
        %10946 = vrot.lane.b32.xlu0 %v10498, 64
        %v10947 = vpop.permute.xlu0 %10946
        %10948 = vrot.lane.b32.xlu0 %v10499, 64
        %v10949 = vpop.permute.xlu0 %10948
        %10950 = vrot.lane.b32.xlu0 %v10500, 64
        %v10951 = vpop.permute.xlu0 %10950
        %10952 = vrot.lane.b32.xlu0 %v10501, 64
        %v10953 = vpop.permute.xlu0 %10952
        %10954 = vrot.lane.b32.xlu0 %v10502, 64
        %v10955 = vpop.permute.xlu0 %10954
        %10956 = vrot.lane.b32.xlu0 %v10503, 64
        %v10957 = vpop.permute.xlu0 %10956
        %10958 = vrot.lane.b32.xlu0 %v10504, 64
        %v10959 = vpop.permute.xlu0 %10958
        %10960 = vrot.lane.b32.xlu0 %v10505, 64
        %v10961 = vpop.permute.xlu0 %10960
        %10962 = vrot.lane.b32.xlu0 %v10506, 64
        %v10963 = vpop.permute.xlu0 %10962
        %10964 = vrot.lane.b32.xlu0 %v10507, 64
        %v10965 = vpop.permute.xlu0 %10964
        %10966 = vrot.lane.b32.xlu0 %v10508, 64
        %v10967 = vpop.permute.xlu0 %10966
        %10968 = vrot.lane.b32.xlu0 %v10509, 64
        %v10969 = vpop.permute.xlu0 %10968
        %10970 = vrot.lane.b32.xlu0 %v10510, 64
        %v10971 = vpop.permute.xlu0 %10970
        %10972 = vrot.lane.b32.xlu0 %v10511, 64
        %v10973 = vpop.permute.xlu0 %10972
        %10974 = vrot.lane.b32.xlu0 %v10512, 64
        %v10975 = vpop.permute.xlu0 %10974
        %10976 = vrot.lane.b32.xlu0 %v10513, 64
        %v10977 = vpop.permute.xlu0 %10976
        %10978 = vrot.lane.b32.xlu0 %v10514, 64
        %v10979 = vpop.permute.xlu0 %10978
        %10980 = vrot.lane.b32.xlu0 %v10515, 64
        %v10981 = vpop.permute.xlu0 %10980
        %10982 = vrot.lane.b32.xlu0 %v10516, 64
        %v10983 = vpop.permute.xlu0 %10982
        %10984 = vrot.lane.b32.xlu0 %v10517, 64
        %v10985 = vpop.permute.xlu0 %10984
        %10986 = vrot.lane.b32.xlu0 %v10518, 64
        %v10987 = vpop.permute.xlu0 %10986
        %10988 = vrot.lane.b32.xlu0 %v10519, 64
        %v10989 = vpop.permute.xlu0 %10988
        %10990 = vrot.lane.b32.xlu0 %v10520, 64
        %v10991 = vpop.permute.xlu0 %10990
        %10992 = vrot.lane.b32.xlu0 %v10521, 64
        %v10993 = vpop.permute.xlu0 %10992
        %10994 = vrot.lane.b32.xlu0 %v10522, 64
        %v10995 = vpop.permute.xlu0 %10994
        %10996 = vrot.lane.b32.xlu0 %v10523, 64
        %v10997 = vpop.permute.xlu0 %10996
        %10998 = vrot.lane.b32.xlu0 %v10524, 64
        %v10999 = vpop.permute.xlu0 %10998
        %11000 = vrot.lane.b32.xlu0 %v10525, 64
        %v11001 = vpop.permute.xlu0 %11000
        %11002 = vrot.lane.b32.xlu0 %v10526, 64
        %v11003 = vpop.permute.xlu0 %11002
        %11004 = vrot.lane.b32.xlu0 %v10527, 64
        %v11005 = vpop.permute.xlu0 %11004
        %11006 = vrot.lane.b32.xlu0 %v10528, 64
        %v11007 = vpop.permute.xlu0 %11006
        %11008 = vrot.lane.b32.xlu0 %v10529, 64
        %v11009 = vpop.permute.xlu0 %11008
        %11010 = vrot.lane.b32.xlu0 %v10530, 64
        %v11011 = vpop.permute.xlu0 %11010
        %v11012 = vsel %vm10723, %v10885, %v10887
        %v11013 = vsel %vm10723, %v10889, %v10891
        %v11014 = vsel %vm10723, %v10893, %v10895
        %v11015 = vsel %vm10723, %v10897, %v10899
        %v11016 = vsel %vm10723, %v10901, %v10903
        %v11017 = vsel %vm10723, %v10905, %v10907
        %v11018 = vsel %vm10723, %v10909, %v10911
        %v11019 = vsel %vm10723, %v10913, %v10915
        %v11020 = vsel %vm10723, %v10917, %v10919
        %v11021 = vsel %vm10723, %v10921, %v10923
        %v11022 = vsel %vm10723, %v10925, %v10927
        %v11023 = vsel %vm10723, %v10929, %v10931
        %v11024 = vsel %vm10723, %v10933, %v10935
        %v11025 = vsel %vm10723, %v10937, %v10939
        %v11026 = vsel %vm10723, %v10941, %v10943
        %v11027 = vsel %vm10723, %v10945, %v10947
        %v11028 = vsel %vm10723, %v10949, %v10951
        %v11029 = vsel %vm10723, %v10953, %v10955
        %v11030 = vsel %vm10723, %v10957, %v10959
        %v11031 = vsel %vm10723, %v10961, %v10963
        %v11032 = vsel %vm10723, %v10965, %v10967
        %v11033 = vsel %vm10723, %v10969, %v10971
        %v11034 = vsel %vm10723, %v10973, %v10975
        %v11035 = vsel %vm10723, %v10977, %v10979
        %v11036 = vsel %vm10723, %v10981, %v10983
        %v11037 = vsel %vm10723, %v10985, %v10987
        %v11038 = vsel %vm10723, %v10989, %v10991
        %v11039 = vsel %vm10723, %v10993, %v10995
        %v11040 = vsel %vm10723, %v10997, %v10999
        %v11041 = vsel %vm10723, %v11001, %v11003
        %v11042 = vsel %vm10723, %v11005, %v11007
        %v11043 = vsel %vm10723, %v11009, %v11011
        %v11108 = vsel %vm10723, %v1569, %v10596
        %v11109 = vsel %vm10723, %v1571, %v10600
        %v11110 = vsel %vm10723, %v1573, %v10604
        %v11111 = vsel %vm10723, %v1575, %v10608
        %v11112 = vsel %vm10723, %v1577, %v10612
        %v11113 = vsel %vm10723, %v1579, %v10616
        %v11114 = vsel %vm10723, %v1581, %v10620
        %v11115 = vsel %vm10723, %v1583, %v10624
        %v11116 = vsel %vm10723, %v1585, %v10628
        %v11117 = vsel %vm10723, %v1587, %v10632
        %v11118 = vsel %vm10723, %v1589, %v10636
        %v11119 = vsel %vm10723, %v1591, %v10640
        %v11120 = vsel %vm10723, %v1593, %v10644
        %v11121 = vsel %vm10723, %v1595, %v10648
        %v11122 = vsel %vm10723, %v1597, %v10652
        %v11123 = vsel %vm10723, %v1599, %v10656
        %v11124 = vsel %vm10723, %v1601, %v10660
        %v11125 = vsel %vm10723, %v1603, %v10664
        %v11126 = vsel %vm10723, %v1605, %v10668
        %v11127 = vsel %vm10723, %v1607, %v10672
        %v11128 = vsel %vm10723, %v1609, %v10676
        %v11129 = vsel %vm10723, %v1611, %v10680
        %v11130 = vsel %vm10723, %v1613, %v10684
        %v11131 = vsel %vm10723, %v1615, %v10688
        %v11132 = vsel %vm10723, %v1617, %v10692
        %v11133 = vsel %vm10723, %v1619, %v10696
        %v11134 = vsel %vm10723, %v1621, %v10700
        %v11135 = vsel %vm10723, %v1623, %v10704
        %v11136 = vsel %vm10723, %v1625, %v10708
        %v11137 = vsel %vm10723, %v1627, %v10712
        %v11138 = vsel %vm10723, %v1629, %v10716
        %v11139 = vsel %vm10723, %v1631, %v10720
        %v11140 = vsel %vm10723, %v9276, %v10885
        %v11141 = vsel %vm10723, %v9278, %v10889
        %v11142 = vsel %vm10723, %v9280, %v10893
        %v11143 = vsel %vm10723, %v9282, %v10897
        %v11144 = vsel %vm10723, %v9284, %v10901
        %v11145 = vsel %vm10723, %v9286, %v10905
        %v11146 = vsel %vm10723, %v9288, %v10909
        %v11147 = vsel %vm10723, %v9290, %v10913
        %v11148 = vsel %vm10723, %v9292, %v10917
        %v11149 = vsel %vm10723, %v9294, %v10921
        %v11150 = vsel %vm10723, %v9296, %v10925
        %v11151 = vsel %vm10723, %v9298, %v10929
        %v11152 = vsel %vm10723, %v9300, %v10933
        %v11153 = vsel %vm10723, %v9302, %v10937
        %v11154 = vsel %vm10723, %v9304, %v10941
        %v11155 = vsel %vm10723, %v9306, %v10945
        %v11156 = vsel %vm10723, %v9308, %v10949
        %v11157 = vsel %vm10723, %v9310, %v10953
        %v11158 = vsel %vm10723, %v9312, %v10957
        %v11159 = vsel %vm10723, %v9314, %v10961
        %v11160 = vsel %vm10723, %v9316, %v10965
        %v11161 = vsel %vm10723, %v9318, %v10969
        %v11162 = vsel %vm10723, %v9320, %v10973
        %v11163 = vsel %vm10723, %v9322, %v10977
        %v11164 = vsel %vm10723, %v9324, %v10981
        %v11165 = vsel %vm10723, %v9326, %v10985
        %v11166 = vsel %vm10723, %v9328, %v10989
        %v11167 = vsel %vm10723, %v9330, %v10993
        %v11168 = vsel %vm10723, %v9332, %v10997
        %v11169 = vsel %vm10723, %v9334, %v11001
        %v11170 = vsel %vm10723, %v9336, %v11005
        %v11171 = vsel %vm10723, %v9338, %v11009
        %11172 = vst [vmem:[%s974] sm:$0xff] %v1568
        %11173 = vst [vmem:[%s974 + $0x8] sm:$0xff] %v11108
        %11174 = vst [vmem:[%s974 + $0x10] sm:$0xff] %v10724
        %11175 = vst [vmem:[%s974 + $0x18] sm:$0xff] %v9275
        %11176 = vst [vmem:[%s974 + $0x20] sm:$0xff] %v11140
        %11177 = vst [vmem:[%s974 + $0x28] sm:$0xff] %v11012
        %11178 = vst [vmem:[%s974 + $0x30] sm:$0xff] %v1570
        %11179 = vst [vmem:[%s974 + $0x38] sm:$0xff] %v11109
        %11180 = vst [vmem:[%s974 + $0x40] sm:$0xff] %v10725
        %11181 = vst [vmem:[%s974 + $0x48] sm:$0xff] %v9277
        %11182 = vst [vmem:[%s974 + $0x50] sm:$0xff] %v11141
        %11183 = vst [vmem:[%s974 + $0x58] sm:$0xff] %v11013
        %11184 = vst [vmem:[%s974 + $0x60] sm:$0xff] %v1572
        %11185 = vst [vmem:[%s974 + $0x68] sm:$0xff] %v11110
        %11186 = vst [vmem:[%s974 + $0x70] sm:$0xff] %v10726
        %11187 = vst [vmem:[%s974 + $0x78] sm:$0xff] %v9279
        %11188 = vst [vmem:[%s974 + $0x80] sm:$0xff] %v11142
        %11189 = vst [vmem:[%s974 + $0x88] sm:$0xff] %v11014
        %11190 = vst [vmem:[%s974 + $0x90] sm:$0xff] %v1574
        %11191 = vst [vmem:[%s974 + $0x98] sm:$0xff] %v11111
        %11192 = vst [vmem:[%s974 + $0xa0] sm:$0xff] %v10727
        %11193 = vst [vmem:[%s974 + $0xa8] sm:$0xff] %v9281
        %11194 = vst [vmem:[%s974 + $0xb0] sm:$0xff] %v11143
        %11195 = vst [vmem:[%s974 + $0xb8] sm:$0xff] %v11015
        %11196 = vst [vmem:[%s974 + $0xc0] sm:$0xff] %v1576
        %11197 = vst [vmem:[%s974 + $0xc8] sm:$0xff] %v11112
        %11198 = vst [vmem:[%s974 + $0xd0] sm:$0xff] %v10728
        %11199 = vst [vmem:[%s974 + $0xd8] sm:$0xff] %v9283
        %11200 = vst [vmem:[%s974 + $0xe0] sm:$0xff] %v11144
        %11201 = vst [vmem:[%s974 + $0xe8] sm:$0xff] %v11016
        %11202 = vst [vmem:[%s974 + $0xf0] sm:$0xff] %v1578
        %11203 = vst [vmem:[%s974 + $0xf8] sm:$0xff] %v11113
        %11204 = vst [vmem:[%s974 + $0x100] sm:$0xff] %v10729
        %11205 = vst [vmem:[%s974 + $0x108] sm:$0xff] %v9285
        %11206 = vst [vmem:[%s974 + $0x110] sm:$0xff] %v11145
        %11207 = vst [vmem:[%s974 + $0x118] sm:$0xff] %v11017
        %11208 = vst [vmem:[%s974 + $0x120] sm:$0xff] %v1580
        %11209 = vst [vmem:[%s974 + $0x128] sm:$0xff] %v11114
        %11210 = vst [vmem:[%s974 + $0x130] sm:$0xff] %v10730
        %11211 = vst [vmem:[%s974 + $0x138] sm:$0xff] %v9287
        %11212 = vst [vmem:[%s974 + $0x140] sm:$0xff] %v11146
        %11213 = vst [vmem:[%s974 + $0x148] sm:$0xff] %v11018
        %11214 = vst [vmem:[%s974 + $0x150] sm:$0xff] %v1582
        %11215 = vst [vmem:[%s974 + $0x158] sm:$0xff] %v11115
        %11216 = vst [vmem:[%s974 + $0x160] sm:$0xff] %v10731
        %11217 = vst [vmem:[%s974 + $0x168] sm:$0xff] %v9289
        %11218 = vst [vmem:[%s974 + $0x170] sm:$0xff] %v11147
        %11219 = vst [vmem:[%s974 + $0x178] sm:$0xff] %v11019
        %11220 = vst [vmem:[%s974 + $0x180] sm:$0xff] %v1584
        %11221 = vst [vmem:[%s974 + $0x188] sm:$0xff] %v11116
        %11222 = vst [vmem:[%s974 + $0x190] sm:$0xff] %v10732
        %11223 = vst [vmem:[%s974 + $0x198] sm:$0xff] %v9291
        %11224 = vst [vmem:[%s974 + $0x1a0] sm:$0xff] %v11148
        %11225 = vst [vmem:[%s974 + $0x1a8] sm:$0xff] %v11020
        %11226 = vst [vmem:[%s974 + $0x1b0] sm:$0xff] %v1586
        %11227 = vst [vmem:[%s974 + $0x1b8] sm:$0xff] %v11117
        %11228 = vst [vmem:[%s974 + $0x1c0] sm:$0xff] %v10733
        %11229 = vst [vmem:[%s974 + $0x1c8] sm:$0xff] %v9293
        %11230 = vst [vmem:[%s974 + $0x1d0] sm:$0xff] %v11149
        %11231 = vst [vmem:[%s974 + $0x1d8] sm:$0xff] %v11021
        %11232 = vst [vmem:[%s974 + $0x1e0] sm:$0xff] %v1588
        %11233 = vst [vmem:[%s974 + $0x1e8] sm:$0xff] %v11118
        %11234 = vst [vmem:[%s974 + $0x1f0] sm:$0xff] %v10734
        %11235 = vst [vmem:[%s974 + $0x1f8] sm:$0xff] %v9295
        %11236 = vst [vmem:[%s974 + $0x200] sm:$0xff] %v11150
        %11237 = vst [vmem:[%s974 + $0x208] sm:$0xff] %v11022
        %11238 = vst [vmem:[%s974 + $0x210] sm:$0xff] %v1590
        %11239 = vst [vmem:[%s974 + $0x218] sm:$0xff] %v11119
        %11240 = vst [vmem:[%s974 + $0x220] sm:$0xff] %v10735
        %11241 = vst [vmem:[%s974 + $0x228] sm:$0xff] %v9297
        %11242 = vst [vmem:[%s974 + $0x230] sm:$0xff] %v11151
        %11243 = vst [vmem:[%s974 + $0x238] sm:$0xff] %v11023
        %11244 = vst [vmem:[%s974 + $0x240] sm:$0xff] %v1592
        %11245 = vst [vmem:[%s974 + $0x248] sm:$0xff] %v11120
        %11246 = vst [vmem:[%s974 + $0x250] sm:$0xff] %v10736
        %11247 = vst [vmem:[%s974 + $0x258] sm:$0xff] %v9299
        %11248 = vst [vmem:[%s974 + $0x260] sm:$0xff] %v11152
        %11249 = vst [vmem:[%s974 + $0x268] sm:$0xff] %v11024
        %11250 = vst [vmem:[%s974 + $0x270] sm:$0xff] %v1594
        %11251 = vst [vmem:[%s974 + $0x278] sm:$0xff] %v11121
        %11252 = vst [vmem:[%s974 + $0x280] sm:$0xff] %v10737
        %11253 = vst [vmem:[%s974 + $0x288] sm:$0xff] %v9301
        %11254 = vst [vmem:[%s974 + $0x290] sm:$0xff] %v11153
        %11255 = vst [vmem:[%s974 + $0x298] sm:$0xff] %v11025
        %11256 = vst [vmem:[%s974 + $0x2a0] sm:$0xff] %v1596
        %11257 = vst [vmem:[%s974 + $0x2a8] sm:$0xff] %v11122
        %11258 = vst [vmem:[%s974 + $0x2b0] sm:$0xff] %v10738
        %11259 = vst [vmem:[%s974 + $0x2b8] sm:$0xff] %v9303
        %11260 = vst [vmem:[%s974 + $0x2c0] sm:$0xff] %v11154
        %11261 = vst [vmem:[%s974 + $0x2c8] sm:$0xff] %v11026
        %11262 = vst [vmem:[%s974 + $0x2d0] sm:$0xff] %v1598
        %11263 = vst [vmem:[%s974 + $0x2d8] sm:$0xff] %v11123
        %11264 = vst [vmem:[%s974 + $0x2e0] sm:$0xff] %v10739
        %11265 = vst [vmem:[%s974 + $0x2e8] sm:$0xff] %v9305
        %11266 = vst [vmem:[%s974 + $0x2f0] sm:$0xff] %v11155
        %11267 = vst [vmem:[%s974 + $0x2f8] sm:$0xff] %v11027
        %11268 = vst [vmem:[%s974 + $0x300] sm:$0xff] %v1600
        %11269 = vst [vmem:[%s974 + $0x308] sm:$0xff] %v11124
        %11270 = vst [vmem:[%s974 + $0x310] sm:$0xff] %v10740
        %11271 = vst [vmem:[%s974 + $0x318] sm:$0xff] %v9307
        %11272 = vst [vmem:[%s974 + $0x320] sm:$0xff] %v11156
        %11273 = vst [vmem:[%s974 + $0x328] sm:$0xff] %v11028
        %11274 = vst [vmem:[%s974 + $0x330] sm:$0xff] %v1602
        %11275 = vst [vmem:[%s974 + $0x338] sm:$0xff] %v11125
        %11276 = vst [vmem:[%s974 + $0x340] sm:$0xff] %v10741
        %11277 = vst [vmem:[%s974 + $0x348] sm:$0xff] %v9309
        %11278 = vst [vmem:[%s974 + $0x350] sm:$0xff] %v11157
        %11279 = vst [vmem:[%s974 + $0x358] sm:$0xff] %v11029
        %11280 = vst [vmem:[%s974 + $0x360] sm:$0xff] %v1604
        %11281 = vst [vmem:[%s974 + $0x368] sm:$0xff] %v11126
        %11282 = vst [vmem:[%s974 + $0x370] sm:$0xff] %v10742
        %11283 = vst [vmem:[%s974 + $0x378] sm:$0xff] %v9311
        %11284 = vst [vmem:[%s974 + $0x380] sm:$0xff] %v11158
        %11285 = vst [vmem:[%s974 + $0x388] sm:$0xff] %v11030
        %11286 = vst [vmem:[%s974 + $0x390] sm:$0xff] %v1606
        %11287 = vst [vmem:[%s974 + $0x398] sm:$0xff] %v11127
        %11288 = vst [vmem:[%s974 + $0x3a0] sm:$0xff] %v10743
        %11289 = vst [vmem:[%s974 + $0x3a8] sm:$0xff] %v9313
        %11290 = vst [vmem:[%s974 + $0x3b0] sm:$0xff] %v11159
        %11291 = vst [vmem:[%s974 + $0x3b8] sm:$0xff] %v11031
        %11292 = vst [vmem:[%s974 + $0x3c0] sm:$0xff] %v1608
        %11293 = vst [vmem:[%s974 + $0x3c8] sm:$0xff] %v11128
        %11294 = vst [vmem:[%s974 + $0x3d0] sm:$0xff] %v10744
        %11295 = vst [vmem:[%s974 + $0x3d8] sm:$0xff] %v9315
        %11296 = vst [vmem:[%s974 + $0x3e0] sm:$0xff] %v11160
        %11297 = vst [vmem:[%s974 + $0x3e8] sm:$0xff] %v11032
        %11298 = vst [vmem:[%s974 + $0x3f0] sm:$0xff] %v1610
        %11299 = vst [vmem:[%s974 + $0x3f8] sm:$0xff] %v11129
        %11300 = vst [vmem:[%s974 + $0x400] sm:$0xff] %v10745
        %11301 = vst [vmem:[%s974 + $0x408] sm:$0xff] %v9317
        %11302 = vst [vmem:[%s974 + $0x410] sm:$0xff] %v11161
        %11303 = vst [vmem:[%s974 + $0x418] sm:$0xff] %v11033
        %11304 = vst [vmem:[%s974 + $0x420] sm:$0xff] %v1612
        %11305 = vst [vmem:[%s974 + $0x428] sm:$0xff] %v11130
        %11306 = vst [vmem:[%s974 + $0x430] sm:$0xff] %v10746
        %11307 = vst [vmem:[%s974 + $0x438] sm:$0xff] %v9319
        %11308 = vst [vmem:[%s974 + $0x440] sm:$0xff] %v11162
        %11309 = vst [vmem:[%s974 + $0x448] sm:$0xff] %v11034
        %11310 = vst [vmem:[%s974 + $0x450] sm:$0xff] %v1614
        %11311 = vst [vmem:[%s974 + $0x458] sm:$0xff] %v11131
        %11312 = vst [vmem:[%s974 + $0x460] sm:$0xff] %v10747
        %11313 = vst [vmem:[%s974 + $0x468] sm:$0xff] %v9321
        %11314 = vst [vmem:[%s974 + $0x470] sm:$0xff] %v11163
        %11315 = vst [vmem:[%s974 + $0x478] sm:$0xff] %v11035
        %11316 = vst [vmem:[%s974 + $0x480] sm:$0xff] %v1616
        %11317 = vst [vmem:[%s974 + $0x488] sm:$0xff] %v11132
        %11318 = vst [vmem:[%s974 + $0x490] sm:$0xff] %v10748
        %11319 = vst [vmem:[%s974 + $0x498] sm:$0xff] %v9323
        %11320 = vst [vmem:[%s974 + $0x4a0] sm:$0xff] %v11164
        %11321 = vst [vmem:[%s974 + $0x4a8] sm:$0xff] %v11036
        %11322 = vst [vmem:[%s974 + $0x4b0] sm:$0xff] %v1618
        %11323 = vst [vmem:[%s974 + $0x4b8] sm:$0xff] %v11133
        %11324 = vst [vmem:[%s974 + $0x4c0] sm:$0xff] %v10749
        %11325 = vst [vmem:[%s974 + $0x4c8] sm:$0xff] %v9325
        %11326 = vst [vmem:[%s974 + $0x4d0] sm:$0xff] %v11165
        %11327 = vst [vmem:[%s974 + $0x4d8] sm:$0xff] %v11037
        %11328 = vst [vmem:[%s974 + $0x4e0] sm:$0xff] %v1620
        %11329 = vst [vmem:[%s974 + $0x4e8] sm:$0xff] %v11134
        %11330 = vst [vmem:[%s974 + $0x4f0] sm:$0xff] %v10750
        %11331 = vst [vmem:[%s974 + $0x4f8] sm:$0xff] %v9327
        %11332 = vst [vmem:[%s974 + $0x500] sm:$0xff] %v11166
        %11333 = vst [vmem:[%s974 + $0x508] sm:$0xff] %v11038
        %11334 = vst [vmem:[%s974 + $0x510] sm:$0xff] %v1622
        %11335 = vst [vmem:[%s974 + $0x518] sm:$0xff] %v11135
        %11336 = vst [vmem:[%s974 + $0x520] sm:$0xff] %v10751
        %11337 = vst [vmem:[%s974 + $0x528] sm:$0xff] %v9329
        %11338 = vst [vmem:[%s974 + $0x530] sm:$0xff] %v11167
        %11339 = vst [vmem:[%s974 + $0x538] sm:$0xff] %v11039
        %11340 = vst [vmem:[%s974 + $0x540] sm:$0xff] %v1624
        %11341 = vst [vmem:[%s974 + $0x548] sm:$0xff] %v11136
        %11342 = vst [vmem:[%s974 + $0x550] sm:$0xff] %v10752
        %11343 = vst [vmem:[%s974 + $0x558] sm:$0xff] %v9331
        %11344 = vst [vmem:[%s974 + $0x560] sm:$0xff] %v11168
        %11345 = vst [vmem:[%s974 + $0x568] sm:$0xff] %v11040
        %11346 = vst [vmem:[%s974 + $0x570] sm:$0xff] %v1626
        %11347 = vst [vmem:[%s974 + $0x578] sm:$0xff] %v11137
        %11348 = vst [vmem:[%s974 + $0x580] sm:$0xff] %v10753
        %11349 = vst [vmem:[%s974 + $0x588] sm:$0xff] %v9333
        %11350 = vst [vmem:[%s974 + $0x590] sm:$0xff] %v11169
        %11351 = vst [vmem:[%s974 + $0x598] sm:$0xff] %v11041
        %11352 = vst [vmem:[%s974 + $0x5a0] sm:$0xff] %v1628
        %11353 = vst [vmem:[%s974 + $0x5a8] sm:$0xff] %v11138
        %11354 = vst [vmem:[%s974 + $0x5b0] sm:$0xff] %v10754
        %11355 = vst [vmem:[%s974 + $0x5b8] sm:$0xff] %v9335
        %11356 = vst [vmem:[%s974 + $0x5c0] sm:$0xff] %v11170
        %11357 = vst [vmem:[%s974 + $0x5c8] sm:$0xff] %v11042
        %11358 = vst [vmem:[%s974 + $0x5d0] sm:$0xff] %v1630
        %11359 = vst [vmem:[%s974 + $0x5d8] sm:$0xff] %v11139
        %11360 = vst [vmem:[%s974 + $0x5e0] sm:$0xff] %v10755
        %11361 = vst [vmem:[%s974 + $0x5e8] sm:$0xff] %v9337
        %11362 = vst [vmem:[%s974 + $0x5f0] sm:$0xff] %v11171
        %11363 = vst [vmem:[%s974 + $0x5f8] sm:$0xff] %v11043
        %s11364 = sand.u32 %s586, 1
        %s11365 = scalar_lea.sflag [#allocation4], %s11364
        %s11366 = sand.u32 %s586, 1
        %s11367 = smul.addr %s11366, 1536
        %s11368 = scalar_lea.vmem [#allocation29], %s11367
        // Predicated region
        $region189: #{inception_c.1} parent=119 // pred_check
          %p11369 = pneg %p596
        $region190: #{inception_c.1} parent=119 // pred_check_branch
          %11371 = sbr.rel (%p11369) target = $region192
        $region191: #{inception_c.1} parent=119 // pred_region
          %s11373 = ssub.s32 24576, 24576
          %11374 = vsyncadd %s11365, %s11373
          %s11375 = smul.addr %s48, 192
          %s11376 = smul.addr %s11375, 128
          %s11377 = scalar_lea.hbm %s25, %s11376
          %s11378 = sshll.u32 %s11368, 4
          %s11379 = int_to_ptr.vmem [resolvable:$true] %s11378
          %11384 = dma.vmem_to_hbm [thread:$0]  %s11379, 24576, %s11377, %s11365, 768, 768, 48
        $region192: #{inception_c.1} parent=119 // pred_fallthru
          _
      $region120: #{inception_c.1} parent=5 // pred_fallthru
        _
      %p11385 = scmp.le.s32.totalorder 2, %s43
      // Predicated region
      $region193: #{inception_c.1} parent=5 // pred_check
        %p11386 = pneg %p11385
      $region194: #{inception_c.1} parent=5 // pred_check_branch
        %11388 = sbr.rel (%p11386) target = $region196
      $region195: #{inception_c.1} parent=5 // pred_region
        %s11389 = ssub.s32 %s43, 2
        // Predicated region
        $region197: #{inception_c.1} parent=195 // pred_check
          %p11390 = pneg %p602
        $region198: #{inception_c.1} parent=195 // pred_check_branch
          %11392 = sbr.rel (%p11390) target = $region200
        $region199: #{inception_c.1} parent=195 // pred_region
          %s11393 = sand.u32 %s587, 1
          %s11394 = scalar_lea.sflag [#allocation4], %s11393
          %s11395 = sand.u32 %s587, 1
          %s11396 = smul.addr %s11395, 1536
          %s11397 = scalar_lea.vmem [#allocation29], %s11396
          %11398 = dma.done %s11394, 24576
        $region200: #{inception_c.1} parent=195 // pred_fallthru
          _
      $region196: #{inception_c.1} parent=5 // pred_fallthru
        _
    $region6: #{inception_c.1} parent=1 // loop_footer
      %s47 = sadd.s32 1, %s43
    $region7: #{inception_c.1} parent=1 // loop_footer_branch
      %42 = sbr.rel target = $region3
    $region8: #{inception_c.1} parent=1 // loop_exit
      _
    %11399 = vsyncpa [#allocation3], 1
    %s11400 = scalar_lea.sflag [#allocation3], 1
    %11401 = vsyncpa %s11400, 1
    %11402 = vsyncpa [#allocation6], 1
    %11403 = vsyncpa [#allocation9], 1
    %11404 = vsyncpa [#allocation12], 1
    %11405 = vsyncpa [#allocation15], 1
    %11406 = vsyncpa [#allocation18], 1
    %11407 = vsyncpa [#allocation21], 1
    %11408 = vsyncpa [#allocation24], 1
    %11409 = vsyncpa [#allocation27], 1
    %11410 = vsyncpa [#allocation4], 1
    %s11411 = scalar_lea.sflag [#allocation4], 1
    %11412 = vsyncpa %s11411, 1

</llo_original>
